<compile_context>
chip_gen: v7x
topology: tpu7x:2x2x1
jax: 0.10.0
libtpu: 0.0.40
codegen_flags: <defaults>
</compile_context>

<pallas_src>
import jax
import jax.numpy as jnp
from jax.experimental import pallas as pl
from jax.experimental.pallas import tpu as pltpu


# channel widths fixed by the PyTorch module
_C_IN, _C1, _C2, _C3 = 2, 32, 64, 128
_D1, _D2, _D3 = 64, 32, 1


def _rup8(x):
    return (x + 7) // 8 * 8


def _stable_sigmoid(x):
    # exp() goes to the EUP; exact reciprocal keeps the result strictly in [0,1].
    z = jnp.exp(-jnp.abs(x))
    r = 1.0 / (1.0 + z)
    return jnp.where(x >= 0.0, r, z * r)


# -----------------------------------------------------------------------------
# in-kernel building blocks (all indices are static Python ints)
# -----------------------------------------------------------------------------
def _conv_im2col(xbuf, wp, m, w_ref, b_ref):
    """3x3 VALID conv over a flat zero-padded buffer as ONE GEMM (K = 9*Cin).

    xbuf : (L, Cin) f32 value; row stride `wp` (multiple of 8); zero ring /
           zero dilation holes already present.
    m    : number of output rows (= (N-1)*Lp + h*wp); rows whose column index
           is >= the valid width are garbage and never read downstream.
    w_ref: (9*Cin, Cout) bf16 ref, taps (kh, kw) row-major, Cin minor.
    """
    pieces = []
    for kh in range(3):
        for kw in range(3):
            d = kh * wp + kw
            # shift the *narrow* (Cin) operand; cast the slice to bf16 for the MXU
            pieces.append(xbuf[d:d + m, :].astype(jnp.bfloat16))
    im = jnp.concatenate(pieces, axis=1)                        # (m, 9*Cin) bf16
    return jnp.dot(im, w_ref[...], preferred_element_type=jnp.float32) + b_ref[...]


def _conv_packed(xbuf, wp, m, cout, w_ref, b_ref):
    """3x3 VALID conv as ONE packed GEMM (N = 9*Cout) + 9 output shift-adds.
    Used for the decoder where Cout <= Cin (so the shifted side is narrow)."""
    y = jnp.dot(xbuf.astype(jnp.bfloat16), w_ref[...],
                preferred_element_type=jnp.float32)             # (L, 9*Cout) f32
    acc = None
    for kh in range(3):
        for kw in range(3):
            t = 3 * kh + kw
            d = kh * wp + kw
            piece = y[d:d + m, t * cout:(t + 1) * cout]
            acc = piece if acc is None else acc + piece
    return acc + b_ref[...]


def _pool2x2(y, stride, h, w, nbatch, src_elem, pmax_ref, dst_ref,
             dst_start, dst_step):
    """Fused ReLU + 2x2/stride-2 maxpool of conv output `y`, scattering pooled
    rows into `dst_ref` (contiguous for encoder pad buffers, stride-2 for the
    decoder's zero-dilated buffer).  Two whole-tile neighbour maxes + ONE
    strided extract per pooled row (was 4 strided loads/row)."""
    colmax = jnp.maximum(y[:-1, :], y[1:, :])                   # horizontal pairs
    rowmax = jnp.maximum(jnp.maximum(colmax[:-stride, :], colmax[stride:, :]),
                         0.0)                                   # vertical pairs + ReLU
    pmax_ref[...] = rowmax
    hn, wn = h // 2, w // 2
    for n in range(nbatch):
        for i in range(hn):
            row = pmax_ref[pl.ds(n * src_elem + 2 * i * stride, wn, 2), :]
            if dst_step == 1:
                dst_ref[pl.ds(dst_start(n, i), wn), :] = row
            else:
                dst_ref[pl.ds(dst_start(n, i), wn, dst_step), :] = row


def _scatter_dilated(a, stride, h_out, w_out, nbatch, src_elem,
                     dst_ref, dst_elem, dst_stride):
    """Scatter a decoder layer's ReLU'd output rows into the next layer's
    zero-dilated buffer (data lands at rows/cols 1, 3, 5, ...)."""
    for n in range(nbatch):
        for r in range(h_out):
            s0 = n * src_elem + r * stride
            dst_ref[pl.ds(n * dst_elem + (1 + 2 * r) * dst_stride + 1,
                          w_out, 2), :] = a[s0:s0 + w_out, :]


# -----------------------------------------------------------------------------
# fused forward
# -----------------------------------------------------------------------------
def autoencoder_forward(params, img1_nchw, img2_nchw):
    N, _, H, W = img1_nchw.shape
    assert H % 8 == 0 and W % 8 == 0, "spatial dims must survive three 2x2 pools"

    # per-layer spatial sizes
    H1, W1 = H, W
    H2, W2 = H // 2, W // 2
    H3, W3 = H // 4, W // 4
    H4, W4 = H // 8, W // 8

    # 8-aligned flat row strides (encoder padded inputs / decoder dilated inputs)
    WP2, WP3 = _rup8(W2 + 2), _rup8(W3 + 2)
    WD1, WD2, WD3 = _rup8(2 * W4 + 2), _rup8(2 * W3 + 2), _rup8(2 * W2 + 2)
    # per-batch-element flat extents (pad/dilation rows + 1 slack row for the
    # shifted im2col / output slices; slack >= 2*stride + 2 flat slots)
    LP2, LP3 = (H2 + 3) * WP2, (H3 + 3) * WP3
    LD1, LD2, LD3 = (2 * H4 + 3) * WD1, (2 * H3 + 3) * WD2, (2 * H2 + 3) * WD3
    # GEMM M per layer (batch folded into M; inter-element rows are garbage,
    # never read downstream)
    M1 = N * H1 * W1
    M2 = (N - 1) * LP2 + H2 * WP2
    M3 = (N - 1) * LP3 + H3 * WP3
    M4 = (N - 1) * LD1 + 2 * H4 * WD1
    M5 = (N - 1) * LD2 + 2 * H3 * WD2
    M6 = (N - 1) * LD3 + 2 * H2 * WD3

    # ---- enc1 im2col in the wrapper (a few KB of XLA work) -------------------
    x = jnp.concatenate([img1_nchw, img2_nchw], axis=1)         # (N, 2, H, W)
    x = jnp.transpose(x, (0, 2, 3, 1)).astype(jnp.float32)      # (N, H, W, 2)
    xp = jnp.pad(x, ((0, 0), (1, 1), (1, 1), (0, 0)))           # (N, H+2, W+2, 2)
    taps = [xp[:, kh:kh + H, kw:kw + W, :] for kh in range(3) for kw in range(3)]
    x_im = jnp.stack(taps, axis=3).reshape(N * H * W, 9 * _C_IN)
    x_im = x_im.astype(jnp.bfloat16)                            # (N*H*W, 18)

    # ---- weights: PyTorch layouts -> GEMM-ready bf16 matrices ----------------
    def enc_mat(w_oihw):            # nn.Conv2d (Cout, Cin, 3, 3) -> (9*Cin, Cout)
        co, ci = w_oihw.shape[0], w_oihw.shape[1]
        return (jnp.transpose(w_oihw, (2, 3, 1, 0))
                .reshape(9 * ci, co).astype(jnp.bfloat16))

    def dec_mat(w_iohw):            # nn.ConvTranspose2d (Cin, Cout, 3, 3) -> (Cin, 9*Cout)
        ci, co = w_iohw.shape[0], w_iohw.shape[1]
        wf = jnp.flip(w_iohw, axis=(2, 3))   # flipped kernel == equivalent fwd conv
        return (jnp.transpose(wf, (0, 2, 3, 1))
                .reshape(ci, 9 * co).astype(jnp.bfloat16))

    ws = [enc_mat(params["enc1_w"]), enc_mat(params["enc2_w"]),
          enc_mat(params["enc3_w"]), dec_mat(params["dec1_w"]),
          dec_mat(params["dec2_w"]), dec_mat(params["dec3_w"])]
    bs = [params[k].reshape(1, -1).astype(jnp.float32)
          for k in ("enc1_b", "enc2_b", "enc3_b", "dec1_b", "dec2_b", "dec3_b")]

    # ---- fully fused kernel: single grid step, whole batch ------------------
    def kernel(x_ref, w1, w2, w3, w4, w5, w6, b1, b2, b3, b4, b5, b6, out_ref,
               pad2, pad3, dil1, dil2, dil3, pm1, pm2, pm3):
        # Zero the scatter targets ONCE per forward call (single grid step):
        # only the pad rings / dilation holes must be zero and they are never
        # overwritten; the interiors are rewritten below.
        for ref in (pad2, pad3, dil1, dil2, dil3):
            ref[...] = jnp.zeros(ref.shape, ref.dtype)

        # ----------------------------- encoder -----------------------------
        # enc1: wrapper-side im2col -> one dense GEMM for the whole batch
        y1 = jnp.dot(x_ref[...], w1[...],
                     preferred_element_type=jnp.float32) + b1[...]
        _pool2x2(y1, W1, H1, W1, N, H1 * W1, pm1, pad2,
                 lambda n, i: n * LP2 + (i + 1) * WP2 + 1, 1)

        y2 = _conv_im2col(pad2[...], WP2, M2, w2, b2)
        _pool2x2(y2, WP2, H2, W2, N, LP2, pm2, pad3,
                 lambda n, i: n * LP3 + (i + 1) * WP3 + 1, 1)

        y3 = _conv_im2col(pad3[...], WP3, M3, w3, b3)
        # bottleneck pool scatters straight into dec1's zero-dilated input
        _pool2x2(y3, WP3, H3, W3, N, LP3, pm3, dil1,
                 lambda n, i: n * LD1 + (1 + 2 * i) * WD1 + 1, 2)

        # ----------------------------- decoder -----------------------------
        a4 = jnp.maximum(_conv_packed(dil1[...], WD1, M4, _D1, w4, b4), 0.0)
        _scatter_dilated(a4, WD1, 2 * H4, 2 * W4, N, LD1, dil2, LD2, WD2)

        a5 = jnp.maximum(_conv_packed(dil2[...], WD2, M5, _D2, w5, b5), 0.0)
        _scatter_dilated(a5, WD2, 2 * H3, 2 * W3, N, LD2, dil3, LD3, WD3)

        a6 = _stable_sigmoid(_conv_packed(dil3[...], WD3, M6, _D3, w6, b6))
        # TODO(synk): per-row (W,1) stores are lane-sparse; a lane-dense output
        # (sublane->lane transpose + (N, H*W) out_spec) only matters when H,W grow.
        for n in range(N):
            for r in range(H1):
                s0 = n * LD3 + r * WD3
                out_ref[n, r] = a6[s0:s0 + W1, :]

    grid_spec = pltpu.PrefetchScalarGridSpec(
        num_scalar_prefetch=0,
        grid=(1,),
        in_specs=(
            [pl.BlockSpec(x_im.shape, lambda i: (0, 0))]
            + [pl.BlockSpec(w.shape, lambda i: (0, 0)) for w in ws]
            + [pl.BlockSpec(b.shape, lambda i: (0, 0)) for b in bs]
        ),
        out_specs=pl.BlockSpec((N, H1, W1, 1), lambda i: (0, 0, 0, 0)),
        scratch_shapes=[
            pltpu.VMEM((N * LP2, _C1), jnp.float32),        # pad2 (enc2 input)
            pltpu.VMEM((N * LP3, _C2), jnp.float32),        # pad3 (enc3 input)
            pltpu.VMEM((N * LD1, _C3), jnp.float32),        # dil1 (dec1 input)
            pltpu.VMEM((N * LD2, _D1), jnp.float32),        # dil2 (dec2 input)
            pltpu.VMEM((N * LD3, _D2), jnp.float32),        # dil3 (dec3 input)
            pltpu.VMEM((M1 - 1 - W1, _C1), jnp.float32),    # pm1 (pool1 rowmax)
            pltpu.VMEM((M2 - 1 - WP2, _C2), jnp.float32),   # pm2 (pool2 rowmax)
            pltpu.VMEM((M3 - 1 - WP3, _C3), jnp.float32),   # pm3 (pool3 rowmax)
        ],
    )

    out = pl.pallas_call(
        kernel,
        out_shape=jax.ShapeDtypeStruct((N, H1, W1, 1), jnp.float32),
        grid_spec=grid_spec,
        compiler_params=pltpu.CompilerParams(
            dimension_semantics=("arbitrary",),
            vmem_limit_bytes=32 * 1024 * 1024),
    )(x_im, *ws, *bs)

    return jnp.transpose(out, (0, 3, 1, 2))        # (N, H, W, 1) -> (N, 1, H, W)


# -----------------------------------------------------------------------------
# Deterministic parameter init (shapes from the PyTorch __init__)
# -----------------------------------------------------------------------------
def init_params(key):
    def conv_w(k, cout, cin):
        return jax.random.normal(k, (cout, cin, 3, 3), jnp.float32) * (2.0 / (cin * 9)) ** 0.5

    def convT_w(k, cin, cout):
        return jax.random.normal(k, (cin, cout, 3, 3), jnp.float32) * (2.0 / (cin * 9)) ** 0.5

    ks = jax.random.split(key, 12)
    return {
        "enc1_w": conv_w(ks[0], 32, 2),
        "enc1_b": jax.random.normal(ks[1], (32,), jnp.float32) * 0.01,
        "enc2_w": conv_w(ks[2], 64, 32),
        "enc2_b": jax.random.normal(ks[3], (64,), jnp.float32) * 0.01,
        "enc3_w": conv_w(ks[4], 128, 64),
        "enc3_b": jax.random.normal(ks[5], (128,), jnp.float32) * 0.01,
        "dec1_w": convT_w(ks[6], 128, 64),
        "dec1_b": jax.random.normal(ks[7], (64,), jnp.float32) * 0.01,
        "dec2_w": convT_w(ks[8], 64, 32),
        "dec2_b": jax.random.normal(ks[9], (32,), jnp.float32) * 0.01,
        "dec3_w": convT_w(ks[10], 32, 1),
        "dec3_b": jax.random.normal(ks[11], (1,), jnp.float32) * 0.01,
    }


if __name__ == "__main__":
    key = jax.random.PRNGKey(0)
    k1, k2, kp = jax.random.split(key, 3)

    # PyTorch forward takes two single-channel NCHW images.
    img1 = jax.random.uniform(k1, (2, 1, 16, 16), jnp.float32)
    img2 = jax.random.uniform(k2, (2, 1, 16, 16), jnp.float32)
    params = init_params(kp)

    out = jax.jit(autoencoder_forward)(params, img1, img2)
    out = jax.block_until_ready(out)

    assert out.shape == (2, 1, 16, 16), out.shape
    assert bool(jnp.all(jnp.isfinite(out)))
    assert bool(jnp.all((out >= 0.0) & (out <= 1.0)))  # sigmoid output
    print("KERNEL_OK")
</pallas_src>

<mosaic_0001>
module attributes {stable_mosaic.version = 11 : i64} {
  func.func @kernel(%arg0: i32, %arg1: memref<512x18xbf16, #tpu.memory_space<vmem>>, %arg2: memref<18x32xbf16, #tpu.memory_space<vmem>>, %arg3: memref<288x64xbf16, #tpu.memory_space<vmem>>, %arg4: memref<576x128xbf16, #tpu.memory_space<vmem>>, %arg5: memref<128x576xbf16, #tpu.memory_space<vmem>>, %arg6: memref<64x288xbf16, #tpu.memory_space<vmem>>, %arg7: memref<32x9xbf16, #tpu.memory_space<vmem>>, %arg8: memref<1x32xf32, #tpu.memory_space<vmem>>, %arg9: memref<1x64xf32, #tpu.memory_space<vmem>>, %arg10: memref<1x128xf32, #tpu.memory_space<vmem>>, %arg11: memref<1x64xf32, #tpu.memory_space<vmem>>, %arg12: memref<1x32xf32, #tpu.memory_space<vmem>>, %arg13: memref<1x1xf32, #tpu.memory_space<vmem>>, %arg14: memref<2x16x16x1xf32, #tpu.memory_space<vmem>>, %arg15: memref<352x32xf32, #tpu.memory_space<vmem>>, %arg16: memref<112x64xf32, #tpu.memory_space<vmem>>, %arg17: memref<112x128xf32, #tpu.memory_space<vmem>>, %arg18: memref<352x64xf32, #tpu.memory_space<vmem>>, %arg19: memref<912x32xf32, #tpu.memory_space<vmem>>, %arg20: memref<495x32xf32, #tpu.memory_space<vmem>>, %arg21: memref<287x64xf32, #tpu.memory_space<vmem>>, %arg22: memref<79x128xf32, #tpu.memory_space<vmem>>) attributes {dimension_semantics = [#tpu.dimension_semantics<arbitrary>], iteration_bounds = array<i64: 1>, scalar_prefetch = 0 : i64, scratch_operands = 8 : i64, tpu.core_type = #tpu.core_type<tc>, window_params = [{pipeline_mode = #tpu.pipeline_mode<synchronous>, transform_indices = @transform_0, window_bounds = array<i64: 512, 18>}, {pipeline_mode = #tpu.pipeline_mode<synchronous>, transform_indices = @transform_1, window_bounds = array<i64: 18, 32>}, {pipeline_mode = #tpu.pipeline_mode<synchronous>, transform_indices = @transform_2, window_bounds = array<i64: 288, 64>}, {pipeline_mode = #tpu.pipeline_mode<synchronous>, transform_indices = @transform_3, window_bounds = array<i64: 576, 128>}, {pipeline_mode = #tpu.pipeline_mode<synchronous>, transform_indices = @transform_4, window_bounds = array<i64: 128, 576>}, {pipeline_mode = #tpu.pipeline_mode<synchronous>, transform_indices = @transform_5, window_bounds = array<i64: 64, 288>}, {pipeline_mode = #tpu.pipeline_mode<synchronous>, transform_indices = @transform_6, window_bounds = array<i64: 32, 9>}, {pipeline_mode = #tpu.pipeline_mode<synchronous>, transform_indices = @transform_7, window_bounds = array<i64: 1, 32>}, {pipeline_mode = #tpu.pipeline_mode<synchronous>, transform_indices = @transform_8, window_bounds = array<i64: 1, 64>}, {pipeline_mode = #tpu.pipeline_mode<synchronous>, transform_indices = @transform_9, window_bounds = array<i64: 1, 128>}, {pipeline_mode = #tpu.pipeline_mode<synchronous>, transform_indices = @transform_10, window_bounds = array<i64: 1, 64>}, {pipeline_mode = #tpu.pipeline_mode<synchronous>, transform_indices = @transform_11, window_bounds = array<i64: 1, 32>}, {pipeline_mode = #tpu.pipeline_mode<synchronous>, transform_indices = @transform_12, window_bounds = array<i64: 1, 1>}, {pipeline_mode = #tpu.pipeline_mode<synchronous>, transform_indices = @transform_13, window_bounds = array<i64: 2, 16, 16, 1>}]} {
    %cst = arith.constant 0.000000e+00 : f32
    %0 = vector.broadcast %cst : f32 to vector<352x32xf32>
    %c0 = arith.constant 0 : index
    %c0_0 = arith.constant 0 : index
    %1 = vector.load %arg15[%c0, %c0_0] : memref<352x32xf32, #tpu.memory_space<vmem>>, vector<352x32xf32>
    tpu.vector_store %arg15[%c0, %c0_0], %0 {strides = array<i32>} : memref<352x32xf32, #tpu.memory_space<vmem>>, vector<352x32xf32>,
    %cst_1 = arith.constant 0.000000e+00 : f32
    %2 = vector.broadcast %cst_1 : f32 to vector<112x64xf32>
    %c0_2 = arith.constant 0 : index
    %c0_3 = arith.constant 0 : index
    %3 = vector.load %arg16[%c0_2, %c0_3] : memref<112x64xf32, #tpu.memory_space<vmem>>, vector<112x64xf32>
    tpu.vector_store %arg16[%c0_2, %c0_3], %2 {strides = array<i32>} : memref<112x64xf32, #tpu.memory_space<vmem>>, vector<112x64xf32>,
    %cst_4 = arith.constant 0.000000e+00 : f32
    %4 = vector.broadcast %cst_4 : f32 to vector<112x128xf32>
    %c0_5 = arith.constant 0 : index
    %c0_6 = arith.constant 0 : index
    %5 = vector.load %arg17[%c0_5, %c0_6] : memref<112x128xf32, #tpu.memory_space<vmem>>, vector<112x128xf32>
    tpu.vector_store %arg17[%c0_5, %c0_6], %4 {strides = array<i32>} : memref<112x128xf32, #tpu.memory_space<vmem>>, vector<112x128xf32>,
    %cst_7 = arith.constant 0.000000e+00 : f32
    %6 = vector.broadcast %cst_7 : f32 to vector<352x64xf32>
    %c0_8 = arith.constant 0 : index
    %c0_9 = arith.constant 0 : index
    %7 = vector.load %arg18[%c0_8, %c0_9] : memref<352x64xf32, #tpu.memory_space<vmem>>, vector<352x64xf32>
    tpu.vector_store %arg18[%c0_8, %c0_9], %6 {strides = array<i32>} : memref<352x64xf32, #tpu.memory_space<vmem>>, vector<352x64xf32>,
    %cst_10 = arith.constant 0.000000e+00 : f32
    %8 = vector.broadcast %cst_10 : f32 to vector<912x32xf32>
    %c0_11 = arith.constant 0 : index
    %c0_12 = arith.constant 0 : index
    %9 = vector.load %arg19[%c0_11, %c0_12] : memref<912x32xf32, #tpu.memory_space<vmem>>, vector<912x32xf32>
    tpu.vector_store %arg19[%c0_11, %c0_12], %8 {strides = array<i32>} : memref<912x32xf32, #tpu.memory_space<vmem>>, vector<912x32xf32>,
    %c0_13 = arith.constant 0 : index
    %c0_14 = arith.constant 0 : index
    %10 = vector.load %arg1[%c0_13, %c0_14] : memref<512x18xbf16, #tpu.memory_space<vmem>>, vector<512x18xbf16>
    %c0_15 = arith.constant 0 : index
    %c0_16 = arith.constant 0 : index
    %11 = vector.load %arg2[%c0_15, %c0_16] : memref<18x32xbf16, #tpu.memory_space<vmem>>, vector<18x32xbf16>
    %cst_17 = arith.constant dense<0.000000e+00> : vector<512x32xf32>
    %12 = tpu.matmul %10, %11, %cst_17 {dimension_numbers = #tpu.dot_dimension_numbers<[1], [0], [0], [1], [0, 0, 1, 1], [], []>} : vector<512x18xbf16>, vector<18x32xbf16>, vector<512x32xf32> -> vector<512x32xf32>
    %c0_18 = arith.constant 0 : index
    %c0_19 = arith.constant 0 : index
    %13 = vector.load %arg8[%c0_18, %c0_19] : memref<1x32xf32, #tpu.memory_space<vmem>>, vector<1x32xf32>
    %14 = vector.broadcast %13 : vector<1x32xf32> to vector<512x32xf32>
    %15 = arith.addf %12, %14 : vector<512x32xf32>
    %16 = vector.extract_strided_slice %15 {offsets = [0, 0], sizes = [511, 32], strides = [1, 1]} : vector<512x32xf32> to vector<511x32xf32>
    %17 = vector.extract_strided_slice %15 {offsets = [1, 0], sizes = [511, 32], strides = [1, 1]} : vector<512x32xf32> to vector<511x32xf32>
    %18 = arith.maximumf %16, %17 : vector<511x32xf32>
    %19 = vector.extract_strided_slice %18 {offsets = [0, 0], sizes = [495, 32], strides = [1, 1]} : vector<511x32xf32> to vector<495x32xf32>
    %20 = vector.extract_strided_slice %18 {offsets = [16, 0], sizes = [495, 32], strides = [1, 1]} : vector<511x32xf32> to vector<495x32xf32>
    %21 = arith.maximumf %19, %20 : vector<495x32xf32>
    %cst_20 = arith.constant 0.000000e+00 : f32
    %22 = vector.broadcast %cst_20 : f32 to vector<495x32xf32>
    %23 = arith.maximumf %21, %22 : vector<495x32xf32>
    %c0_21 = arith.constant 0 : index
    %c0_22 = arith.constant 0 : index
    %24 = vector.load %arg20[%c0_21, %c0_22] : memref<495x32xf32, #tpu.memory_space<vmem>>, vector<495x32xf32>
    tpu.vector_store %arg20[%c0_21, %c0_22], %23 {strides = array<i32>} : memref<495x32xf32, #tpu.memory_space<vmem>>, vector<495x32xf32>,
    %c0_23 = arith.constant 0 : index
    %c0_24 = arith.constant 0 : index
    %25 = tpu.strided_load %arg20[%c0_23, %c0_24] {strides = array<i32: 2, 1>} : memref<495x32xf32, #tpu.memory_space<vmem>>, vector<8x32xf32>
    %c17 = arith.constant 17 : index
    %c0_25 = arith.constant 0 : index
    %26 = vector.load %arg15[%c17, %c0_25] : memref<352x32xf32, #tpu.memory_space<vmem>>, vector<8x32xf32>
    tpu.vector_store %arg15[%c17, %c0_25], %25 {strides = array<i32>} : memref<352x32xf32, #tpu.memory_space<vmem>>, vector<8x32xf32>,
    %c32 = arith.constant 32 : index
    %c0_26 = arith.constant 0 : index
    %27 = tpu.strided_load %arg20[%c32, %c0_26] {strides = array<i32: 2, 1>} : memref<495x32xf32, #tpu.memory_space<vmem>>, vector<8x32xf32>
    %c33 = arith.constant 33 : index
    %c0_27 = arith.constant 0 : index
    %28 = vector.load %arg15[%c33, %c0_27] : memref<352x32xf32, #tpu.memory_space<vmem>>, vector<8x32xf32>
    tpu.vector_store %arg15[%c33, %c0_27], %27 {strides = array<i32>} : memref<352x32xf32, #tpu.memory_space<vmem>>, vector<8x32xf32>,
    %c64 = arith.constant 64 : index
    %c0_28 = arith.constant 0 : index
    %29 = tpu.strided_load %arg20[%c64, %c0_28] {strides = array<i32: 2, 1>} : memref<495x32xf32, #tpu.memory_space<vmem>>, vector<8x32xf32>
    %c49 = arith.constant 49 : index
    %c0_29 = arith.constant 0 : index
    %30 = vector.load %arg15[%c49, %c0_29] : memref<352x32xf32, #tpu.memory_space<vmem>>, vector<8x32xf32>
    tpu.vector_store %arg15[%c49, %c0_29], %29 {strides = array<i32>} : memref<352x32xf32, #tpu.memory_space<vmem>>, vector<8x32xf32>,
    %c96 = arith.constant 96 : index
    %c0_30 = arith.constant 0 : index
    %31 = tpu.strided_load %arg20[%c96, %c0_30] {strides = array<i32: 2, 1>} : memref<495x32xf32, #tpu.memory_space<vmem>>, vector<8x32xf32>
    %c65 = arith.constant 65 : index
    %c0_31 = arith.constant 0 : index
    %32 = vector.load %arg15[%c65, %c0_31] : memref<352x32xf32, #tpu.memory_space<vmem>>, vector<8x32xf32>
    tpu.vector_store %arg15[%c65, %c0_31], %31 {strides = array<i32>} : memref<352x32xf32, #tpu.memory_space<vmem>>, vector<8x32xf32>,
    %c128 = arith.constant 128 : index
    %c0_32 = arith.constant 0 : index
    %33 = tpu.strided_load %arg20[%c128, %c0_32] {strides = array<i32: 2, 1>} : memref<495x32xf32, #tpu.memory_space<vmem>>, vector<8x32xf32>
    %c81 = arith.constant 81 : index
    %c0_33 = arith.constant 0 : index
    %34 = vector.load %arg15[%c81, %c0_33] : memref<352x32xf32, #tpu.memory_space<vmem>>, vector<8x32xf32>
    tpu.vector_store %arg15[%c81, %c0_33], %33 {strides = array<i32>} : memref<352x32xf32, #tpu.memory_space<vmem>>, vector<8x32xf32>,
    %c160 = arith.constant 160 : index
    %c0_34 = arith.constant 0 : index
    %35 = tpu.strided_load %arg20[%c160, %c0_34] {strides = array<i32: 2, 1>} : memref<495x32xf32, #tpu.memory_space<vmem>>, vector<8x32xf32>
    %c97 = arith.constant 97 : index
    %c0_35 = arith.constant 0 : index
    %36 = vector.load %arg15[%c97, %c0_35] : memref<352x32xf32, #tpu.memory_space<vmem>>, vector<8x32xf32>
    tpu.vector_store %arg15[%c97, %c0_35], %35 {strides = array<i32>} : memref<352x32xf32, #tpu.memory_space<vmem>>, vector<8x32xf32>,
    %c192 = arith.constant 192 : index
    %c0_36 = arith.constant 0 : index
    %37 = tpu.strided_load %arg20[%c192, %c0_36] {strides = array<i32: 2, 1>} : memref<495x32xf32, #tpu.memory_space<vmem>>, vector<8x32xf32>
    %c113 = arith.constant 113 : index
    %c0_37 = arith.constant 0 : index
    %38 = vector.load %arg15[%c113, %c0_37] : memref<352x32xf32, #tpu.memory_space<vmem>>, vector<8x32xf32>
    tpu.vector_store %arg15[%c113, %c0_37], %37 {strides = array<i32>} : memref<352x32xf32, #tpu.memory_space<vmem>>, vector<8x32xf32>,
    %c224 = arith.constant 224 : index
    %c0_38 = arith.constant 0 : index
    %39 = tpu.strided_load %arg20[%c224, %c0_38] {strides = array<i32: 2, 1>} : memref<495x32xf32, #tpu.memory_space<vmem>>, vector<8x32xf32>
    %c129 = arith.constant 129 : index
    %c0_39 = arith.constant 0 : index
    %40 = vector.load %arg15[%c129, %c0_39] : memref<352x32xf32, #tpu.memory_space<vmem>>, vector<8x32xf32>
    tpu.vector_store %arg15[%c129, %c0_39], %39 {strides = array<i32>} : memref<352x32xf32, #tpu.memory_space<vmem>>, vector<8x32xf32>,
    %c256 = arith.constant 256 : index
    %c0_40 = arith.constant 0 : index
    %41 = tpu.strided_load %arg20[%c256, %c0_40] {strides = array<i32: 2, 1>} : memref<495x32xf32, #tpu.memory_space<vmem>>, vector<8x32xf32>
    %c193 = arith.constant 193 : index
    %c0_41 = arith.constant 0 : index
    %42 = vector.load %arg15[%c193, %c0_41] : memref<352x32xf32, #tpu.memory_space<vmem>>, vector<8x32xf32>
    tpu.vector_store %arg15[%c193, %c0_41], %41 {strides = array<i32>} : memref<352x32xf32, #tpu.memory_space<vmem>>, vector<8x32xf32>,
    %c288 = arith.constant 288 : index
    %c0_42 = arith.constant 0 : index
    %43 = tpu.strided_load %arg20[%c288, %c0_42] {strides = array<i32: 2, 1>} : memref<495x32xf32, #tpu.memory_space<vmem>>, vector<8x32xf32>
    %c209 = arith.constant 209 : index
    %c0_43 = arith.constant 0 : index
    %44 = vector.load %arg15[%c209, %c0_43] : memref<352x32xf32, #tpu.memory_space<vmem>>, vector<8x32xf32>
    tpu.vector_store %arg15[%c209, %c0_43], %43 {strides = array<i32>} : memref<352x32xf32, #tpu.memory_space<vmem>>, vector<8x32xf32>,
    %c320 = arith.constant 320 : index
    %c0_44 = arith.constant 0 : index
    %45 = tpu.strided_load %arg20[%c320, %c0_44] {strides = array<i32: 2, 1>} : memref<495x32xf32, #tpu.memory_space<vmem>>, vector<8x32xf32>
    %c225 = arith.constant 225 : index
    %c0_45 = arith.constant 0 : index
    %46 = vector.load %arg15[%c225, %c0_45] : memref<352x32xf32, #tpu.memory_space<vmem>>, vector<8x32xf32>
    tpu.vector_store %arg15[%c225, %c0_45], %45 {strides = array<i32>} : memref<352x32xf32, #tpu.memory_space<vmem>>, vector<8x32xf32>,
    %c352 = arith.constant 352 : index
    %c0_46 = arith.constant 0 : index
    %47 = tpu.strided_load %arg20[%c352, %c0_46] {strides = array<i32: 2, 1>} : memref<495x32xf32, #tpu.memory_space<vmem>>, vector<8x32xf32>
    %c241 = arith.constant 241 : index
    %c0_47 = arith.constant 0 : index
    %48 = vector.load %arg15[%c241, %c0_47] : memref<352x32xf32, #tpu.memory_space<vmem>>, vector<8x32xf32>
    tpu.vector_store %arg15[%c241, %c0_47], %47 {strides = array<i32>} : memref<352x32xf32, #tpu.memory_space<vmem>>, vector<8x32xf32>,
    %c384 = arith.constant 384 : index
    %c0_48 = arith.constant 0 : index
    %49 = tpu.strided_load %arg20[%c384, %c0_48] {strides = array<i32: 2, 1>} : memref<495x32xf32, #tpu.memory_space<vmem>>, vector<8x32xf32>
    %c257 = arith.constant 257 : index
    %c0_49 = arith.constant 0 : index
    %50 = vector.load %arg15[%c257, %c0_49] : memref<352x32xf32, #tpu.memory_space<vmem>>, vector<8x32xf32>
    tpu.vector_store %arg15[%c257, %c0_49], %49 {strides = array<i32>} : memref<352x32xf32, #tpu.memory_space<vmem>>, vector<8x32xf32>,
    %c416 = arith.constant 416 : index
    %c0_50 = arith.constant 0 : index
    %51 = tpu.strided_load %arg20[%c416, %c0_50] {strides = array<i32: 2, 1>} : memref<495x32xf32, #tpu.memory_space<vmem>>, vector<8x32xf32>
    %c273 = arith.constant 273 : index
    %c0_51 = arith.constant 0 : index
    %52 = vector.load %arg15[%c273, %c0_51] : memref<352x32xf32, #tpu.memory_space<vmem>>, vector<8x32xf32>
    tpu.vector_store %arg15[%c273, %c0_51], %51 {strides = array<i32>} : memref<352x32xf32, #tpu.memory_space<vmem>>, vector<8x32xf32>,
    %c448 = arith.constant 448 : index
    %c0_52 = arith.constant 0 : index
    %53 = tpu.strided_load %arg20[%c448, %c0_52] {strides = array<i32: 2, 1>} : memref<495x32xf32, #tpu.memory_space<vmem>>, vector<8x32xf32>
    %c289 = arith.constant 289 : index
    %c0_53 = arith.constant 0 : index
    %54 = vector.load %arg15[%c289, %c0_53] : memref<352x32xf32, #tpu.memory_space<vmem>>, vector<8x32xf32>
    tpu.vector_store %arg15[%c289, %c0_53], %53 {strides = array<i32>} : memref<352x32xf32, #tpu.memory_space<vmem>>, vector<8x32xf32>,
    %c480 = arith.constant 480 : index
    %c0_54 = arith.constant 0 : index
    %55 = tpu.strided_load %arg20[%c480, %c0_54] {strides = array<i32: 2, 1>} : memref<495x32xf32, #tpu.memory_space<vmem>>, vector<8x32xf32>
    %c305 = arith.constant 305 : index
    %c0_55 = arith.constant 0 : index
    %56 = vector.load %arg15[%c305, %c0_55] : memref<352x32xf32, #tpu.memory_space<vmem>>, vector<8x32xf32>
    tpu.vector_store %arg15[%c305, %c0_55], %55 {strides = array<i32>} : memref<352x32xf32, #tpu.memory_space<vmem>>, vector<8x32xf32>,
    %c0_56 = arith.constant 0 : index
    %c0_57 = arith.constant 0 : index
    %57 = vector.load %arg15[%c0_56, %c0_57] : memref<352x32xf32, #tpu.memory_space<vmem>>, vector<352x32xf32>
    %58 = vector.extract_strided_slice %57 {offsets = [0, 0], sizes = [304, 32], strides = [1, 1]} : vector<352x32xf32> to vector<304x32xf32>
    %59 = arith.truncf %58 : vector<304x32xf32> to vector<304x32xbf16>
    %60 = vector.extract_strided_slice %57 {offsets = [1, 0], sizes = [304, 32], strides = [1, 1]} : vector<352x32xf32> to vector<304x32xf32>
    %61 = arith.truncf %60 : vector<304x32xf32> to vector<304x32xbf16>
    %62 = vector.extract_strided_slice %57 {offsets = [2, 0], sizes = [304, 32], strides = [1, 1]} : vector<352x32xf32> to vector<304x32xf32>
    %63 = arith.truncf %62 : vector<304x32xf32> to vector<304x32xbf16>
    %64 = vector.extract_strided_slice %57 {offsets = [16, 0], sizes = [304, 32], strides = [1, 1]} : vector<352x32xf32> to vector<304x32xf32>
    %65 = arith.truncf %64 : vector<304x32xf32> to vector<304x32xbf16>
    %66 = vector.extract_strided_slice %57 {offsets = [17, 0], sizes = [304, 32], strides = [1, 1]} : vector<352x32xf32> to vector<304x32xf32>
    %67 = arith.truncf %66 : vector<304x32xf32> to vector<304x32xbf16>
    %68 = vector.extract_strided_slice %57 {offsets = [18, 0], sizes = [304, 32], strides = [1, 1]} : vector<352x32xf32> to vector<304x32xf32>
    %69 = arith.truncf %68 : vector<304x32xf32> to vector<304x32xbf16>
    %70 = vector.extract_strided_slice %57 {offsets = [32, 0], sizes = [304, 32], strides = [1, 1]} : vector<352x32xf32> to vector<304x32xf32>
    %71 = arith.truncf %70 : vector<304x32xf32> to vector<304x32xbf16>
    %72 = vector.extract_strided_slice %57 {offsets = [33, 0], sizes = [304, 32], strides = [1, 1]} : vector<352x32xf32> to vector<304x32xf32>
    %73 = arith.truncf %72 : vector<304x32xf32> to vector<304x32xbf16>
    %74 = vector.extract_strided_slice %57 {offsets = [34, 0], sizes = [304, 32], strides = [1, 1]} : vector<352x32xf32> to vector<304x32xf32>
    %75 = arith.truncf %74 : vector<304x32xf32> to vector<304x32xbf16>
    %76 = tpu.concatenate %59, %61, %63, %65, %67, %69, %71, %73, %75 in 1 : vector<304x32xbf16>, vector<304x32xbf16>, vector<304x32xbf16>, vector<304x32xbf16>, vector<304x32xbf16>, vector<304x32xbf16>, vector<304x32xbf16>, vector<304x32xbf16>, vector<304x32xbf16> -> vector<304x288xbf16>
    %c0_58 = arith.constant 0 : index
    %c0_59 = arith.constant 0 : index
    %77 = vector.load %arg3[%c0_58, %c0_59] : memref<288x64xbf16, #tpu.memory_space<vmem>>, vector<288x64xbf16>
    %cst_60 = arith.constant dense<0.000000e+00> : vector<304x64xf32>
    %78 = tpu.matmul %76, %77, %cst_60 {dimension_numbers = #tpu.dot_dimension_numbers<[1], [0], [0], [1], [0, 0, 1, 1], [], []>} : vector<304x288xbf16>, vector<288x64xbf16>, vector<304x64xf32> -> vector<304x64xf32>
    %c0_61 = arith.constant 0 : index
    %c0_62 = arith.constant 0 : index
    %79 = vector.load %arg9[%c0_61, %c0_62] : memref<1x64xf32, #tpu.memory_space<vmem>>, vector<1x64xf32>
    %80 = vector.broadcast %79 : vector<1x64xf32> to vector<304x64xf32>
    %81 = arith.addf %78, %80 : vector<304x64xf32>
    %82 = vector.extract_strided_slice %81 {offsets = [0, 0], sizes = [303, 64], strides = [1, 1]} : vector<304x64xf32> to vector<303x64xf32>
    %83 = vector.extract_strided_slice %81 {offsets = [1, 0], sizes = [303, 64], strides = [1, 1]} : vector<304x64xf32> to vector<303x64xf32>
    %84 = arith.maximumf %82, %83 : vector<303x64xf32>
    %85 = vector.extract_strided_slice %84 {offsets = [0, 0], sizes = [287, 64], strides = [1, 1]} : vector<303x64xf32> to vector<287x64xf32>
    %86 = vector.extract_strided_slice %84 {offsets = [16, 0], sizes = [287, 64], strides = [1, 1]} : vector<303x64xf32> to vector<287x64xf32>
    %87 = arith.maximumf %85, %86 : vector<287x64xf32>
    %cst_63 = arith.constant 0.000000e+00 : f32
    %88 = vector.broadcast %cst_63 : f32 to vector<287x64xf32>
    %89 = arith.maximumf %87, %88 : vector<287x64xf32>
    %c0_64 = arith.constant 0 : index
    %c0_65 = arith.constant 0 : index
    %90 = vector.load %arg21[%c0_64, %c0_65] : memref<287x64xf32, #tpu.memory_space<vmem>>, vector<287x64xf32>
    tpu.vector_store %arg21[%c0_64, %c0_65], %89 {strides = array<i32>} : memref<287x64xf32, #tpu.memory_space<vmem>>, vector<287x64xf32>,
    %c0_66 = arith.constant 0 : index
    %c0_67 = arith.constant 0 : index
    %91 = tpu.strided_load %arg21[%c0_66, %c0_67] {strides = array<i32: 2, 1>} : memref<287x64xf32, #tpu.memory_space<vmem>>, vector<4x64xf32>
    %c9 = arith.constant 9 : index
    %c0_68 = arith.constant 0 : index
    %92 = vector.load %arg16[%c9, %c0_68] : memref<112x64xf32, #tpu.memory_space<vmem>>, vector<4x64xf32>
    tpu.vector_store %arg16[%c9, %c0_68], %91 {strides = array<i32>} : memref<112x64xf32, #tpu.memory_space<vmem>>, vector<4x64xf32>,
    %c32_69 = arith.constant 32 : index
    %c0_70 = arith.constant 0 : index
    %93 = tpu.strided_load %arg21[%c32_69, %c0_70] {strides = array<i32: 2, 1>} : memref<287x64xf32, #tpu.memory_space<vmem>>, vector<4x64xf32>
    %c17_71 = arith.constant 17 : index
    %c0_72 = arith.constant 0 : index
    %94 = vector.load %arg16[%c17_71, %c0_72] : memref<112x64xf32, #tpu.memory_space<vmem>>, vector<4x64xf32>
    tpu.vector_store %arg16[%c17_71, %c0_72], %93 {strides = array<i32>} : memref<112x64xf32, #tpu.memory_space<vmem>>, vector<4x64xf32>,
    %c64_73 = arith.constant 64 : index
    %c0_74 = arith.constant 0 : index
    %95 = tpu.strided_load %arg21[%c64_73, %c0_74] {strides = array<i32: 2, 1>} : memref<287x64xf32, #tpu.memory_space<vmem>>, vector<4x64xf32>
    %c25 = arith.constant 25 : index
    %c0_75 = arith.constant 0 : index
    %96 = vector.load %arg16[%c25, %c0_75] : memref<112x64xf32, #tpu.memory_space<vmem>>, vector<4x64xf32>
    tpu.vector_store %arg16[%c25, %c0_75], %95 {strides = array<i32>} : memref<112x64xf32, #tpu.memory_space<vmem>>, vector<4x64xf32>,
    %c96_76 = arith.constant 96 : index
    %c0_77 = arith.constant 0 : index
    %97 = tpu.strided_load %arg21[%c96_76, %c0_77] {strides = array<i32: 2, 1>} : memref<287x64xf32, #tpu.memory_space<vmem>>, vector<4x64xf32>
    %c33_78 = arith.constant 33 : index
    %c0_79 = arith.constant 0 : index
    %98 = vector.load %arg16[%c33_78, %c0_79] : memref<112x64xf32, #tpu.memory_space<vmem>>, vector<4x64xf32>
    tpu.vector_store %arg16[%c33_78, %c0_79], %97 {strides = array<i32>} : memref<112x64xf32, #tpu.memory_space<vmem>>, vector<4x64xf32>,
    %c176 = arith.constant 176 : index
    %c0_80 = arith.constant 0 : index
    %99 = tpu.strided_load %arg21[%c176, %c0_80] {strides = array<i32: 2, 1>} : memref<287x64xf32, #tpu.memory_space<vmem>>, vector<4x64xf32>
    %c65_81 = arith.constant 65 : index
    %c0_82 = arith.constant 0 : index
    %100 = vector.load %arg16[%c65_81, %c0_82] : memref<112x64xf32, #tpu.memory_space<vmem>>, vector<4x64xf32>
    tpu.vector_store %arg16[%c65_81, %c0_82], %99 {strides = array<i32>} : memref<112x64xf32, #tpu.memory_space<vmem>>, vector<4x64xf32>,
    %c208 = arith.constant 208 : index
    %c0_83 = arith.constant 0 : index
    %101 = tpu.strided_load %arg21[%c208, %c0_83] {strides = array<i32: 2, 1>} : memref<287x64xf32, #tpu.memory_space<vmem>>, vector<4x64xf32>
    %c73 = arith.constant 73 : index
    %c0_84 = arith.constant 0 : index
    %102 = vector.load %arg16[%c73, %c0_84] : memref<112x64xf32, #tpu.memory_space<vmem>>, vector<4x64xf32>
    tpu.vector_store %arg16[%c73, %c0_84], %101 {strides = array<i32>} : memref<112x64xf32, #tpu.memory_space<vmem>>, vector<4x64xf32>,
    %c240 = arith.constant 240 : index
    %c0_85 = arith.constant 0 : index
    %103 = tpu.strided_load %arg21[%c240, %c0_85] {strides = array<i32: 2, 1>} : memref<287x64xf32, #tpu.memory_space<vmem>>, vector<4x64xf32>
    %c81_86 = arith.constant 81 : index
    %c0_87 = arith.constant 0 : index
    %104 = vector.load %arg16[%c81_86, %c0_87] : memref<112x64xf32, #tpu.memory_space<vmem>>, vector<4x64xf32>
    tpu.vector_store %arg16[%c81_86, %c0_87], %103 {strides = array<i32>} : memref<112x64xf32, #tpu.memory_space<vmem>>, vector<4x64xf32>,
    %c272 = arith.constant 272 : index
    %c0_88 = arith.constant 0 : index
    %105 = tpu.strided_load %arg21[%c272, %c0_88] {strides = array<i32: 2, 1>} : memref<287x64xf32, #tpu.memory_space<vmem>>, vector<4x64xf32>
    %c89 = arith.constant 89 : index
    %c0_89 = arith.constant 0 : index
    %106 = vector.load %arg16[%c89, %c0_89] : memref<112x64xf32, #tpu.memory_space<vmem>>, vector<4x64xf32>
    tpu.vector_store %arg16[%c89, %c0_89], %105 {strides = array<i32>} : memref<112x64xf32, #tpu.memory_space<vmem>>, vector<4x64xf32>,
    %c0_90 = arith.constant 0 : index
    %c0_91 = arith.constant 0 : index
    %107 = vector.load %arg16[%c0_90, %c0_91] : memref<112x64xf32, #tpu.memory_space<vmem>>, vector<112x64xf32>
    %108 = vector.extract_strided_slice %107 {offsets = [0, 0], sizes = [88, 64], strides = [1, 1]} : vector<112x64xf32> to vector<88x64xf32>
    %109 = arith.truncf %108 : vector<88x64xf32> to vector<88x64xbf16>
    %110 = vector.extract_strided_slice %107 {offsets = [1, 0], sizes = [88, 64], strides = [1, 1]} : vector<112x64xf32> to vector<88x64xf32>
    %111 = arith.truncf %110 : vector<88x64xf32> to vector<88x64xbf16>
    %112 = vector.extract_strided_slice %107 {offsets = [2, 0], sizes = [88, 64], strides = [1, 1]} : vector<112x64xf32> to vector<88x64xf32>
    %113 = arith.truncf %112 : vector<88x64xf32> to vector<88x64xbf16>
    %114 = vector.extract_strided_slice %107 {offsets = [8, 0], sizes = [88, 64], strides = [1, 1]} : vector<112x64xf32> to vector<88x64xf32>
    %115 = arith.truncf %114 : vector<88x64xf32> to vector<88x64xbf16>
    %116 = vector.extract_strided_slice %107 {offsets = [9, 0], sizes = [88, 64], strides = [1, 1]} : vector<112x64xf32> to vector<88x64xf32>
    %117 = arith.truncf %116 : vector<88x64xf32> to vector<88x64xbf16>
    %118 = vector.extract_strided_slice %107 {offsets = [10, 0], sizes = [88, 64], strides = [1, 1]} : vector<112x64xf32> to vector<88x64xf32>
    %119 = arith.truncf %118 : vector<88x64xf32> to vector<88x64xbf16>
    %120 = vector.extract_strided_slice %107 {offsets = [16, 0], sizes = [88, 64], strides = [1, 1]} : vector<112x64xf32> to vector<88x64xf32>
    %121 = arith.truncf %120 : vector<88x64xf32> to vector<88x64xbf16>
    %122 = vector.extract_strided_slice %107 {offsets = [17, 0], sizes = [88, 64], strides = [1, 1]} : vector<112x64xf32> to vector<88x64xf32>
    %123 = arith.truncf %122 : vector<88x64xf32> to vector<88x64xbf16>
    %124 = vector.extract_strided_slice %107 {offsets = [18, 0], sizes = [88, 64], strides = [1, 1]} : vector<112x64xf32> to vector<88x64xf32>
    %125 = arith.truncf %124 : vector<88x64xf32> to vector<88x64xbf16>
    %126 = tpu.concatenate %109, %111, %113, %115, %117, %119, %121, %123, %125 in 1 : vector<88x64xbf16>, vector<88x64xbf16>, vector<88x64xbf16>, vector<88x64xbf16>, vector<88x64xbf16>, vector<88x64xbf16>, vector<88x64xbf16>, vector<88x64xbf16>, vector<88x64xbf16> -> vector<88x576xbf16>
    %c0_92 = arith.constant 0 : index
    %c0_93 = arith.constant 0 : index
    %127 = vector.load %arg4[%c0_92, %c0_93] : memref<576x128xbf16, #tpu.memory_space<vmem>>, vector<576x128xbf16>
    %cst_94 = arith.constant dense<0.000000e+00> : vector<88x128xf32>
    %128 = tpu.matmul %126, %127, %cst_94 {dimension_numbers = #tpu.dot_dimension_numbers<[1], [0], [0], [1], [0, 0, 1, 1], [], []>} : vector<88x576xbf16>, vector<576x128xbf16>, vector<88x128xf32> -> vector<88x128xf32>
    %c0_95 = arith.constant 0 : index
    %c0_96 = arith.constant 0 : index
    %129 = vector.load %arg10[%c0_95, %c0_96] : memref<1x128xf32, #tpu.memory_space<vmem>>, vector<1x128xf32>
    %130 = vector.broadcast %129 : vector<1x128xf32> to vector<88x128xf32>
    %131 = arith.addf %128, %130 : vector<88x128xf32>
    %132 = vector.extract_strided_slice %131 {offsets = [0, 0], sizes = [87, 128], strides = [1, 1]} : vector<88x128xf32> to vector<87x128xf32>
    %133 = vector.extract_strided_slice %131 {offsets = [1, 0], sizes = [87, 128], strides = [1, 1]} : vector<88x128xf32> to vector<87x128xf32>
    %134 = arith.maximumf %132, %133 : vector<87x128xf32>
    %135 = vector.extract_strided_slice %134 {offsets = [0, 0], sizes = [79, 128], strides = [1, 1]} : vector<87x128xf32> to vector<79x128xf32>
    %136 = vector.extract_strided_slice %134 {offsets = [8, 0], sizes = [79, 128], strides = [1, 1]} : vector<87x128xf32> to vector<79x128xf32>
    %137 = arith.maximumf %135, %136 : vector<79x128xf32>
    %cst_97 = arith.constant 0.000000e+00 : f32
    %138 = vector.broadcast %cst_97 : f32 to vector<79x128xf32>
    %139 = arith.maximumf %137, %138 : vector<79x128xf32>
    %c0_98 = arith.constant 0 : index
    %c0_99 = arith.constant 0 : index
    %140 = vector.load %arg22[%c0_98, %c0_99] : memref<79x128xf32, #tpu.memory_space<vmem>>, vector<79x128xf32>
    tpu.vector_store %arg22[%c0_98, %c0_99], %139 {strides = array<i32>} : memref<79x128xf32, #tpu.memory_space<vmem>>, vector<79x128xf32>,
    %c0_100 = arith.constant 0 : index
    %c0_101 = arith.constant 0 : index
    %141 = tpu.strided_load %arg22[%c0_100, %c0_101] {strides = array<i32: 2, 1>} : memref<79x128xf32, #tpu.memory_space<vmem>>, vector<2x128xf32>
    %c9_102 = arith.constant 9 : index
    %c0_103 = arith.constant 0 : index
    %142 = tpu.strided_load %arg17[%c9_102, %c0_103] {strides = array<i32: 2, 1>} : memref<112x128xf32, #tpu.memory_space<vmem>>, vector<2x128xf32>
    tpu.strided_store %arg17[%c9_102, %c0_103], %141 {strides = array<i32: 2, 1>} : memref<112x128xf32, #tpu.memory_space<vmem>>, vector<2x128xf32>
    %c16 = arith.constant 16 : index
    %c0_104 = arith.constant 0 : index
    %143 = tpu.strided_load %arg22[%c16, %c0_104] {strides = array<i32: 2, 1>} : memref<79x128xf32, #tpu.memory_space<vmem>>, vector<2x128xf32>
    %c25_105 = arith.constant 25 : index
    %c0_106 = arith.constant 0 : index
    %144 = tpu.strided_load %arg17[%c25_105, %c0_106] {strides = array<i32: 2, 1>} : memref<112x128xf32, #tpu.memory_space<vmem>>, vector<2x128xf32>
    tpu.strided_store %arg17[%c25_105, %c0_106], %143 {strides = array<i32: 2, 1>} : memref<112x128xf32, #tpu.memory_space<vmem>>, vector<2x128xf32>
    %c56 = arith.constant 56 : index
    %c0_107 = arith.constant 0 : index
    %145 = tpu.strided_load %arg22[%c56, %c0_107] {strides = array<i32: 2, 1>} : memref<79x128xf32, #tpu.memory_space<vmem>>, vector<2x128xf32>
    %c65_108 = arith.constant 65 : index
    %c0_109 = arith.constant 0 : index
    %146 = tpu.strided_load %arg17[%c65_108, %c0_109] {strides = array<i32: 2, 1>} : memref<112x128xf32, #tpu.memory_space<vmem>>, vector<2x128xf32>
    tpu.strided_store %arg17[%c65_108, %c0_109], %145 {strides = array<i32: 2, 1>} : memref<112x128xf32, #tpu.memory_space<vmem>>, vector<2x128xf32>
    %c72 = arith.constant 72 : index
    %c0_110 = arith.constant 0 : index
    %147 = tpu.strided_load %arg22[%c72, %c0_110] {strides = array<i32: 2, 1>} : memref<79x128xf32, #tpu.memory_space<vmem>>, vector<2x128xf32>
    %c81_111 = arith.constant 81 : index
    %c0_112 = arith.constant 0 : index
    %148 = tpu.strided_load %arg17[%c81_111, %c0_112] {strides = array<i32: 2, 1>} : memref<112x128xf32, #tpu.memory_space<vmem>>, vector<2x128xf32>
    tpu.strided_store %arg17[%c81_111, %c0_112], %147 {strides = array<i32: 2, 1>} : memref<112x128xf32, #tpu.memory_space<vmem>>, vector<2x128xf32>
    %c0_113 = arith.constant 0 : index
    %c0_114 = arith.constant 0 : index
    %149 = vector.load %arg17[%c0_113, %c0_114] : memref<112x128xf32, #tpu.memory_space<vmem>>, vector<112x128xf32>
    %150 = arith.truncf %149 : vector<112x128xf32> to vector<112x128xbf16>
    %c0_115 = arith.constant 0 : index
    %c0_116 = arith.constant 0 : index
    %151 = vector.load %arg5[%c0_115, %c0_116] : memref<128x576xbf16, #tpu.memory_space<vmem>>, vector<128x576xbf16>
    %cst_117 = arith.constant dense<0.000000e+00> : vector<112x576xf32>
    %152 = tpu.matmul %150, %151, %cst_117 {dimension_numbers = #tpu.dot_dimension_numbers<[1], [0], [0], [1], [0, 0, 1, 1], [], []>} : vector<112x128xbf16>, vector<128x576xbf16>, vector<112x576xf32> -> vector<112x576xf32>
    %153 = vector.extract_strided_slice %152 {offsets = [0, 0], sizes = [88, 64], strides = [1, 1]} : vector<112x576xf32> to vector<88x64xf32>
    %154 = vector.extract_strided_slice %152 {offsets = [1, 64], sizes = [88, 64], strides = [1, 1]} : vector<112x576xf32> to vector<88x64xf32>
    %155 = arith.addf %153, %154 : vector<88x64xf32>
    %156 = vector.extract_strided_slice %152 {offsets = [2, 128], sizes = [88, 64], strides = [1, 1]} : vector<112x576xf32> to vector<88x64xf32>
    %157 = arith.addf %155, %156 : vector<88x64xf32>
    %158 = vector.extract_strided_slice %152 {offsets = [8, 192], sizes = [88, 64], strides = [1, 1]} : vector<112x576xf32> to vector<88x64xf32>
    %159 = arith.addf %157, %158 : vector<88x64xf32>
    %160 = vector.extract_strided_slice %152 {offsets = [9, 256], sizes = [88, 64], strides = [1, 1]} : vector<112x576xf32> to vector<88x64xf32>
    %161 = arith.addf %159, %160 : vector<88x64xf32>
    %162 = vector.extract_strided_slice %152 {offsets = [10, 320], sizes = [88, 64], strides = [1, 1]} : vector<112x576xf32> to vector<88x64xf32>
    %163 = arith.addf %161, %162 : vector<88x64xf32>
    %164 = vector.extract_strided_slice %152 {offsets = [16, 384], sizes = [88, 64], strides = [1, 1]} : vector<112x576xf32> to vector<88x64xf32>
    %165 = arith.addf %163, %164 : vector<88x64xf32>
    %166 = vector.extract_strided_slice %152 {offsets = [17, 448], sizes = [88, 64], strides = [1, 1]} : vector<112x576xf32> to vector<88x64xf32>
    %167 = arith.addf %165, %166 : vector<88x64xf32>
    %168 = vector.extract_strided_slice %152 {offsets = [18, 512], sizes = [88, 64], strides = [1, 1]} : vector<112x576xf32> to vector<88x64xf32>
    %169 = arith.addf %167, %168 : vector<88x64xf32>
    %c0_118 = arith.constant 0 : index
    %c0_119 = arith.constant 0 : index
    %170 = vector.load %arg11[%c0_118, %c0_119] : memref<1x64xf32, #tpu.memory_space<vmem>>, vector<1x64xf32>
    %171 = vector.broadcast %170 : vector<1x64xf32> to vector<88x64xf32>
    %172 = arith.addf %169, %171 : vector<88x64xf32>
    %cst_120 = arith.constant 0.000000e+00 : f32
    %173 = vector.broadcast %cst_120 : f32 to vector<88x64xf32>
    %174 = arith.maximumf %172, %173 : vector<88x64xf32>
    %175 = vector.extract_strided_slice %174 {offsets = [0, 0], sizes = [4, 64], strides = [1, 1]} : vector<88x64xf32> to vector<4x64xf32>
    %c17_121 = arith.constant 17 : index
    %c0_122 = arith.constant 0 : index
    %176 = tpu.strided_load %arg18[%c17_121, %c0_122] {strides = array<i32: 2, 1>} : memref<352x64xf32, #tpu.memory_space<vmem>>, vector<4x64xf32>
    tpu.strided_store %arg18[%c17_121, %c0_122], %175 {strides = array<i32: 2, 1>} : memref<352x64xf32, #tpu.memory_space<vmem>>, vector<4x64xf32>
    %177 = vector.extract_strided_slice %174 {offsets = [8, 0], sizes = [4, 64], strides = [1, 1]} : vector<88x64xf32> to vector<4x64xf32>
    %c49_123 = arith.constant 49 : index
    %c0_124 = arith.constant 0 : index
    %178 = tpu.strided_load %arg18[%c49_123, %c0_124] {strides = array<i32: 2, 1>} : memref<352x64xf32, #tpu.memory_space<vmem>>, vector<4x64xf32>
    tpu.strided_store %arg18[%c49_123, %c0_124], %177 {strides = array<i32: 2, 1>} : memref<352x64xf32, #tpu.memory_space<vmem>>, vector<4x64xf32>
    %179 = vector.extract_strided_slice %174 {offsets = [16, 0], sizes = [4, 64], strides = [1, 1]} : vector<88x64xf32> to vector<4x64xf32>
    %c81_125 = arith.constant 81 : index
    %c0_126 = arith.constant 0 : index
    %180 = tpu.strided_load %arg18[%c81_125, %c0_126] {strides = array<i32: 2, 1>} : memref<352x64xf32, #tpu.memory_space<vmem>>, vector<4x64xf32>
    tpu.strided_store %arg18[%c81_125, %c0_126], %179 {strides = array<i32: 2, 1>} : memref<352x64xf32, #tpu.memory_space<vmem>>, vector<4x64xf32>
    %181 = vector.extract_strided_slice %174 {offsets = [24, 0], sizes = [4, 64], strides = [1, 1]} : vector<88x64xf32> to vector<4x64xf32>
    %c113_127 = arith.constant 113 : index
    %c0_128 = arith.constant 0 : index
    %182 = tpu.strided_load %arg18[%c113_127, %c0_128] {strides = array<i32: 2, 1>} : memref<352x64xf32, #tpu.memory_space<vmem>>, vector<4x64xf32>
    tpu.strided_store %arg18[%c113_127, %c0_128], %181 {strides = array<i32: 2, 1>} : memref<352x64xf32, #tpu.memory_space<vmem>>, vector<4x64xf32>
    %183 = vector.extract_strided_slice %174 {offsets = [56, 0], sizes = [4, 64], strides = [1, 1]} : vector<88x64xf32> to vector<4x64xf32>
    %c193_129 = arith.constant 193 : index
    %c0_130 = arith.constant 0 : index
    %184 = tpu.strided_load %arg18[%c193_129, %c0_130] {strides = array<i32: 2, 1>} : memref<352x64xf32, #tpu.memory_space<vmem>>, vector<4x64xf32>
    tpu.strided_store %arg18[%c193_129, %c0_130], %183 {strides = array<i32: 2, 1>} : memref<352x64xf32, #tpu.memory_space<vmem>>, vector<4x64xf32>
    %185 = vector.extract_strided_slice %174 {offsets = [64, 0], sizes = [4, 64], strides = [1, 1]} : vector<88x64xf32> to vector<4x64xf32>
    %c225_131 = arith.constant 225 : index
    %c0_132 = arith.constant 0 : index
    %186 = tpu.strided_load %arg18[%c225_131, %c0_132] {strides = array<i32: 2, 1>} : memref<352x64xf32, #tpu.memory_space<vmem>>, vector<4x64xf32>
    tpu.strided_store %arg18[%c225_131, %c0_132], %185 {strides = array<i32: 2, 1>} : memref<352x64xf32, #tpu.memory_space<vmem>>, vector<4x64xf32>
    %187 = vector.extract_strided_slice %174 {offsets = [72, 0], sizes = [4, 64], strides = [1, 1]} : vector<88x64xf32> to vector<4x64xf32>
    %c257_133 = arith.constant 257 : index
    %c0_134 = arith.constant 0 : index
    %188 = tpu.strided_load %arg18[%c257_133, %c0_134] {strides = array<i32: 2, 1>} : memref<352x64xf32, #tpu.memory_space<vmem>>, vector<4x64xf32>
    tpu.strided_store %arg18[%c257_133, %c0_134], %187 {strides = array<i32: 2, 1>} : memref<352x64xf32, #tpu.memory_space<vmem>>, vector<4x64xf32>
    %189 = vector.extract_strided_slice %174 {offsets = [80, 0], sizes = [4, 64], strides = [1, 1]} : vector<88x64xf32> to vector<4x64xf32>
    %c289_135 = arith.constant 289 : index
    %c0_136 = arith.constant 0 : index
    %190 = tpu.strided_load %arg18[%c289_135, %c0_136] {strides = array<i32: 2, 1>} : memref<352x64xf32, #tpu.memory_space<vmem>>, vector<4x64xf32>
    tpu.strided_store %arg18[%c289_135, %c0_136], %189 {strides = array<i32: 2, 1>} : memref<352x64xf32, #tpu.memory_space<vmem>>, vector<4x64xf32>
    %c0_137 = arith.constant 0 : index
    %c0_138 = arith.constant 0 : index
    %191 = vector.load %arg18[%c0_137, %c0_138] : memref<352x64xf32, #tpu.memory_space<vmem>>, vector<352x64xf32>
    %192 = arith.truncf %191 : vector<352x64xf32> to vector<352x64xbf16>
    %c0_139 = arith.constant 0 : index
    %c0_140 = arith.constant 0 : index
    %193 = vector.load %arg6[%c0_139, %c0_140] : memref<64x288xbf16, #tpu.memory_space<vmem>>, vector<64x288xbf16>
    %cst_141 = arith.constant dense<0.000000e+00> : vector<352x288xf32>
    %194 = tpu.matmul %192, %193, %cst_141 {dimension_numbers = #tpu.dot_dimension_numbers<[1], [0], [0], [1], [0, 0, 1, 1], [], []>} : vector<352x64xbf16>, vector<64x288xbf16>, vector<352x288xf32> -> vector<352x288xf32>
    %195 = vector.extract_strided_slice %194 {offsets = [0, 0], sizes = [304, 32], strides = [1, 1]} : vector<352x288xf32> to vector<304x32xf32>
    %196 = vector.extract_strided_slice %194 {offsets = [1, 32], sizes = [304, 32], strides = [1, 1]} : vector<352x288xf32> to vector<304x32xf32>
    %197 = arith.addf %195, %196 : vector<304x32xf32>
    %198 = vector.extract_strided_slice %194 {offsets = [2, 64], sizes = [304, 32], strides = [1, 1]} : vector<352x288xf32> to vector<304x32xf32>
    %199 = arith.addf %197, %198 : vector<304x32xf32>
    %200 = vector.extract_strided_slice %194 {offsets = [16, 96], sizes = [304, 32], strides = [1, 1]} : vector<352x288xf32> to vector<304x32xf32>
    %201 = arith.addf %199, %200 : vector<304x32xf32>
    %202 = vector.extract_strided_slice %194 {offsets = [17, 128], sizes = [304, 32], strides = [1, 1]} : vector<352x288xf32> to vector<304x32xf32>
    %203 = arith.addf %201, %202 : vector<304x32xf32>
    %204 = vector.extract_strided_slice %194 {offsets = [18, 160], sizes = [304, 32], strides = [1, 1]} : vector<352x288xf32> to vector<304x32xf32>
    %205 = arith.addf %203, %204 : vector<304x32xf32>
    %206 = vector.extract_strided_slice %194 {offsets = [32, 192], sizes = [304, 32], strides = [1, 1]} : vector<352x288xf32> to vector<304x32xf32>
    %207 = arith.addf %205, %206 : vector<304x32xf32>
    %208 = vector.extract_strided_slice %194 {offsets = [33, 224], sizes = [304, 32], strides = [1, 1]} : vector<352x288xf32> to vector<304x32xf32>
    %209 = arith.addf %207, %208 : vector<304x32xf32>
    %210 = vector.extract_strided_slice %194 {offsets = [34, 256], sizes = [304, 32], strides = [1, 1]} : vector<352x288xf32> to vector<304x32xf32>
    %211 = arith.addf %209, %210 : vector<304x32xf32>
    %c0_142 = arith.constant 0 : index
    %c0_143 = arith.constant 0 : index
    %212 = vector.load %arg12[%c0_142, %c0_143] : memref<1x32xf32, #tpu.memory_space<vmem>>, vector<1x32xf32>
    %213 = vector.broadcast %212 : vector<1x32xf32> to vector<304x32xf32>
    %214 = arith.addf %211, %213 : vector<304x32xf32>
    %cst_144 = arith.constant 0.000000e+00 : f32
    %215 = vector.broadcast %cst_144 : f32 to vector<304x32xf32>
    %216 = arith.maximumf %214, %215 : vector<304x32xf32>
    %217 = vector.extract_strided_slice %216 {offsets = [0, 0], sizes = [8, 32], strides = [1, 1]} : vector<304x32xf32> to vector<8x32xf32>
    %c25_145 = arith.constant 25 : index
    %c0_146 = arith.constant 0 : index
    %218 = tpu.strided_load %arg19[%c25_145, %c0_146] {strides = array<i32: 2, 1>} : memref<912x32xf32, #tpu.memory_space<vmem>>, vector<8x32xf32>
    tpu.strided_store %arg19[%c25_145, %c0_146], %217 {strides = array<i32: 2, 1>} : memref<912x32xf32, #tpu.memory_space<vmem>>, vector<8x32xf32>
    %219 = vector.extract_strided_slice %216 {offsets = [16, 0], sizes = [8, 32], strides = [1, 1]} : vector<304x32xf32> to vector<8x32xf32>
    %c73_147 = arith.constant 73 : index
    %c0_148 = arith.constant 0 : index
    %220 = tpu.strided_load %arg19[%c73_147, %c0_148] {strides = array<i32: 2, 1>} : memref<912x32xf32, #tpu.memory_space<vmem>>, vector<8x32xf32>
    tpu.strided_store %arg19[%c73_147, %c0_148], %219 {strides = array<i32: 2, 1>} : memref<912x32xf32, #tpu.memory_space<vmem>>, vector<8x32xf32>
    %221 = vector.extract_strided_slice %216 {offsets = [32, 0], sizes = [8, 32], strides = [1, 1]} : vector<304x32xf32> to vector<8x32xf32>
    %c121 = arith.constant 121 : index
    %c0_149 = arith.constant 0 : index
    %222 = tpu.strided_load %arg19[%c121, %c0_149] {strides = array<i32: 2, 1>} : memref<912x32xf32, #tpu.memory_space<vmem>>, vector<8x32xf32>
    tpu.strided_store %arg19[%c121, %c0_149], %221 {strides = array<i32: 2, 1>} : memref<912x32xf32, #tpu.memory_space<vmem>>, vector<8x32xf32>
    %223 = vector.extract_strided_slice %216 {offsets = [48, 0], sizes = [8, 32], strides = [1, 1]} : vector<304x32xf32> to vector<8x32xf32>
    %c169 = arith.constant 169 : index
    %c0_150 = arith.constant 0 : index
    %224 = tpu.strided_load %arg19[%c169, %c0_150] {strides = array<i32: 2, 1>} : memref<912x32xf32, #tpu.memory_space<vmem>>, vector<8x32xf32>
    tpu.strided_store %arg19[%c169, %c0_150], %223 {strides = array<i32: 2, 1>} : memref<912x32xf32, #tpu.memory_space<vmem>>, vector<8x32xf32>
    %225 = vector.extract_strided_slice %216 {offsets = [64, 0], sizes = [8, 32], strides = [1, 1]} : vector<304x32xf32> to vector<8x32xf32>
    %c217 = arith.constant 217 : index
    %c0_151 = arith.constant 0 : index
    %226 = tpu.strided_load %arg19[%c217, %c0_151] {strides = array<i32: 2, 1>} : memref<912x32xf32, #tpu.memory_space<vmem>>, vector<8x32xf32>
    tpu.strided_store %arg19[%c217, %c0_151], %225 {strides = array<i32: 2, 1>} : memref<912x32xf32, #tpu.memory_space<vmem>>, vector<8x32xf32>
    %227 = vector.extract_strided_slice %216 {offsets = [80, 0], sizes = [8, 32], strides = [1, 1]} : vector<304x32xf32> to vector<8x32xf32>
    %c265 = arith.constant 265 : index
    %c0_152 = arith.constant 0 : index
    %228 = tpu.strided_load %arg19[%c265, %c0_152] {strides = array<i32: 2, 1>} : memref<912x32xf32, #tpu.memory_space<vmem>>, vector<8x32xf32>
    tpu.strided_store %arg19[%c265, %c0_152], %227 {strides = array<i32: 2, 1>} : memref<912x32xf32, #tpu.memory_space<vmem>>, vector<8x32xf32>
    %229 = vector.extract_strided_slice %216 {offsets = [96, 0], sizes = [8, 32], strides = [1, 1]} : vector<304x32xf32> to vector<8x32xf32>
    %c313 = arith.constant 313 : index
    %c0_153 = arith.constant 0 : index
    %230 = tpu.strided_load %arg19[%c313, %c0_153] {strides = array<i32: 2, 1>} : memref<912x32xf32, #tpu.memory_space<vmem>>, vector<8x32xf32>
    tpu.strided_store %arg19[%c313, %c0_153], %229 {strides = array<i32: 2, 1>} : memref<912x32xf32, #tpu.memory_space<vmem>>, vector<8x32xf32>
    %231 = vector.extract_strided_slice %216 {offsets = [112, 0], sizes = [8, 32], strides = [1, 1]} : vector<304x32xf32> to vector<8x32xf32>
    %c361 = arith.constant 361 : index
    %c0_154 = arith.constant 0 : index
    %232 = tpu.strided_load %arg19[%c361, %c0_154] {strides = array<i32: 2, 1>} : memref<912x32xf32, #tpu.memory_space<vmem>>, vector<8x32xf32>
    tpu.strided_store %arg19[%c361, %c0_154], %231 {strides = array<i32: 2, 1>} : memref<912x32xf32, #tpu.memory_space<vmem>>, vector<8x32xf32>
    %233 = vector.extract_strided_slice %216 {offsets = [176, 0], sizes = [8, 32], strides = [1, 1]} : vector<304x32xf32> to vector<8x32xf32>
    %c481 = arith.constant 481 : index
    %c0_155 = arith.constant 0 : index
    %234 = tpu.strided_load %arg19[%c481, %c0_155] {strides = array<i32: 2, 1>} : memref<912x32xf32, #tpu.memory_space<vmem>>, vector<8x32xf32>
    tpu.strided_store %arg19[%c481, %c0_155], %233 {strides = array<i32: 2, 1>} : memref<912x32xf32, #tpu.memory_space<vmem>>, vector<8x32xf32>
    %235 = vector.extract_strided_slice %216 {offsets = [192, 0], sizes = [8, 32], strides = [1, 1]} : vector<304x32xf32> to vector<8x32xf32>
    %c529 = arith.constant 529 : index
    %c0_156 = arith.constant 0 : index
    %236 = tpu.strided_load %arg19[%c529, %c0_156] {strides = array<i32: 2, 1>} : memref<912x32xf32, #tpu.memory_space<vmem>>, vector<8x32xf32>
    tpu.strided_store %arg19[%c529, %c0_156], %235 {strides = array<i32: 2, 1>} : memref<912x32xf32, #tpu.memory_space<vmem>>, vector<8x32xf32>
    %237 = vector.extract_strided_slice %216 {offsets = [208, 0], sizes = [8, 32], strides = [1, 1]} : vector<304x32xf32> to vector<8x32xf32>
    %c577 = arith.constant 577 : index
    %c0_157 = arith.constant 0 : index
    %238 = tpu.strided_load %arg19[%c577, %c0_157] {strides = array<i32: 2, 1>} : memref<912x32xf32, #tpu.memory_space<vmem>>, vector<8x32xf32>
    tpu.strided_store %arg19[%c577, %c0_157], %237 {strides = array<i32: 2, 1>} : memref<912x32xf32, #tpu.memory_space<vmem>>, vector<8x32xf32>
    %239 = vector.extract_strided_slice %216 {offsets = [224, 0], sizes = [8, 32], strides = [1, 1]} : vector<304x32xf32> to vector<8x32xf32>
    %c625 = arith.constant 625 : index
    %c0_158 = arith.constant 0 : index
    %240 = tpu.strided_load %arg19[%c625, %c0_158] {strides = array<i32: 2, 1>} : memref<912x32xf32, #tpu.memory_space<vmem>>, vector<8x32xf32>
    tpu.strided_store %arg19[%c625, %c0_158], %239 {strides = array<i32: 2, 1>} : memref<912x32xf32, #tpu.memory_space<vmem>>, vector<8x32xf32>
    %241 = vector.extract_strided_slice %216 {offsets = [240, 0], sizes = [8, 32], strides = [1, 1]} : vector<304x32xf32> to vector<8x32xf32>
    %c673 = arith.constant 673 : index
    %c0_159 = arith.constant 0 : index
    %242 = tpu.strided_load %arg19[%c673, %c0_159] {strides = array<i32: 2, 1>} : memref<912x32xf32, #tpu.memory_space<vmem>>, vector<8x32xf32>
    tpu.strided_store %arg19[%c673, %c0_159], %241 {strides = array<i32: 2, 1>} : memref<912x32xf32, #tpu.memory_space<vmem>>, vector<8x32xf32>
    %243 = vector.extract_strided_slice %216 {offsets = [256, 0], sizes = [8, 32], strides = [1, 1]} : vector<304x32xf32> to vector<8x32xf32>
    %c721 = arith.constant 721 : index
    %c0_160 = arith.constant 0 : index
    %244 = tpu.strided_load %arg19[%c721, %c0_160] {strides = array<i32: 2, 1>} : memref<912x32xf32, #tpu.memory_space<vmem>>, vector<8x32xf32>
    tpu.strided_store %arg19[%c721, %c0_160], %243 {strides = array<i32: 2, 1>} : memref<912x32xf32, #tpu.memory_space<vmem>>, vector<8x32xf32>
    %245 = vector.extract_strided_slice %216 {offsets = [272, 0], sizes = [8, 32], strides = [1, 1]} : vector<304x32xf32> to vector<8x32xf32>
    %c769 = arith.constant 769 : index
    %c0_161 = arith.constant 0 : index
    %246 = tpu.strided_load %arg19[%c769, %c0_161] {strides = array<i32: 2, 1>} : memref<912x32xf32, #tpu.memory_space<vmem>>, vector<8x32xf32>
    tpu.strided_store %arg19[%c769, %c0_161], %245 {strides = array<i32: 2, 1>} : memref<912x32xf32, #tpu.memory_space<vmem>>, vector<8x32xf32>
    %247 = vector.extract_strided_slice %216 {offsets = [288, 0], sizes = [8, 32], strides = [1, 1]} : vector<304x32xf32> to vector<8x32xf32>
    %c817 = arith.constant 817 : index
    %c0_162 = arith.constant 0 : index
    %248 = tpu.strided_load %arg19[%c817, %c0_162] {strides = array<i32: 2, 1>} : memref<912x32xf32, #tpu.memory_space<vmem>>, vector<8x32xf32>
    tpu.strided_store %arg19[%c817, %c0_162], %247 {strides = array<i32: 2, 1>} : memref<912x32xf32, #tpu.memory_space<vmem>>, vector<8x32xf32>
    %c0_163 = arith.constant 0 : index
    %c0_164 = arith.constant 0 : index
    %249 = vector.load %arg19[%c0_163, %c0_164] : memref<912x32xf32, #tpu.memory_space<vmem>>, vector<912x32xf32>
    %250 = arith.truncf %249 : vector<912x32xf32> to vector<912x32xbf16>
    %c0_165 = arith.constant 0 : index
    %c0_166 = arith.constant 0 : index
    %251 = vector.load %arg7[%c0_165, %c0_166] : memref<32x9xbf16, #tpu.memory_space<vmem>>, vector<32x9xbf16>
    %cst_167 = arith.constant dense<0.000000e+00> : vector<912x9xf32>
    %252 = tpu.matmul %250, %251, %cst_167 {dimension_numbers = #tpu.dot_dimension_numbers<[1], [0], [0], [1], [0, 0, 1, 1], [], []>} : vector<912x32xbf16>, vector<32x9xbf16>, vector<912x9xf32> -> vector<912x9xf32>
    %253 = vector.extract_strided_slice %252 {offsets = [0, 0], sizes = [840, 1], strides = [1, 1]} : vector<912x9xf32> to vector<840x1xf32>
    %254 = vector.extract_strided_slice %252 {offsets = [1, 1], sizes = [840, 1], strides = [1, 1]} : vector<912x9xf32> to vector<840x1xf32>
    %255 = arith.addf %253, %254 : vector<840x1xf32>
    %256 = vector.extract_strided_slice %252 {offsets = [2, 2], sizes = [840, 1], strides = [1, 1]} : vector<912x9xf32> to vector<840x1xf32>
    %257 = arith.addf %255, %256 : vector<840x1xf32>
    %258 = vector.extract_strided_slice %252 {offsets = [24, 3], sizes = [840, 1], strides = [1, 1]} : vector<912x9xf32> to vector<840x1xf32>
    %259 = arith.addf %257, %258 : vector<840x1xf32>
    %260 = vector.extract_strided_slice %252 {offsets = [25, 4], sizes = [840, 1], strides = [1, 1]} : vector<912x9xf32> to vector<840x1xf32>
    %261 = arith.addf %259, %260 : vector<840x1xf32>
    %262 = vector.extract_strided_slice %252 {offsets = [26, 5], sizes = [840, 1], strides = [1, 1]} : vector<912x9xf32> to vector<840x1xf32>
    %263 = arith.addf %261, %262 : vector<840x1xf32>
    %264 = vector.extract_strided_slice %252 {offsets = [48, 6], sizes = [840, 1], strides = [1, 1]} : vector<912x9xf32> to vector<840x1xf32>
    %265 = arith.addf %263, %264 : vector<840x1xf32>
    %266 = vector.extract_strided_slice %252 {offsets = [49, 7], sizes = [840, 1], strides = [1, 1]} : vector<912x9xf32> to vector<840x1xf32>
    %267 = arith.addf %265, %266 : vector<840x1xf32>
    %268 = vector.extract_strided_slice %252 {offsets = [50, 8], sizes = [840, 1], strides = [1, 1]} : vector<912x9xf32> to vector<840x1xf32>
    %269 = arith.addf %267, %268 : vector<840x1xf32>
    %c0_168 = arith.constant 0 : index
    %c0_169 = arith.constant 0 : index
    %270 = vector.load %arg13[%c0_168, %c0_169] : memref<1x1xf32, #tpu.memory_space<vmem>>, vector<1x1xf32>
    %271 = vector.broadcast %270 : vector<1x1xf32> to vector<840x1xf32>
    %272 = arith.addf %269, %271 : vector<840x1xf32>
    %273 = math.absf %272 : vector<840x1xf32>
    %cst_170 = arith.constant 0.000000e+00 : f32
    %274 = vector.broadcast %cst_170 : f32 to vector<840x1xf32>
    %275 = arith.subf %274, %273 : vector<840x1xf32>
    %276 = math.exp %275 : vector<840x1xf32>
    %cst_171 = arith.constant 1.000000e+00 : f32
    %277 = vector.broadcast %cst_171 : f32 to vector<840x1xf32>
    %278 = arith.addf %277, %276 : vector<840x1xf32>
    %cst_172 = arith.constant 1.000000e+00 : f32
    %279 = vector.broadcast %cst_172 : f32 to vector<840x1xf32>
    %280 = arith.divf %279, %278 : vector<840x1xf32>
    %cst_173 = arith.constant 0.000000e+00 : f32
    %281 = vector.broadcast %cst_173 : f32 to vector<840x1xf32>
    %282 = arith.cmpf oge, %272, %281 : vector<840x1xf32>
    %283 = arith.mulf %276, %280 : vector<840x1xf32>
    %284 = arith.select %282, %280, %283 : vector<840x1xi1>, vector<840x1xf32>
    %285 = vector.extract_strided_slice %284 {offsets = [0, 0], sizes = [16, 1], strides = [1, 1]} : vector<840x1xf32> to vector<16x1xf32>
    %c0_174 = arith.constant 0 : index
    %c0_175 = arith.constant 0 : index
    %c0_176 = arith.constant 0 : index
    %c0_177 = arith.constant 0 : index
    %286 = vector.load %arg14[%c0_174, %c0_175, %c0_176, %c0_177] : memref<2x16x16x1xf32, #tpu.memory_space<vmem>>, vector<1x1x16x1xf32>
    %287 = vector.shape_cast %286 : vector<1x1x16x1xf32> to vector<16x1xf32>
    %288 = vector.shape_cast %285 : vector<16x1xf32> to vector<1x1x16x1xf32>
    tpu.vector_store %arg14[%c0_174, %c0_175, %c0_176, %c0_177], %288 {strides = array<i32>} : memref<2x16x16x1xf32, #tpu.memory_space<vmem>>, vector<1x1x16x1xf32>,
    %289 = vector.extract_strided_slice %284 {offsets = [24, 0], sizes = [16, 1], strides = [1, 1]} : vector<840x1xf32> to vector<16x1xf32>
    %c0_178 = arith.constant 0 : index
    %c1 = arith.constant 1 : index
    %c0_179 = arith.constant 0 : index
    %c0_180 = arith.constant 0 : index
    %290 = vector.load %arg14[%c0_178, %c1, %c0_179, %c0_180] : memref<2x16x16x1xf32, #tpu.memory_space<vmem>>, vector<1x1x16x1xf32>
    %291 = vector.shape_cast %290 : vector<1x1x16x1xf32> to vector<16x1xf32>
    %292 = vector.shape_cast %289 : vector<16x1xf32> to vector<1x1x16x1xf32>
    tpu.vector_store %arg14[%c0_178, %c1, %c0_179, %c0_180], %292 {strides = array<i32>} : memref<2x16x16x1xf32, #tpu.memory_space<vmem>>, vector<1x1x16x1xf32>,
    %293 = vector.extract_strided_slice %284 {offsets = [48, 0], sizes = [16, 1], strides = [1, 1]} : vector<840x1xf32> to vector<16x1xf32>
    %c0_181 = arith.constant 0 : index
    %c2 = arith.constant 2 : index
    %c0_182 = arith.constant 0 : index
    %c0_183 = arith.constant 0 : index
    %294 = vector.load %arg14[%c0_181, %c2, %c0_182, %c0_183] : memref<2x16x16x1xf32, #tpu.memory_space<vmem>>, vector<1x1x16x1xf32>
    %295 = vector.shape_cast %294 : vector<1x1x16x1xf32> to vector<16x1xf32>
    %296 = vector.shape_cast %293 : vector<16x1xf32> to vector<1x1x16x1xf32>
    tpu.vector_store %arg14[%c0_181, %c2, %c0_182, %c0_183], %296 {strides = array<i32>} : memref<2x16x16x1xf32, #tpu.memory_space<vmem>>, vector<1x1x16x1xf32>,
    %297 = vector.extract_strided_slice %284 {offsets = [72, 0], sizes = [16, 1], strides = [1, 1]} : vector<840x1xf32> to vector<16x1xf32>
    %c0_184 = arith.constant 0 : index
    %c3 = arith.constant 3 : index
    %c0_185 = arith.constant 0 : index
    %c0_186 = arith.constant 0 : index
    %298 = vector.load %arg14[%c0_184, %c3, %c0_185, %c0_186] : memref<2x16x16x1xf32, #tpu.memory_space<vmem>>, vector<1x1x16x1xf32>
    %299 = vector.shape_cast %298 : vector<1x1x16x1xf32> to vector<16x1xf32>
    %300 = vector.shape_cast %297 : vector<16x1xf32> to vector<1x1x16x1xf32>
    tpu.vector_store %arg14[%c0_184, %c3, %c0_185, %c0_186], %300 {strides = array<i32>} : memref<2x16x16x1xf32, #tpu.memory_space<vmem>>, vector<1x1x16x1xf32>,
    %301 = vector.extract_strided_slice %284 {offsets = [96, 0], sizes = [16, 1], strides = [1, 1]} : vector<840x1xf32> to vector<16x1xf32>
    %c0_187 = arith.constant 0 : index
    %c4 = arith.constant 4 : index
    %c0_188 = arith.constant 0 : index
    %c0_189 = arith.constant 0 : index
    %302 = vector.load %arg14[%c0_187, %c4, %c0_188, %c0_189] : memref<2x16x16x1xf32, #tpu.memory_space<vmem>>, vector<1x1x16x1xf32>
    %303 = vector.shape_cast %302 : vector<1x1x16x1xf32> to vector<16x1xf32>
    %304 = vector.shape_cast %301 : vector<16x1xf32> to vector<1x1x16x1xf32>
    tpu.vector_store %arg14[%c0_187, %c4, %c0_188, %c0_189], %304 {strides = array<i32>} : memref<2x16x16x1xf32, #tpu.memory_space<vmem>>, vector<1x1x16x1xf32>,
    %305 = vector.extract_strided_slice %284 {offsets = [120, 0], sizes = [16, 1], strides = [1, 1]} : vector<840x1xf32> to vector<16x1xf32>
    %c0_190 = arith.constant 0 : index
    %c5 = arith.constant 5 : index
    %c0_191 = arith.constant 0 : index
    %c0_192 = arith.constant 0 : index
    %306 = vector.load %arg14[%c0_190, %c5, %c0_191, %c0_192] : memref<2x16x16x1xf32, #tpu.memory_space<vmem>>, vector<1x1x16x1xf32>
    %307 = vector.shape_cast %306 : vector<1x1x16x1xf32> to vector<16x1xf32>
    %308 = vector.shape_cast %305 : vector<16x1xf32> to vector<1x1x16x1xf32>
    tpu.vector_store %arg14[%c0_190, %c5, %c0_191, %c0_192], %308 {strides = array<i32>} : memref<2x16x16x1xf32, #tpu.memory_space<vmem>>, vector<1x1x16x1xf32>,
    %309 = vector.extract_strided_slice %284 {offsets = [144, 0], sizes = [16, 1], strides = [1, 1]} : vector<840x1xf32> to vector<16x1xf32>
    %c0_193 = arith.constant 0 : index
    %c6 = arith.constant 6 : index
    %c0_194 = arith.constant 0 : index
    %c0_195 = arith.constant 0 : index
    %310 = vector.load %arg14[%c0_193, %c6, %c0_194, %c0_195] : memref<2x16x16x1xf32, #tpu.memory_space<vmem>>, vector<1x1x16x1xf32>
    %311 = vector.shape_cast %310 : vector<1x1x16x1xf32> to vector<16x1xf32>
    %312 = vector.shape_cast %309 : vector<16x1xf32> to vector<1x1x16x1xf32>
    tpu.vector_store %arg14[%c0_193, %c6, %c0_194, %c0_195], %312 {strides = array<i32>} : memref<2x16x16x1xf32, #tpu.memory_space<vmem>>, vector<1x1x16x1xf32>,
    %313 = vector.extract_strided_slice %284 {offsets = [168, 0], sizes = [16, 1], strides = [1, 1]} : vector<840x1xf32> to vector<16x1xf32>
    %c0_196 = arith.constant 0 : index
    %c7 = arith.constant 7 : index
    %c0_197 = arith.constant 0 : index
    %c0_198 = arith.constant 0 : index
    %314 = vector.load %arg14[%c0_196, %c7, %c0_197, %c0_198] : memref<2x16x16x1xf32, #tpu.memory_space<vmem>>, vector<1x1x16x1xf32>
    %315 = vector.shape_cast %314 : vector<1x1x16x1xf32> to vector<16x1xf32>
    %316 = vector.shape_cast %313 : vector<16x1xf32> to vector<1x1x16x1xf32>
    tpu.vector_store %arg14[%c0_196, %c7, %c0_197, %c0_198], %316 {strides = array<i32>} : memref<2x16x16x1xf32, #tpu.memory_space<vmem>>, vector<1x1x16x1xf32>,
    %317 = vector.extract_strided_slice %284 {offsets = [192, 0], sizes = [16, 1], strides = [1, 1]} : vector<840x1xf32> to vector<16x1xf32>
    %c0_199 = arith.constant 0 : index
    %c8 = arith.constant 8 : index
    %c0_200 = arith.constant 0 : index
    %c0_201 = arith.constant 0 : index
    %318 = vector.load %arg14[%c0_199, %c8, %c0_200, %c0_201] : memref<2x16x16x1xf32, #tpu.memory_space<vmem>>, vector<1x1x16x1xf32>
    %319 = vector.shape_cast %318 : vector<1x1x16x1xf32> to vector<16x1xf32>
    %320 = vector.shape_cast %317 : vector<16x1xf32> to vector<1x1x16x1xf32>
    tpu.vector_store %arg14[%c0_199, %c8, %c0_200, %c0_201], %320 {strides = array<i32>} : memref<2x16x16x1xf32, #tpu.memory_space<vmem>>, vector<1x1x16x1xf32>,
    %321 = vector.extract_strided_slice %284 {offsets = [216, 0], sizes = [16, 1], strides = [1, 1]} : vector<840x1xf32> to vector<16x1xf32>
    %c0_202 = arith.constant 0 : index
    %c9_203 = arith.constant 9 : index
    %c0_204 = arith.constant 0 : index
    %c0_205 = arith.constant 0 : index
    %322 = vector.load %arg14[%c0_202, %c9_203, %c0_204, %c0_205] : memref<2x16x16x1xf32, #tpu.memory_space<vmem>>, vector<1x1x16x1xf32>
    %323 = vector.shape_cast %322 : vector<1x1x16x1xf32> to vector<16x1xf32>
    %324 = vector.shape_cast %321 : vector<16x1xf32> to vector<1x1x16x1xf32>
    tpu.vector_store %arg14[%c0_202, %c9_203, %c0_204, %c0_205], %324 {strides = array<i32>} : memref<2x16x16x1xf32, #tpu.memory_space<vmem>>, vector<1x1x16x1xf32>,
    %325 = vector.extract_strided_slice %284 {offsets = [240, 0], sizes = [16, 1], strides = [1, 1]} : vector<840x1xf32> to vector<16x1xf32>
    %c0_206 = arith.constant 0 : index
    %c10 = arith.constant 10 : index
    %c0_207 = arith.constant 0 : index
    %c0_208 = arith.constant 0 : index
    %326 = vector.load %arg14[%c0_206, %c10, %c0_207, %c0_208] : memref<2x16x16x1xf32, #tpu.memory_space<vmem>>, vector<1x1x16x1xf32>
    %327 = vector.shape_cast %326 : vector<1x1x16x1xf32> to vector<16x1xf32>
    %328 = vector.shape_cast %325 : vector<16x1xf32> to vector<1x1x16x1xf32>
    tpu.vector_store %arg14[%c0_206, %c10, %c0_207, %c0_208], %328 {strides = array<i32>} : memref<2x16x16x1xf32, #tpu.memory_space<vmem>>, vector<1x1x16x1xf32>,
    %329 = vector.extract_strided_slice %284 {offsets = [264, 0], sizes = [16, 1], strides = [1, 1]} : vector<840x1xf32> to vector<16x1xf32>
    %c0_209 = arith.constant 0 : index
    %c11 = arith.constant 11 : index
    %c0_210 = arith.constant 0 : index
    %c0_211 = arith.constant 0 : index
    %330 = vector.load %arg14[%c0_209, %c11, %c0_210, %c0_211] : memref<2x16x16x1xf32, #tpu.memory_space<vmem>>, vector<1x1x16x1xf32>
    %331 = vector.shape_cast %330 : vector<1x1x16x1xf32> to vector<16x1xf32>
    %332 = vector.shape_cast %329 : vector<16x1xf32> to vector<1x1x16x1xf32>
    tpu.vector_store %arg14[%c0_209, %c11, %c0_210, %c0_211], %332 {strides = array<i32>} : memref<2x16x16x1xf32, #tpu.memory_space<vmem>>, vector<1x1x16x1xf32>,
    %333 = vector.extract_strided_slice %284 {offsets = [288, 0], sizes = [16, 1], strides = [1, 1]} : vector<840x1xf32> to vector<16x1xf32>
    %c0_212 = arith.constant 0 : index
    %c12 = arith.constant 12 : index
    %c0_213 = arith.constant 0 : index
    %c0_214 = arith.constant 0 : index
    %334 = vector.load %arg14[%c0_212, %c12, %c0_213, %c0_214] : memref<2x16x16x1xf32, #tpu.memory_space<vmem>>, vector<1x1x16x1xf32>
    %335 = vector.shape_cast %334 : vector<1x1x16x1xf32> to vector<16x1xf32>
    %336 = vector.shape_cast %333 : vector<16x1xf32> to vector<1x1x16x1xf32>
    tpu.vector_store %arg14[%c0_212, %c12, %c0_213, %c0_214], %336 {strides = array<i32>} : memref<2x16x16x1xf32, #tpu.memory_space<vmem>>, vector<1x1x16x1xf32>,
    %337 = vector.extract_strided_slice %284 {offsets = [312, 0], sizes = [16, 1], strides = [1, 1]} : vector<840x1xf32> to vector<16x1xf32>
    %c0_215 = arith.constant 0 : index
    %c13 = arith.constant 13 : index
    %c0_216 = arith.constant 0 : index
    %c0_217 = arith.constant 0 : index
    %338 = vector.load %arg14[%c0_215, %c13, %c0_216, %c0_217] : memref<2x16x16x1xf32, #tpu.memory_space<vmem>>, vector<1x1x16x1xf32>
    %339 = vector.shape_cast %338 : vector<1x1x16x1xf32> to vector<16x1xf32>
    %340 = vector.shape_cast %337 : vector<16x1xf32> to vector<1x1x16x1xf32>
    tpu.vector_store %arg14[%c0_215, %c13, %c0_216, %c0_217], %340 {strides = array<i32>} : memref<2x16x16x1xf32, #tpu.memory_space<vmem>>, vector<1x1x16x1xf32>,
    %341 = vector.extract_strided_slice %284 {offsets = [336, 0], sizes = [16, 1], strides = [1, 1]} : vector<840x1xf32> to vector<16x1xf32>
    %c0_218 = arith.constant 0 : index
    %c14 = arith.constant 14 : index
    %c0_219 = arith.constant 0 : index
    %c0_220 = arith.constant 0 : index
    %342 = vector.load %arg14[%c0_218, %c14, %c0_219, %c0_220] : memref<2x16x16x1xf32, #tpu.memory_space<vmem>>, vector<1x1x16x1xf32>
    %343 = vector.shape_cast %342 : vector<1x1x16x1xf32> to vector<16x1xf32>
    %344 = vector.shape_cast %341 : vector<16x1xf32> to vector<1x1x16x1xf32>
    tpu.vector_store %arg14[%c0_218, %c14, %c0_219, %c0_220], %344 {strides = array<i32>} : memref<2x16x16x1xf32, #tpu.memory_space<vmem>>, vector<1x1x16x1xf32>,
    %345 = vector.extract_strided_slice %284 {offsets = [360, 0], sizes = [16, 1], strides = [1, 1]} : vector<840x1xf32> to vector<16x1xf32>
    %c0_221 = arith.constant 0 : index
    %c15 = arith.constant 15 : index
    %c0_222 = arith.constant 0 : index
    %c0_223 = arith.constant 0 : index
    %346 = vector.load %arg14[%c0_221, %c15, %c0_222, %c0_223] : memref<2x16x16x1xf32, #tpu.memory_space<vmem>>, vector<1x1x16x1xf32>
    %347 = vector.shape_cast %346 : vector<1x1x16x1xf32> to vector<16x1xf32>
    %348 = vector.shape_cast %345 : vector<16x1xf32> to vector<1x1x16x1xf32>
    tpu.vector_store %arg14[%c0_221, %c15, %c0_222, %c0_223], %348 {strides = array<i32>} : memref<2x16x16x1xf32, #tpu.memory_space<vmem>>, vector<1x1x16x1xf32>,
    %349 = vector.extract_strided_slice %284 {offsets = [456, 0], sizes = [16, 1], strides = [1, 1]} : vector<840x1xf32> to vector<16x1xf32>
    %c1_224 = arith.constant 1 : index
    %c0_225 = arith.constant 0 : index
    %c0_226 = arith.constant 0 : index
    %c0_227 = arith.constant 0 : index
    %350 = vector.load %arg14[%c1_224, %c0_225, %c0_226, %c0_227] : memref<2x16x16x1xf32, #tpu.memory_space<vmem>>, vector<1x1x16x1xf32>
    %351 = vector.shape_cast %350 : vector<1x1x16x1xf32> to vector<16x1xf32>
    %352 = vector.shape_cast %349 : vector<16x1xf32> to vector<1x1x16x1xf32>
    tpu.vector_store %arg14[%c1_224, %c0_225, %c0_226, %c0_227], %352 {strides = array<i32>} : memref<2x16x16x1xf32, #tpu.memory_space<vmem>>, vector<1x1x16x1xf32>,
    %353 = vector.extract_strided_slice %284 {offsets = [480, 0], sizes = [16, 1], strides = [1, 1]} : vector<840x1xf32> to vector<16x1xf32>
    %c1_228 = arith.constant 1 : index
    %c1_229 = arith.constant 1 : index
    %c0_230 = arith.constant 0 : index
    %c0_231 = arith.constant 0 : index
    %354 = vector.load %arg14[%c1_228, %c1_229, %c0_230, %c0_231] : memref<2x16x16x1xf32, #tpu.memory_space<vmem>>, vector<1x1x16x1xf32>
    %355 = vector.shape_cast %354 : vector<1x1x16x1xf32> to vector<16x1xf32>
    %356 = vector.shape_cast %353 : vector<16x1xf32> to vector<1x1x16x1xf32>
    tpu.vector_store %arg14[%c1_228, %c1_229, %c0_230, %c0_231], %356 {strides = array<i32>} : memref<2x16x16x1xf32, #tpu.memory_space<vmem>>, vector<1x1x16x1xf32>,
    %357 = vector.extract_strided_slice %284 {offsets = [504, 0], sizes = [16, 1], strides = [1, 1]} : vector<840x1xf32> to vector<16x1xf32>
    %c1_232 = arith.constant 1 : index
    %c2_233 = arith.constant 2 : index
    %c0_234 = arith.constant 0 : index
    %c0_235 = arith.constant 0 : index
    %358 = vector.load %arg14[%c1_232, %c2_233, %c0_234, %c0_235] : memref<2x16x16x1xf32, #tpu.memory_space<vmem>>, vector<1x1x16x1xf32>
    %359 = vector.shape_cast %358 : vector<1x1x16x1xf32> to vector<16x1xf32>
    %360 = vector.shape_cast %357 : vector<16x1xf32> to vector<1x1x16x1xf32>
    tpu.vector_store %arg14[%c1_232, %c2_233, %c0_234, %c0_235], %360 {strides = array<i32>} : memref<2x16x16x1xf32, #tpu.memory_space<vmem>>, vector<1x1x16x1xf32>,
    %361 = vector.extract_strided_slice %284 {offsets = [528, 0], sizes = [16, 1], strides = [1, 1]} : vector<840x1xf32> to vector<16x1xf32>
    %c1_236 = arith.constant 1 : index
    %c3_237 = arith.constant 3 : index
    %c0_238 = arith.constant 0 : index
    %c0_239 = arith.constant 0 : index
    %362 = vector.load %arg14[%c1_236, %c3_237, %c0_238, %c0_239] : memref<2x16x16x1xf32, #tpu.memory_space<vmem>>, vector<1x1x16x1xf32>
    %363 = vector.shape_cast %362 : vector<1x1x16x1xf32> to vector<16x1xf32>
    %364 = vector.shape_cast %361 : vector<16x1xf32> to vector<1x1x16x1xf32>
    tpu.vector_store %arg14[%c1_236, %c3_237, %c0_238, %c0_239], %364 {strides = array<i32>} : memref<2x16x16x1xf32, #tpu.memory_space<vmem>>, vector<1x1x16x1xf32>,
    %365 = vector.extract_strided_slice %284 {offsets = [552, 0], sizes = [16, 1], strides = [1, 1]} : vector<840x1xf32> to vector<16x1xf32>
    %c1_240 = arith.constant 1 : index
    %c4_241 = arith.constant 4 : index
    %c0_242 = arith.constant 0 : index
    %c0_243 = arith.constant 0 : index
    %366 = vector.load %arg14[%c1_240, %c4_241, %c0_242, %c0_243] : memref<2x16x16x1xf32, #tpu.memory_space<vmem>>, vector<1x1x16x1xf32>
    %367 = vector.shape_cast %366 : vector<1x1x16x1xf32> to vector<16x1xf32>
    %368 = vector.shape_cast %365 : vector<16x1xf32> to vector<1x1x16x1xf32>
    tpu.vector_store %arg14[%c1_240, %c4_241, %c0_242, %c0_243], %368 {strides = array<i32>} : memref<2x16x16x1xf32, #tpu.memory_space<vmem>>, vector<1x1x16x1xf32>,
    %369 = vector.extract_strided_slice %284 {offsets = [576, 0], sizes = [16, 1], strides = [1, 1]} : vector<840x1xf32> to vector<16x1xf32>
    %c1_244 = arith.constant 1 : index
    %c5_245 = arith.constant 5 : index
    %c0_246 = arith.constant 0 : index
    %c0_247 = arith.constant 0 : index
    %370 = vector.load %arg14[%c1_244, %c5_245, %c0_246, %c0_247] : memref<2x16x16x1xf32, #tpu.memory_space<vmem>>, vector<1x1x16x1xf32>
    %371 = vector.shape_cast %370 : vector<1x1x16x1xf32> to vector<16x1xf32>
    %372 = vector.shape_cast %369 : vector<16x1xf32> to vector<1x1x16x1xf32>
    tpu.vector_store %arg14[%c1_244, %c5_245, %c0_246, %c0_247], %372 {strides = array<i32>} : memref<2x16x16x1xf32, #tpu.memory_space<vmem>>, vector<1x1x16x1xf32>,
    %373 = vector.extract_strided_slice %284 {offsets = [600, 0], sizes = [16, 1], strides = [1, 1]} : vector<840x1xf32> to vector<16x1xf32>
    %c1_248 = arith.constant 1 : index
    %c6_249 = arith.constant 6 : index
    %c0_250 = arith.constant 0 : index
    %c0_251 = arith.constant 0 : index
    %374 = vector.load %arg14[%c1_248, %c6_249, %c0_250, %c0_251] : memref<2x16x16x1xf32, #tpu.memory_space<vmem>>, vector<1x1x16x1xf32>
    %375 = vector.shape_cast %374 : vector<1x1x16x1xf32> to vector<16x1xf32>
    %376 = vector.shape_cast %373 : vector<16x1xf32> to vector<1x1x16x1xf32>
    tpu.vector_store %arg14[%c1_248, %c6_249, %c0_250, %c0_251], %376 {strides = array<i32>} : memref<2x16x16x1xf32, #tpu.memory_space<vmem>>, vector<1x1x16x1xf32>,
    %377 = vector.extract_strided_slice %284 {offsets = [624, 0], sizes = [16, 1], strides = [1, 1]} : vector<840x1xf32> to vector<16x1xf32>
    %c1_252 = arith.constant 1 : index
    %c7_253 = arith.constant 7 : index
    %c0_254 = arith.constant 0 : index
    %c0_255 = arith.constant 0 : index
    %378 = vector.load %arg14[%c1_252, %c7_253, %c0_254, %c0_255] : memref<2x16x16x1xf32, #tpu.memory_space<vmem>>, vector<1x1x16x1xf32>
    %379 = vector.shape_cast %378 : vector<1x1x16x1xf32> to vector<16x1xf32>
    %380 = vector.shape_cast %377 : vector<16x1xf32> to vector<1x1x16x1xf32>
    tpu.vector_store %arg14[%c1_252, %c7_253, %c0_254, %c0_255], %380 {strides = array<i32>} : memref<2x16x16x1xf32, #tpu.memory_space<vmem>>, vector<1x1x16x1xf32>,
    %381 = vector.extract_strided_slice %284 {offsets = [648, 0], sizes = [16, 1], strides = [1, 1]} : vector<840x1xf32> to vector<16x1xf32>
    %c1_256 = arith.constant 1 : index
    %c8_257 = arith.constant 8 : index
    %c0_258 = arith.constant 0 : index
    %c0_259 = arith.constant 0 : index
    %382 = vector.load %arg14[%c1_256, %c8_257, %c0_258, %c0_259] : memref<2x16x16x1xf32, #tpu.memory_space<vmem>>, vector<1x1x16x1xf32>
    %383 = vector.shape_cast %382 : vector<1x1x16x1xf32> to vector<16x1xf32>
    %384 = vector.shape_cast %381 : vector<16x1xf32> to vector<1x1x16x1xf32>
    tpu.vector_store %arg14[%c1_256, %c8_257, %c0_258, %c0_259], %384 {strides = array<i32>} : memref<2x16x16x1xf32, #tpu.memory_space<vmem>>, vector<1x1x16x1xf32>,
    %385 = vector.extract_strided_slice %284 {offsets = [672, 0], sizes = [16, 1], strides = [1, 1]} : vector<840x1xf32> to vector<16x1xf32>
    %c1_260 = arith.constant 1 : index
    %c9_261 = arith.constant 9 : index
    %c0_262 = arith.constant 0 : index
    %c0_263 = arith.constant 0 : index
    %386 = vector.load %arg14[%c1_260, %c9_261, %c0_262, %c0_263] : memref<2x16x16x1xf32, #tpu.memory_space<vmem>>, vector<1x1x16x1xf32>
    %387 = vector.shape_cast %386 : vector<1x1x16x1xf32> to vector<16x1xf32>
    %388 = vector.shape_cast %385 : vector<16x1xf32> to vector<1x1x16x1xf32>
    tpu.vector_store %arg14[%c1_260, %c9_261, %c0_262, %c0_263], %388 {strides = array<i32>} : memref<2x16x16x1xf32, #tpu.memory_space<vmem>>, vector<1x1x16x1xf32>,
    %389 = vector.extract_strided_slice %284 {offsets = [696, 0], sizes = [16, 1], strides = [1, 1]} : vector<840x1xf32> to vector<16x1xf32>
    %c1_264 = arith.constant 1 : index
    %c10_265 = arith.constant 10 : index
    %c0_266 = arith.constant 0 : index
    %c0_267 = arith.constant 0 : index
    %390 = vector.load %arg14[%c1_264, %c10_265, %c0_266, %c0_267] : memref<2x16x16x1xf32, #tpu.memory_space<vmem>>, vector<1x1x16x1xf32>
    %391 = vector.shape_cast %390 : vector<1x1x16x1xf32> to vector<16x1xf32>
    %392 = vector.shape_cast %389 : vector<16x1xf32> to vector<1x1x16x1xf32>
    tpu.vector_store %arg14[%c1_264, %c10_265, %c0_266, %c0_267], %392 {strides = array<i32>} : memref<2x16x16x1xf32, #tpu.memory_space<vmem>>, vector<1x1x16x1xf32>,
    %393 = vector.extract_strided_slice %284 {offsets = [720, 0], sizes = [16, 1], strides = [1, 1]} : vector<840x1xf32> to vector<16x1xf32>
    %c1_268 = arith.constant 1 : index
    %c11_269 = arith.constant 11 : index
    %c0_270 = arith.constant 0 : index
    %c0_271 = arith.constant 0 : index
    %394 = vector.load %arg14[%c1_268, %c11_269, %c0_270, %c0_271] : memref<2x16x16x1xf32, #tpu.memory_space<vmem>>, vector<1x1x16x1xf32>
    %395 = vector.shape_cast %394 : vector<1x1x16x1xf32> to vector<16x1xf32>
    %396 = vector.shape_cast %393 : vector<16x1xf32> to vector<1x1x16x1xf32>
    tpu.vector_store %arg14[%c1_268, %c11_269, %c0_270, %c0_271], %396 {strides = array<i32>} : memref<2x16x16x1xf32, #tpu.memory_space<vmem>>, vector<1x1x16x1xf32>,
    %397 = vector.extract_strided_slice %284 {offsets = [744, 0], sizes = [16, 1], strides = [1, 1]} : vector<840x1xf32> to vector<16x1xf32>
    %c1_272 = arith.constant 1 : index
    %c12_273 = arith.constant 12 : index
    %c0_274 = arith.constant 0 : index
    %c0_275 = arith.constant 0 : index
    %398 = vector.load %arg14[%c1_272, %c12_273, %c0_274, %c0_275] : memref<2x16x16x1xf32, #tpu.memory_space<vmem>>, vector<1x1x16x1xf32>
    %399 = vector.shape_cast %398 : vector<1x1x16x1xf32> to vector<16x1xf32>
    %400 = vector.shape_cast %397 : vector<16x1xf32> to vector<1x1x16x1xf32>
    tpu.vector_store %arg14[%c1_272, %c12_273, %c0_274, %c0_275], %400 {strides = array<i32>} : memref<2x16x16x1xf32, #tpu.memory_space<vmem>>, vector<1x1x16x1xf32>,
    %401 = vector.extract_strided_slice %284 {offsets = [768, 0], sizes = [16, 1], strides = [1, 1]} : vector<840x1xf32> to vector<16x1xf32>
    %c1_276 = arith.constant 1 : index
    %c13_277 = arith.constant 13 : index
    %c0_278 = arith.constant 0 : index
    %c0_279 = arith.constant 0 : index
    %402 = vector.load %arg14[%c1_276, %c13_277, %c0_278, %c0_279] : memref<2x16x16x1xf32, #tpu.memory_space<vmem>>, vector<1x1x16x1xf32>
    %403 = vector.shape_cast %402 : vector<1x1x16x1xf32> to vector<16x1xf32>
    %404 = vector.shape_cast %401 : vector<16x1xf32> to vector<1x1x16x1xf32>
    tpu.vector_store %arg14[%c1_276, %c13_277, %c0_278, %c0_279], %404 {strides = array<i32>} : memref<2x16x16x1xf32, #tpu.memory_space<vmem>>, vector<1x1x16x1xf32>,
    %405 = vector.extract_strided_slice %284 {offsets = [792, 0], sizes = [16, 1], strides = [1, 1]} : vector<840x1xf32> to vector<16x1xf32>
    %c1_280 = arith.constant 1 : index
    %c14_281 = arith.constant 14 : index
    %c0_282 = arith.constant 0 : index
    %c0_283 = arith.constant 0 : index
    %406 = vector.load %arg14[%c1_280, %c14_281, %c0_282, %c0_283] : memref<2x16x16x1xf32, #tpu.memory_space<vmem>>, vector<1x1x16x1xf32>
    %407 = vector.shape_cast %406 : vector<1x1x16x1xf32> to vector<16x1xf32>
    %408 = vector.shape_cast %405 : vector<16x1xf32> to vector<1x1x16x1xf32>
    tpu.vector_store %arg14[%c1_280, %c14_281, %c0_282, %c0_283], %408 {strides = array<i32>} : memref<2x16x16x1xf32, #tpu.memory_space<vmem>>, vector<1x1x16x1xf32>,
    %409 = vector.extract_strided_slice %284 {offsets = [816, 0], sizes = [16, 1], strides = [1, 1]} : vector<840x1xf32> to vector<16x1xf32>
    %c1_284 = arith.constant 1 : index
    %c15_285 = arith.constant 15 : index
    %c0_286 = arith.constant 0 : index
    %c0_287 = arith.constant 0 : index
    %410 = vector.load %arg14[%c1_284, %c15_285, %c0_286, %c0_287] : memref<2x16x16x1xf32, #tpu.memory_space<vmem>>, vector<1x1x16x1xf32>
    %411 = vector.shape_cast %410 : vector<1x1x16x1xf32> to vector<16x1xf32>
    %412 = vector.shape_cast %409 : vector<16x1xf32> to vector<1x1x16x1xf32>
    tpu.vector_store %arg14[%c1_284, %c15_285, %c0_286, %c0_287], %412 {strides = array<i32>} : memref<2x16x16x1xf32, #tpu.memory_space<vmem>>, vector<1x1x16x1xf32>,
    return
  }
  func.func @transform_0(%arg0: i32) -> (i32, i32) {
    %c0_i32 = arith.constant 0 : i32
    %c0_i32_0 = arith.constant 0 : i32
    %c0_i32_1 = arith.constant 0 : i32
    return %c0_i32, %c0_i32_0 : i32, i32
  }
  func.func @transform_1(%arg0: i32) -> (i32, i32) {
    %c0_i32 = arith.constant 0 : i32
    %c0_i32_0 = arith.constant 0 : i32
    %c0_i32_1 = arith.constant 0 : i32
    return %c0_i32, %c0_i32_0 : i32, i32
  }
  func.func @transform_2(%arg0: i32) -> (i32, i32) {
    %c0_i32 = arith.constant 0 : i32
    %c0_i32_0 = arith.constant 0 : i32
    %c0_i32_1 = arith.constant 0 : i32
    return %c0_i32, %c0_i32_0 : i32, i32
  }
  func.func @transform_3(%arg0: i32) -> (i32, i32) {
    %c0_i32 = arith.constant 0 : i32
    %c0_i32_0 = arith.constant 0 : i32
    %c0_i32_1 = arith.constant 0 : i32
    return %c0_i32, %c0_i32_0 : i32, i32
  }
  func.func @transform_4(%arg0: i32) -> (i32, i32) {
    %c0_i32 = arith.constant 0 : i32
    %c0_i32_0 = arith.constant 0 : i32
    %c0_i32_1 = arith.constant 0 : i32
    return %c0_i32, %c0_i32_0 : i32, i32
  }
  func.func @transform_5(%arg0: i32) -> (i32, i32) {
    %c0_i32 = arith.constant 0 : i32
    %c0_i32_0 = arith.constant 0 : i32
    %c0_i32_1 = arith.constant 0 : i32
    return %c0_i32, %c0_i32_0 : i32, i32
  }
  func.func @transform_6(%arg0: i32) -> (i32, i32) {
    %c0_i32 = arith.constant 0 : i32
    %c0_i32_0 = arith.constant 0 : i32
    %c0_i32_1 = arith.constant 0 : i32
    return %c0_i32, %c0_i32_0 : i32, i32
  }
  func.func @transform_7(%arg0: i32) -> (i32, i32) {
    %c0_i32 = arith.constant 0 : i32
    %c0_i32_0 = arith.constant 0 : i32
    %c0_i32_1 = arith.constant 0 : i32
    return %c0_i32, %c0_i32_0 : i32, i32
  }
  func.func @transform_8(%arg0: i32) -> (i32, i32) {
    %c0_i32 = arith.constant 0 : i32
    %c0_i32_0 = arith.constant 0 : i32
    %c0_i32_1 = arith.constant 0 : i32
    return %c0_i32, %c0_i32_0 : i32, i32
  }
  func.func @transform_9(%arg0: i32) -> (i32, i32) {
    %c0_i32 = arith.constant 0 : i32
    %c0_i32_0 = arith.constant 0 : i32
    %c0_i32_1 = arith.constant 0 : i32
    return %c0_i32, %c0_i32_0 : i32, i32
  }
  func.func @transform_10(%arg0: i32) -> (i32, i32) {
    %c0_i32 = arith.constant 0 : i32
    %c0_i32_0 = arith.constant 0 : i32
    %c0_i32_1 = arith.constant 0 : i32
    return %c0_i32, %c0_i32_0 : i32, i32
  }
  func.func @transform_11(%arg0: i32) -> (i32, i32) {
    %c0_i32 = arith.constant 0 : i32
    %c0_i32_0 = arith.constant 0 : i32
    %c0_i32_1 = arith.constant 0 : i32
    return %c0_i32, %c0_i32_0 : i32, i32
  }
  func.func @transform_12(%arg0: i32) -> (i32, i32) {
    %c0_i32 = arith.constant 0 : i32
    %c0_i32_0 = arith.constant 0 : i32
    %c0_i32_1 = arith.constant 0 : i32
    return %c0_i32, %c0_i32_0 : i32, i32
  }
  func.func @transform_13(%arg0: i32) -> (i32, i32, i32, i32) {
    %c0_i32 = arith.constant 0 : i32
    %c0_i32_0 = arith.constant 0 : i32
    %c0_i32_1 = arith.constant 0 : i32
    %c0_i32_2 = arith.constant 0 : i32
    %c0_i32_3 = arith.constant 0 : i32
    return %c0_i32, %c0_i32_0, %c0_i32_1, %c0_i32_2 : i32, i32, i32, i32
  }
}

</mosaic_0001>

<llo_original>
// kernel: autoencoder_forward.1
$region0: #{autoencoder_forward.1}
  #allocation0 [shape = 'u32[]', space=smem, size = 0x4, offset = 0x4, fixed_abs, tag = 'smem constant byte address 0x4 - core index']
  #allocation1 [shape = 'u32[144,128]{1,0:T(1,128)}', space=vmem, size = 0x12000, scoped, tag = 'internal scratch']
  #allocation2 [shape = 'f32[352,32]{1,0:T(8,128)}', space=vmem, size = 0x2c000, scoped, tag = 'scratch operand']
  #allocation3 [shape = 'f32[112,64]{1,0:T(8,128)}', space=vmem, size = 0xe000, scoped, tag = 'scratch operand']
  #allocation4 [shape = 'f32[112,128]{1,0:T(8,128)}', space=vmem, size = 0xe000, scoped, tag = 'scratch operand']
  #allocation5 [shape = 'f32[352,64]{1,0:T(8,128)}', space=vmem, size = 0x2c000, scoped, tag = 'scratch operand']
  #allocation6 [shape = 'f32[912,32]{1,0:T(8,128)}', space=vmem, size = 0x72000, scoped, tag = 'scratch operand']
  #allocation7 [shape = 'f32[495,32]{1,0:T(8,128)}', space=vmem, size = 0x3e000, scoped, tag = 'scratch operand']
  #allocation8 [shape = 'f32[287,64]{1,0:T(8,128)}', space=vmem, size = 0x24000, scoped, tag = 'scratch operand']
  #allocation9 [shape = 'f32[79,128]{1,0:T(8,128)}', space=vmem, size = 0xa000, scoped, tag = 'scratch operand']
  #allocation10 [shape = 'f32[1,1]{1,0:T(1,128)S(1)}', space=vmem, size = 0x200, scoped, tag = 'scoped memory for autoencoder_forward.1']
  %s0 = inlined_call_operand.vmem [shape: bf16[512,18], index: 0, kind: input, shape index: {}]
  %s1 = inlined_call_operand.vmem [shape: bf16[18,32], index: 1, kind: input, shape index: {}]
  %s2 = inlined_call_operand.vmem [shape: bf16[288,64], index: 2, kind: input, shape index: {}]
  %s3 = inlined_call_operand.vmem [shape: bf16[576,128], index: 3, kind: input, shape index: {}]
  %s4 = inlined_call_operand.vmem [shape: bf16[128,576], index: 4, kind: input, shape index: {}]
  %s5 = inlined_call_operand.vmem [shape: bf16[64,288], index: 5, kind: input, shape index: {}]
  %s6 = inlined_call_operand.vmem [shape: bf16[32,9], index: 6, kind: input, shape index: {}]
  %s7 = inlined_call_operand.vmem [shape: f32[1,32], index: 7, kind: input, shape index: {}]
  %s8 = inlined_call_operand.vmem [shape: f32[1,64], index: 8, kind: input, shape index: {}]
  %s9 = inlined_call_operand.vmem [shape: f32[1,128], index: 9, kind: input, shape index: {}]
  %s10 = inlined_call_operand.vmem [shape: f32[1,64], index: 10, kind: input, shape index: {}]
  %s11 = inlined_call_operand.vmem [shape: f32[1,32], index: 11, kind: input, shape index: {}]
  %s12 = inlined_call_operand.<no memory space> [shape: f32[1,1], index: 12, kind: input, shape index: {}]
  %s13 = inlined_call_operand.vmem [shape: f32[2,16,16,1], index: 13, kind: output, shape index: {}]
  %s14 = sld [smem:[#allocation0]]
  $region62: #{autoencoder_forward.1} parent=0
    _
  %s16 = ssub.s32 1, %s14
  %s17 = scalar_select 0, %s16, %s14
  %v18 = vstv %s12
  %19 = vst [vmem:[#allocation10] sm:$0x1] %v18
  // Predicated region
  $region2: #{autoencoder_forward.1} parent=0 // pred_check
    _
  $region3: #{autoencoder_forward.1} parent=0 // pred_check_branch
    %21 = sbr.rel (0) target = $region5
  $region4: #{autoencoder_forward.1} parent=0 // pred_region
    _
  $region5: #{autoencoder_forward.1} parent=0 // pred_fallthru
    _
  // Predicated region
  $region6: #{autoencoder_forward.1} parent=0 // pred_check
    _
  $region7: #{autoencoder_forward.1} parent=0 // pred_check_branch
    %23 = sbr.rel (0) target = $region9
  $region8: #{autoencoder_forward.1} parent=0 // pred_region
    _
  $region9: #{autoencoder_forward.1} parent=0 // pred_fallthru
    _
  // Predicated region
  $region10: #{autoencoder_forward.1} parent=0 // pred_check
    _
  $region11: #{autoencoder_forward.1} parent=0 // pred_check_branch
    %25 = sbr.rel (0) target = $region13
  $region12: #{autoencoder_forward.1} parent=0 // pred_region
    _
  $region13: #{autoencoder_forward.1} parent=0 // pred_fallthru
    _
  // Predicated region
  $region14: #{autoencoder_forward.1} parent=0 // pred_check
    _
  $region15: #{autoencoder_forward.1} parent=0 // pred_check_branch
    %27 = sbr.rel (0) target = $region17
  $region16: #{autoencoder_forward.1} parent=0 // pred_region
    _
  $region17: #{autoencoder_forward.1} parent=0 // pred_fallthru
    _
  // Predicated region
  $region18: #{autoencoder_forward.1} parent=0 // pred_check
    _
  $region19: #{autoencoder_forward.1} parent=0 // pred_check_branch
    %29 = sbr.rel (0) target = $region21
  $region20: #{autoencoder_forward.1} parent=0 // pred_region
    _
  $region21: #{autoencoder_forward.1} parent=0 // pred_fallthru
    _
  // Predicated region
  $region22: #{autoencoder_forward.1} parent=0 // pred_check
    _
  $region23: #{autoencoder_forward.1} parent=0 // pred_check_branch
    %31 = sbr.rel (0) target = $region25
  $region24: #{autoencoder_forward.1} parent=0 // pred_region
    _
  $region25: #{autoencoder_forward.1} parent=0 // pred_fallthru
    _
  // Predicated region
  $region26: #{autoencoder_forward.1} parent=0 // pred_check
    _
  $region27: #{autoencoder_forward.1} parent=0 // pred_check_branch
    %33 = sbr.rel (0) target = $region29
  $region28: #{autoencoder_forward.1} parent=0 // pred_region
    _
  $region29: #{autoencoder_forward.1} parent=0 // pred_fallthru
    _
  // Predicated region
  $region30: #{autoencoder_forward.1} parent=0 // pred_check
    _
  $region31: #{autoencoder_forward.1} parent=0 // pred_check_branch
    %35 = sbr.rel (0) target = $region33
  $region32: #{autoencoder_forward.1} parent=0 // pred_region
    _
  $region33: #{autoencoder_forward.1} parent=0 // pred_fallthru
    _
  // Predicated region
  $region34: #{autoencoder_forward.1} parent=0 // pred_check
    _
  $region35: #{autoencoder_forward.1} parent=0 // pred_check_branch
    %37 = sbr.rel (0) target = $region37
  $region36: #{autoencoder_forward.1} parent=0 // pred_region
    _
  $region37: #{autoencoder_forward.1} parent=0 // pred_fallthru
    _
  // Predicated region
  $region38: #{autoencoder_forward.1} parent=0 // pred_check
    _
  $region39: #{autoencoder_forward.1} parent=0 // pred_check_branch
    %39 = sbr.rel (0) target = $region41
  $region40: #{autoencoder_forward.1} parent=0 // pred_region
    _
  $region41: #{autoencoder_forward.1} parent=0 // pred_fallthru
    _
  // Predicated region
  $region42: #{autoencoder_forward.1} parent=0 // pred_check
    _
  $region43: #{autoencoder_forward.1} parent=0 // pred_check_branch
    %41 = sbr.rel (0) target = $region45
  $region44: #{autoencoder_forward.1} parent=0 // pred_region
    _
  $region45: #{autoencoder_forward.1} parent=0 // pred_fallthru
    _
  // Predicated region
  $region46: #{autoencoder_forward.1} parent=0 // pred_check
    _
  $region47: #{autoencoder_forward.1} parent=0 // pred_check_branch
    %43 = sbr.rel (0) target = $region49
  $region48: #{autoencoder_forward.1} parent=0 // pred_region
    _
  $region49: #{autoencoder_forward.1} parent=0 // pred_fallthru
    _
  // Predicated region
  $region50: #{autoencoder_forward.1} parent=0 // pred_check
    _
  $region51: #{autoencoder_forward.1} parent=0 // pred_check_branch
    %45 = sbr.rel (0) target = $region53
  $region52: #{autoencoder_forward.1} parent=0 // pred_region
    _
  $region53: #{autoencoder_forward.1} parent=0 // pred_fallthru
    _
  %vm47 = vcmask 261120
  %48 = vst.msk [vmem:[#allocation2] sm:$0xff] %vm47, 0.0
  %49 = vst.msk [vmem:[#allocation2 + $0x8] sm:$0xff] %vm47, 0.0
  %50 = vst.msk [vmem:[#allocation2 + $0x10] sm:$0xff] %vm47, 0.0
  %51 = vst.msk [vmem:[#allocation2 + $0x18] sm:$0xff] %vm47, 0.0
  %52 = vst.msk [vmem:[#allocation2 + $0x20] sm:$0xff] %vm47, 0.0
  %53 = vst.msk [vmem:[#allocation2 + $0x28] sm:$0xff] %vm47, 0.0
  %54 = vst.msk [vmem:[#allocation2 + $0x30] sm:$0xff] %vm47, 0.0
  %55 = vst.msk [vmem:[#allocation2 + $0x38] sm:$0xff] %vm47, 0.0
  %56 = vst.msk [vmem:[#allocation2 + $0x40] sm:$0xff] %vm47, 0.0
  %57 = vst.msk [vmem:[#allocation2 + $0x48] sm:$0xff] %vm47, 0.0
  %58 = vst.msk [vmem:[#allocation2 + $0x50] sm:$0xff] %vm47, 0.0
  %59 = vst.msk [vmem:[#allocation2 + $0x58] sm:$0xff] %vm47, 0.0
  %60 = vst.msk [vmem:[#allocation2 + $0x60] sm:$0xff] %vm47, 0.0
  %61 = vst.msk [vmem:[#allocation2 + $0x68] sm:$0xff] %vm47, 0.0
  %62 = vst.msk [vmem:[#allocation2 + $0x70] sm:$0xff] %vm47, 0.0
  %63 = vst.msk [vmem:[#allocation2 + $0x78] sm:$0xff] %vm47, 0.0
  %64 = vst.msk [vmem:[#allocation2 + $0x80] sm:$0xff] %vm47, 0.0
  %65 = vst.msk [vmem:[#allocation2 + $0x88] sm:$0xff] %vm47, 0.0
  %66 = vst.msk [vmem:[#allocation2 + $0x90] sm:$0xff] %vm47, 0.0
  %67 = vst.msk [vmem:[#allocation2 + $0x98] sm:$0xff] %vm47, 0.0
  %68 = vst.msk [vmem:[#allocation2 + $0xa0] sm:$0xff] %vm47, 0.0
  %69 = vst.msk [vmem:[#allocation2 + $0xa8] sm:$0xff] %vm47, 0.0
  %70 = vst.msk [vmem:[#allocation2 + $0xb0] sm:$0xff] %vm47, 0.0
  %71 = vst.msk [vmem:[#allocation2 + $0xb8] sm:$0xff] %vm47, 0.0
  %72 = vst.msk [vmem:[#allocation2 + $0xc0] sm:$0xff] %vm47, 0.0
  %73 = vst.msk [vmem:[#allocation2 + $0xc8] sm:$0xff] %vm47, 0.0
  %74 = vst.msk [vmem:[#allocation2 + $0xd0] sm:$0xff] %vm47, 0.0
  %75 = vst.msk [vmem:[#allocation2 + $0xd8] sm:$0xff] %vm47, 0.0
  %76 = vst.msk [vmem:[#allocation2 + $0xe0] sm:$0xff] %vm47, 0.0
  %77 = vst.msk [vmem:[#allocation2 + $0xe8] sm:$0xff] %vm47, 0.0
  %78 = vst.msk [vmem:[#allocation2 + $0xf0] sm:$0xff] %vm47, 0.0
  %79 = vst.msk [vmem:[#allocation2 + $0xf8] sm:$0xff] %vm47, 0.0
  %80 = vst.msk [vmem:[#allocation2 + $0x100] sm:$0xff] %vm47, 0.0
  %81 = vst.msk [vmem:[#allocation2 + $0x108] sm:$0xff] %vm47, 0.0
  %82 = vst.msk [vmem:[#allocation2 + $0x110] sm:$0xff] %vm47, 0.0
  %83 = vst.msk [vmem:[#allocation2 + $0x118] sm:$0xff] %vm47, 0.0
  %84 = vst.msk [vmem:[#allocation2 + $0x120] sm:$0xff] %vm47, 0.0
  %85 = vst.msk [vmem:[#allocation2 + $0x128] sm:$0xff] %vm47, 0.0
  %86 = vst.msk [vmem:[#allocation2 + $0x130] sm:$0xff] %vm47, 0.0
  %87 = vst.msk [vmem:[#allocation2 + $0x138] sm:$0xff] %vm47, 0.0
  %88 = vst.msk [vmem:[#allocation2 + $0x140] sm:$0xff] %vm47, 0.0
  %89 = vst.msk [vmem:[#allocation2 + $0x148] sm:$0xff] %vm47, 0.0
  %90 = vst.msk [vmem:[#allocation2 + $0x150] sm:$0xff] %vm47, 0.0
  %91 = vst.msk [vmem:[#allocation2 + $0x158] sm:$0xff] %vm47, 0.0
  %vm92 = vcmask 523264
  %93 = vst.msk [vmem:[#allocation3] sm:$0xff] %vm92, 0.0
  %94 = vst.msk [vmem:[#allocation3 + $0x8] sm:$0xff] %vm92, 0.0
  %95 = vst.msk [vmem:[#allocation3 + $0x10] sm:$0xff] %vm92, 0.0
  %96 = vst.msk [vmem:[#allocation3 + $0x18] sm:$0xff] %vm92, 0.0
  %97 = vst.msk [vmem:[#allocation3 + $0x20] sm:$0xff] %vm92, 0.0
  %98 = vst.msk [vmem:[#allocation3 + $0x28] sm:$0xff] %vm92, 0.0
  %99 = vst.msk [vmem:[#allocation3 + $0x30] sm:$0xff] %vm92, 0.0
  %100 = vst.msk [vmem:[#allocation3 + $0x38] sm:$0xff] %vm92, 0.0
  %101 = vst.msk [vmem:[#allocation3 + $0x40] sm:$0xff] %vm92, 0.0
  %102 = vst.msk [vmem:[#allocation3 + $0x48] sm:$0xff] %vm92, 0.0
  %103 = vst.msk [vmem:[#allocation3 + $0x50] sm:$0xff] %vm92, 0.0
  %104 = vst.msk [vmem:[#allocation3 + $0x58] sm:$0xff] %vm92, 0.0
  %105 = vst.msk [vmem:[#allocation3 + $0x60] sm:$0xff] %vm92, 0.0
  %106 = vst.msk [vmem:[#allocation3 + $0x68] sm:$0xff] %vm92, 0.0
  %107 = vst [vmem:[#allocation4] sm:$0xff] 0.0
  %108 = vst [vmem:[#allocation4 + $0x8] sm:$0xff] 0.0
  %109 = vst [vmem:[#allocation4 + $0x10] sm:$0xff] 0.0
  %110 = vst [vmem:[#allocation4 + $0x18] sm:$0xff] 0.0
  %111 = vst [vmem:[#allocation4 + $0x20] sm:$0xff] 0.0
  %112 = vst [vmem:[#allocation4 + $0x28] sm:$0xff] 0.0
  %113 = vst [vmem:[#allocation4 + $0x30] sm:$0xff] 0.0
  %114 = vst [vmem:[#allocation4 + $0x38] sm:$0xff] 0.0
  %115 = vst [vmem:[#allocation4 + $0x40] sm:$0xff] 0.0
  %116 = vst [vmem:[#allocation4 + $0x48] sm:$0xff] 0.0
  %117 = vst [vmem:[#allocation4 + $0x50] sm:$0xff] 0.0
  %118 = vst [vmem:[#allocation4 + $0x58] sm:$0xff] 0.0
  %119 = vst [vmem:[#allocation4 + $0x60] sm:$0xff] 0.0
  %120 = vst [vmem:[#allocation4 + $0x68] sm:$0xff] 0.0
  %121 = vst.msk [vmem:[#allocation5] sm:$0xff] %vm92, 0.0
  %122 = vst.msk [vmem:[#allocation5 + $0x8] sm:$0xff] %vm92, 0.0
  %123 = vst.msk [vmem:[#allocation5 + $0x10] sm:$0xff] %vm92, 0.0
  %124 = vst.msk [vmem:[#allocation5 + $0x18] sm:$0xff] %vm92, 0.0
  %125 = vst.msk [vmem:[#allocation5 + $0x20] sm:$0xff] %vm92, 0.0
  %126 = vst.msk [vmem:[#allocation5 + $0x28] sm:$0xff] %vm92, 0.0
  %127 = vst.msk [vmem:[#allocation5 + $0x30] sm:$0xff] %vm92, 0.0
  %128 = vst.msk [vmem:[#allocation5 + $0x38] sm:$0xff] %vm92, 0.0
  %129 = vst.msk [vmem:[#allocation5 + $0x40] sm:$0xff] %vm92, 0.0
  %130 = vst.msk [vmem:[#allocation5 + $0x48] sm:$0xff] %vm92, 0.0
  %131 = vst.msk [vmem:[#allocation5 + $0x50] sm:$0xff] %vm92, 0.0
  %132 = vst.msk [vmem:[#allocation5 + $0x58] sm:$0xff] %vm92, 0.0
  %133 = vst.msk [vmem:[#allocation5 + $0x60] sm:$0xff] %vm92, 0.0
  %134 = vst.msk [vmem:[#allocation5 + $0x68] sm:$0xff] %vm92, 0.0
  %135 = vst.msk [vmem:[#allocation5 + $0x70] sm:$0xff] %vm92, 0.0
  %136 = vst.msk [vmem:[#allocation5 + $0x78] sm:$0xff] %vm92, 0.0
  %137 = vst.msk [vmem:[#allocation5 + $0x80] sm:$0xff] %vm92, 0.0
  %138 = vst.msk [vmem:[#allocation5 + $0x88] sm:$0xff] %vm92, 0.0
  %139 = vst.msk [vmem:[#allocation5 + $0x90] sm:$0xff] %vm92, 0.0
  %140 = vst.msk [vmem:[#allocation5 + $0x98] sm:$0xff] %vm92, 0.0
  %141 = vst.msk [vmem:[#allocation5 + $0xa0] sm:$0xff] %vm92, 0.0
  %142 = vst.msk [vmem:[#allocation5 + $0xa8] sm:$0xff] %vm92, 0.0
  %143 = vst.msk [vmem:[#allocation5 + $0xb0] sm:$0xff] %vm92, 0.0
  %144 = vst.msk [vmem:[#allocation5 + $0xb8] sm:$0xff] %vm92, 0.0
  %145 = vst.msk [vmem:[#allocation5 + $0xc0] sm:$0xff] %vm92, 0.0
  %146 = vst.msk [vmem:[#allocation5 + $0xc8] sm:$0xff] %vm92, 0.0
  %147 = vst.msk [vmem:[#allocation5 + $0xd0] sm:$0xff] %vm92, 0.0
  %148 = vst.msk [vmem:[#allocation5 + $0xd8] sm:$0xff] %vm92, 0.0
  %149 = vst.msk [vmem:[#allocation5 + $0xe0] sm:$0xff] %vm92, 0.0
  %150 = vst.msk [vmem:[#allocation5 + $0xe8] sm:$0xff] %vm92, 0.0
  %151 = vst.msk [vmem:[#allocation5 + $0xf0] sm:$0xff] %vm92, 0.0
  %152 = vst.msk [vmem:[#allocation5 + $0xf8] sm:$0xff] %vm92, 0.0
  %153 = vst.msk [vmem:[#allocation5 + $0x100] sm:$0xff] %vm92, 0.0
  %154 = vst.msk [vmem:[#allocation5 + $0x108] sm:$0xff] %vm92, 0.0
  %155 = vst.msk [vmem:[#allocation5 + $0x110] sm:$0xff] %vm92, 0.0
  %156 = vst.msk [vmem:[#allocation5 + $0x118] sm:$0xff] %vm92, 0.0
  %157 = vst.msk [vmem:[#allocation5 + $0x120] sm:$0xff] %vm92, 0.0
  %158 = vst.msk [vmem:[#allocation5 + $0x128] sm:$0xff] %vm92, 0.0
  %159 = vst.msk [vmem:[#allocation5 + $0x130] sm:$0xff] %vm92, 0.0
  %160 = vst.msk [vmem:[#allocation5 + $0x138] sm:$0xff] %vm92, 0.0
  %161 = vst.msk [vmem:[#allocation5 + $0x140] sm:$0xff] %vm92, 0.0
  %162 = vst.msk [vmem:[#allocation5 + $0x148] sm:$0xff] %vm92, 0.0
  %163 = vst.msk [vmem:[#allocation5 + $0x150] sm:$0xff] %vm92, 0.0
  %164 = vst.msk [vmem:[#allocation5 + $0x158] sm:$0xff] %vm92, 0.0
  %165 = vst.msk [vmem:[#allocation6] sm:$0xff] %vm47, 0.0
  %166 = vst.msk [vmem:[#allocation6 + $0x8] sm:$0xff] %vm47, 0.0
  %167 = vst.msk [vmem:[#allocation6 + $0x10] sm:$0xff] %vm47, 0.0
  %168 = vst.msk [vmem:[#allocation6 + $0x18] sm:$0xff] %vm47, 0.0
  %169 = vst.msk [vmem:[#allocation6 + $0x20] sm:$0xff] %vm47, 0.0
  %170 = vst.msk [vmem:[#allocation6 + $0x28] sm:$0xff] %vm47, 0.0
  %171 = vst.msk [vmem:[#allocation6 + $0x30] sm:$0xff] %vm47, 0.0
  %172 = vst.msk [vmem:[#allocation6 + $0x38] sm:$0xff] %vm47, 0.0
  %173 = vst.msk [vmem:[#allocation6 + $0x40] sm:$0xff] %vm47, 0.0
  %174 = vst.msk [vmem:[#allocation6 + $0x48] sm:$0xff] %vm47, 0.0
  %175 = vst.msk [vmem:[#allocation6 + $0x50] sm:$0xff] %vm47, 0.0
  %176 = vst.msk [vmem:[#allocation6 + $0x58] sm:$0xff] %vm47, 0.0
  %177 = vst.msk [vmem:[#allocation6 + $0x60] sm:$0xff] %vm47, 0.0
  %178 = vst.msk [vmem:[#allocation6 + $0x68] sm:$0xff] %vm47, 0.0
  %179 = vst.msk [vmem:[#allocation6 + $0x70] sm:$0xff] %vm47, 0.0
  %180 = vst.msk [vmem:[#allocation6 + $0x78] sm:$0xff] %vm47, 0.0
  %181 = vst.msk [vmem:[#allocation6 + $0x80] sm:$0xff] %vm47, 0.0
  %182 = vst.msk [vmem:[#allocation6 + $0x88] sm:$0xff] %vm47, 0.0
  %183 = vst.msk [vmem:[#allocation6 + $0x90] sm:$0xff] %vm47, 0.0
  %184 = vst.msk [vmem:[#allocation6 + $0x98] sm:$0xff] %vm47, 0.0
  %185 = vst.msk [vmem:[#allocation6 + $0xa0] sm:$0xff] %vm47, 0.0
  %186 = vst.msk [vmem:[#allocation6 + $0xa8] sm:$0xff] %vm47, 0.0
  %187 = vst.msk [vmem:[#allocation6 + $0xb0] sm:$0xff] %vm47, 0.0
  %188 = vst.msk [vmem:[#allocation6 + $0xb8] sm:$0xff] %vm47, 0.0
  %189 = vst.msk [vmem:[#allocation6 + $0xc0] sm:$0xff] %vm47, 0.0
  %190 = vst.msk [vmem:[#allocation6 + $0xc8] sm:$0xff] %vm47, 0.0
  %191 = vst.msk [vmem:[#allocation6 + $0xd0] sm:$0xff] %vm47, 0.0
  %192 = vst.msk [vmem:[#allocation6 + $0xd8] sm:$0xff] %vm47, 0.0
  %193 = vst.msk [vmem:[#allocation6 + $0xe0] sm:$0xff] %vm47, 0.0
  %194 = vst.msk [vmem:[#allocation6 + $0xe8] sm:$0xff] %vm47, 0.0
  %195 = vst.msk [vmem:[#allocation6 + $0xf0] sm:$0xff] %vm47, 0.0
  %196 = vst.msk [vmem:[#allocation6 + $0xf8] sm:$0xff] %vm47, 0.0
  %197 = vst.msk [vmem:[#allocation6 + $0x100] sm:$0xff] %vm47, 0.0
  %198 = vst.msk [vmem:[#allocation6 + $0x108] sm:$0xff] %vm47, 0.0
  %199 = vst.msk [vmem:[#allocation6 + $0x110] sm:$0xff] %vm47, 0.0
  %200 = vst.msk [vmem:[#allocation6 + $0x118] sm:$0xff] %vm47, 0.0
  %201 = vst.msk [vmem:[#allocation6 + $0x120] sm:$0xff] %vm47, 0.0
  %202 = vst.msk [vmem:[#allocation6 + $0x128] sm:$0xff] %vm47, 0.0
  %203 = vst.msk [vmem:[#allocation6 + $0x130] sm:$0xff] %vm47, 0.0
  %204 = vst.msk [vmem:[#allocation6 + $0x138] sm:$0xff] %vm47, 0.0
  %205 = vst.msk [vmem:[#allocation6 + $0x140] sm:$0xff] %vm47, 0.0
  %206 = vst.msk [vmem:[#allocation6 + $0x148] sm:$0xff] %vm47, 0.0
  %207 = vst.msk [vmem:[#allocation6 + $0x150] sm:$0xff] %vm47, 0.0
  %208 = vst.msk [vmem:[#allocation6 + $0x158] sm:$0xff] %vm47, 0.0
  %209 = vst.msk [vmem:[#allocation6 + $0x160] sm:$0xff] %vm47, 0.0
  %210 = vst.msk [vmem:[#allocation6 + $0x168] sm:$0xff] %vm47, 0.0
  %211 = vst.msk [vmem:[#allocation6 + $0x170] sm:$0xff] %vm47, 0.0
  %212 = vst.msk [vmem:[#allocation6 + $0x178] sm:$0xff] %vm47, 0.0
  %213 = vst.msk [vmem:[#allocation6 + $0x180] sm:$0xff] %vm47, 0.0
  %214 = vst.msk [vmem:[#allocation6 + $0x188] sm:$0xff] %vm47, 0.0
  %215 = vst.msk [vmem:[#allocation6 + $0x190] sm:$0xff] %vm47, 0.0
  %216 = vst.msk [vmem:[#allocation6 + $0x198] sm:$0xff] %vm47, 0.0
  %217 = vst.msk [vmem:[#allocation6 + $0x1a0] sm:$0xff] %vm47, 0.0
  %218 = vst.msk [vmem:[#allocation6 + $0x1a8] sm:$0xff] %vm47, 0.0
  %219 = vst.msk [vmem:[#allocation6 + $0x1b0] sm:$0xff] %vm47, 0.0
  %220 = vst.msk [vmem:[#allocation6 + $0x1b8] sm:$0xff] %vm47, 0.0
  %221 = vst.msk [vmem:[#allocation6 + $0x1c0] sm:$0xff] %vm47, 0.0
  %222 = vst.msk [vmem:[#allocation6 + $0x1c8] sm:$0xff] %vm47, 0.0
  %223 = vst.msk [vmem:[#allocation6 + $0x1d0] sm:$0xff] %vm47, 0.0
  %224 = vst.msk [vmem:[#allocation6 + $0x1d8] sm:$0xff] %vm47, 0.0
  %225 = vst.msk [vmem:[#allocation6 + $0x1e0] sm:$0xff] %vm47, 0.0
  %226 = vst.msk [vmem:[#allocation6 + $0x1e8] sm:$0xff] %vm47, 0.0
  %227 = vst.msk [vmem:[#allocation6 + $0x1f0] sm:$0xff] %vm47, 0.0
  %228 = vst.msk [vmem:[#allocation6 + $0x1f8] sm:$0xff] %vm47, 0.0
  %229 = vst.msk [vmem:[#allocation6 + $0x200] sm:$0xff] %vm47, 0.0
  %230 = vst.msk [vmem:[#allocation6 + $0x208] sm:$0xff] %vm47, 0.0
  %231 = vst.msk [vmem:[#allocation6 + $0x210] sm:$0xff] %vm47, 0.0
  %232 = vst.msk [vmem:[#allocation6 + $0x218] sm:$0xff] %vm47, 0.0
  %233 = vst.msk [vmem:[#allocation6 + $0x220] sm:$0xff] %vm47, 0.0
  %234 = vst.msk [vmem:[#allocation6 + $0x228] sm:$0xff] %vm47, 0.0
  %235 = vst.msk [vmem:[#allocation6 + $0x230] sm:$0xff] %vm47, 0.0
  %236 = vst.msk [vmem:[#allocation6 + $0x238] sm:$0xff] %vm47, 0.0
  %237 = vst.msk [vmem:[#allocation6 + $0x240] sm:$0xff] %vm47, 0.0
  %238 = vst.msk [vmem:[#allocation6 + $0x248] sm:$0xff] %vm47, 0.0
  %239 = vst.msk [vmem:[#allocation6 + $0x250] sm:$0xff] %vm47, 0.0
  %240 = vst.msk [vmem:[#allocation6 + $0x258] sm:$0xff] %vm47, 0.0
  %241 = vst.msk [vmem:[#allocation6 + $0x260] sm:$0xff] %vm47, 0.0
  %242 = vst.msk [vmem:[#allocation6 + $0x268] sm:$0xff] %vm47, 0.0
  %243 = vst.msk [vmem:[#allocation6 + $0x270] sm:$0xff] %vm47, 0.0
  %244 = vst.msk [vmem:[#allocation6 + $0x278] sm:$0xff] %vm47, 0.0
  %245 = vst.msk [vmem:[#allocation6 + $0x280] sm:$0xff] %vm47, 0.0
  %246 = vst.msk [vmem:[#allocation6 + $0x288] sm:$0xff] %vm47, 0.0
  %247 = vst.msk [vmem:[#allocation6 + $0x290] sm:$0xff] %vm47, 0.0
  %248 = vst.msk [vmem:[#allocation6 + $0x298] sm:$0xff] %vm47, 0.0
  %249 = vst.msk [vmem:[#allocation6 + $0x2a0] sm:$0xff] %vm47, 0.0
  %250 = vst.msk [vmem:[#allocation6 + $0x2a8] sm:$0xff] %vm47, 0.0
  %251 = vst.msk [vmem:[#allocation6 + $0x2b0] sm:$0xff] %vm47, 0.0
  %252 = vst.msk [vmem:[#allocation6 + $0x2b8] sm:$0xff] %vm47, 0.0
  %253 = vst.msk [vmem:[#allocation6 + $0x2c0] sm:$0xff] %vm47, 0.0
  %254 = vst.msk [vmem:[#allocation6 + $0x2c8] sm:$0xff] %vm47, 0.0
  %255 = vst.msk [vmem:[#allocation6 + $0x2d0] sm:$0xff] %vm47, 0.0
  %256 = vst.msk [vmem:[#allocation6 + $0x2d8] sm:$0xff] %vm47, 0.0
  %257 = vst.msk [vmem:[#allocation6 + $0x2e0] sm:$0xff] %vm47, 0.0
  %258 = vst.msk [vmem:[#allocation6 + $0x2e8] sm:$0xff] %vm47, 0.0
  %259 = vst.msk [vmem:[#allocation6 + $0x2f0] sm:$0xff] %vm47, 0.0
  %260 = vst.msk [vmem:[#allocation6 + $0x2f8] sm:$0xff] %vm47, 0.0
  %261 = vst.msk [vmem:[#allocation6 + $0x300] sm:$0xff] %vm47, 0.0
  %262 = vst.msk [vmem:[#allocation6 + $0x308] sm:$0xff] %vm47, 0.0
  %263 = vst.msk [vmem:[#allocation6 + $0x310] sm:$0xff] %vm47, 0.0
  %264 = vst.msk [vmem:[#allocation6 + $0x318] sm:$0xff] %vm47, 0.0
  %265 = vst.msk [vmem:[#allocation6 + $0x320] sm:$0xff] %vm47, 0.0
  %266 = vst.msk [vmem:[#allocation6 + $0x328] sm:$0xff] %vm47, 0.0
  %267 = vst.msk [vmem:[#allocation6 + $0x330] sm:$0xff] %vm47, 0.0
  %268 = vst.msk [vmem:[#allocation6 + $0x338] sm:$0xff] %vm47, 0.0
  %269 = vst.msk [vmem:[#allocation6 + $0x340] sm:$0xff] %vm47, 0.0
  %270 = vst.msk [vmem:[#allocation6 + $0x348] sm:$0xff] %vm47, 0.0
  %271 = vst.msk [vmem:[#allocation6 + $0x350] sm:$0xff] %vm47, 0.0
  %272 = vst.msk [vmem:[#allocation6 + $0x358] sm:$0xff] %vm47, 0.0
  %273 = vst.msk [vmem:[#allocation6 + $0x360] sm:$0xff] %vm47, 0.0
  %274 = vst.msk [vmem:[#allocation6 + $0x368] sm:$0xff] %vm47, 0.0
  %275 = vst.msk [vmem:[#allocation6 + $0x370] sm:$0xff] %vm47, 0.0
  %276 = vst.msk [vmem:[#allocation6 + $0x378] sm:$0xff] %vm47, 0.0
  %277 = vst.msk [vmem:[#allocation6 + $0x380] sm:$0xff] %vm47, 0.0
  %278 = vst.msk [vmem:[#allocation6 + $0x388] sm:$0xff] %vm47, 0.0
  %v279 = vld [vmem:[%s0] sm:$0xf]
  %v280 = vld [vmem:[%s0 + $0x4] sm:$0xf]
  %v281 = vld [vmem:[%s0 + $0x8] sm:$0xf]
  %v282 = vld [vmem:[%s0 + $0xc] sm:$0xf]
  %v283 = vld [vmem:[%s0 + $0x10] sm:$0xf]
  %v284 = vld [vmem:[%s0 + $0x14] sm:$0xf]
  %v285 = vld [vmem:[%s0 + $0x18] sm:$0xf]
  %v286 = vld [vmem:[%s0 + $0x1c] sm:$0xf]
  %v287 = vld [vmem:[%s0 + $0x20] sm:$0xf]
  %v288 = vld [vmem:[%s0 + $0x24] sm:$0xf]
  %v289 = vld [vmem:[%s0 + $0x28] sm:$0xf]
  %v290 = vld [vmem:[%s0 + $0x2c] sm:$0xf]
  %v291 = vld [vmem:[%s0 + $0x30] sm:$0xf]
  %v292 = vld [vmem:[%s0 + $0x34] sm:$0xf]
  %v293 = vld [vmem:[%s0 + $0x38] sm:$0xf]
  %v294 = vld [vmem:[%s0 + $0x3c] sm:$0xf]
  %v295 = vld [vmem:[%s0 + $0x40] sm:$0xf]
  %v296 = vld [vmem:[%s0 + $0x44] sm:$0xf]
  %v297 = vld [vmem:[%s0 + $0x48] sm:$0xf]
  %v298 = vld [vmem:[%s0 + $0x4c] sm:$0xf]
  %v299 = vld [vmem:[%s0 + $0x50] sm:$0xf]
  %v300 = vld [vmem:[%s0 + $0x54] sm:$0xf]
  %v301 = vld [vmem:[%s0 + $0x58] sm:$0xf]
  %v302 = vld [vmem:[%s0 + $0x5c] sm:$0xf]
  %v303 = vld [vmem:[%s0 + $0x60] sm:$0xf]
  %v304 = vld [vmem:[%s0 + $0x64] sm:$0xf]
  %v305 = vld [vmem:[%s0 + $0x68] sm:$0xf]
  %v306 = vld [vmem:[%s0 + $0x6c] sm:$0xf]
  %v307 = vld [vmem:[%s0 + $0x70] sm:$0xf]
  %v308 = vld [vmem:[%s0 + $0x74] sm:$0xf]
  %v309 = vld [vmem:[%s0 + $0x78] sm:$0xf]
  %v310 = vld [vmem:[%s0 + $0x7c] sm:$0xf]
  %v311 = vld [vmem:[%s0 + $0x80] sm:$0xf]
  %v312 = vld [vmem:[%s0 + $0x84] sm:$0xf]
  %v313 = vld [vmem:[%s0 + $0x88] sm:$0xf]
  %v314 = vld [vmem:[%s0 + $0x8c] sm:$0xf]
  %v315 = vld [vmem:[%s0 + $0x90] sm:$0xf]
  %v316 = vld [vmem:[%s0 + $0x94] sm:$0xf]
  %v317 = vld [vmem:[%s0 + $0x98] sm:$0xf]
  %v318 = vld [vmem:[%s0 + $0x9c] sm:$0xf]
  %v319 = vld [vmem:[%s0 + $0xa0] sm:$0xf]
  %v320 = vld [vmem:[%s0 + $0xa4] sm:$0xf]
  %v321 = vld [vmem:[%s0 + $0xa8] sm:$0xf]
  %v322 = vld [vmem:[%s0 + $0xac] sm:$0xf]
  %v323 = vld [vmem:[%s0 + $0xb0] sm:$0xf]
  %v324 = vld [vmem:[%s0 + $0xb4] sm:$0xf]
  %v325 = vld [vmem:[%s0 + $0xb8] sm:$0xf]
  %v326 = vld [vmem:[%s0 + $0xbc] sm:$0xf]
  %v327 = vld [vmem:[%s0 + $0xc0] sm:$0xf]
  %v328 = vld [vmem:[%s0 + $0xc4] sm:$0xf]
  %v329 = vld [vmem:[%s0 + $0xc8] sm:$0xf]
  %v330 = vld [vmem:[%s0 + $0xcc] sm:$0xf]
  %v331 = vld [vmem:[%s0 + $0xd0] sm:$0xf]
  %v332 = vld [vmem:[%s0 + $0xd4] sm:$0xf]
  %v333 = vld [vmem:[%s0 + $0xd8] sm:$0xf]
  %v334 = vld [vmem:[%s0 + $0xdc] sm:$0xf]
  %v335 = vld [vmem:[%s0 + $0xe0] sm:$0xf]
  %v336 = vld [vmem:[%s0 + $0xe4] sm:$0xf]
  %v337 = vld [vmem:[%s0 + $0xe8] sm:$0xf]
  %v338 = vld [vmem:[%s0 + $0xec] sm:$0xf]
  %v339 = vld [vmem:[%s0 + $0xf0] sm:$0xf]
  %v340 = vld [vmem:[%s0 + $0xf4] sm:$0xf]
  %v341 = vld [vmem:[%s0 + $0xf8] sm:$0xf]
  %v342 = vld [vmem:[%s0 + $0xfc] sm:$0xf]
  %v343 = vld [vmem:[%s1] sm:$0xf]
  %v344 = vld [vmem:[%s1 + $0x4] sm:$0xf]
  %v345 = vld [vmem:[%s1 + $0x8] sm:$0x1]
  %v346 = vld [vmem:[%s7] sm:$0x1]
  %v348 = vlaneseq
  %v349 = vshrl.u32 %v348, 7
  %v350 = vsub.s32 0, %v349
  %v351 = vrot.slane %v346, %v350
  %v417 = vunpack.c.l.b16 %v279
  %v418 = vunpack.c.l.b16 %v280
  %v419 = vunpack.c.l.b16 %v281
  %v420 = vunpack.c.l.b16 %v282
  %v421 = vunpack.c.l.b16 %v283
  %v422 = vunpack.c.l.b16 %v284
  %v423 = vunpack.c.l.b16 %v285
  %v424 = vunpack.c.l.b16 %v286
  %v425 = vunpack.c.l.b16 %v287
  %v426 = vunpack.c.l.b16 %v288
  %v427 = vunpack.c.l.b16 %v289
  %v428 = vunpack.c.l.b16 %v290
  %v429 = vunpack.c.l.b16 %v291
  %v430 = vunpack.c.l.b16 %v292
  %v431 = vunpack.c.l.b16 %v293
  %v432 = vunpack.c.l.b16 %v294
  %v433 = vunpack.c.l.b16 %v295
  %v434 = vunpack.c.l.b16 %v296
  %v435 = vunpack.c.l.b16 %v297
  %v436 = vunpack.c.l.b16 %v298
  %v437 = vunpack.c.l.b16 %v299
  %v438 = vunpack.c.l.b16 %v300
  %v439 = vunpack.c.l.b16 %v301
  %v440 = vunpack.c.l.b16 %v302
  %v441 = vunpack.c.l.b16 %v303
  %v442 = vunpack.c.l.b16 %v304
  %v443 = vunpack.c.l.b16 %v305
  %v444 = vunpack.c.l.b16 %v306
  %v445 = vunpack.c.l.b16 %v307
  %v446 = vunpack.c.l.b16 %v308
  %v447 = vunpack.c.l.b16 %v309
  %v448 = vunpack.c.l.b16 %v310
  %v449 = vunpack.c.l.b16 %v311
  %v450 = vunpack.c.l.b16 %v312
  %v451 = vunpack.c.l.b16 %v313
  %v452 = vunpack.c.l.b16 %v314
  %v453 = vunpack.c.l.b16 %v315
  %v454 = vunpack.c.l.b16 %v316
  %v455 = vunpack.c.l.b16 %v317
  %v456 = vunpack.c.l.b16 %v318
  %v457 = vunpack.c.l.b16 %v319
  %v458 = vunpack.c.l.b16 %v320
  %v459 = vunpack.c.l.b16 %v321
  %v460 = vunpack.c.l.b16 %v322
  %v461 = vunpack.c.l.b16 %v323
  %v462 = vunpack.c.l.b16 %v324
  %v463 = vunpack.c.l.b16 %v325
  %v464 = vunpack.c.l.b16 %v326
  %v465 = vunpack.c.l.b16 %v327
  %v466 = vunpack.c.l.b16 %v328
  %v467 = vunpack.c.l.b16 %v329
  %v468 = vunpack.c.l.b16 %v330
  %v469 = vunpack.c.l.b16 %v331
  %v470 = vunpack.c.l.b16 %v332
  %v471 = vunpack.c.l.b16 %v333
  %v472 = vunpack.c.l.b16 %v334
  %v473 = vunpack.c.l.b16 %v335
  %v474 = vunpack.c.l.b16 %v336
  %v475 = vunpack.c.l.b16 %v337
  %v476 = vunpack.c.l.b16 %v338
  %v477 = vunpack.c.l.b16 %v339
  %v478 = vunpack.c.l.b16 %v340
  %v479 = vunpack.c.l.b16 %v341
  %v480 = vunpack.c.l.b16 %v342
  %v481 = vpack.c.b16 %v418, %v417
  %v482 = vpack.c.b16 %v420, %v419
  %v483 = vpack.c.b16 %v422, %v421
  %v484 = vpack.c.b16 %v424, %v423
  %v485 = vpack.c.b16 %v426, %v425
  %v486 = vpack.c.b16 %v428, %v427
  %v487 = vpack.c.b16 %v430, %v429
  %v488 = vpack.c.b16 %v432, %v431
  %v489 = vpack.c.b16 %v434, %v433
  %v490 = vpack.c.b16 %v436, %v435
  %v491 = vpack.c.b16 %v438, %v437
  %v492 = vpack.c.b16 %v440, %v439
  %v493 = vpack.c.b16 %v442, %v441
  %v494 = vpack.c.b16 %v444, %v443
  %v495 = vpack.c.b16 %v446, %v445
  %v496 = vpack.c.b16 %v448, %v447
  %v497 = vpack.c.b16 %v450, %v449
  %v498 = vpack.c.b16 %v452, %v451
  %v499 = vpack.c.b16 %v454, %v453
  %v500 = vpack.c.b16 %v456, %v455
  %v501 = vpack.c.b16 %v458, %v457
  %v502 = vpack.c.b16 %v460, %v459
  %v503 = vpack.c.b16 %v462, %v461
  %v504 = vpack.c.b16 %v464, %v463
  %v505 = vpack.c.b16 %v466, %v465
  %v506 = vpack.c.b16 %v468, %v467
  %v507 = vpack.c.b16 %v470, %v469
  %v508 = vpack.c.b16 %v472, %v471
  %v509 = vpack.c.b16 %v474, %v473
  %v510 = vpack.c.b16 %v476, %v475
  %v511 = vpack.c.b16 %v478, %v477
  %v512 = vpack.c.b16 %v480, %v479
  %v516 = vunpack.c.l.b16 %v343
  %v517 = vunpack.c.l.b16 %v344
  %v518 = vunpack.c.l.b16 %v345
  %v519 = vpack.c.b16 %v517, %v516
  %v520 = vpack.c.b16 %v518, %v518
  %vm522 = vcmask 146432
  %v524 = vsel %vm522, %v481, 0
  %v527 = vsel %vm522, %v482, 0
  %v530 = vsel %vm522, %v483, 0
  %v533 = vsel %vm522, %v484, 0
  %v536 = vsel %vm522, %v485, 0
  %v539 = vsel %vm522, %v486, 0
  %v542 = vsel %vm522, %v487, 0
  %v545 = vsel %vm522, %v488, 0
  %v548 = vsel %vm522, %v489, 0
  %v551 = vsel %vm522, %v490, 0
  %v554 = vsel %vm522, %v491, 0
  %v557 = vsel %vm522, %v492, 0
  %v560 = vsel %vm522, %v493, 0
  %v563 = vsel %vm522, %v494, 0
  %v566 = vsel %vm522, %v495, 0
  %v569 = vsel %vm522, %v496, 0
  %v572 = vsel %vm522, %v497, 0
  %v575 = vsel %vm522, %v498, 0
  %v578 = vsel %vm522, %v499, 0
  %v581 = vsel %vm522, %v500, 0
  %v584 = vsel %vm522, %v501, 0
  %v587 = vsel %vm522, %v502, 0
  %v590 = vsel %vm522, %v503, 0
  %v593 = vsel %vm522, %v504, 0
  %v596 = vsel %vm522, %v505, 0
  %v599 = vsel %vm522, %v506, 0
  %v602 = vsel %vm522, %v507, 0
  %v605 = vsel %vm522, %v508, 0
  %v608 = vsel %vm522, %v509, 0
  %v611 = vsel %vm522, %v510, 0
  %v614 = vsel %vm522, %v511, 0
  %v617 = vsel %vm522, %v512, 0
  %vm619 = vcmask 1040384
  %v621 = vsel %vm619, %v520, 0
  %623 = vmatprep.subr.bf16.mxu0 0
  %624 = vmatpush1.bf16.msra.mxu0 %v519
  %625 = vmatprep.subr.bf16.mxu0 0
  %626 = vmatpush1.bf16.msra.mxu0 %v621
  %627 = vmatprep.subr.bf16.mxu0 0
  %628 = vmatpush1.bf16.msra.mxu0 0
  %629 = vmatprep.subr.bf16.mxu0 0
  %630 = vmatpush1.bf16.msra.mxu0 0
  %631 = vmatprep.subr.bf16.mxu0 0
  %632 = vmatpush1.bf16.msra.mxu0 0
  %633 = vmatprep.subr.bf16.mxu0 0
  %634 = vmatpush1.bf16.msra.mxu0 0
  %635 = vmatprep.subr.bf16.mxu0 0
  %636 = vmatpush1.bf16.msra.mxu0 0
  %637 = vmatprep.subr.bf16.mxu0 0
  %638 = vmatpush1.bf16.msra.mxu0 0
  %639 = vmatprep.subr.bf16.mxu0 0
  %640 = vmatpush1.bf16.msra.mxu0 0
  %641 = vmatprep.subr.bf16.mxu0 0
  %642 = vmatpush1.bf16.msra.mxu0 0
  %643 = vmatprep.subr.bf16.mxu0 0
  %644 = vmatpush1.bf16.msra.mxu0 0
  %645 = vmatprep.subr.bf16.mxu0 0
  %646 = vmatpush1.bf16.msra.mxu0 0
  %647 = vmatprep.subr.bf16.mxu0 0
  %648 = vmatpush1.bf16.msra.mxu0 0
  %649 = vmatprep.subr.bf16.mxu0 0
  %650 = vmatpush1.bf16.msra.mxu0 0
  %651 = vmatprep.subr.bf16.mxu0 0
  %652 = vmatpush1.bf16.msra.mxu0 0
  %653 = vmatprep.subr.bf16.mxu0 0
  %654 = vmatpush1.bf16.msra.mxu0 0
  %655 = vmatprep.mubr.bf16.mxu0 0
  %656 = vmatmul.mubr.bf16.gmra.mrb[0].mxu0 %v524
  %v657 = vpop.f32.mrb[0].mxu0
  %v658 = vadd.f32 %v351, %v657
  %v659 = vpop.f32.mrb[0].mxu0
  %v660 = vpop.f32.mrb[0].mxu0
  %v661 = vadd.f32 %v351, %v660
  %v662 = vpop.f32.mrb[0].mxu0
  %663 = vmatprep.mubr.bf16.mxu0 0
  %664 = vmatmul.mubr.bf16.gmra.mrb[0].mxu0 %v527
  %v665 = vpop.f32.mrb[0].mxu0
  %v666 = vadd.f32 %v351, %v665
  %v667 = vpop.f32.mrb[0].mxu0
  %v668 = vpop.f32.mrb[0].mxu0
  %v669 = vadd.f32 %v351, %v668
  %v670 = vpop.f32.mrb[0].mxu0
  %671 = vmatprep.mubr.bf16.mxu0 0
  %672 = vmatmul.mubr.bf16.gmra.mrb[0].mxu0 %v530
  %v673 = vpop.f32.mrb[0].mxu0
  %v674 = vadd.f32 %v351, %v673
  %v675 = vpop.f32.mrb[0].mxu0
  %v676 = vpop.f32.mrb[0].mxu0
  %v677 = vadd.f32 %v351, %v676
  %v678 = vpop.f32.mrb[0].mxu0
  %679 = vmatprep.mubr.bf16.mxu0 0
  %680 = vmatmul.mubr.bf16.gmra.mrb[0].mxu0 %v533
  %v681 = vpop.f32.mrb[0].mxu0
  %v682 = vadd.f32 %v351, %v681
  %v683 = vpop.f32.mrb[0].mxu0
  %v684 = vpop.f32.mrb[0].mxu0
  %v685 = vadd.f32 %v351, %v684
  %v686 = vpop.f32.mrb[0].mxu0
  %687 = vmatprep.mubr.bf16.mxu0 0
  %688 = vmatmul.mubr.bf16.gmra.mrb[0].mxu0 %v536
  %v689 = vpop.f32.mrb[0].mxu0
  %v690 = vadd.f32 %v351, %v689
  %v691 = vpop.f32.mrb[0].mxu0
  %v692 = vpop.f32.mrb[0].mxu0
  %v693 = vadd.f32 %v351, %v692
  %v694 = vpop.f32.mrb[0].mxu0
  %695 = vmatprep.mubr.bf16.mxu0 0
  %696 = vmatmul.mubr.bf16.gmra.mrb[0].mxu0 %v539
  %v697 = vpop.f32.mrb[0].mxu0
  %v698 = vadd.f32 %v351, %v697
  %v699 = vpop.f32.mrb[0].mxu0
  %v700 = vpop.f32.mrb[0].mxu0
  %v701 = vadd.f32 %v351, %v700
  %v702 = vpop.f32.mrb[0].mxu0
  %703 = vmatprep.mubr.bf16.mxu0 0
  %704 = vmatmul.mubr.bf16.gmra.mrb[0].mxu0 %v542
  %v705 = vpop.f32.mrb[0].mxu0
  %v706 = vadd.f32 %v351, %v705
  %v707 = vpop.f32.mrb[0].mxu0
  %v708 = vpop.f32.mrb[0].mxu0
  %v709 = vadd.f32 %v351, %v708
  %v710 = vpop.f32.mrb[0].mxu0
  %711 = vmatprep.mubr.bf16.mxu0 0
  %712 = vmatmul.mubr.bf16.gmra.mrb[0].mxu0 %v545
  %v713 = vpop.f32.mrb[0].mxu0
  %v714 = vadd.f32 %v351, %v713
  %v715 = vpop.f32.mrb[0].mxu0
  %v716 = vpop.f32.mrb[0].mxu0
  %v717 = vadd.f32 %v351, %v716
  %v718 = vpop.f32.mrb[0].mxu0
  %719 = vmatprep.mubr.bf16.mxu0 0
  %720 = vmatmul.mubr.bf16.gmra.mrb[0].mxu0 %v548
  %v721 = vpop.f32.mrb[0].mxu0
  %v722 = vadd.f32 %v351, %v721
  %v723 = vpop.f32.mrb[0].mxu0
  %v724 = vpop.f32.mrb[0].mxu0
  %v725 = vadd.f32 %v351, %v724
  %v726 = vpop.f32.mrb[0].mxu0
  %727 = vmatprep.mubr.bf16.mxu0 0
  %728 = vmatmul.mubr.bf16.gmra.mrb[0].mxu0 %v551
  %v729 = vpop.f32.mrb[0].mxu0
  %v730 = vadd.f32 %v351, %v729
  %v731 = vpop.f32.mrb[0].mxu0
  %v732 = vpop.f32.mrb[0].mxu0
  %v733 = vadd.f32 %v351, %v732
  %v734 = vpop.f32.mrb[0].mxu0
  %735 = vmatprep.mubr.bf16.mxu0 0
  %736 = vmatmul.mubr.bf16.gmra.mrb[0].mxu0 %v554
  %v737 = vpop.f32.mrb[0].mxu0
  %v738 = vadd.f32 %v351, %v737
  %v739 = vpop.f32.mrb[0].mxu0
  %v740 = vpop.f32.mrb[0].mxu0
  %v741 = vadd.f32 %v351, %v740
  %v742 = vpop.f32.mrb[0].mxu0
  %743 = vmatprep.mubr.bf16.mxu0 0
  %744 = vmatmul.mubr.bf16.gmra.mrb[0].mxu0 %v557
  %v745 = vpop.f32.mrb[0].mxu0
  %v746 = vadd.f32 %v351, %v745
  %v747 = vpop.f32.mrb[0].mxu0
  %v748 = vpop.f32.mrb[0].mxu0
  %v749 = vadd.f32 %v351, %v748
  %v750 = vpop.f32.mrb[0].mxu0
  %751 = vmatprep.mubr.bf16.mxu0 0
  %752 = vmatmul.mubr.bf16.gmra.mrb[0].mxu0 %v560
  %v753 = vpop.f32.mrb[0].mxu0
  %v754 = vadd.f32 %v351, %v753
  %v755 = vpop.f32.mrb[0].mxu0
  %v756 = vpop.f32.mrb[0].mxu0
  %v757 = vadd.f32 %v351, %v756
  %v758 = vpop.f32.mrb[0].mxu0
  %759 = vmatprep.mubr.bf16.mxu0 0
  %760 = vmatmul.mubr.bf16.gmra.mrb[0].mxu0 %v563
  %v761 = vpop.f32.mrb[0].mxu0
  %v762 = vadd.f32 %v351, %v761
  %v763 = vpop.f32.mrb[0].mxu0
  %v764 = vpop.f32.mrb[0].mxu0
  %v765 = vadd.f32 %v351, %v764
  %v766 = vpop.f32.mrb[0].mxu0
  %767 = vmatprep.mubr.bf16.mxu0 0
  %768 = vmatmul.mubr.bf16.gmra.mrb[0].mxu0 %v566
  %v769 = vpop.f32.mrb[0].mxu0
  %v770 = vadd.f32 %v351, %v769
  %v771 = vpop.f32.mrb[0].mxu0
  %v772 = vpop.f32.mrb[0].mxu0
  %v773 = vadd.f32 %v351, %v772
  %v774 = vpop.f32.mrb[0].mxu0
  %775 = vmatprep.mubr.bf16.mxu0 0
  %776 = vmatmul.mubr.bf16.gmra.mrb[0].mxu0 %v569
  %v777 = vpop.f32.mrb[0].mxu0
  %v778 = vadd.f32 %v351, %v777
  %v779 = vpop.f32.mrb[0].mxu0
  %v780 = vpop.f32.mrb[0].mxu0
  %v781 = vadd.f32 %v351, %v780
  %v782 = vpop.f32.mrb[0].mxu0
  %783 = vmatprep.mubr.bf16.mxu0 0
  %784 = vmatmul.mubr.bf16.gmra.mrb[0].mxu0 %v572
  %v785 = vpop.f32.mrb[0].mxu0
  %v786 = vadd.f32 %v351, %v785
  %v787 = vpop.f32.mrb[0].mxu0
  %v788 = vpop.f32.mrb[0].mxu0
  %v789 = vadd.f32 %v351, %v788
  %v790 = vpop.f32.mrb[0].mxu0
  %791 = vmatprep.mubr.bf16.mxu0 0
  %792 = vmatmul.mubr.bf16.gmra.mrb[0].mxu0 %v575
  %v793 = vpop.f32.mrb[0].mxu0
  %v794 = vadd.f32 %v351, %v793
  %v795 = vpop.f32.mrb[0].mxu0
  %v796 = vpop.f32.mrb[0].mxu0
  %v797 = vadd.f32 %v351, %v796
  %v798 = vpop.f32.mrb[0].mxu0
  %799 = vmatprep.mubr.bf16.mxu0 0
  %800 = vmatmul.mubr.bf16.gmra.mrb[0].mxu0 %v578
  %v801 = vpop.f32.mrb[0].mxu0
  %v802 = vadd.f32 %v351, %v801
  %v803 = vpop.f32.mrb[0].mxu0
  %v804 = vpop.f32.mrb[0].mxu0
  %v805 = vadd.f32 %v351, %v804
  %v806 = vpop.f32.mrb[0].mxu0
  %807 = vmatprep.mubr.bf16.mxu0 0
  %808 = vmatmul.mubr.bf16.gmra.mrb[0].mxu0 %v581
  %v809 = vpop.f32.mrb[0].mxu0
  %v810 = vadd.f32 %v351, %v809
  %v811 = vpop.f32.mrb[0].mxu0
  %v812 = vpop.f32.mrb[0].mxu0
  %v813 = vadd.f32 %v351, %v812
  %v814 = vpop.f32.mrb[0].mxu0
  %815 = vmatprep.mubr.bf16.mxu0 0
  %816 = vmatmul.mubr.bf16.gmra.mrb[0].mxu0 %v584
  %v817 = vpop.f32.mrb[0].mxu0
  %v818 = vadd.f32 %v351, %v817
  %v819 = vpop.f32.mrb[0].mxu0
  %v820 = vpop.f32.mrb[0].mxu0
  %v821 = vadd.f32 %v351, %v820
  %v822 = vpop.f32.mrb[0].mxu0
  %823 = vmatprep.mubr.bf16.mxu0 0
  %824 = vmatmul.mubr.bf16.gmra.mrb[0].mxu0 %v587
  %v825 = vpop.f32.mrb[0].mxu0
  %v826 = vadd.f32 %v351, %v825
  %v827 = vpop.f32.mrb[0].mxu0
  %v828 = vpop.f32.mrb[0].mxu0
  %v829 = vadd.f32 %v351, %v828
  %v830 = vpop.f32.mrb[0].mxu0
  %831 = vmatprep.mubr.bf16.mxu0 0
  %832 = vmatmul.mubr.bf16.gmra.mrb[0].mxu0 %v590
  %v833 = vpop.f32.mrb[0].mxu0
  %v834 = vadd.f32 %v351, %v833
  %v835 = vpop.f32.mrb[0].mxu0
  %v836 = vpop.f32.mrb[0].mxu0
  %v837 = vadd.f32 %v351, %v836
  %v838 = vpop.f32.mrb[0].mxu0
  %839 = vmatprep.mubr.bf16.mxu0 0
  %840 = vmatmul.mubr.bf16.gmra.mrb[0].mxu0 %v593
  %v841 = vpop.f32.mrb[0].mxu0
  %v842 = vadd.f32 %v351, %v841
  %v843 = vpop.f32.mrb[0].mxu0
  %v844 = vpop.f32.mrb[0].mxu0
  %v845 = vadd.f32 %v351, %v844
  %v846 = vpop.f32.mrb[0].mxu0
  %847 = vmatprep.mubr.bf16.mxu0 0
  %848 = vmatmul.mubr.bf16.gmra.mrb[0].mxu0 %v596
  %v849 = vpop.f32.mrb[0].mxu0
  %v850 = vadd.f32 %v351, %v849
  %v851 = vpop.f32.mrb[0].mxu0
  %v852 = vpop.f32.mrb[0].mxu0
  %v853 = vadd.f32 %v351, %v852
  %v854 = vpop.f32.mrb[0].mxu0
  %855 = vmatprep.mubr.bf16.mxu0 0
  %856 = vmatmul.mubr.bf16.gmra.mrb[0].mxu0 %v599
  %v857 = vpop.f32.mrb[0].mxu0
  %v858 = vadd.f32 %v351, %v857
  %v859 = vpop.f32.mrb[0].mxu0
  %v860 = vpop.f32.mrb[0].mxu0
  %v861 = vadd.f32 %v351, %v860
  %v862 = vpop.f32.mrb[0].mxu0
  %863 = vmatprep.mubr.bf16.mxu0 0
  %864 = vmatmul.mubr.bf16.gmra.mrb[0].mxu0 %v602
  %v865 = vpop.f32.mrb[0].mxu0
  %v866 = vadd.f32 %v351, %v865
  %v867 = vpop.f32.mrb[0].mxu0
  %v868 = vpop.f32.mrb[0].mxu0
  %v869 = vadd.f32 %v351, %v868
  %v870 = vpop.f32.mrb[0].mxu0
  %871 = vmatprep.mubr.bf16.mxu0 0
  %872 = vmatmul.mubr.bf16.gmra.mrb[0].mxu0 %v605
  %v873 = vpop.f32.mrb[0].mxu0
  %v874 = vadd.f32 %v351, %v873
  %v875 = vpop.f32.mrb[0].mxu0
  %v876 = vpop.f32.mrb[0].mxu0
  %v877 = vadd.f32 %v351, %v876
  %v878 = vpop.f32.mrb[0].mxu0
  %879 = vmatprep.mubr.bf16.mxu0 0
  %880 = vmatmul.mubr.bf16.gmra.mrb[0].mxu0 %v608
  %v881 = vpop.f32.mrb[0].mxu0
  %v882 = vadd.f32 %v351, %v881
  %v883 = vpop.f32.mrb[0].mxu0
  %v884 = vpop.f32.mrb[0].mxu0
  %v885 = vadd.f32 %v351, %v884
  %v886 = vpop.f32.mrb[0].mxu0
  %887 = vmatprep.mubr.bf16.mxu0 0
  %888 = vmatmul.mubr.bf16.gmra.mrb[0].mxu0 %v611
  %v889 = vpop.f32.mrb[0].mxu0
  %v890 = vadd.f32 %v351, %v889
  %v891 = vpop.f32.mrb[0].mxu0
  %v892 = vpop.f32.mrb[0].mxu0
  %v893 = vadd.f32 %v351, %v892
  %v894 = vpop.f32.mrb[0].mxu0
  %895 = vmatprep.mubr.bf16.mxu0 0
  %896 = vmatmul.mubr.bf16.gmra.mrb[0].mxu0 %v614
  %v897 = vpop.f32.mrb[0].mxu0
  %v898 = vadd.f32 %v351, %v897
  %v899 = vpop.f32.mrb[0].mxu0
  %v900 = vpop.f32.mrb[0].mxu0
  %v901 = vadd.f32 %v351, %v900
  %v902 = vpop.f32.mrb[0].mxu0
  %903 = vmatprep.mubr.bf16.mxu0 0
  %904 = vmatmul.mubr.bf16.gmra.mrb[0].mxu0 %v617
  %v905 = vpop.f32.mrb[0].mxu0
  %v906 = vadd.f32 %v351, %v905
  %v907 = vpop.f32.mrb[0].mxu0
  %v908 = vpop.f32.mrb[0].mxu0
  %v909 = vadd.f32 %v351, %v908
  %v910 = vpop.f32.mrb[0].mxu0
  %911 = vdwg.mxu0
  %vm976 = vcmask 1046528
  %v977 = vrot.slane %v658, 1
  %v978 = vrot.slane %v661, 1
  %v979 = vsel %vm976, %v977, %v978
  %v980 = vrot.slane %v666, 1
  %v981 = vsel %vm976, %v978, %v980
  %v982 = vrot.slane %v669, 1
  %v983 = vsel %vm976, %v980, %v982
  %v984 = vrot.slane %v674, 1
  %v985 = vsel %vm976, %v982, %v984
  %v986 = vrot.slane %v677, 1
  %v987 = vsel %vm976, %v984, %v986
  %v988 = vrot.slane %v682, 1
  %v989 = vsel %vm976, %v986, %v988
  %v990 = vrot.slane %v685, 1
  %v991 = vsel %vm976, %v988, %v990
  %v992 = vrot.slane %v690, 1
  %v993 = vsel %vm976, %v990, %v992
  %v994 = vrot.slane %v693, 1
  %v995 = vsel %vm976, %v992, %v994
  %v996 = vrot.slane %v698, 1
  %v997 = vsel %vm976, %v994, %v996
  %v998 = vrot.slane %v701, 1
  %v999 = vsel %vm976, %v996, %v998
  %v1000 = vrot.slane %v706, 1
  %v1001 = vsel %vm976, %v998, %v1000
  %v1002 = vrot.slane %v709, 1
  %v1003 = vsel %vm976, %v1000, %v1002
  %v1004 = vrot.slane %v714, 1
  %v1005 = vsel %vm976, %v1002, %v1004
  %v1006 = vrot.slane %v717, 1
  %v1007 = vsel %vm976, %v1004, %v1006
  %v1008 = vrot.slane %v722, 1
  %v1009 = vsel %vm976, %v1006, %v1008
  %v1010 = vrot.slane %v725, 1
  %v1011 = vsel %vm976, %v1008, %v1010
  %v1012 = vrot.slane %v730, 1
  %v1013 = vsel %vm976, %v1010, %v1012
  %v1014 = vrot.slane %v733, 1
  %v1015 = vsel %vm976, %v1012, %v1014
  %v1016 = vrot.slane %v738, 1
  %v1017 = vsel %vm976, %v1014, %v1016
  %v1018 = vrot.slane %v741, 1
  %v1019 = vsel %vm976, %v1016, %v1018
  %v1020 = vrot.slane %v746, 1
  %v1021 = vsel %vm976, %v1018, %v1020
  %v1022 = vrot.slane %v749, 1
  %v1023 = vsel %vm976, %v1020, %v1022
  %v1024 = vrot.slane %v754, 1
  %v1025 = vsel %vm976, %v1022, %v1024
  %v1026 = vrot.slane %v757, 1
  %v1027 = vsel %vm976, %v1024, %v1026
  %v1028 = vrot.slane %v762, 1
  %v1029 = vsel %vm976, %v1026, %v1028
  %v1030 = vrot.slane %v765, 1
  %v1031 = vsel %vm976, %v1028, %v1030
  %v1032 = vrot.slane %v770, 1
  %v1033 = vsel %vm976, %v1030, %v1032
  %v1034 = vrot.slane %v773, 1
  %v1035 = vsel %vm976, %v1032, %v1034
  %v1036 = vrot.slane %v778, 1
  %v1037 = vsel %vm976, %v1034, %v1036
  %v1038 = vrot.slane %v781, 1
  %v1039 = vsel %vm976, %v1036, %v1038
  %v1040 = vrot.slane %v786, 1
  %v1041 = vsel %vm976, %v1038, %v1040
  %v1042 = vrot.slane %v789, 1
  %v1043 = vsel %vm976, %v1040, %v1042
  %v1044 = vrot.slane %v794, 1
  %v1045 = vsel %vm976, %v1042, %v1044
  %v1046 = vrot.slane %v797, 1
  %v1047 = vsel %vm976, %v1044, %v1046
  %v1048 = vrot.slane %v802, 1
  %v1049 = vsel %vm976, %v1046, %v1048
  %v1050 = vrot.slane %v805, 1
  %v1051 = vsel %vm976, %v1048, %v1050
  %v1052 = vrot.slane %v810, 1
  %v1053 = vsel %vm976, %v1050, %v1052
  %v1054 = vrot.slane %v813, 1
  %v1055 = vsel %vm976, %v1052, %v1054
  %v1056 = vrot.slane %v818, 1
  %v1057 = vsel %vm976, %v1054, %v1056
  %v1058 = vrot.slane %v821, 1
  %v1059 = vsel %vm976, %v1056, %v1058
  %v1060 = vrot.slane %v826, 1
  %v1061 = vsel %vm976, %v1058, %v1060
  %v1062 = vrot.slane %v829, 1
  %v1063 = vsel %vm976, %v1060, %v1062
  %v1064 = vrot.slane %v834, 1
  %v1065 = vsel %vm976, %v1062, %v1064
  %v1066 = vrot.slane %v837, 1
  %v1067 = vsel %vm976, %v1064, %v1066
  %v1068 = vrot.slane %v842, 1
  %v1069 = vsel %vm976, %v1066, %v1068
  %v1070 = vrot.slane %v845, 1
  %v1071 = vsel %vm976, %v1068, %v1070
  %v1072 = vrot.slane %v850, 1
  %v1073 = vsel %vm976, %v1070, %v1072
  %v1074 = vrot.slane %v853, 1
  %v1075 = vsel %vm976, %v1072, %v1074
  %v1076 = vrot.slane %v858, 1
  %v1077 = vsel %vm976, %v1074, %v1076
  %v1078 = vrot.slane %v861, 1
  %v1079 = vsel %vm976, %v1076, %v1078
  %v1080 = vrot.slane %v866, 1
  %v1081 = vsel %vm976, %v1078, %v1080
  %v1082 = vrot.slane %v869, 1
  %v1083 = vsel %vm976, %v1080, %v1082
  %v1084 = vrot.slane %v874, 1
  %v1085 = vsel %vm976, %v1082, %v1084
  %v1086 = vrot.slane %v877, 1
  %v1087 = vsel %vm976, %v1084, %v1086
  %v1088 = vrot.slane %v882, 1
  %v1089 = vsel %vm976, %v1086, %v1088
  %v1090 = vrot.slane %v885, 1
  %v1091 = vsel %vm976, %v1088, %v1090
  %v1092 = vrot.slane %v890, 1
  %v1093 = vsel %vm976, %v1090, %v1092
  %v1094 = vrot.slane %v893, 1
  %v1095 = vsel %vm976, %v1092, %v1094
  %v1096 = vrot.slane %v898, 1
  %v1097 = vsel %vm976, %v1094, %v1096
  %v1098 = vrot.slane %v901, 1
  %v1099 = vsel %vm976, %v1096, %v1098
  %v1100 = vrot.slane %v906, 1
  %v1101 = vsel %vm976, %v1098, %v1100
  %v1102 = vrot.slane %v909, 1
  %v1103 = vsel %vm976, %v1100, %v1102
  %v1168 = vmax.f32 %v658, %v979
  %v1169 = vmax.f32 %v661, %v981
  %v1170 = vmax.f32 %v666, %v983
  %v1171 = vmax.f32 %v669, %v985
  %v1172 = vmax.f32 %v674, %v987
  %v1173 = vmax.f32 %v677, %v989
  %v1174 = vmax.f32 %v682, %v991
  %v1175 = vmax.f32 %v685, %v993
  %v1176 = vmax.f32 %v690, %v995
  %v1177 = vmax.f32 %v693, %v997
  %v1178 = vmax.f32 %v698, %v999
  %v1179 = vmax.f32 %v701, %v1001
  %v1180 = vmax.f32 %v706, %v1003
  %v1181 = vmax.f32 %v709, %v1005
  %v1182 = vmax.f32 %v714, %v1007
  %v1183 = vmax.f32 %v717, %v1009
  %v1184 = vmax.f32 %v722, %v1011
  %v1185 = vmax.f32 %v725, %v1013
  %v1186 = vmax.f32 %v730, %v1015
  %v1187 = vmax.f32 %v733, %v1017
  %v1188 = vmax.f32 %v738, %v1019
  %v1189 = vmax.f32 %v741, %v1021
  %v1190 = vmax.f32 %v746, %v1023
  %v1191 = vmax.f32 %v749, %v1025
  %v1192 = vmax.f32 %v754, %v1027
  %v1193 = vmax.f32 %v757, %v1029
  %v1194 = vmax.f32 %v762, %v1031
  %v1195 = vmax.f32 %v765, %v1033
  %v1196 = vmax.f32 %v770, %v1035
  %v1197 = vmax.f32 %v773, %v1037
  %v1198 = vmax.f32 %v778, %v1039
  %v1199 = vmax.f32 %v781, %v1041
  %v1200 = vmax.f32 %v786, %v1043
  %v1201 = vmax.f32 %v789, %v1045
  %v1202 = vmax.f32 %v794, %v1047
  %v1203 = vmax.f32 %v797, %v1049
  %v1204 = vmax.f32 %v802, %v1051
  %v1205 = vmax.f32 %v805, %v1053
  %v1206 = vmax.f32 %v810, %v1055
  %v1207 = vmax.f32 %v813, %v1057
  %v1208 = vmax.f32 %v818, %v1059
  %v1209 = vmax.f32 %v821, %v1061
  %v1210 = vmax.f32 %v826, %v1063
  %v1211 = vmax.f32 %v829, %v1065
  %v1212 = vmax.f32 %v834, %v1067
  %v1213 = vmax.f32 %v837, %v1069
  %v1214 = vmax.f32 %v842, %v1071
  %v1215 = vmax.f32 %v845, %v1073
  %v1216 = vmax.f32 %v850, %v1075
  %v1217 = vmax.f32 %v853, %v1077
  %v1218 = vmax.f32 %v858, %v1079
  %v1219 = vmax.f32 %v861, %v1081
  %v1220 = vmax.f32 %v866, %v1083
  %v1221 = vmax.f32 %v869, %v1085
  %v1222 = vmax.f32 %v874, %v1087
  %v1223 = vmax.f32 %v877, %v1089
  %v1224 = vmax.f32 %v882, %v1091
  %v1225 = vmax.f32 %v885, %v1093
  %v1226 = vmax.f32 %v890, %v1095
  %v1227 = vmax.f32 %v893, %v1097
  %v1228 = vmax.f32 %v898, %v1099
  %v1229 = vmax.f32 %v901, %v1101
  %v1230 = vmax.f32 %v906, %v1103
  %v1231 = vmax.f32 %v909, %v1102
  %v1232 = vmax.f32 %v1168, %v1170
  %v1233 = vmax.f32 %v1169, %v1171
  %v1234 = vmax.f32 %v1170, %v1172
  %v1235 = vmax.f32 %v1171, %v1173
  %v1236 = vmax.f32 %v1172, %v1174
  %v1237 = vmax.f32 %v1173, %v1175
  %v1238 = vmax.f32 %v1174, %v1176
  %v1239 = vmax.f32 %v1175, %v1177
  %v1240 = vmax.f32 %v1176, %v1178
  %v1241 = vmax.f32 %v1177, %v1179
  %v1242 = vmax.f32 %v1178, %v1180
  %v1243 = vmax.f32 %v1179, %v1181
  %v1244 = vmax.f32 %v1180, %v1182
  %v1245 = vmax.f32 %v1181, %v1183
  %v1246 = vmax.f32 %v1182, %v1184
  %v1247 = vmax.f32 %v1183, %v1185
  %v1248 = vmax.f32 %v1184, %v1186
  %v1249 = vmax.f32 %v1185, %v1187
  %v1250 = vmax.f32 %v1186, %v1188
  %v1251 = vmax.f32 %v1187, %v1189
  %v1252 = vmax.f32 %v1188, %v1190
  %v1253 = vmax.f32 %v1189, %v1191
  %v1254 = vmax.f32 %v1190, %v1192
  %v1255 = vmax.f32 %v1191, %v1193
  %v1256 = vmax.f32 %v1192, %v1194
  %v1257 = vmax.f32 %v1193, %v1195
  %v1258 = vmax.f32 %v1194, %v1196
  %v1259 = vmax.f32 %v1195, %v1197
  %v1260 = vmax.f32 %v1196, %v1198
  %v1261 = vmax.f32 %v1197, %v1199
  %v1262 = vmax.f32 %v1198, %v1200
  %v1263 = vmax.f32 %v1199, %v1201
  %v1264 = vmax.f32 %v1200, %v1202
  %v1265 = vmax.f32 %v1201, %v1203
  %v1266 = vmax.f32 %v1202, %v1204
  %v1267 = vmax.f32 %v1203, %v1205
  %v1268 = vmax.f32 %v1204, %v1206
  %v1269 = vmax.f32 %v1205, %v1207
  %v1270 = vmax.f32 %v1206, %v1208
  %v1271 = vmax.f32 %v1207, %v1209
  %v1272 = vmax.f32 %v1208, %v1210
  %v1273 = vmax.f32 %v1209, %v1211
  %v1274 = vmax.f32 %v1210, %v1212
  %v1275 = vmax.f32 %v1211, %v1213
  %v1276 = vmax.f32 %v1212, %v1214
  %v1277 = vmax.f32 %v1213, %v1215
  %v1278 = vmax.f32 %v1214, %v1216
  %v1279 = vmax.f32 %v1215, %v1217
  %v1280 = vmax.f32 %v1216, %v1218
  %v1281 = vmax.f32 %v1217, %v1219
  %v1282 = vmax.f32 %v1218, %v1220
  %v1283 = vmax.f32 %v1219, %v1221
  %v1284 = vmax.f32 %v1220, %v1222
  %v1285 = vmax.f32 %v1221, %v1223
  %v1286 = vmax.f32 %v1222, %v1224
  %v1287 = vmax.f32 %v1223, %v1225
  %v1288 = vmax.f32 %v1224, %v1226
  %v1289 = vmax.f32 %v1225, %v1227
  %v1290 = vmax.f32 %v1226, %v1228
  %v1291 = vmax.f32 %v1227, %v1229
  %v1292 = vmax.f32 %v1228, %v1230
  %v1293 = vmax.f32 %v1229, %v1231
  %v1294 = vmax.f32 %v1232, 0.0
  %v1295 = vmax.f32 %v1233, 0.0
  %v1296 = vmax.f32 %v1234, 0.0
  %v1297 = vmax.f32 %v1235, 0.0
  %v1298 = vmax.f32 %v1236, 0.0
  %v1299 = vmax.f32 %v1237, 0.0
  %v1300 = vmax.f32 %v1238, 0.0
  %v1301 = vmax.f32 %v1239, 0.0
  %v1302 = vmax.f32 %v1240, 0.0
  %v1303 = vmax.f32 %v1241, 0.0
  %v1304 = vmax.f32 %v1242, 0.0
  %v1305 = vmax.f32 %v1243, 0.0
  %v1306 = vmax.f32 %v1244, 0.0
  %v1307 = vmax.f32 %v1245, 0.0
  %v1308 = vmax.f32 %v1246, 0.0
  %v1309 = vmax.f32 %v1247, 0.0
  %v1310 = vmax.f32 %v1248, 0.0
  %v1311 = vmax.f32 %v1249, 0.0
  %v1312 = vmax.f32 %v1250, 0.0
  %v1313 = vmax.f32 %v1251, 0.0
  %v1314 = vmax.f32 %v1252, 0.0
  %v1315 = vmax.f32 %v1253, 0.0
  %v1316 = vmax.f32 %v1254, 0.0
  %v1317 = vmax.f32 %v1255, 0.0
  %v1318 = vmax.f32 %v1256, 0.0
  %v1319 = vmax.f32 %v1257, 0.0
  %v1320 = vmax.f32 %v1258, 0.0
  %v1321 = vmax.f32 %v1259, 0.0
  %v1322 = vmax.f32 %v1260, 0.0
  %v1323 = vmax.f32 %v1261, 0.0
  %v1324 = vmax.f32 %v1262, 0.0
  %v1325 = vmax.f32 %v1263, 0.0
  %v1326 = vmax.f32 %v1264, 0.0
  %v1327 = vmax.f32 %v1265, 0.0
  %v1328 = vmax.f32 %v1266, 0.0
  %v1329 = vmax.f32 %v1267, 0.0
  %v1330 = vmax.f32 %v1268, 0.0
  %v1331 = vmax.f32 %v1269, 0.0
  %v1332 = vmax.f32 %v1270, 0.0
  %v1333 = vmax.f32 %v1271, 0.0
  %v1334 = vmax.f32 %v1272, 0.0
  %v1335 = vmax.f32 %v1273, 0.0
  %v1336 = vmax.f32 %v1274, 0.0
  %v1337 = vmax.f32 %v1275, 0.0
  %v1338 = vmax.f32 %v1276, 0.0
  %v1339 = vmax.f32 %v1277, 0.0
  %v1340 = vmax.f32 %v1278, 0.0
  %v1341 = vmax.f32 %v1279, 0.0
  %v1342 = vmax.f32 %v1280, 0.0
  %v1343 = vmax.f32 %v1281, 0.0
  %v1344 = vmax.f32 %v1282, 0.0
  %v1345 = vmax.f32 %v1283, 0.0
  %v1346 = vmax.f32 %v1284, 0.0
  %v1347 = vmax.f32 %v1285, 0.0
  %v1348 = vmax.f32 %v1286, 0.0
  %v1349 = vmax.f32 %v1287, 0.0
  %v1350 = vmax.f32 %v1288, 0.0
  %v1351 = vmax.f32 %v1289, 0.0
  %v1352 = vmax.f32 %v1290, 0.0
  %v1353 = vmax.f32 %v1291, 0.0
  %v1354 = vmax.f32 %v1292, 0.0
  %v1355 = vmax.f32 %v1293, 0.0
  %1356 = vst.msk [vmem:[#allocation7] sm:$0xff] %vm47, %v1294
  %1357 = vst.msk [vmem:[#allocation7 + $0x8] sm:$0xff] %vm47, %v1295
  %1358 = vst.msk [vmem:[#allocation7 + $0x10] sm:$0xff] %vm47, %v1296
  %1359 = vst.msk [vmem:[#allocation7 + $0x18] sm:$0xff] %vm47, %v1297
  %1360 = vst.msk [vmem:[#allocation7 + $0x20] sm:$0xff] %vm47, %v1298
  %1361 = vst.msk [vmem:[#allocation7 + $0x28] sm:$0xff] %vm47, %v1299
  %1362 = vst.msk [vmem:[#allocation7 + $0x30] sm:$0xff] %vm47, %v1300
  %1363 = vst.msk [vmem:[#allocation7 + $0x38] sm:$0xff] %vm47, %v1301
  %1364 = vst.msk [vmem:[#allocation7 + $0x40] sm:$0xff] %vm47, %v1302
  %1365 = vst.msk [vmem:[#allocation7 + $0x48] sm:$0xff] %vm47, %v1303
  %1366 = vst.msk [vmem:[#allocation7 + $0x50] sm:$0xff] %vm47, %v1304
  %1367 = vst.msk [vmem:[#allocation7 + $0x58] sm:$0xff] %vm47, %v1305
  %1368 = vst.msk [vmem:[#allocation7 + $0x60] sm:$0xff] %vm47, %v1306
  %1369 = vst.msk [vmem:[#allocation7 + $0x68] sm:$0xff] %vm47, %v1307
  %1370 = vst.msk [vmem:[#allocation7 + $0x70] sm:$0xff] %vm47, %v1308
  %1371 = vst.msk [vmem:[#allocation7 + $0x78] sm:$0xff] %vm47, %v1309
  %1372 = vst.msk [vmem:[#allocation7 + $0x80] sm:$0xff] %vm47, %v1310
  %1373 = vst.msk [vmem:[#allocation7 + $0x88] sm:$0xff] %vm47, %v1311
  %1374 = vst.msk [vmem:[#allocation7 + $0x90] sm:$0xff] %vm47, %v1312
  %1375 = vst.msk [vmem:[#allocation7 + $0x98] sm:$0xff] %vm47, %v1313
  %1376 = vst.msk [vmem:[#allocation7 + $0xa0] sm:$0xff] %vm47, %v1314
  %1377 = vst.msk [vmem:[#allocation7 + $0xa8] sm:$0xff] %vm47, %v1315
  %1378 = vst.msk [vmem:[#allocation7 + $0xb0] sm:$0xff] %vm47, %v1316
  %1379 = vst.msk [vmem:[#allocation7 + $0xb8] sm:$0xff] %vm47, %v1317
  %1380 = vst.msk [vmem:[#allocation7 + $0xc0] sm:$0xff] %vm47, %v1318
  %1381 = vst.msk [vmem:[#allocation7 + $0xc8] sm:$0xff] %vm47, %v1319
  %1382 = vst.msk [vmem:[#allocation7 + $0xd0] sm:$0xff] %vm47, %v1320
  %1383 = vst.msk [vmem:[#allocation7 + $0xd8] sm:$0xff] %vm47, %v1321
  %1384 = vst.msk [vmem:[#allocation7 + $0xe0] sm:$0xff] %vm47, %v1322
  %1385 = vst.msk [vmem:[#allocation7 + $0xe8] sm:$0xff] %vm47, %v1323
  %1386 = vst.msk [vmem:[#allocation7 + $0xf0] sm:$0xff] %vm47, %v1324
  %1387 = vst.msk [vmem:[#allocation7 + $0xf8] sm:$0xff] %vm47, %v1325
  %1388 = vst.msk [vmem:[#allocation7 + $0x100] sm:$0xff] %vm47, %v1326
  %1389 = vst.msk [vmem:[#allocation7 + $0x108] sm:$0xff] %vm47, %v1327
  %1390 = vst.msk [vmem:[#allocation7 + $0x110] sm:$0xff] %vm47, %v1328
  %1391 = vst.msk [vmem:[#allocation7 + $0x118] sm:$0xff] %vm47, %v1329
  %1392 = vst.msk [vmem:[#allocation7 + $0x120] sm:$0xff] %vm47, %v1330
  %1393 = vst.msk [vmem:[#allocation7 + $0x128] sm:$0xff] %vm47, %v1331
  %1394 = vst.msk [vmem:[#allocation7 + $0x130] sm:$0xff] %vm47, %v1332
  %1395 = vst.msk [vmem:[#allocation7 + $0x138] sm:$0xff] %vm47, %v1333
  %1396 = vst.msk [vmem:[#allocation7 + $0x140] sm:$0xff] %vm47, %v1334
  %1397 = vst.msk [vmem:[#allocation7 + $0x148] sm:$0xff] %vm47, %v1335
  %1398 = vst.msk [vmem:[#allocation7 + $0x150] sm:$0xff] %vm47, %v1336
  %1399 = vst.msk [vmem:[#allocation7 + $0x158] sm:$0xff] %vm47, %v1337
  %1400 = vst.msk [vmem:[#allocation7 + $0x160] sm:$0xff] %vm47, %v1338
  %1401 = vst.msk [vmem:[#allocation7 + $0x168] sm:$0xff] %vm47, %v1339
  %1402 = vst.msk [vmem:[#allocation7 + $0x170] sm:$0xff] %vm47, %v1340
  %1403 = vst.msk [vmem:[#allocation7 + $0x178] sm:$0xff] %vm47, %v1341
  %1404 = vst.msk [vmem:[#allocation7 + $0x180] sm:$0xff] %vm47, %v1342
  %1405 = vst.msk [vmem:[#allocation7 + $0x188] sm:$0xff] %vm47, %v1343
  %1406 = vst.msk [vmem:[#allocation7 + $0x190] sm:$0xff] %vm47, %v1344
  %1407 = vst.msk [vmem:[#allocation7 + $0x198] sm:$0xff] %vm47, %v1345
  %1408 = vst.msk [vmem:[#allocation7 + $0x1a0] sm:$0xff] %vm47, %v1346
  %1409 = vst.msk [vmem:[#allocation7 + $0x1a8] sm:$0xff] %vm47, %v1347
  %1410 = vst.msk [vmem:[#allocation7 + $0x1b0] sm:$0xff] %vm47, %v1348
  %1411 = vst.msk [vmem:[#allocation7 + $0x1b8] sm:$0xff] %vm47, %v1349
  %1412 = vst.msk [vmem:[#allocation7 + $0x1c0] sm:$0xff] %vm47, %v1350
  %1413 = vst.msk [vmem:[#allocation7 + $0x1c8] sm:$0xff] %vm47, %v1351
  %1414 = vst.msk [vmem:[#allocation7 + $0x1d0] sm:$0xff] %vm47, %v1352
  %1415 = vst.msk [vmem:[#allocation7 + $0x1d8] sm:$0xff] %vm47, %v1353
  %1416 = vst.msk [vmem:[#allocation7 + $0x1e0] sm:$0xff] %vm47, %v1354
  %vm1417 = vcmask 260096
  %1418 = vst.msk [vmem:[#allocation7 + $0x1e8] sm:$0x7f] %vm1417, %v1355
  %v1419 = vld [vmem:[#allocation7] ss:$2 sm:$0xff]
  %1420 = vst.msk [vmem:[#allocation2 + $0x11] sm:$0xff] %vm47, %v1419
  %s1421 = scalar_lea.vmem [#allocation7], 32
  %v1422 = vld [vmem:[%s1421] ss:$2 sm:$0xff]
  %1423 = vst.msk [vmem:[#allocation2 + $0x21] sm:$0xff] %vm47, %v1422
  %s1424 = scalar_lea.vmem [#allocation7], 64
  %v1425 = vld [vmem:[%s1424] ss:$2 sm:$0xff]
  %1426 = vst.msk [vmem:[#allocation2 + $0x31] sm:$0xff] %vm47, %v1425
  %s1427 = scalar_lea.vmem [#allocation7], 96
  %v1428 = vld [vmem:[%s1427] ss:$2 sm:$0xff]
  %1429 = vst.msk [vmem:[#allocation2 + $0x41] sm:$0xff] %vm47, %v1428
  %s1430 = scalar_lea.vmem [#allocation7], 128
  %v1431 = vld [vmem:[%s1430] ss:$2 sm:$0xff]
  %1432 = vst.msk [vmem:[#allocation2 + $0x51] sm:$0xff] %vm47, %v1431
  %s1433 = scalar_lea.vmem [#allocation7], 160
  %v1434 = vld [vmem:[%s1433] ss:$2 sm:$0xff]
  %1435 = vst.msk [vmem:[#allocation2 + $0x61] sm:$0xff] %vm47, %v1434
  %s1436 = scalar_lea.vmem [#allocation7], 192
  %v1437 = vld [vmem:[%s1436] ss:$2 sm:$0xff]
  %1438 = vst.msk [vmem:[#allocation2 + $0x71] sm:$0xff] %vm47, %v1437
  %s1439 = scalar_lea.vmem [#allocation7], 224
  %v1440 = vld [vmem:[%s1439] ss:$2 sm:$0xff]
  %1441 = vst.msk [vmem:[#allocation2 + $0x81] sm:$0xff] %vm47, %v1440
  %s1442 = scalar_lea.vmem [#allocation7], 256
  %v1443 = vld [vmem:[%s1442] ss:$2 sm:$0xff]
  %1444 = vst.msk [vmem:[#allocation2 + $0xc1] sm:$0xff] %vm47, %v1443
  %s1445 = scalar_lea.vmem [#allocation7], 288
  %v1446 = vld [vmem:[%s1445] ss:$2 sm:$0xff]
  %1447 = vst.msk [vmem:[#allocation2 + $0xd1] sm:$0xff] %vm47, %v1446
  %s1448 = scalar_lea.vmem [#allocation7], 320
  %v1449 = vld [vmem:[%s1448] ss:$2 sm:$0xff]
  %1450 = vst.msk [vmem:[#allocation2 + $0xe1] sm:$0xff] %vm47, %v1449
  %s1451 = scalar_lea.vmem [#allocation7], 352
  %v1452 = vld [vmem:[%s1451] ss:$2 sm:$0xff]
  %1453 = vst.msk [vmem:[#allocation2 + $0xf1] sm:$0xff] %vm47, %v1452
  %s1454 = scalar_lea.vmem [#allocation7], 384
  %v1455 = vld [vmem:[%s1454] ss:$2 sm:$0xff]
  %1456 = vst.msk [vmem:[#allocation2 + $0x101] sm:$0xff] %vm47, %v1455
  %s1457 = scalar_lea.vmem [#allocation7], 416
  %v1458 = vld [vmem:[%s1457] ss:$2 sm:$0xff]
  %1459 = vst.msk [vmem:[#allocation2 + $0x111] sm:$0xff] %vm47, %v1458
  %s1460 = scalar_lea.vmem [#allocation7], 448
  %v1461 = vld [vmem:[%s1460] ss:$2 sm:$0xff]
  %1462 = vst.msk [vmem:[#allocation2 + $0x121] sm:$0xff] %vm47, %v1461
  %s1463 = scalar_lea.vmem [#allocation7], 480
  %v1464 = vld [vmem:[%s1463] ss:$2 sm:$0xff]
  %1465 = vst.msk [vmem:[#allocation2 + $0x131] sm:$0xff] %vm47, %v1464
  %v1466 = vld [vmem:[#allocation2] sm:$0xff]
  %v1467 = vld [vmem:[#allocation2 + $0x8] sm:$0xff]
  %v1468 = vld [vmem:[#allocation2 + $0x10] sm:$0xff]
  %v1469 = vld [vmem:[#allocation2 + $0x18] sm:$0xff]
  %v1470 = vld [vmem:[#allocation2 + $0x20] sm:$0xff]
  %v1471 = vld [vmem:[#allocation2 + $0x28] sm:$0xff]
  %v1472 = vld [vmem:[#allocation2 + $0x30] sm:$0xff]
  %v1473 = vld [vmem:[#allocation2 + $0x38] sm:$0xff]
  %v1474 = vld [vmem:[#allocation2 + $0x40] sm:$0xff]
  %v1475 = vld [vmem:[#allocation2 + $0x48] sm:$0xff]
  %v1476 = vld [vmem:[#allocation2 + $0x50] sm:$0xff]
  %v1477 = vld [vmem:[#allocation2 + $0x58] sm:$0xff]
  %v1478 = vld [vmem:[#allocation2 + $0x60] sm:$0xff]
  %v1479 = vld [vmem:[#allocation2 + $0x68] sm:$0xff]
  %v1480 = vld [vmem:[#allocation2 + $0x70] sm:$0xff]
  %v1481 = vld [vmem:[#allocation2 + $0x78] sm:$0xff]
  %v1482 = vld [vmem:[#allocation2 + $0x80] sm:$0xff]
  %v1483 = vld [vmem:[#allocation2 + $0x88] sm:$0xff]
  %v1484 = vld [vmem:[#allocation2 + $0x90] sm:$0xff]
  %v1485 = vld [vmem:[#allocation2 + $0x98] sm:$0xff]
  %v1486 = vld [vmem:[#allocation2 + $0xa0] sm:$0xff]
  %v1487 = vld [vmem:[#allocation2 + $0xa8] sm:$0xff]
  %v1488 = vld [vmem:[#allocation2 + $0xb0] sm:$0xff]
  %v1489 = vld [vmem:[#allocation2 + $0xb8] sm:$0xff]
  %v1490 = vld [vmem:[#allocation2 + $0xc0] sm:$0xff]
  %v1491 = vld [vmem:[#allocation2 + $0xc8] sm:$0xff]
  %v1492 = vld [vmem:[#allocation2 + $0xd0] sm:$0xff]
  %v1493 = vld [vmem:[#allocation2 + $0xd8] sm:$0xff]
  %v1494 = vld [vmem:[#allocation2 + $0xe0] sm:$0xff]
  %v1495 = vld [vmem:[#allocation2 + $0xe8] sm:$0xff]
  %v1496 = vld [vmem:[#allocation2 + $0xf0] sm:$0xff]
  %v1497 = vld [vmem:[#allocation2 + $0xf8] sm:$0xff]
  %v1498 = vld [vmem:[#allocation2 + $0x100] sm:$0xff]
  %v1499 = vld [vmem:[#allocation2 + $0x108] sm:$0xff]
  %v1500 = vld [vmem:[#allocation2 + $0x110] sm:$0xff]
  %v1501 = vld [vmem:[#allocation2 + $0x118] sm:$0xff]
  %v1502 = vld [vmem:[#allocation2 + $0x120] sm:$0xff]
  %v1503 = vld [vmem:[#allocation2 + $0x128] sm:$0xff]
  %v1504 = vld [vmem:[#allocation2 + $0x130] sm:$0xff]
  %v1505 = vld [vmem:[#allocation2 + $0x138] sm:$0xff]
  %v1506 = vld [vmem:[#allocation2 + $0x140] sm:$0xff]
  %v1507 = vld [vmem:[#allocation2 + $0x148] sm:$0xff]
  %v1508 = vld [vmem:[#allocation2 + $0x150] sm:$0xff]
  %v1509 = vpack.c.bf16 %v1467, %v1466
  %v1510 = vpack.c.bf16 %v1469, %v1468
  %v1511 = vpack.c.bf16 %v1471, %v1470
  %v1512 = vpack.c.bf16 %v1473, %v1472
  %v1513 = vpack.c.bf16 %v1475, %v1474
  %v1514 = vpack.c.bf16 %v1477, %v1476
  %v1515 = vpack.c.bf16 %v1479, %v1478
  %v1516 = vpack.c.bf16 %v1481, %v1480
  %v1517 = vpack.c.bf16 %v1483, %v1482
  %v1518 = vpack.c.bf16 %v1485, %v1484
  %v1519 = vpack.c.bf16 %v1487, %v1486
  %v1520 = vpack.c.bf16 %v1489, %v1488
  %v1521 = vpack.c.bf16 %v1491, %v1490
  %v1522 = vpack.c.bf16 %v1493, %v1492
  %v1523 = vpack.c.bf16 %v1495, %v1494
  %v1524 = vpack.c.bf16 %v1497, %v1496
  %v1525 = vpack.c.bf16 %v1499, %v1498
  %v1526 = vpack.c.bf16 %v1501, %v1500
  %v1527 = vpack.c.bf16 %v1503, %v1502
  %v1528 = vpack.c.bf16 %v1504, %v1504
  %v1529 = vpack.c.bf16 %v1505, %v1504
  %v1530 = vpack.c.bf16 %v1506, %v1506
  %v1531 = vpack.c.bf16 %v1507, %v1506
  %v1532 = vpack.c.bf16 %v1508, %v1508
  %vm1533 = vsmask.f32 7424
  %v1535 = vshrl.u32 %v1509, 16
  %v1537 = vshll.u32 %v1509, 16
  %v1539 = vrot.slane %v1537, 1
  %v1540 = vor.u32 %v1535, %v1539
  %v1542 = vshll.u32 %v1510, 16
  %v1544 = vrot.slane %v1542, 1
  %v1545 = vsel %vm1533, %v1540, %v1544
  %v1546 = vshrl.u32 %v1510, 16
  %v1548 = vor.u32 %v1546, %v1544
  %v1550 = vshll.u32 %v1511, 16
  %v1552 = vrot.slane %v1550, 1
  %v1553 = vsel %vm1533, %v1548, %v1552
  %v1554 = vshrl.u32 %v1511, 16
  %v1556 = vor.u32 %v1554, %v1552
  %v1558 = vshll.u32 %v1512, 16
  %v1560 = vrot.slane %v1558, 1
  %v1561 = vsel %vm1533, %v1556, %v1560
  %v1562 = vshrl.u32 %v1512, 16
  %v1564 = vor.u32 %v1562, %v1560
  %v1566 = vshll.u32 %v1513, 16
  %v1568 = vrot.slane %v1566, 1
  %v1569 = vsel %vm1533, %v1564, %v1568
  %v1570 = vshrl.u32 %v1513, 16
  %v1572 = vor.u32 %v1570, %v1568
  %v1574 = vshll.u32 %v1514, 16
  %v1576 = vrot.slane %v1574, 1
  %v1577 = vsel %vm1533, %v1572, %v1576
  %v1578 = vshrl.u32 %v1514, 16
  %v1580 = vor.u32 %v1578, %v1576
  %v1582 = vshll.u32 %v1515, 16
  %v1584 = vrot.slane %v1582, 1
  %v1585 = vsel %vm1533, %v1580, %v1584
  %v1586 = vshrl.u32 %v1515, 16
  %v1588 = vor.u32 %v1586, %v1584
  %v1590 = vshll.u32 %v1516, 16
  %v1592 = vrot.slane %v1590, 1
  %v1593 = vsel %vm1533, %v1588, %v1592
  %v1594 = vshrl.u32 %v1516, 16
  %v1596 = vor.u32 %v1594, %v1592
  %v1598 = vshll.u32 %v1517, 16
  %v1600 = vrot.slane %v1598, 1
  %v1601 = vsel %vm1533, %v1596, %v1600
  %v1602 = vshrl.u32 %v1517, 16
  %v1604 = vor.u32 %v1602, %v1600
  %v1606 = vshll.u32 %v1518, 16
  %v1608 = vrot.slane %v1606, 1
  %v1609 = vsel %vm1533, %v1604, %v1608
  %v1610 = vshrl.u32 %v1518, 16
  %v1612 = vor.u32 %v1610, %v1608
  %v1614 = vshll.u32 %v1519, 16
  %v1616 = vrot.slane %v1614, 1
  %v1617 = vsel %vm1533, %v1612, %v1616
  %v1618 = vshrl.u32 %v1519, 16
  %v1620 = vor.u32 %v1618, %v1616
  %v1622 = vshll.u32 %v1520, 16
  %v1624 = vrot.slane %v1622, 1
  %v1625 = vsel %vm1533, %v1620, %v1624
  %v1626 = vshrl.u32 %v1520, 16
  %v1628 = vor.u32 %v1626, %v1624
  %v1630 = vshll.u32 %v1521, 16
  %v1632 = vrot.slane %v1630, 1
  %v1633 = vsel %vm1533, %v1628, %v1632
  %v1634 = vshrl.u32 %v1521, 16
  %v1636 = vor.u32 %v1634, %v1632
  %v1638 = vshll.u32 %v1522, 16
  %v1640 = vrot.slane %v1638, 1
  %v1641 = vsel %vm1533, %v1636, %v1640
  %v1642 = vshrl.u32 %v1522, 16
  %v1644 = vor.u32 %v1642, %v1640
  %v1646 = vshll.u32 %v1523, 16
  %v1648 = vrot.slane %v1646, 1
  %v1649 = vsel %vm1533, %v1644, %v1648
  %v1650 = vshrl.u32 %v1523, 16
  %v1652 = vor.u32 %v1650, %v1648
  %v1654 = vshll.u32 %v1524, 16
  %v1656 = vrot.slane %v1654, 1
  %v1657 = vsel %vm1533, %v1652, %v1656
  %v1658 = vshrl.u32 %v1524, 16
  %v1660 = vor.u32 %v1658, %v1656
  %v1662 = vshll.u32 %v1525, 16
  %v1664 = vrot.slane %v1662, 1
  %v1665 = vsel %vm1533, %v1660, %v1664
  %v1666 = vshrl.u32 %v1525, 16
  %v1668 = vor.u32 %v1666, %v1664
  %v1670 = vshll.u32 %v1526, 16
  %v1672 = vrot.slane %v1670, 1
  %v1673 = vsel %vm1533, %v1668, %v1672
  %v1674 = vshrl.u32 %v1526, 16
  %v1676 = vor.u32 %v1674, %v1672
  %v1678 = vshll.u32 %v1527, 16
  %v1680 = vrot.slane %v1678, 1
  %v1681 = vsel %vm1533, %v1676, %v1680
  %v1682 = vshrl.u32 %v1527, 16
  %v1684 = vor.u32 %v1682, %v1680
  %v1686 = vshll.u32 %v1528, 16
  %v1688 = vrot.slane %v1686, 1
  %v1689 = vsel %vm1533, %v1684, %v1688
  %1690 = vrot.lane.b32.xlu0 %v1545, 32
  %v1691 = vpop.permute.xlu0 %1690
  %1692 = vrot.lane.b32.xlu0 %v1553, 32
  %v1693 = vpop.permute.xlu0 %1692
  %1694 = vrot.lane.b32.xlu0 %v1561, 32
  %v1695 = vpop.permute.xlu0 %1694
  %1696 = vrot.lane.b32.xlu0 %v1569, 32
  %v1697 = vpop.permute.xlu0 %1696
  %1698 = vrot.lane.b32.xlu0 %v1577, 32
  %v1699 = vpop.permute.xlu0 %1698
  %1700 = vrot.lane.b32.xlu0 %v1585, 32
  %v1701 = vpop.permute.xlu0 %1700
  %1702 = vrot.lane.b32.xlu0 %v1593, 32
  %v1703 = vpop.permute.xlu0 %1702
  %1704 = vrot.lane.b32.xlu0 %v1601, 32
  %v1705 = vpop.permute.xlu0 %1704
  %1706 = vrot.lane.b32.xlu0 %v1609, 32
  %v1707 = vpop.permute.xlu0 %1706
  %1708 = vrot.lane.b32.xlu0 %v1617, 32
  %v1709 = vpop.permute.xlu0 %1708
  %1710 = vrot.lane.b32.xlu0 %v1625, 32
  %v1711 = vpop.permute.xlu0 %1710
  %1712 = vrot.lane.b32.xlu0 %v1633, 32
  %v1713 = vpop.permute.xlu0 %1712
  %1714 = vrot.lane.b32.xlu0 %v1641, 32
  %v1715 = vpop.permute.xlu0 %1714
  %1716 = vrot.lane.b32.xlu0 %v1649, 32
  %v1717 = vpop.permute.xlu0 %1716
  %1718 = vrot.lane.b32.xlu0 %v1657, 32
  %v1719 = vpop.permute.xlu0 %1718
  %1720 = vrot.lane.b32.xlu0 %v1665, 32
  %v1721 = vpop.permute.xlu0 %1720
  %1722 = vrot.lane.b32.xlu0 %v1673, 32
  %v1723 = vpop.permute.xlu0 %1722
  %1724 = vrot.lane.b32.xlu0 %v1681, 32
  %v1725 = vpop.permute.xlu0 %1724
  %1726 = vrot.lane.b32.xlu0 %v1689, 32
  %v1727 = vpop.permute.xlu0 %1726
  %vm1748 = vcmask 1046528
  %v1749 = vrot.slane %v1509, 1
  %v1750 = vrot.slane %v1510, 1
  %v1751 = vsel %vm1748, %v1749, %v1750
  %v1752 = vrot.slane %v1511, 1
  %v1753 = vsel %vm1748, %v1750, %v1752
  %v1754 = vrot.slane %v1512, 1
  %v1755 = vsel %vm1748, %v1752, %v1754
  %v1756 = vrot.slane %v1513, 1
  %v1757 = vsel %vm1748, %v1754, %v1756
  %v1758 = vrot.slane %v1514, 1
  %v1759 = vsel %vm1748, %v1756, %v1758
  %v1760 = vrot.slane %v1515, 1
  %v1761 = vsel %vm1748, %v1758, %v1760
  %v1762 = vrot.slane %v1516, 1
  %v1763 = vsel %vm1748, %v1760, %v1762
  %v1764 = vrot.slane %v1517, 1
  %v1765 = vsel %vm1748, %v1762, %v1764
  %v1766 = vrot.slane %v1518, 1
  %v1767 = vsel %vm1748, %v1764, %v1766
  %v1768 = vrot.slane %v1519, 1
  %v1769 = vsel %vm1748, %v1766, %v1768
  %v1770 = vrot.slane %v1520, 1
  %v1771 = vsel %vm1748, %v1768, %v1770
  %v1772 = vrot.slane %v1521, 1
  %v1773 = vsel %vm1748, %v1770, %v1772
  %v1774 = vrot.slane %v1522, 1
  %v1775 = vsel %vm1748, %v1772, %v1774
  %v1776 = vrot.slane %v1523, 1
  %v1777 = vsel %vm1748, %v1774, %v1776
  %v1778 = vrot.slane %v1524, 1
  %v1779 = vsel %vm1748, %v1776, %v1778
  %v1780 = vrot.slane %v1525, 1
  %v1781 = vsel %vm1748, %v1778, %v1780
  %v1782 = vrot.slane %v1526, 1
  %v1783 = vsel %vm1748, %v1780, %v1782
  %v1784 = vrot.slane %v1527, 1
  %v1785 = vsel %vm1748, %v1782, %v1784
  %v1786 = vrot.slane %v1528, 1
  %v1787 = vsel %vm1748, %v1784, %v1786
  %1788 = vrot.lane.b32.xlu0 %v1751, 64
  %v1789 = vpop.permute.xlu0 %1788
  %1790 = vrot.lane.b32.xlu0 %v1753, 64
  %v1791 = vpop.permute.xlu0 %1790
  %1792 = vrot.lane.b32.xlu0 %v1755, 64
  %v1793 = vpop.permute.xlu0 %1792
  %1794 = vrot.lane.b32.xlu0 %v1757, 64
  %v1795 = vpop.permute.xlu0 %1794
  %1796 = vrot.lane.b32.xlu0 %v1759, 64
  %v1797 = vpop.permute.xlu0 %1796
  %1798 = vrot.lane.b32.xlu0 %v1761, 64
  %v1799 = vpop.permute.xlu0 %1798
  %1800 = vrot.lane.b32.xlu0 %v1763, 64
  %v1801 = vpop.permute.xlu0 %1800
  %1802 = vrot.lane.b32.xlu0 %v1765, 64
  %v1803 = vpop.permute.xlu0 %1802
  %1804 = vrot.lane.b32.xlu0 %v1767, 64
  %v1805 = vpop.permute.xlu0 %1804
  %1806 = vrot.lane.b32.xlu0 %v1769, 64
  %v1807 = vpop.permute.xlu0 %1806
  %1808 = vrot.lane.b32.xlu0 %v1771, 64
  %v1809 = vpop.permute.xlu0 %1808
  %1810 = vrot.lane.b32.xlu0 %v1773, 64
  %v1811 = vpop.permute.xlu0 %1810
  %1812 = vrot.lane.b32.xlu0 %v1775, 64
  %v1813 = vpop.permute.xlu0 %1812
  %1814 = vrot.lane.b32.xlu0 %v1777, 64
  %v1815 = vpop.permute.xlu0 %1814
  %1816 = vrot.lane.b32.xlu0 %v1779, 64
  %v1817 = vpop.permute.xlu0 %1816
  %1818 = vrot.lane.b32.xlu0 %v1781, 64
  %v1819 = vpop.permute.xlu0 %1818
  %1820 = vrot.lane.b32.xlu0 %v1783, 64
  %v1821 = vpop.permute.xlu0 %1820
  %1822 = vrot.lane.b32.xlu0 %v1785, 64
  %v1823 = vpop.permute.xlu0 %1822
  %1824 = vrot.lane.b32.xlu0 %v1787, 64
  %v1825 = vpop.permute.xlu0 %1824
  %1827 = vrot.lane.b32.xlu0 %v1510, 96
  %v1828 = vpop.permute.xlu0 %1827
  %1829 = vrot.lane.b32.xlu0 %v1511, 96
  %v1830 = vpop.permute.xlu0 %1829
  %1831 = vrot.lane.b32.xlu0 %v1512, 96
  %v1832 = vpop.permute.xlu0 %1831
  %1833 = vrot.lane.b32.xlu0 %v1513, 96
  %v1834 = vpop.permute.xlu0 %1833
  %1835 = vrot.lane.b32.xlu0 %v1514, 96
  %v1836 = vpop.permute.xlu0 %1835
  %1837 = vrot.lane.b32.xlu0 %v1515, 96
  %v1838 = vpop.permute.xlu0 %1837
  %1839 = vrot.lane.b32.xlu0 %v1516, 96
  %v1840 = vpop.permute.xlu0 %1839
  %1841 = vrot.lane.b32.xlu0 %v1517, 96
  %v1842 = vpop.permute.xlu0 %1841
  %1843 = vrot.lane.b32.xlu0 %v1518, 96
  %v1844 = vpop.permute.xlu0 %1843
  %1845 = vrot.lane.b32.xlu0 %v1519, 96
  %v1846 = vpop.permute.xlu0 %1845
  %1847 = vrot.lane.b32.xlu0 %v1520, 96
  %v1848 = vpop.permute.xlu0 %1847
  %1849 = vrot.lane.b32.xlu0 %v1521, 96
  %v1850 = vpop.permute.xlu0 %1849
  %1851 = vrot.lane.b32.xlu0 %v1522, 96
  %v1852 = vpop.permute.xlu0 %1851
  %1853 = vrot.lane.b32.xlu0 %v1523, 96
  %v1854 = vpop.permute.xlu0 %1853
  %1855 = vrot.lane.b32.xlu0 %v1524, 96
  %v1856 = vpop.permute.xlu0 %1855
  %1857 = vrot.lane.b32.xlu0 %v1525, 96
  %v1858 = vpop.permute.xlu0 %1857
  %1859 = vrot.lane.b32.xlu0 %v1526, 96
  %v1860 = vpop.permute.xlu0 %1859
  %1861 = vrot.lane.b32.xlu0 %v1527, 96
  %v1862 = vpop.permute.xlu0 %1861
  %1863 = vrot.lane.b32.xlu0 %v1529, 96
  %v1864 = vpop.permute.xlu0 %1863
  %v1866 = vshll.u32 %v1529, 16
  %v1868 = vrot.slane %v1866, 1
  %v1869 = vsel %vm1533, %v1684, %v1868
  %v1870 = vshrl.u32 %v1529, 16
  %v1872 = vor.u32 %v1870, %v1868
  %v1874 = vshll.u32 %v1530, 16
  %v1876 = vrot.slane %v1874, 1
  %v1877 = vsel %vm1533, %v1872, %v1876
  %v1879 = vrot.slane %v1529, 1
  %v1880 = vsel %vm1748, %v1784, %v1879
  %v1881 = vrot.slane %v1530, 1
  %v1882 = vsel %vm1748, %v1879, %v1881
  %1883 = vrot.lane.b32.xlu0 %v1753, 32
  %v1884 = vpop.permute.xlu0 %1883
  %1885 = vrot.lane.b32.xlu0 %v1755, 32
  %v1886 = vpop.permute.xlu0 %1885
  %1887 = vrot.lane.b32.xlu0 %v1757, 32
  %v1888 = vpop.permute.xlu0 %1887
  %1889 = vrot.lane.b32.xlu0 %v1759, 32
  %v1890 = vpop.permute.xlu0 %1889
  %1891 = vrot.lane.b32.xlu0 %v1761, 32
  %v1892 = vpop.permute.xlu0 %1891
  %1893 = vrot.lane.b32.xlu0 %v1763, 32
  %v1894 = vpop.permute.xlu0 %1893
  %1895 = vrot.lane.b32.xlu0 %v1765, 32
  %v1896 = vpop.permute.xlu0 %1895
  %1897 = vrot.lane.b32.xlu0 %v1767, 32
  %v1898 = vpop.permute.xlu0 %1897
  %1899 = vrot.lane.b32.xlu0 %v1769, 32
  %v1900 = vpop.permute.xlu0 %1899
  %1901 = vrot.lane.b32.xlu0 %v1771, 32
  %v1902 = vpop.permute.xlu0 %1901
  %1903 = vrot.lane.b32.xlu0 %v1773, 32
  %v1904 = vpop.permute.xlu0 %1903
  %1905 = vrot.lane.b32.xlu0 %v1775, 32
  %v1906 = vpop.permute.xlu0 %1905
  %1907 = vrot.lane.b32.xlu0 %v1777, 32
  %v1908 = vpop.permute.xlu0 %1907
  %1909 = vrot.lane.b32.xlu0 %v1779, 32
  %v1910 = vpop.permute.xlu0 %1909
  %1911 = vrot.lane.b32.xlu0 %v1781, 32
  %v1912 = vpop.permute.xlu0 %1911
  %1913 = vrot.lane.b32.xlu0 %v1783, 32
  %v1914 = vpop.permute.xlu0 %1913
  %1915 = vrot.lane.b32.xlu0 %v1785, 32
  %v1916 = vpop.permute.xlu0 %1915
  %1917 = vrot.lane.b32.xlu0 %v1880, 32
  %v1918 = vpop.permute.xlu0 %1917
  %1919 = vrot.lane.b32.xlu0 %v1882, 32
  %v1920 = vpop.permute.xlu0 %1919
  %1922 = vrot.lane.b32.xlu0 %v1511, 64
  %v1923 = vpop.permute.xlu0 %1922
  %1924 = vrot.lane.b32.xlu0 %v1512, 64
  %v1925 = vpop.permute.xlu0 %1924
  %1926 = vrot.lane.b32.xlu0 %v1513, 64
  %v1927 = vpop.permute.xlu0 %1926
  %1928 = vrot.lane.b32.xlu0 %v1514, 64
  %v1929 = vpop.permute.xlu0 %1928
  %1930 = vrot.lane.b32.xlu0 %v1515, 64
  %v1931 = vpop.permute.xlu0 %1930
  %1932 = vrot.lane.b32.xlu0 %v1516, 64
  %v1933 = vpop.permute.xlu0 %1932
  %1934 = vrot.lane.b32.xlu0 %v1517, 64
  %v1935 = vpop.permute.xlu0 %1934
  %1936 = vrot.lane.b32.xlu0 %v1518, 64
  %v1937 = vpop.permute.xlu0 %1936
  %1938 = vrot.lane.b32.xlu0 %v1519, 64
  %v1939 = vpop.permute.xlu0 %1938
  %1940 = vrot.lane.b32.xlu0 %v1520, 64
  %v1941 = vpop.permute.xlu0 %1940
  %1942 = vrot.lane.b32.xlu0 %v1521, 64
  %v1943 = vpop.permute.xlu0 %1942
  %1944 = vrot.lane.b32.xlu0 %v1522, 64
  %v1945 = vpop.permute.xlu0 %1944
  %1946 = vrot.lane.b32.xlu0 %v1523, 64
  %v1947 = vpop.permute.xlu0 %1946
  %1948 = vrot.lane.b32.xlu0 %v1524, 64
  %v1949 = vpop.permute.xlu0 %1948
  %1950 = vrot.lane.b32.xlu0 %v1525, 64
  %v1951 = vpop.permute.xlu0 %1950
  %1952 = vrot.lane.b32.xlu0 %v1526, 64
  %v1953 = vpop.permute.xlu0 %1952
  %1954 = vrot.lane.b32.xlu0 %v1527, 64
  %v1955 = vpop.permute.xlu0 %1954
  %1956 = vrot.lane.b32.xlu0 %v1529, 64
  %v1957 = vpop.permute.xlu0 %1956
  %1958 = vrot.lane.b32.xlu0 %v1531, 64
  %v1959 = vpop.permute.xlu0 %1958
  %v1961 = vshll.u32 %v1531, 16
  %v1963 = vrot.slane %v1961, 1
  %v1964 = vsel %vm1533, %v1872, %v1963
  %v1965 = vshrl.u32 %v1531, 16
  %v1967 = vor.u32 %v1965, %v1963
  %v1969 = vshll.u32 %v1532, 16
  %v1971 = vrot.slane %v1969, 1
  %v1972 = vsel %vm1533, %v1967, %v1971
  %1973 = vrot.lane.b32.xlu0 %v1561, 96
  %v1974 = vpop.permute.xlu0 %1973
  %1975 = vrot.lane.b32.xlu0 %v1569, 96
  %v1976 = vpop.permute.xlu0 %1975
  %1977 = vrot.lane.b32.xlu0 %v1577, 96
  %v1978 = vpop.permute.xlu0 %1977
  %1979 = vrot.lane.b32.xlu0 %v1585, 96
  %v1980 = vpop.permute.xlu0 %1979
  %1981 = vrot.lane.b32.xlu0 %v1593, 96
  %v1982 = vpop.permute.xlu0 %1981
  %1983 = vrot.lane.b32.xlu0 %v1601, 96
  %v1984 = vpop.permute.xlu0 %1983
  %1985 = vrot.lane.b32.xlu0 %v1609, 96
  %v1986 = vpop.permute.xlu0 %1985
  %1987 = vrot.lane.b32.xlu0 %v1617, 96
  %v1988 = vpop.permute.xlu0 %1987
  %1989 = vrot.lane.b32.xlu0 %v1625, 96
  %v1990 = vpop.permute.xlu0 %1989
  %1991 = vrot.lane.b32.xlu0 %v1633, 96
  %v1992 = vpop.permute.xlu0 %1991
  %1993 = vrot.lane.b32.xlu0 %v1641, 96
  %v1994 = vpop.permute.xlu0 %1993
  %1995 = vrot.lane.b32.xlu0 %v1649, 96
  %v1996 = vpop.permute.xlu0 %1995
  %1997 = vrot.lane.b32.xlu0 %v1657, 96
  %v1998 = vpop.permute.xlu0 %1997
  %1999 = vrot.lane.b32.xlu0 %v1665, 96
  %v2000 = vpop.permute.xlu0 %1999
  %2001 = vrot.lane.b32.xlu0 %v1673, 96
  %v2002 = vpop.permute.xlu0 %2001
  %2003 = vrot.lane.b32.xlu0 %v1681, 96
  %v2004 = vpop.permute.xlu0 %2003
  %2005 = vrot.lane.b32.xlu0 %v1869, 96
  %v2006 = vpop.permute.xlu0 %2005
  %2007 = vrot.lane.b32.xlu0 %v1964, 96
  %v2008 = vpop.permute.xlu0 %2007
  %2009 = vrot.lane.b32.xlu0 %v1972, 96
  %v2010 = vpop.permute.xlu0 %2009
  %v2012 = vrot.slane %v1531, 1
  %v2013 = vsel %vm1748, %v1879, %v2012
  %v2014 = vrot.slane %v1532, 1
  %v2015 = vsel %vm1748, %v2012, %v2014
  %v2017 = vsel %vm47, %v1509, %v1691
  %v2019 = vsel %vm47, %v1510, %v1693
  %v2021 = vsel %vm47, %v1511, %v1695
  %v2023 = vsel %vm47, %v1512, %v1697
  %v2025 = vsel %vm47, %v1513, %v1699
  %v2027 = vsel %vm47, %v1514, %v1701
  %v2029 = vsel %vm47, %v1515, %v1703
  %v2031 = vsel %vm47, %v1516, %v1705
  %v2033 = vsel %vm47, %v1517, %v1707
  %v2035 = vsel %vm47, %v1518, %v1709
  %v2037 = vsel %vm47, %v1519, %v1711
  %v2039 = vsel %vm47, %v1520, %v1713
  %v2041 = vsel %vm47, %v1521, %v1715
  %v2043 = vsel %vm47, %v1522, %v1717
  %v2045 = vsel %vm47, %v1523, %v1719
  %v2047 = vsel %vm47, %v1524, %v1721
  %v2049 = vsel %vm47, %v1525, %v1723
  %v2051 = vsel %vm47, %v1526, %v1725
  %v2053 = vsel %vm47, %v1527, %v1727
  %v2055 = vsel %vm92, %v2017, %v1789
  %v2057 = vsel %vm92, %v2019, %v1791
  %v2059 = vsel %vm92, %v2021, %v1793
  %v2061 = vsel %vm92, %v2023, %v1795
  %v2063 = vsel %vm92, %v2025, %v1797
  %v2065 = vsel %vm92, %v2027, %v1799
  %v2067 = vsel %vm92, %v2029, %v1801
  %v2069 = vsel %vm92, %v2031, %v1803
  %v2071 = vsel %vm92, %v2033, %v1805
  %v2073 = vsel %vm92, %v2035, %v1807
  %v2075 = vsel %vm92, %v2037, %v1809
  %v2077 = vsel %vm92, %v2039, %v1811
  %v2079 = vsel %vm92, %v2041, %v1813
  %v2081 = vsel %vm92, %v2043, %v1815
  %v2083 = vsel %vm92, %v2045, %v1817
  %v2085 = vsel %vm92, %v2047, %v1819
  %v2087 = vsel %vm92, %v2049, %v1821
  %v2089 = vsel %vm92, %v2051, %v1823
  %v2091 = vsel %vm92, %v2053, %v1825
  %vm2092 = vcmask 785408
  %v2094 = vsel %vm2092, %v2055, %v1828
  %v2097 = vsel %vm2092, %v2057, %v1830
  %v2100 = vsel %vm2092, %v2059, %v1832
  %v2103 = vsel %vm2092, %v2061, %v1834
  %v2106 = vsel %vm2092, %v2063, %v1836
  %v2109 = vsel %vm2092, %v2065, %v1838
  %v2112 = vsel %vm2092, %v2067, %v1840
  %v2115 = vsel %vm2092, %v2069, %v1842
  %v2118 = vsel %vm2092, %v2071, %v1844
  %v2121 = vsel %vm2092, %v2073, %v1846
  %v2124 = vsel %vm2092, %v2075, %v1848
  %v2127 = vsel %vm2092, %v2077, %v1850
  %v2130 = vsel %vm2092, %v2079, %v1852
  %v2133 = vsel %vm2092, %v2081, %v1854
  %v2136 = vsel %vm2092, %v2083, %v1856
  %v2139 = vsel %vm2092, %v2085, %v1858
  %v2142 = vsel %vm2092, %v2087, %v1860
  %v2145 = vsel %vm2092, %v2089, %v1862
  %v2148 = vsel %vm2092, %v2091, %v1864
  %v2152 = vsel %vm47, %v1553, %v1884
  %v2155 = vsel %vm47, %v1561, %v1886
  %v2158 = vsel %vm47, %v1569, %v1888
  %v2161 = vsel %vm47, %v1577, %v1890
  %v2164 = vsel %vm47, %v1585, %v1892
  %v2167 = vsel %vm47, %v1593, %v1894
  %v2170 = vsel %vm47, %v1601, %v1896
  %v2173 = vsel %vm47, %v1609, %v1898
  %v2176 = vsel %vm47, %v1617, %v1900
  %v2179 = vsel %vm47, %v1625, %v1902
  %v2182 = vsel %vm47, %v1633, %v1904
  %v2185 = vsel %vm47, %v1641, %v1906
  %v2188 = vsel %vm47, %v1649, %v1908
  %v2191 = vsel %vm47, %v1657, %v1910
  %v2194 = vsel %vm47, %v1665, %v1912
  %v2197 = vsel %vm47, %v1673, %v1914
  %v2200 = vsel %vm47, %v1681, %v1916
  %v2203 = vsel %vm47, %v1869, %v1918
  %v2206 = vsel %vm47, %v1877, %v1920
  %v2208 = vsel %vm92, %v2152, %v1923
  %v2210 = vsel %vm92, %v2155, %v1925
  %v2212 = vsel %vm92, %v2158, %v1927
  %v2214 = vsel %vm92, %v2161, %v1929
  %v2216 = vsel %vm92, %v2164, %v1931
  %v2218 = vsel %vm92, %v2167, %v1933
  %v2220 = vsel %vm92, %v2170, %v1935
  %v2222 = vsel %vm92, %v2173, %v1937
  %v2224 = vsel %vm92, %v2176, %v1939
  %v2226 = vsel %vm92, %v2179, %v1941
  %v2228 = vsel %vm92, %v2182, %v1943
  %v2230 = vsel %vm92, %v2185, %v1945
  %v2232 = vsel %vm92, %v2188, %v1947
  %v2234 = vsel %vm92, %v2191, %v1949
  %v2236 = vsel %vm92, %v2194, %v1951
  %v2238 = vsel %vm92, %v2197, %v1953
  %v2240 = vsel %vm92, %v2200, %v1955
  %v2242 = vsel %vm92, %v2203, %v1957
  %v2244 = vsel %vm92, %v2206, %v1959
  %v2246 = vsel %vm2092, %v2208, %v1974
  %v2249 = vsel %vm2092, %v2210, %v1976
  %v2252 = vsel %vm2092, %v2212, %v1978
  %v2255 = vsel %vm2092, %v2214, %v1980
  %v2258 = vsel %vm2092, %v2216, %v1982
  %v2261 = vsel %vm2092, %v2218, %v1984
  %v2264 = vsel %vm2092, %v2220, %v1986
  %v2267 = vsel %vm2092, %v2222, %v1988
  %v2270 = vsel %vm2092, %v2224, %v1990
  %v2273 = vsel %vm2092, %v2226, %v1992
  %v2276 = vsel %vm2092, %v2228, %v1994
  %v2279 = vsel %vm2092, %v2230, %v1996
  %v2282 = vsel %vm2092, %v2232, %v1998
  %v2285 = vsel %vm2092, %v2234, %v2000
  %v2288 = vsel %vm2092, %v2236, %v2002
  %v2291 = vsel %vm2092, %v2238, %v2004
  %v2294 = vsel %vm2092, %v2240, %v2006
  %v2297 = vsel %vm2092, %v2242, %v2008
  %v2300 = vsel %vm2092, %v2244, %v2010
  %v2302 = vld [vmem:[%s2] sm:$0xf]
  %v2303 = vld [vmem:[%s2 + $0x4] sm:$0xf]
  %v2304 = vld [vmem:[%s2 + $0x8] sm:$0xf]
  %v2305 = vld [vmem:[%s2 + $0xc] sm:$0xf]
  %v2306 = vld [vmem:[%s2 + $0x10] sm:$0xf]
  %v2307 = vld [vmem:[%s2 + $0x14] sm:$0xf]
  %v2308 = vld [vmem:[%s2 + $0x18] sm:$0xf]
  %v2309 = vld [vmem:[%s2 + $0x1c] sm:$0xf]
  %v2310 = vld [vmem:[%s2 + $0x20] sm:$0xf]
  %v2311 = vld [vmem:[%s2 + $0x24] sm:$0xf]
  %v2312 = vld [vmem:[%s2 + $0x28] sm:$0xf]
  %v2313 = vld [vmem:[%s2 + $0x2c] sm:$0xf]
  %v2314 = vld [vmem:[%s2 + $0x30] sm:$0xf]
  %v2315 = vld [vmem:[%s2 + $0x34] sm:$0xf]
  %v2316 = vld [vmem:[%s2 + $0x38] sm:$0xf]
  %v2317 = vld [vmem:[%s2 + $0x3c] sm:$0xf]
  %v2318 = vld [vmem:[%s2 + $0x40] sm:$0xf]
  %v2319 = vld [vmem:[%s2 + $0x44] sm:$0xf]
  %v2320 = vld [vmem:[%s2 + $0x48] sm:$0xf]
  %v2321 = vld [vmem:[%s2 + $0x4c] sm:$0xf]
  %v2322 = vld [vmem:[%s2 + $0x50] sm:$0xf]
  %v2323 = vld [vmem:[%s2 + $0x54] sm:$0xf]
  %v2324 = vld [vmem:[%s2 + $0x58] sm:$0xf]
  %v2325 = vld [vmem:[%s2 + $0x5c] sm:$0xf]
  %v2326 = vld [vmem:[%s2 + $0x60] sm:$0xf]
  %v2327 = vld [vmem:[%s2 + $0x64] sm:$0xf]
  %v2328 = vld [vmem:[%s2 + $0x68] sm:$0xf]
  %v2329 = vld [vmem:[%s2 + $0x6c] sm:$0xf]
  %v2330 = vld [vmem:[%s2 + $0x70] sm:$0xf]
  %v2331 = vld [vmem:[%s2 + $0x74] sm:$0xf]
  %v2332 = vld [vmem:[%s2 + $0x78] sm:$0xf]
  %v2333 = vld [vmem:[%s2 + $0x7c] sm:$0xf]
  %v2334 = vld [vmem:[%s2 + $0x80] sm:$0xf]
  %v2335 = vld [vmem:[%s2 + $0x84] sm:$0xf]
  %v2336 = vld [vmem:[%s2 + $0x88] sm:$0xf]
  %v2337 = vld [vmem:[%s2 + $0x8c] sm:$0xf]
  %v2338 = vld [vmem:[%s8] sm:$0x1]
  %v2340 = vlaneseq
  %v2341 = vshrl.u32 %v2340, 7
  %v2342 = vsub.s32 0, %v2341
  %v2343 = vrot.slane %v2338, %v2342
  %v2381 = vunpack.c.l.b16 %v2302
  %v2382 = vunpack.c.l.b16 %v2303
  %v2383 = vunpack.c.l.b16 %v2304
  %v2384 = vunpack.c.l.b16 %v2305
  %v2385 = vunpack.c.l.b16 %v2306
  %v2386 = vunpack.c.l.b16 %v2307
  %v2387 = vunpack.c.l.b16 %v2308
  %v2388 = vunpack.c.l.b16 %v2309
  %v2389 = vunpack.c.l.b16 %v2310
  %v2390 = vunpack.c.l.b16 %v2311
  %v2391 = vunpack.c.l.b16 %v2312
  %v2392 = vunpack.c.l.b16 %v2313
  %v2393 = vunpack.c.l.b16 %v2314
  %v2394 = vunpack.c.l.b16 %v2315
  %v2395 = vunpack.c.l.b16 %v2316
  %v2396 = vunpack.c.l.b16 %v2317
  %v2397 = vunpack.c.l.b16 %v2318
  %v2398 = vunpack.c.l.b16 %v2319
  %v2399 = vunpack.c.l.b16 %v2320
  %v2400 = vunpack.c.l.b16 %v2321
  %v2401 = vunpack.c.l.b16 %v2322
  %v2402 = vunpack.c.l.b16 %v2323
  %v2403 = vunpack.c.l.b16 %v2324
  %v2404 = vunpack.c.l.b16 %v2325
  %v2405 = vunpack.c.l.b16 %v2326
  %v2406 = vunpack.c.l.b16 %v2327
  %v2407 = vunpack.c.l.b16 %v2328
  %v2408 = vunpack.c.l.b16 %v2329
  %v2409 = vunpack.c.l.b16 %v2330
  %v2410 = vunpack.c.l.b16 %v2331
  %v2411 = vunpack.c.l.b16 %v2332
  %v2412 = vunpack.c.l.b16 %v2333
  %v2413 = vunpack.c.l.b16 %v2334
  %v2414 = vunpack.c.l.b16 %v2335
  %v2415 = vunpack.c.l.b16 %v2336
  %v2416 = vunpack.c.l.b16 %v2337
  %v2417 = vpack.c.b16 %v2382, %v2381
  %v2418 = vpack.c.b16 %v2384, %v2383
  %v2419 = vpack.c.b16 %v2386, %v2385
  %v2420 = vpack.c.b16 %v2388, %v2387
  %v2421 = vpack.c.b16 %v2390, %v2389
  %v2422 = vpack.c.b16 %v2392, %v2391
  %v2423 = vpack.c.b16 %v2394, %v2393
  %v2424 = vpack.c.b16 %v2396, %v2395
  %v2425 = vpack.c.b16 %v2398, %v2397
  %v2426 = vpack.c.b16 %v2400, %v2399
  %v2427 = vpack.c.b16 %v2402, %v2401
  %v2428 = vpack.c.b16 %v2404, %v2403
  %v2429 = vpack.c.b16 %v2406, %v2405
  %v2430 = vpack.c.b16 %v2408, %v2407
  %v2431 = vpack.c.b16 %v2410, %v2409
  %v2432 = vpack.c.b16 %v2412, %v2411
  %v2433 = vpack.c.b16 %v2414, %v2413
  %v2434 = vpack.c.b16 %v2416, %v2415
  %v2454 = vsel %vm47, %v1755, 0
  %v2457 = vsel %vm47, %v1757, 0
  %v2460 = vsel %vm47, %v1759, 0
  %v2463 = vsel %vm47, %v1761, 0
  %v2466 = vsel %vm47, %v1763, 0
  %v2469 = vsel %vm47, %v1765, 0
  %v2472 = vsel %vm47, %v1767, 0
  %v2475 = vsel %vm47, %v1769, 0
  %v2478 = vsel %vm47, %v1771, 0
  %v2481 = vsel %vm47, %v1773, 0
  %v2484 = vsel %vm47, %v1775, 0
  %v2487 = vsel %vm47, %v1777, 0
  %v2490 = vsel %vm47, %v1779, 0
  %v2493 = vsel %vm47, %v1781, 0
  %v2496 = vsel %vm47, %v1783, 0
  %v2499 = vsel %vm47, %v1785, 0
  %v2502 = vsel %vm47, %v1880, 0
  %v2505 = vsel %vm47, %v2013, 0
  %v2508 = vsel %vm47, %v2015, 0
  %2510 = vmatprep.subr.bf16.mxu0 0
  %2511 = vmatpush1.bf16.msra.mxu0 %v2417
  %2512 = vmatprep.subr.bf16.mxu0 0
  %2513 = vmatpush1.bf16.msra.mxu0 %v2418
  %2514 = vmatprep.subr.bf16.mxu0 0
  %2515 = vmatpush1.bf16.msra.mxu0 %v2419
  %2516 = vmatprep.subr.bf16.mxu0 0
  %2517 = vmatpush1.bf16.msra.mxu0 %v2420
  %2518 = vmatprep.subr.bf16.mxu0 0
  %2519 = vmatpush1.bf16.msra.mxu0 %v2421
  %2520 = vmatprep.subr.bf16.mxu0 0
  %2521 = vmatpush1.bf16.msra.mxu0 %v2422
  %2522 = vmatprep.subr.bf16.mxu0 0
  %2523 = vmatpush1.bf16.msra.mxu0 %v2423
  %2524 = vmatprep.subr.bf16.mxu0 0
  %2525 = vmatpush1.bf16.msra.mxu0 %v2424
  %2526 = vmatprep.subr.bf16.mxu0 0
  %2527 = vmatpush1.bf16.msra.mxu0 %v2425
  %2528 = vmatprep.subr.bf16.mxu0 0
  %2529 = vmatpush1.bf16.msra.mxu0 %v2426
  %2530 = vmatprep.subr.bf16.mxu0 0
  %2531 = vmatpush1.bf16.msra.mxu0 %v2427
  %2532 = vmatprep.subr.bf16.mxu0 0
  %2533 = vmatpush1.bf16.msra.mxu0 %v2428
  %2534 = vmatprep.subr.bf16.mxu0 0
  %2535 = vmatpush1.bf16.msra.mxu0 %v2429
  %2536 = vmatprep.subr.bf16.mxu0 0
  %2537 = vmatpush1.bf16.msra.mxu0 %v2430
  %2538 = vmatprep.subr.bf16.mxu0 0
  %2539 = vmatpush1.bf16.msra.mxu0 %v2431
  %2540 = vmatprep.subr.bf16.mxu0 0
  %2541 = vmatpush1.bf16.msra.mxu0 %v2432
  %2542 = vmatprep.mubr.bf16.mxu0 %v2246
  %2543 = vmatmul.mubr.bf16.gmra.mrb[0].mxu0 %v2094
  %v2544 = vpop.f32.mrb[0].mxu0
  %v2545 = vadd.f32 %v2343, %v2544
  %v2546 = vpop.f32.mrb[0].mxu0
  %v2547 = vpop.f32.mrb[0].mxu0
  %v2548 = vadd.f32 %v2343, %v2547
  %v2549 = vpop.f32.mrb[0].mxu0
  %2550 = vmatprep.mubr.bf16.mxu0 %v2249
  %2551 = vmatmul.mubr.bf16.gmra.mrb[0].mxu0 %v2097
  %v2552 = vpop.f32.mrb[0].mxu0
  %v2553 = vadd.f32 %v2343, %v2552
  %v2554 = vpop.f32.mrb[0].mxu0
  %v2555 = vpop.f32.mrb[0].mxu0
  %v2556 = vadd.f32 %v2343, %v2555
  %v2557 = vpop.f32.mrb[0].mxu0
  %2558 = vmatprep.mubr.bf16.mxu0 %v2252
  %2559 = vmatmul.mubr.bf16.gmra.mrb[0].mxu0 %v2100
  %v2560 = vpop.f32.mrb[0].mxu0
  %v2561 = vadd.f32 %v2343, %v2560
  %v2562 = vpop.f32.mrb[0].mxu0
  %v2563 = vpop.f32.mrb[0].mxu0
  %v2564 = vadd.f32 %v2343, %v2563
  %v2565 = vpop.f32.mrb[0].mxu0
  %2566 = vmatprep.mubr.bf16.mxu0 %v2255
  %2567 = vmatmul.mubr.bf16.gmra.mrb[0].mxu0 %v2103
  %v2568 = vpop.f32.mrb[0].mxu0
  %v2569 = vadd.f32 %v2343, %v2568
  %v2570 = vpop.f32.mrb[0].mxu0
  %v2571 = vpop.f32.mrb[0].mxu0
  %v2572 = vadd.f32 %v2343, %v2571
  %v2573 = vpop.f32.mrb[0].mxu0
  %2574 = vmatprep.mubr.bf16.mxu0 %v2258
  %2575 = vmatmul.mubr.bf16.gmra.mrb[0].mxu0 %v2106
  %v2576 = vpop.f32.mrb[0].mxu0
  %v2577 = vadd.f32 %v2343, %v2576
  %v2578 = vpop.f32.mrb[0].mxu0
  %v2579 = vpop.f32.mrb[0].mxu0
  %v2580 = vadd.f32 %v2343, %v2579
  %v2581 = vpop.f32.mrb[0].mxu0
  %2582 = vmatprep.mubr.bf16.mxu0 %v2261
  %2583 = vmatmul.mubr.bf16.gmra.mrb[0].mxu0 %v2109
  %v2584 = vpop.f32.mrb[0].mxu0
  %v2585 = vadd.f32 %v2343, %v2584
  %v2586 = vpop.f32.mrb[0].mxu0
  %v2587 = vpop.f32.mrb[0].mxu0
  %v2588 = vadd.f32 %v2343, %v2587
  %v2589 = vpop.f32.mrb[0].mxu0
  %2590 = vmatprep.mubr.bf16.mxu0 %v2264
  %2591 = vmatmul.mubr.bf16.gmra.mrb[0].mxu0 %v2112
  %v2592 = vpop.f32.mrb[0].mxu0
  %v2593 = vadd.f32 %v2343, %v2592
  %v2594 = vpop.f32.mrb[0].mxu0
  %v2595 = vpop.f32.mrb[0].mxu0
  %v2596 = vadd.f32 %v2343, %v2595
  %v2597 = vpop.f32.mrb[0].mxu0
  %2598 = vmatprep.mubr.bf16.mxu0 %v2267
  %2599 = vmatmul.mubr.bf16.gmra.mrb[0].mxu0 %v2115
  %v2600 = vpop.f32.mrb[0].mxu0
  %v2601 = vadd.f32 %v2343, %v2600
  %v2602 = vpop.f32.mrb[0].mxu0
  %v2603 = vpop.f32.mrb[0].mxu0
  %v2604 = vadd.f32 %v2343, %v2603
  %v2605 = vpop.f32.mrb[0].mxu0
  %2606 = vmatprep.mubr.bf16.mxu0 %v2270
  %2607 = vmatmul.mubr.bf16.gmra.mrb[0].mxu0 %v2118
  %v2608 = vpop.f32.mrb[0].mxu0
  %v2609 = vadd.f32 %v2343, %v2608
  %v2610 = vpop.f32.mrb[0].mxu0
  %v2611 = vpop.f32.mrb[0].mxu0
  %v2612 = vadd.f32 %v2343, %v2611
  %v2613 = vpop.f32.mrb[0].mxu0
  %2614 = vmatprep.mubr.bf16.mxu0 %v2273
  %2615 = vmatmul.mubr.bf16.gmra.mrb[0].mxu0 %v2121
  %v2616 = vpop.f32.mrb[0].mxu0
  %v2617 = vadd.f32 %v2343, %v2616
  %v2618 = vpop.f32.mrb[0].mxu0
  %v2619 = vpop.f32.mrb[0].mxu0
  %v2620 = vadd.f32 %v2343, %v2619
  %v2621 = vpop.f32.mrb[0].mxu0
  %2622 = vmatprep.mubr.bf16.mxu0 %v2276
  %2623 = vmatmul.mubr.bf16.gmra.mrb[0].mxu0 %v2124
  %v2624 = vpop.f32.mrb[0].mxu0
  %v2625 = vadd.f32 %v2343, %v2624
  %v2626 = vpop.f32.mrb[0].mxu0
  %v2627 = vpop.f32.mrb[0].mxu0
  %v2628 = vadd.f32 %v2343, %v2627
  %v2629 = vpop.f32.mrb[0].mxu0
  %2630 = vmatprep.mubr.bf16.mxu0 %v2279
  %2631 = vmatmul.mubr.bf16.gmra.mrb[0].mxu0 %v2127
  %v2632 = vpop.f32.mrb[0].mxu0
  %v2633 = vadd.f32 %v2343, %v2632
  %v2634 = vpop.f32.mrb[0].mxu0
  %v2635 = vpop.f32.mrb[0].mxu0
  %v2636 = vadd.f32 %v2343, %v2635
  %v2637 = vpop.f32.mrb[0].mxu0
  %2638 = vmatprep.mubr.bf16.mxu0 %v2282
  %2639 = vmatmul.mubr.bf16.gmra.mrb[0].mxu0 %v2130
  %v2640 = vpop.f32.mrb[0].mxu0
  %v2641 = vadd.f32 %v2343, %v2640
  %v2642 = vpop.f32.mrb[0].mxu0
  %v2643 = vpop.f32.mrb[0].mxu0
  %v2644 = vadd.f32 %v2343, %v2643
  %v2645 = vpop.f32.mrb[0].mxu0
  %2646 = vmatprep.mubr.bf16.mxu0 %v2285
  %2647 = vmatmul.mubr.bf16.gmra.mrb[0].mxu0 %v2133
  %v2648 = vpop.f32.mrb[0].mxu0
  %v2649 = vadd.f32 %v2343, %v2648
  %v2650 = vpop.f32.mrb[0].mxu0
  %v2651 = vpop.f32.mrb[0].mxu0
  %v2652 = vadd.f32 %v2343, %v2651
  %v2653 = vpop.f32.mrb[0].mxu0
  %2654 = vmatprep.mubr.bf16.mxu0 %v2288
  %2655 = vmatmul.mubr.bf16.gmra.mrb[0].mxu0 %v2136
  %v2656 = vpop.f32.mrb[0].mxu0
  %v2657 = vadd.f32 %v2343, %v2656
  %v2658 = vpop.f32.mrb[0].mxu0
  %v2659 = vpop.f32.mrb[0].mxu0
  %v2660 = vadd.f32 %v2343, %v2659
  %v2661 = vpop.f32.mrb[0].mxu0
  %2662 = vmatprep.mubr.bf16.mxu0 %v2291
  %2663 = vmatmul.mubr.bf16.gmra.mrb[0].mxu0 %v2139
  %v2664 = vpop.f32.mrb[0].mxu0
  %v2665 = vadd.f32 %v2343, %v2664
  %v2666 = vpop.f32.mrb[0].mxu0
  %v2667 = vpop.f32.mrb[0].mxu0
  %v2668 = vadd.f32 %v2343, %v2667
  %v2669 = vpop.f32.mrb[0].mxu0
  %2670 = vmatprep.mubr.bf16.mxu0 %v2294
  %2671 = vmatmul.mubr.bf16.gmra.mrb[0].mxu0 %v2142
  %v2672 = vpop.f32.mrb[0].mxu0
  %v2673 = vadd.f32 %v2343, %v2672
  %v2674 = vpop.f32.mrb[0].mxu0
  %v2675 = vpop.f32.mrb[0].mxu0
  %v2676 = vadd.f32 %v2343, %v2675
  %v2677 = vpop.f32.mrb[0].mxu0
  %2678 = vmatprep.mubr.bf16.mxu0 %v2297
  %2679 = vmatmul.mubr.bf16.gmra.mrb[0].mxu0 %v2145
  %v2680 = vpop.f32.mrb[0].mxu0
  %v2681 = vadd.f32 %v2343, %v2680
  %v2682 = vpop.f32.mrb[0].mxu0
  %v2683 = vpop.f32.mrb[0].mxu0
  %v2684 = vadd.f32 %v2343, %v2683
  %v2685 = vpop.f32.mrb[0].mxu0
  %2686 = vmatprep.mubr.bf16.mxu0 %v2300
  %2687 = vmatmul.mubr.bf16.gmra.mrb[0].mxu0 %v2148
  %v2688 = vpop.f32.mrb[0].mxu0
  %v2689 = vadd.f32 %v2343, %v2688
  %v2690 = vpop.f32.mrb[0].mxu0
  %v2691 = vpop.f32.mrb[0].mxu0
  %v2692 = vadd.f32 %v2343, %v2691
  %v2693 = vpop.f32.mrb[0].mxu0
  %2694 = vdwg.mxu0
  %2695 = vmatprep.subr.bf16.mxu0 0
  %2696 = vmatpush1.bf16.msra.mxu0 %v2433
  %2697 = vmatprep.subr.bf16.mxu0 0
  %2698 = vmatpush1.bf16.msra.mxu0 %v2434
  %2699 = vmatprep.subr.bf16.mxu0 0
  %2700 = vmatpush1.bf16.msra.mxu0 0
  %2701 = vmatprep.subr.bf16.mxu0 0
  %2702 = vmatpush1.bf16.msra.mxu0 0
  %2703 = vmatprep.subr.bf16.mxu0 0
  %2704 = vmatpush1.bf16.msra.mxu0 0
  %2705 = vmatprep.subr.bf16.mxu0 0
  %2706 = vmatpush1.bf16.msra.mxu0 0
  %2707 = vmatprep.subr.bf16.mxu0 0
  %2708 = vmatpush1.bf16.msra.mxu0 0
  %2709 = vmatprep.subr.bf16.mxu0 0
  %2710 = vmatpush1.bf16.msra.mxu0 0
  %2711 = vmatprep.subr.bf16.mxu0 0
  %2712 = vmatpush1.bf16.msra.mxu0 0
  %2713 = vmatprep.subr.bf16.mxu0 0
  %2714 = vmatpush1.bf16.msra.mxu0 0
  %2715 = vmatprep.subr.bf16.mxu0 0
  %2716 = vmatpush1.bf16.msra.mxu0 0
  %2717 = vmatprep.subr.bf16.mxu0 0
  %2718 = vmatpush1.bf16.msra.mxu0 0
  %2719 = vmatprep.subr.bf16.mxu0 0
  %2720 = vmatpush1.bf16.msra.mxu0 0
  %2721 = vmatprep.subr.bf16.mxu0 0
  %2722 = vmatpush1.bf16.msra.mxu0 0
  %2723 = vmatprep.subr.bf16.mxu0 0
  %2724 = vmatpush1.bf16.msra.mxu0 0
  %2725 = vmatprep.subr.bf16.mxu0 0
  %2726 = vmatpush1.bf16.msra.mxu0 0
  %2727 = vmatprep.mubr.bf16.mxu0 0
  %2728 = vmatmul.mubr.bf16.gmra.mrb[0].mxu0 %v2454
  %v2729 = vpop.f32.mrb[0].mxu0
  %v2730 = vadd.f32 %v2545, %v2729
  %v2731 = vpop.f32.mrb[0].mxu0
  %v2732 = vpop.f32.mrb[0].mxu0
  %v2733 = vadd.f32 %v2548, %v2732
  %v2734 = vpop.f32.mrb[0].mxu0
  %2735 = vmatprep.mubr.bf16.mxu0 0
  %2736 = vmatmul.mubr.bf16.gmra.mrb[0].mxu0 %v2457
  %v2737 = vpop.f32.mrb[0].mxu0
  %v2738 = vadd.f32 %v2553, %v2737
  %v2739 = vpop.f32.mrb[0].mxu0
  %v2740 = vpop.f32.mrb[0].mxu0
  %v2741 = vadd.f32 %v2556, %v2740
  %v2742 = vpop.f32.mrb[0].mxu0
  %2743 = vmatprep.mubr.bf16.mxu0 0
  %2744 = vmatmul.mubr.bf16.gmra.mrb[0].mxu0 %v2460
  %v2745 = vpop.f32.mrb[0].mxu0
  %v2746 = vadd.f32 %v2561, %v2745
  %v2747 = vpop.f32.mrb[0].mxu0
  %v2748 = vpop.f32.mrb[0].mxu0
  %v2749 = vadd.f32 %v2564, %v2748
  %v2750 = vpop.f32.mrb[0].mxu0
  %2751 = vmatprep.mubr.bf16.mxu0 0
  %2752 = vmatmul.mubr.bf16.gmra.mrb[0].mxu0 %v2463
  %v2753 = vpop.f32.mrb[0].mxu0
  %v2754 = vadd.f32 %v2569, %v2753
  %v2755 = vpop.f32.mrb[0].mxu0
  %v2756 = vpop.f32.mrb[0].mxu0
  %v2757 = vadd.f32 %v2572, %v2756
  %v2758 = vpop.f32.mrb[0].mxu0
  %2759 = vmatprep.mubr.bf16.mxu0 0
  %2760 = vmatmul.mubr.bf16.gmra.mrb[0].mxu0 %v2466
  %v2761 = vpop.f32.mrb[0].mxu0
  %v2762 = vadd.f32 %v2577, %v2761
  %v2763 = vpop.f32.mrb[0].mxu0
  %v2764 = vpop.f32.mrb[0].mxu0
  %v2765 = vadd.f32 %v2580, %v2764
  %v2766 = vpop.f32.mrb[0].mxu0
  %2767 = vmatprep.mubr.bf16.mxu0 0
  %2768 = vmatmul.mubr.bf16.gmra.mrb[0].mxu0 %v2469
  %v2769 = vpop.f32.mrb[0].mxu0
  %v2770 = vadd.f32 %v2585, %v2769
  %v2771 = vpop.f32.mrb[0].mxu0
  %v2772 = vpop.f32.mrb[0].mxu0
  %v2773 = vadd.f32 %v2588, %v2772
  %v2774 = vpop.f32.mrb[0].mxu0
  %2775 = vmatprep.mubr.bf16.mxu0 0
  %2776 = vmatmul.mubr.bf16.gmra.mrb[0].mxu0 %v2472
  %v2777 = vpop.f32.mrb[0].mxu0
  %v2778 = vadd.f32 %v2593, %v2777
  %v2779 = vpop.f32.mrb[0].mxu0
  %v2780 = vpop.f32.mrb[0].mxu0
  %v2781 = vadd.f32 %v2596, %v2780
  %v2782 = vpop.f32.mrb[0].mxu0
  %2783 = vmatprep.mubr.bf16.mxu0 0
  %2784 = vmatmul.mubr.bf16.gmra.mrb[0].mxu0 %v2475
  %v2785 = vpop.f32.mrb[0].mxu0
  %v2786 = vadd.f32 %v2601, %v2785
  %v2787 = vpop.f32.mrb[0].mxu0
  %v2788 = vpop.f32.mrb[0].mxu0
  %v2789 = vadd.f32 %v2604, %v2788
  %v2790 = vpop.f32.mrb[0].mxu0
  %2791 = vmatprep.mubr.bf16.mxu0 0
  %2792 = vmatmul.mubr.bf16.gmra.mrb[0].mxu0 %v2478
  %v2793 = vpop.f32.mrb[0].mxu0
  %v2794 = vadd.f32 %v2609, %v2793
  %v2795 = vpop.f32.mrb[0].mxu0
  %v2796 = vpop.f32.mrb[0].mxu0
  %v2797 = vadd.f32 %v2612, %v2796
  %v2798 = vpop.f32.mrb[0].mxu0
  %2799 = vmatprep.mubr.bf16.mxu0 0
  %2800 = vmatmul.mubr.bf16.gmra.mrb[0].mxu0 %v2481
  %v2801 = vpop.f32.mrb[0].mxu0
  %v2802 = vadd.f32 %v2617, %v2801
  %v2803 = vpop.f32.mrb[0].mxu0
  %v2804 = vpop.f32.mrb[0].mxu0
  %v2805 = vadd.f32 %v2620, %v2804
  %v2806 = vpop.f32.mrb[0].mxu0
  %2807 = vmatprep.mubr.bf16.mxu0 0
  %2808 = vmatmul.mubr.bf16.gmra.mrb[0].mxu0 %v2484
  %v2809 = vpop.f32.mrb[0].mxu0
  %v2810 = vadd.f32 %v2625, %v2809
  %v2811 = vpop.f32.mrb[0].mxu0
  %v2812 = vpop.f32.mrb[0].mxu0
  %v2813 = vadd.f32 %v2628, %v2812
  %v2814 = vpop.f32.mrb[0].mxu0
  %2815 = vmatprep.mubr.bf16.mxu0 0
  %2816 = vmatmul.mubr.bf16.gmra.mrb[0].mxu0 %v2487
  %v2817 = vpop.f32.mrb[0].mxu0
  %v2818 = vadd.f32 %v2633, %v2817
  %v2819 = vpop.f32.mrb[0].mxu0
  %v2820 = vpop.f32.mrb[0].mxu0
  %v2821 = vadd.f32 %v2636, %v2820
  %v2822 = vpop.f32.mrb[0].mxu0
  %2823 = vmatprep.mubr.bf16.mxu0 0
  %2824 = vmatmul.mubr.bf16.gmra.mrb[0].mxu0 %v2490
  %v2825 = vpop.f32.mrb[0].mxu0
  %v2826 = vadd.f32 %v2641, %v2825
  %v2827 = vpop.f32.mrb[0].mxu0
  %v2828 = vpop.f32.mrb[0].mxu0
  %v2829 = vadd.f32 %v2644, %v2828
  %v2830 = vpop.f32.mrb[0].mxu0
  %2831 = vmatprep.mubr.bf16.mxu0 0
  %2832 = vmatmul.mubr.bf16.gmra.mrb[0].mxu0 %v2493
  %v2833 = vpop.f32.mrb[0].mxu0
  %v2834 = vadd.f32 %v2649, %v2833
  %v2835 = vpop.f32.mrb[0].mxu0
  %v2836 = vpop.f32.mrb[0].mxu0
  %v2837 = vadd.f32 %v2652, %v2836
  %v2838 = vpop.f32.mrb[0].mxu0
  %2839 = vmatprep.mubr.bf16.mxu0 0
  %2840 = vmatmul.mubr.bf16.gmra.mrb[0].mxu0 %v2496
  %v2841 = vpop.f32.mrb[0].mxu0
  %v2842 = vadd.f32 %v2657, %v2841
  %v2843 = vpop.f32.mrb[0].mxu0
  %v2844 = vpop.f32.mrb[0].mxu0
  %v2845 = vadd.f32 %v2660, %v2844
  %v2846 = vpop.f32.mrb[0].mxu0
  %2847 = vmatprep.mubr.bf16.mxu0 0
  %2848 = vmatmul.mubr.bf16.gmra.mrb[0].mxu0 %v2499
  %v2849 = vpop.f32.mrb[0].mxu0
  %v2850 = vadd.f32 %v2665, %v2849
  %v2851 = vpop.f32.mrb[0].mxu0
  %v2852 = vpop.f32.mrb[0].mxu0
  %v2853 = vadd.f32 %v2668, %v2852
  %v2854 = vpop.f32.mrb[0].mxu0
  %2855 = vmatprep.mubr.bf16.mxu0 0
  %2856 = vmatmul.mubr.bf16.gmra.mrb[0].mxu0 %v2502
  %v2857 = vpop.f32.mrb[0].mxu0
  %v2858 = vadd.f32 %v2673, %v2857
  %v2859 = vpop.f32.mrb[0].mxu0
  %v2860 = vpop.f32.mrb[0].mxu0
  %v2861 = vadd.f32 %v2676, %v2860
  %v2862 = vpop.f32.mrb[0].mxu0
  %2863 = vmatprep.mubr.bf16.mxu0 0
  %2864 = vmatmul.mubr.bf16.gmra.mrb[0].mxu0 %v2505
  %v2865 = vpop.f32.mrb[0].mxu0
  %v2866 = vadd.f32 %v2681, %v2865
  %v2867 = vpop.f32.mrb[0].mxu0
  %v2868 = vpop.f32.mrb[0].mxu0
  %v2869 = vadd.f32 %v2684, %v2868
  %v2870 = vpop.f32.mrb[0].mxu0
  %2871 = vmatprep.mubr.bf16.mxu0 0
  %2872 = vmatmul.mubr.bf16.gmra.mrb[0].mxu0 %v2508
  %v2873 = vpop.f32.mrb[0].mxu0
  %v2874 = vadd.f32 %v2689, %v2873
  %v2875 = vpop.f32.mrb[0].mxu0
  %v2876 = vpop.f32.mrb[0].mxu0
  %v2877 = vadd.f32 %v2692, %v2876
  %v2878 = vpop.f32.mrb[0].mxu0
  %2879 = vdwg.mxu0
  %v2918 = vrot.slane %v2730, 1
  %v2919 = vrot.slane %v2733, 1
  %v2920 = vsel %vm976, %v2918, %v2919
  %v2921 = vrot.slane %v2738, 1
  %v2922 = vsel %vm976, %v2919, %v2921
  %v2923 = vrot.slane %v2741, 1
  %v2924 = vsel %vm976, %v2921, %v2923
  %v2925 = vrot.slane %v2746, 1
  %v2926 = vsel %vm976, %v2923, %v2925
  %v2927 = vrot.slane %v2749, 1
  %v2928 = vsel %vm976, %v2925, %v2927
  %v2929 = vrot.slane %v2754, 1
  %v2930 = vsel %vm976, %v2927, %v2929
  %v2931 = vrot.slane %v2757, 1
  %v2932 = vsel %vm976, %v2929, %v2931
  %v2933 = vrot.slane %v2762, 1
  %v2934 = vsel %vm976, %v2931, %v2933
  %v2935 = vrot.slane %v2765, 1
  %v2936 = vsel %vm976, %v2933, %v2935
  %v2937 = vrot.slane %v2770, 1
  %v2938 = vsel %vm976, %v2935, %v2937
  %v2939 = vrot.slane %v2773, 1
  %v2940 = vsel %vm976, %v2937, %v2939
  %v2941 = vrot.slane %v2778, 1
  %v2942 = vsel %vm976, %v2939, %v2941
  %v2943 = vrot.slane %v2781, 1
  %v2944 = vsel %vm976, %v2941, %v2943
  %v2945 = vrot.slane %v2786, 1
  %v2946 = vsel %vm976, %v2943, %v2945
  %v2947 = vrot.slane %v2789, 1
  %v2948 = vsel %vm976, %v2945, %v2947
  %v2949 = vrot.slane %v2794, 1
  %v2950 = vsel %vm976, %v2947, %v2949
  %v2951 = vrot.slane %v2797, 1
  %v2952 = vsel %vm976, %v2949, %v2951
  %v2953 = vrot.slane %v2802, 1
  %v2954 = vsel %vm976, %v2951, %v2953
  %v2955 = vrot.slane %v2805, 1
  %v2956 = vsel %vm976, %v2953, %v2955
  %v2957 = vrot.slane %v2810, 1
  %v2958 = vsel %vm976, %v2955, %v2957
  %v2959 = vrot.slane %v2813, 1
  %v2960 = vsel %vm976, %v2957, %v2959
  %v2961 = vrot.slane %v2818, 1
  %v2962 = vsel %vm976, %v2959, %v2961
  %v2963 = vrot.slane %v2821, 1
  %v2964 = vsel %vm976, %v2961, %v2963
  %v2965 = vrot.slane %v2826, 1
  %v2966 = vsel %vm976, %v2963, %v2965
  %v2967 = vrot.slane %v2829, 1
  %v2968 = vsel %vm976, %v2965, %v2967
  %v2969 = vrot.slane %v2834, 1
  %v2970 = vsel %vm976, %v2967, %v2969
  %v2971 = vrot.slane %v2837, 1
  %v2972 = vsel %vm976, %v2969, %v2971
  %v2973 = vrot.slane %v2842, 1
  %v2974 = vsel %vm976, %v2971, %v2973
  %v2975 = vrot.slane %v2845, 1
  %v2976 = vsel %vm976, %v2973, %v2975
  %v2977 = vrot.slane %v2850, 1
  %v2978 = vsel %vm976, %v2975, %v2977
  %v2979 = vrot.slane %v2853, 1
  %v2980 = vsel %vm976, %v2977, %v2979
  %v2981 = vrot.slane %v2858, 1
  %v2982 = vsel %vm976, %v2979, %v2981
  %v2983 = vrot.slane %v2861, 1
  %v2984 = vsel %vm976, %v2981, %v2983
  %v2985 = vrot.slane %v2866, 1
  %v2986 = vsel %vm976, %v2983, %v2985
  %v2987 = vrot.slane %v2869, 1
  %v2988 = vsel %vm976, %v2985, %v2987
  %v2989 = vrot.slane %v2874, 1
  %v2990 = vsel %vm976, %v2987, %v2989
  %v2991 = vrot.slane %v2877, 1
  %v2992 = vsel %vm976, %v2989, %v2991
  %v3031 = vmax.f32 %v2730, %v2920
  %v3032 = vmax.f32 %v2733, %v2922
  %v3033 = vmax.f32 %v2738, %v2924
  %v3034 = vmax.f32 %v2741, %v2926
  %v3035 = vmax.f32 %v2746, %v2928
  %v3036 = vmax.f32 %v2749, %v2930
  %v3037 = vmax.f32 %v2754, %v2932
  %v3038 = vmax.f32 %v2757, %v2934
  %v3039 = vmax.f32 %v2762, %v2936
  %v3040 = vmax.f32 %v2765, %v2938
  %v3041 = vmax.f32 %v2770, %v2940
  %v3042 = vmax.f32 %v2773, %v2942
  %v3043 = vmax.f32 %v2778, %v2944
  %v3044 = vmax.f32 %v2781, %v2946
  %v3045 = vmax.f32 %v2786, %v2948
  %v3046 = vmax.f32 %v2789, %v2950
  %v3047 = vmax.f32 %v2794, %v2952
  %v3048 = vmax.f32 %v2797, %v2954
  %v3049 = vmax.f32 %v2802, %v2956
  %v3050 = vmax.f32 %v2805, %v2958
  %v3051 = vmax.f32 %v2810, %v2960
  %v3052 = vmax.f32 %v2813, %v2962
  %v3053 = vmax.f32 %v2818, %v2964
  %v3054 = vmax.f32 %v2821, %v2966
  %v3055 = vmax.f32 %v2826, %v2968
  %v3056 = vmax.f32 %v2829, %v2970
  %v3057 = vmax.f32 %v2834, %v2972
  %v3058 = vmax.f32 %v2837, %v2974
  %v3059 = vmax.f32 %v2842, %v2976
  %v3060 = vmax.f32 %v2845, %v2978
  %v3061 = vmax.f32 %v2850, %v2980
  %v3062 = vmax.f32 %v2853, %v2982
  %v3063 = vmax.f32 %v2858, %v2984
  %v3064 = vmax.f32 %v2861, %v2986
  %v3065 = vmax.f32 %v2866, %v2988
  %v3066 = vmax.f32 %v2869, %v2990
  %v3067 = vmax.f32 %v2874, %v2992
  %v3068 = vmax.f32 %v2877, %v2991
  %v3069 = vmax.f32 %v3031, %v3033
  %v3070 = vmax.f32 %v3032, %v3034
  %v3071 = vmax.f32 %v3033, %v3035
  %v3072 = vmax.f32 %v3034, %v3036
  %v3073 = vmax.f32 %v3035, %v3037
  %v3074 = vmax.f32 %v3036, %v3038
  %v3075 = vmax.f32 %v3037, %v3039
  %v3076 = vmax.f32 %v3038, %v3040
  %v3077 = vmax.f32 %v3039, %v3041
  %v3078 = vmax.f32 %v3040, %v3042
  %v3079 = vmax.f32 %v3041, %v3043
  %v3080 = vmax.f32 %v3042, %v3044
  %v3081 = vmax.f32 %v3043, %v3045
  %v3082 = vmax.f32 %v3044, %v3046
  %v3083 = vmax.f32 %v3045, %v3047
  %v3084 = vmax.f32 %v3046, %v3048
  %v3085 = vmax.f32 %v3047, %v3049
  %v3086 = vmax.f32 %v3048, %v3050
  %v3087 = vmax.f32 %v3049, %v3051
  %v3088 = vmax.f32 %v3050, %v3052
  %v3089 = vmax.f32 %v3051, %v3053
  %v3090 = vmax.f32 %v3052, %v3054
  %v3091 = vmax.f32 %v3053, %v3055
  %v3092 = vmax.f32 %v3054, %v3056
  %v3093 = vmax.f32 %v3055, %v3057
  %v3094 = vmax.f32 %v3056, %v3058
  %v3095 = vmax.f32 %v3057, %v3059
  %v3096 = vmax.f32 %v3058, %v3060
  %v3097 = vmax.f32 %v3059, %v3061
  %v3098 = vmax.f32 %v3060, %v3062
  %v3099 = vmax.f32 %v3061, %v3063
  %v3100 = vmax.f32 %v3062, %v3064
  %v3101 = vmax.f32 %v3063, %v3065
  %v3102 = vmax.f32 %v3064, %v3066
  %v3103 = vmax.f32 %v3065, %v3067
  %v3104 = vmax.f32 %v3066, %v3068
  %v3105 = vmax.f32 %v3069, 0.0
  %v3106 = vmax.f32 %v3070, 0.0
  %v3107 = vmax.f32 %v3071, 0.0
  %v3108 = vmax.f32 %v3072, 0.0
  %v3109 = vmax.f32 %v3073, 0.0
  %v3110 = vmax.f32 %v3074, 0.0
  %v3111 = vmax.f32 %v3075, 0.0
  %v3112 = vmax.f32 %v3076, 0.0
  %v3113 = vmax.f32 %v3077, 0.0
  %v3114 = vmax.f32 %v3078, 0.0
  %v3115 = vmax.f32 %v3079, 0.0
  %v3116 = vmax.f32 %v3080, 0.0
  %v3117 = vmax.f32 %v3081, 0.0
  %v3118 = vmax.f32 %v3082, 0.0
  %v3119 = vmax.f32 %v3083, 0.0
  %v3120 = vmax.f32 %v3084, 0.0
  %v3121 = vmax.f32 %v3085, 0.0
  %v3122 = vmax.f32 %v3086, 0.0
  %v3123 = vmax.f32 %v3087, 0.0
  %v3124 = vmax.f32 %v3088, 0.0
  %v3125 = vmax.f32 %v3089, 0.0
  %v3126 = vmax.f32 %v3090, 0.0
  %v3127 = vmax.f32 %v3091, 0.0
  %v3128 = vmax.f32 %v3092, 0.0
  %v3129 = vmax.f32 %v3093, 0.0
  %v3130 = vmax.f32 %v3094, 0.0
  %v3131 = vmax.f32 %v3095, 0.0
  %v3132 = vmax.f32 %v3096, 0.0
  %v3133 = vmax.f32 %v3097, 0.0
  %v3134 = vmax.f32 %v3098, 0.0
  %v3135 = vmax.f32 %v3099, 0.0
  %v3136 = vmax.f32 %v3100, 0.0
  %v3137 = vmax.f32 %v3101, 0.0
  %v3138 = vmax.f32 %v3102, 0.0
  %v3139 = vmax.f32 %v3103, 0.0
  %v3140 = vmax.f32 %v3104, 0.0
  %3141 = vst.msk [vmem:[#allocation8] sm:$0xff] %vm92, %v3105
  %3142 = vst.msk [vmem:[#allocation8 + $0x8] sm:$0xff] %vm92, %v3106
  %3143 = vst.msk [vmem:[#allocation8 + $0x10] sm:$0xff] %vm92, %v3107
  %3144 = vst.msk [vmem:[#allocation8 + $0x18] sm:$0xff] %vm92, %v3108
  %3145 = vst.msk [vmem:[#allocation8 + $0x20] sm:$0xff] %vm92, %v3109
  %3146 = vst.msk [vmem:[#allocation8 + $0x28] sm:$0xff] %vm92, %v3110
  %3147 = vst.msk [vmem:[#allocation8 + $0x30] sm:$0xff] %vm92, %v3111
  %3148 = vst.msk [vmem:[#allocation8 + $0x38] sm:$0xff] %vm92, %v3112
  %3149 = vst.msk [vmem:[#allocation8 + $0x40] sm:$0xff] %vm92, %v3113
  %3150 = vst.msk [vmem:[#allocation8 + $0x48] sm:$0xff] %vm92, %v3114
  %3151 = vst.msk [vmem:[#allocation8 + $0x50] sm:$0xff] %vm92, %v3115
  %3152 = vst.msk [vmem:[#allocation8 + $0x58] sm:$0xff] %vm92, %v3116
  %3153 = vst.msk [vmem:[#allocation8 + $0x60] sm:$0xff] %vm92, %v3117
  %3154 = vst.msk [vmem:[#allocation8 + $0x68] sm:$0xff] %vm92, %v3118
  %3155 = vst.msk [vmem:[#allocation8 + $0x70] sm:$0xff] %vm92, %v3119
  %3156 = vst.msk [vmem:[#allocation8 + $0x78] sm:$0xff] %vm92, %v3120
  %3157 = vst.msk [vmem:[#allocation8 + $0x80] sm:$0xff] %vm92, %v3121
  %3158 = vst.msk [vmem:[#allocation8 + $0x88] sm:$0xff] %vm92, %v3122
  %3159 = vst.msk [vmem:[#allocation8 + $0x90] sm:$0xff] %vm92, %v3123
  %3160 = vst.msk [vmem:[#allocation8 + $0x98] sm:$0xff] %vm92, %v3124
  %3161 = vst.msk [vmem:[#allocation8 + $0xa0] sm:$0xff] %vm92, %v3125
  %3162 = vst.msk [vmem:[#allocation8 + $0xa8] sm:$0xff] %vm92, %v3126
  %3163 = vst.msk [vmem:[#allocation8 + $0xb0] sm:$0xff] %vm92, %v3127
  %3164 = vst.msk [vmem:[#allocation8 + $0xb8] sm:$0xff] %vm92, %v3128
  %3165 = vst.msk [vmem:[#allocation8 + $0xc0] sm:$0xff] %vm92, %v3129
  %3166 = vst.msk [vmem:[#allocation8 + $0xc8] sm:$0xff] %vm92, %v3130
  %3167 = vst.msk [vmem:[#allocation8 + $0xd0] sm:$0xff] %vm92, %v3131
  %3168 = vst.msk [vmem:[#allocation8 + $0xd8] sm:$0xff] %vm92, %v3132
  %3169 = vst.msk [vmem:[#allocation8 + $0xe0] sm:$0xff] %vm92, %v3133
  %3170 = vst.msk [vmem:[#allocation8 + $0xe8] sm:$0xff] %vm92, %v3134
  %3171 = vst.msk [vmem:[#allocation8 + $0xf0] sm:$0xff] %vm92, %v3135
  %3172 = vst.msk [vmem:[#allocation8 + $0xf8] sm:$0xff] %vm92, %v3136
  %3173 = vst.msk [vmem:[#allocation8 + $0x100] sm:$0xff] %vm92, %v3137
  %3174 = vst.msk [vmem:[#allocation8 + $0x108] sm:$0xff] %vm92, %v3138
  %3175 = vst.msk [vmem:[#allocation8 + $0x110] sm:$0xff] %vm92, %v3139
  %vm3176 = vcmask 522240
  %3177 = vst.msk [vmem:[#allocation8 + $0x118] sm:$0x7f] %vm3176, %v3140
  %v3178 = vld [vmem:[#allocation8] ss:$2 sm:$0xf]
  %vm3179 = vcmask 519168
  %3180 = vst.msk [vmem:[#allocation3 + $0x9] sm:$0xf] %vm3179, %v3178
  %s3181 = scalar_lea.vmem [#allocation8], 32
  %v3182 = vld [vmem:[%s3181] ss:$2 sm:$0xf]
  %3183 = vst.msk [vmem:[#allocation3 + $0x11] sm:$0xf] %vm3179, %v3182
  %s3184 = scalar_lea.vmem [#allocation8], 64
  %v3185 = vld [vmem:[%s3184] ss:$2 sm:$0xf]
  %3186 = vst.msk [vmem:[#allocation3 + $0x19] sm:$0xf] %vm3179, %v3185
  %s3187 = scalar_lea.vmem [#allocation8], 96
  %v3188 = vld [vmem:[%s3187] ss:$2 sm:$0xf]
  %3189 = vst.msk [vmem:[#allocation3 + $0x21] sm:$0xf] %vm3179, %v3188
  %s3190 = scalar_lea.vmem [#allocation8], 176
  %v3191 = vld [vmem:[%s3190] ss:$2 sm:$0xf]
  %3192 = vst.msk [vmem:[#allocation3 + $0x41] sm:$0xf] %vm3179, %v3191
  %s3193 = scalar_lea.vmem [#allocation8], 208
  %v3194 = vld [vmem:[%s3193] ss:$2 sm:$0xf]
  %3195 = vst.msk [vmem:[#allocation3 + $0x49] sm:$0xf] %vm3179, %v3194
  %s3196 = scalar_lea.vmem [#allocation8], 240
  %v3197 = vld [vmem:[%s3196] ss:$2 sm:$0xf]
  %3198 = vst.msk [vmem:[#allocation3 + $0x51] sm:$0xf] %vm3179, %v3197
  %s3199 = scalar_lea.vmem [#allocation8], 272
  %v3200 = vld [vmem:[%s3199] ss:$2 sm:$0xf]
  %3201 = vst.msk [vmem:[#allocation3 + $0x59] sm:$0xf] %vm3179, %v3200
  %v3202 = vld [vmem:[#allocation3] sm:$0xff]
  %v3203 = vld [vmem:[#allocation3 + $0x8] sm:$0xff]
  %v3204 = vld [vmem:[#allocation3 + $0x10] sm:$0xff]
  %v3205 = vld [vmem:[#allocation3 + $0x18] sm:$0xff]
  %v3206 = vld [vmem:[#allocation3 + $0x20] sm:$0xff]
  %v3207 = vld [vmem:[#allocation3 + $0x28] sm:$0xff]
  %v3208 = vld [vmem:[#allocation3 + $0x30] sm:$0xff]
  %v3209 = vld [vmem:[#allocation3 + $0x38] sm:$0xff]
  %v3210 = vld [vmem:[#allocation3 + $0x40] sm:$0xff]
  %v3211 = vld [vmem:[#allocation3 + $0x48] sm:$0xff]
  %v3212 = vld [vmem:[#allocation3 + $0x50] sm:$0xff]
  %v3213 = vld [vmem:[#allocation3 + $0x58] sm:$0xff]
  %v3214 = vld [vmem:[#allocation3 + $0x60] sm:$0xff]
  %v3215 = vld [vmem:[#allocation3 + $0x68] sm:$0xff]
  %v3216 = vpack.c.bf16 %v3203, %v3202
  %v3217 = vpack.c.bf16 %v3205, %v3204
  %v3218 = vpack.c.bf16 %v3207, %v3206
  %v3219 = vpack.c.bf16 %v3209, %v3208
  %v3220 = vpack.c.bf16 %v3211, %v3210
  %v3221 = vpack.c.bf16 %v3212, %v3212
  %v3222 = vpack.c.bf16 %v3213, %v3212
  %v3223 = vpack.c.bf16 %v3204, %v3203
  %v3224 = vpack.c.bf16 %v3206, %v3205
  %v3225 = vpack.c.bf16 %v3208, %v3207
  %v3226 = vpack.c.bf16 %v3210, %v3209
  %v3227 = vpack.c.bf16 %v3212, %v3211
  %v3228 = vpack.c.bf16 %v3213, %v3213
  %v3229 = vpack.c.bf16 %v3214, %v3213
  %v3230 = vpack.c.bf16 %v3214, %v3214
  %v3231 = vpack.c.bf16 %v3215, %v3214
  %v3233 = vshrl.u32 %v3216, 16
  %v3235 = vshll.u32 %v3216, 16
  %v3237 = vrot.slane %v3235, 1
  %v3238 = vor.u32 %v3233, %v3237
  %v3240 = vshll.u32 %v3217, 16
  %v3242 = vrot.slane %v3240, 1
  %v3243 = vsel %vm1533, %v3238, %v3242
  %v3244 = vshrl.u32 %v3217, 16
  %v3246 = vor.u32 %v3244, %v3242
  %v3248 = vshll.u32 %v3218, 16
  %v3250 = vrot.slane %v3248, 1
  %v3251 = vsel %vm1533, %v3246, %v3250
  %v3252 = vshrl.u32 %v3218, 16
  %v3254 = vor.u32 %v3252, %v3250
  %v3256 = vshll.u32 %v3219, 16
  %v3258 = vrot.slane %v3256, 1
  %v3259 = vsel %vm1533, %v3254, %v3258
  %v3260 = vshrl.u32 %v3219, 16
  %v3262 = vor.u32 %v3260, %v3258
  %v3264 = vshll.u32 %v3220, 16
  %v3266 = vrot.slane %v3264, 1
  %v3267 = vsel %vm1533, %v3262, %v3266
  %v3268 = vshrl.u32 %v3220, 16
  %v3270 = vor.u32 %v3268, %v3266
  %v3272 = vshll.u32 %v3222, 16
  %v3274 = vrot.slane %v3272, 1
  %v3275 = vsel %vm1533, %v3270, %v3274
  %v3276 = vshrl.u32 %v3222, 16
  %v3278 = vor.u32 %v3276, %v3274
  %3279 = vrot.lane.b32.xlu0 %v3243, 64
  %v3280 = vpop.permute.xlu0 %3279
  %3281 = vrot.lane.b32.xlu0 %v3251, 64
  %v3282 = vpop.permute.xlu0 %3281
  %3283 = vrot.lane.b32.xlu0 %v3259, 64
  %v3284 = vpop.permute.xlu0 %3283
  %3285 = vrot.lane.b32.xlu0 %v3267, 64
  %v3286 = vpop.permute.xlu0 %3285
  %3287 = vrot.lane.b32.xlu0 %v3275, 64
  %v3288 = vpop.permute.xlu0 %3287
  %3289 = vrot.lane.b32.xlu0 %v3278, 64
  %v3290 = vpop.permute.xlu0 %3289
  %v3297 = vrot.slane %v3216, 1
  %v3298 = vrot.slane %v3217, 1
  %v3299 = vsel %vm1748, %v3297, %v3298
  %v3300 = vrot.slane %v3218, 1
  %v3301 = vsel %vm1748, %v3298, %v3300
  %v3302 = vrot.slane %v3219, 1
  %v3303 = vsel %vm1748, %v3300, %v3302
  %v3304 = vrot.slane %v3220, 1
  %v3305 = vsel %vm1748, %v3302, %v3304
  %v3306 = vrot.slane %v3222, 1
  %v3307 = vsel %vm1748, %v3304, %v3306
  %3314 = vrot.lane.b32.xlu0 %v3223, 64
  %v3315 = vpop.permute.xlu0 %3314
  %3316 = vrot.lane.b32.xlu0 %v3224, 64
  %v3317 = vpop.permute.xlu0 %3316
  %3318 = vrot.lane.b32.xlu0 %v3225, 64
  %v3319 = vpop.permute.xlu0 %3318
  %3320 = vrot.lane.b32.xlu0 %v3226, 64
  %v3321 = vpop.permute.xlu0 %3320
  %3322 = vrot.lane.b32.xlu0 %v3227, 64
  %v3323 = vpop.permute.xlu0 %3322
  %3324 = vrot.lane.b32.xlu0 %v3228, 64
  %v3325 = vpop.permute.xlu0 %3324
  %v3327 = vshrl.u32 %v3223, 16
  %v3329 = vshll.u32 %v3223, 16
  %v3331 = vrot.slane %v3329, 1
  %v3332 = vor.u32 %v3327, %v3331
  %v3334 = vshll.u32 %v3224, 16
  %v3336 = vrot.slane %v3334, 1
  %v3337 = vsel %vm1533, %v3332, %v3336
  %v3338 = vshrl.u32 %v3224, 16
  %v3340 = vor.u32 %v3338, %v3336
  %v3342 = vshll.u32 %v3225, 16
  %v3344 = vrot.slane %v3342, 1
  %v3345 = vsel %vm1533, %v3340, %v3344
  %v3346 = vshrl.u32 %v3225, 16
  %v3348 = vor.u32 %v3346, %v3344
  %v3350 = vshll.u32 %v3226, 16
  %v3352 = vrot.slane %v3350, 1
  %v3353 = vsel %vm1533, %v3348, %v3352
  %v3354 = vshrl.u32 %v3226, 16
  %v3356 = vor.u32 %v3354, %v3352
  %v3358 = vshll.u32 %v3227, 16
  %v3360 = vrot.slane %v3358, 1
  %v3361 = vsel %vm1533, %v3356, %v3360
  %v3362 = vshrl.u32 %v3227, 16
  %v3364 = vor.u32 %v3362, %v3360
  %v3366 = vshll.u32 %v3229, 16
  %v3368 = vrot.slane %v3366, 1
  %v3369 = vsel %vm1533, %v3364, %v3368
  %v3370 = vshrl.u32 %v3229, 16
  %v3372 = vor.u32 %v3370, %v3368
  %v3374 = vrot.slane %v3223, 1
  %v3375 = vrot.slane %v3224, 1
  %v3376 = vsel %vm1748, %v3374, %v3375
  %v3377 = vrot.slane %v3225, 1
  %v3378 = vsel %vm1748, %v3375, %v3377
  %v3379 = vrot.slane %v3226, 1
  %v3380 = vsel %vm1748, %v3377, %v3379
  %v3381 = vrot.slane %v3227, 1
  %v3382 = vsel %vm1748, %v3379, %v3381
  %v3383 = vrot.slane %v3229, 1
  %v3384 = vsel %vm1748, %v3381, %v3383
  %3385 = vrot.lane.b32.xlu0 %v3376, 64
  %v3386 = vpop.permute.xlu0 %3385
  %3387 = vrot.lane.b32.xlu0 %v3378, 64
  %v3388 = vpop.permute.xlu0 %3387
  %3389 = vrot.lane.b32.xlu0 %v3380, 64
  %v3390 = vpop.permute.xlu0 %3389
  %3391 = vrot.lane.b32.xlu0 %v3382, 64
  %v3392 = vpop.permute.xlu0 %3391
  %3393 = vrot.lane.b32.xlu0 %v3384, 64
  %v3394 = vpop.permute.xlu0 %3393
  %3395 = vrot.lane.b32.xlu0 %v3383, 64
  %v3396 = vpop.permute.xlu0 %3395
  %v3398 = vshll.u32 %v3231, 16
  %v3400 = vrot.slane %v3398, 1
  %v3401 = vsel %vm1533, %v3278, %v3400
  %v3402 = vshrl.u32 %v3231, 16
  %v3404 = vor.u32 %v3402, %v3400
  %3405 = vrot.lane.b32.xlu0 %v3401, 64
  %v3406 = vpop.permute.xlu0 %3405
  %3407 = vrot.lane.b32.xlu0 %v3404, 64
  %v3408 = vpop.permute.xlu0 %3407
  %v3410 = vrot.slane %v3231, 1
  %v3411 = vsel %vm1748, %v3306, %v3410
  %v3413 = vsel %vm92, %v3216, %v3280
  %v3416 = vsel %vm92, %v3217, %v3282
  %v3419 = vsel %vm92, %v3218, %v3284
  %v3422 = vsel %vm92, %v3219, %v3286
  %v3425 = vsel %vm92, %v3220, %v3288
  %v3429 = vsel %vm92, %v3221, %v3290
  %v3433 = vsel %vm92, %v3299, %v3315
  %v3437 = vsel %vm92, %v3301, %v3317
  %v3441 = vsel %vm92, %v3303, %v3319
  %v3445 = vsel %vm92, %v3305, %v3321
  %v3449 = vsel %vm92, %v3307, %v3323
  %v3453 = vsel %vm92, %v3306, %v3325
  %v3457 = vsel %vm92, %v3337, %v3386
  %v3461 = vsel %vm92, %v3345, %v3388
  %v3465 = vsel %vm92, %v3353, %v3390
  %v3469 = vsel %vm92, %v3361, %v3392
  %v3473 = vsel %vm92, %v3369, %v3394
  %v3477 = vsel %vm92, %v3372, %v3396
  %v3480 = vsel %vm92, %v3222, %v3406
  %v3484 = vsel %vm92, %v3230, %v3408
  %v3486 = vld [vmem:[%s3] sm:$0xf]
  %v3487 = vld [vmem:[%s3 + $0x4] sm:$0xf]
  %v3488 = vld [vmem:[%s3 + $0x8] sm:$0xf]
  %v3489 = vld [vmem:[%s3 + $0xc] sm:$0xf]
  %v3490 = vld [vmem:[%s3 + $0x10] sm:$0xf]
  %v3491 = vld [vmem:[%s3 + $0x14] sm:$0xf]
  %v3492 = vld [vmem:[%s3 + $0x18] sm:$0xf]
  %v3493 = vld [vmem:[%s3 + $0x1c] sm:$0xf]
  %v3494 = vld [vmem:[%s3 + $0x20] sm:$0xf]
  %v3495 = vld [vmem:[%s3 + $0x24] sm:$0xf]
  %v3496 = vld [vmem:[%s3 + $0x28] sm:$0xf]
  %v3497 = vld [vmem:[%s3 + $0x2c] sm:$0xf]
  %v3498 = vld [vmem:[%s3 + $0x30] sm:$0xf]
  %v3499 = vld [vmem:[%s3 + $0x34] sm:$0xf]
  %v3500 = vld [vmem:[%s3 + $0x38] sm:$0xf]
  %v3501 = vld [vmem:[%s3 + $0x3c] sm:$0xf]
  %v3502 = vld [vmem:[%s3 + $0x40] sm:$0xf]
  %v3503 = vld [vmem:[%s3 + $0x44] sm:$0xf]
  %v3504 = vld [vmem:[%s3 + $0x48] sm:$0xf]
  %v3505 = vld [vmem:[%s3 + $0x4c] sm:$0xf]
  %v3506 = vld [vmem:[%s3 + $0x50] sm:$0xf]
  %v3507 = vld [vmem:[%s3 + $0x54] sm:$0xf]
  %v3508 = vld [vmem:[%s3 + $0x58] sm:$0xf]
  %v3509 = vld [vmem:[%s3 + $0x5c] sm:$0xf]
  %v3510 = vld [vmem:[%s3 + $0x60] sm:$0xf]
  %v3511 = vld [vmem:[%s3 + $0x64] sm:$0xf]
  %v3512 = vld [vmem:[%s3 + $0x68] sm:$0xf]
  %v3513 = vld [vmem:[%s3 + $0x6c] sm:$0xf]
  %v3514 = vld [vmem:[%s3 + $0x70] sm:$0xf]
  %v3515 = vld [vmem:[%s3 + $0x74] sm:$0xf]
  %v3516 = vld [vmem:[%s3 + $0x78] sm:$0xf]
  %v3517 = vld [vmem:[%s3 + $0x7c] sm:$0xf]
  %v3518 = vld [vmem:[%s3 + $0x80] sm:$0xf]
  %v3519 = vld [vmem:[%s3 + $0x84] sm:$0xf]
  %v3520 = vld [vmem:[%s3 + $0x88] sm:$0xf]
  %v3521 = vld [vmem:[%s3 + $0x8c] sm:$0xf]
  %v3522 = vld [vmem:[%s3 + $0x90] sm:$0xf]
  %v3523 = vld [vmem:[%s3 + $0x94] sm:$0xf]
  %v3524 = vld [vmem:[%s3 + $0x98] sm:$0xf]
  %v3525 = vld [vmem:[%s3 + $0x9c] sm:$0xf]
  %v3526 = vld [vmem:[%s3 + $0xa0] sm:$0xf]
  %v3527 = vld [vmem:[%s3 + $0xa4] sm:$0xf]
  %v3528 = vld [vmem:[%s3 + $0xa8] sm:$0xf]
  %v3529 = vld [vmem:[%s3 + $0xac] sm:$0xf]
  %v3530 = vld [vmem:[%s3 + $0xb0] sm:$0xf]
  %v3531 = vld [vmem:[%s3 + $0xb4] sm:$0xf]
  %v3532 = vld [vmem:[%s3 + $0xb8] sm:$0xf]
  %v3533 = vld [vmem:[%s3 + $0xbc] sm:$0xf]
  %v3534 = vld [vmem:[%s3 + $0xc0] sm:$0xf]
  %v3535 = vld [vmem:[%s3 + $0xc4] sm:$0xf]
  %v3536 = vld [vmem:[%s3 + $0xc8] sm:$0xf]
  %v3537 = vld [vmem:[%s3 + $0xcc] sm:$0xf]
  %v3538 = vld [vmem:[%s3 + $0xd0] sm:$0xf]
  %v3539 = vld [vmem:[%s3 + $0xd4] sm:$0xf]
  %v3540 = vld [vmem:[%s3 + $0xd8] sm:$0xf]
  %v3541 = vld [vmem:[%s3 + $0xdc] sm:$0xf]
  %v3542 = vld [vmem:[%s3 + $0xe0] sm:$0xf]
  %v3543 = vld [vmem:[%s3 + $0xe4] sm:$0xf]
  %v3544 = vld [vmem:[%s3 + $0xe8] sm:$0xf]
  %v3545 = vld [vmem:[%s3 + $0xec] sm:$0xf]
  %v3546 = vld [vmem:[%s3 + $0xf0] sm:$0xf]
  %v3547 = vld [vmem:[%s3 + $0xf4] sm:$0xf]
  %v3548 = vld [vmem:[%s3 + $0xf8] sm:$0xf]
  %v3549 = vld [vmem:[%s3 + $0xfc] sm:$0xf]
  %v3550 = vld [vmem:[%s3 + $0x100] sm:$0xf]
  %v3551 = vld [vmem:[%s3 + $0x104] sm:$0xf]
  %v3552 = vld [vmem:[%s3 + $0x108] sm:$0xf]
  %v3553 = vld [vmem:[%s3 + $0x10c] sm:$0xf]
  %v3554 = vld [vmem:[%s3 + $0x110] sm:$0xf]
  %v3555 = vld [vmem:[%s3 + $0x114] sm:$0xf]
  %v3556 = vld [vmem:[%s3 + $0x118] sm:$0xf]
  %v3557 = vld [vmem:[%s3 + $0x11c] sm:$0xf]
  %v3558 = vld [vmem:[%s9] sm:$0x1]
  %v3560 = vlaneseq
  %v3561 = vshrl.u32 %v3560, 7
  %v3562 = vsub.s32 0, %v3561
  %v3563 = vrot.slane %v3558, %v3562
  %v3637 = vunpack.c.l.b16 %v3486
  %v3638 = vunpack.c.l.b16 %v3487
  %v3639 = vunpack.c.l.b16 %v3488
  %v3640 = vunpack.c.l.b16 %v3489
  %v3641 = vunpack.c.l.b16 %v3490
  %v3642 = vunpack.c.l.b16 %v3491
  %v3643 = vunpack.c.l.b16 %v3492
  %v3644 = vunpack.c.l.b16 %v3493
  %v3645 = vunpack.c.l.b16 %v3494
  %v3646 = vunpack.c.l.b16 %v3495
  %v3647 = vunpack.c.l.b16 %v3496
  %v3648 = vunpack.c.l.b16 %v3497
  %v3649 = vunpack.c.l.b16 %v3498
  %v3650 = vunpack.c.l.b16 %v3499
  %v3651 = vunpack.c.l.b16 %v3500
  %v3652 = vunpack.c.l.b16 %v3501
  %v3653 = vunpack.c.l.b16 %v3502
  %v3654 = vunpack.c.l.b16 %v3503
  %v3655 = vunpack.c.l.b16 %v3504
  %v3656 = vunpack.c.l.b16 %v3505
  %v3657 = vunpack.c.l.b16 %v3506
  %v3658 = vunpack.c.l.b16 %v3507
  %v3659 = vunpack.c.l.b16 %v3508
  %v3660 = vunpack.c.l.b16 %v3509
  %v3661 = vunpack.c.l.b16 %v3510
  %v3662 = vunpack.c.l.b16 %v3511
  %v3663 = vunpack.c.l.b16 %v3512
  %v3664 = vunpack.c.l.b16 %v3513
  %v3665 = vunpack.c.l.b16 %v3514
  %v3666 = vunpack.c.l.b16 %v3515
  %v3667 = vunpack.c.l.b16 %v3516
  %v3668 = vunpack.c.l.b16 %v3517
  %v3669 = vunpack.c.l.b16 %v3518
  %v3670 = vunpack.c.l.b16 %v3519
  %v3671 = vunpack.c.l.b16 %v3520
  %v3672 = vunpack.c.l.b16 %v3521
  %v3673 = vunpack.c.l.b16 %v3522
  %v3674 = vunpack.c.l.b16 %v3523
  %v3675 = vunpack.c.l.b16 %v3524
  %v3676 = vunpack.c.l.b16 %v3525
  %v3677 = vunpack.c.l.b16 %v3526
  %v3678 = vunpack.c.l.b16 %v3527
  %v3679 = vunpack.c.l.b16 %v3528
  %v3680 = vunpack.c.l.b16 %v3529
  %v3681 = vunpack.c.l.b16 %v3530
  %v3682 = vunpack.c.l.b16 %v3531
  %v3683 = vunpack.c.l.b16 %v3532
  %v3684 = vunpack.c.l.b16 %v3533
  %v3685 = vunpack.c.l.b16 %v3534
  %v3686 = vunpack.c.l.b16 %v3535
  %v3687 = vunpack.c.l.b16 %v3536
  %v3688 = vunpack.c.l.b16 %v3537
  %v3689 = vunpack.c.l.b16 %v3538
  %v3690 = vunpack.c.l.b16 %v3539
  %v3691 = vunpack.c.l.b16 %v3540
  %v3692 = vunpack.c.l.b16 %v3541
  %v3693 = vunpack.c.l.b16 %v3542
  %v3694 = vunpack.c.l.b16 %v3543
  %v3695 = vunpack.c.l.b16 %v3544
  %v3696 = vunpack.c.l.b16 %v3545
  %v3697 = vunpack.c.l.b16 %v3546
  %v3698 = vunpack.c.l.b16 %v3547
  %v3699 = vunpack.c.l.b16 %v3548
  %v3700 = vunpack.c.l.b16 %v3549
  %v3701 = vunpack.c.l.b16 %v3550
  %v3702 = vunpack.c.l.b16 %v3551
  %v3703 = vunpack.c.l.b16 %v3552
  %v3704 = vunpack.c.l.b16 %v3553
  %v3705 = vunpack.c.l.b16 %v3554
  %v3706 = vunpack.c.l.b16 %v3555
  %v3707 = vunpack.c.l.b16 %v3556
  %v3708 = vunpack.c.l.b16 %v3557
  %v3709 = vpack.c.b16 %v3638, %v3637
  %v3710 = vpack.c.b16 %v3640, %v3639
  %v3711 = vpack.c.b16 %v3642, %v3641
  %v3712 = vpack.c.b16 %v3644, %v3643
  %v3713 = vpack.c.b16 %v3646, %v3645
  %v3714 = vpack.c.b16 %v3648, %v3647
  %v3715 = vpack.c.b16 %v3650, %v3649
  %v3716 = vpack.c.b16 %v3652, %v3651
  %v3717 = vpack.c.b16 %v3654, %v3653
  %v3718 = vpack.c.b16 %v3656, %v3655
  %v3719 = vpack.c.b16 %v3658, %v3657
  %v3720 = vpack.c.b16 %v3660, %v3659
  %v3721 = vpack.c.b16 %v3662, %v3661
  %v3722 = vpack.c.b16 %v3664, %v3663
  %v3723 = vpack.c.b16 %v3666, %v3665
  %v3724 = vpack.c.b16 %v3668, %v3667
  %v3725 = vpack.c.b16 %v3670, %v3669
  %v3726 = vpack.c.b16 %v3672, %v3671
  %v3727 = vpack.c.b16 %v3674, %v3673
  %v3728 = vpack.c.b16 %v3676, %v3675
  %v3729 = vpack.c.b16 %v3678, %v3677
  %v3730 = vpack.c.b16 %v3680, %v3679
  %v3731 = vpack.c.b16 %v3682, %v3681
  %v3732 = vpack.c.b16 %v3684, %v3683
  %v3733 = vpack.c.b16 %v3686, %v3685
  %v3734 = vpack.c.b16 %v3688, %v3687
  %v3735 = vpack.c.b16 %v3690, %v3689
  %v3736 = vpack.c.b16 %v3692, %v3691
  %v3737 = vpack.c.b16 %v3694, %v3693
  %v3738 = vpack.c.b16 %v3696, %v3695
  %v3739 = vpack.c.b16 %v3698, %v3697
  %v3740 = vpack.c.b16 %v3700, %v3699
  %v3741 = vpack.c.b16 %v3702, %v3701
  %v3742 = vpack.c.b16 %v3704, %v3703
  %v3743 = vpack.c.b16 %v3706, %v3705
  %v3744 = vpack.c.b16 %v3708, %v3707
  %v3781 = vsel %vm92, %v3301, 0
  %v3783 = vsel %vm92, %v3303, 0
  %v3785 = vsel %vm92, %v3305, 0
  %v3787 = vsel %vm92, %v3307, 0
  %v3790 = vsel %vm92, %v3411, 0
  %v3793 = vsel %vm92, %v3410, 0
  %3795 = vmatprep.subr.bf16.mxu0 0
  %3796 = vmatpush1.bf16.msra.mxu0 %v3709
  %3797 = vmatprep.subr.bf16.mxu0 0
  %3798 = vmatpush1.bf16.msra.mxu0 %v3710
  %3799 = vmatprep.subr.bf16.mxu0 0
  %3800 = vmatpush1.bf16.msra.mxu0 %v3711
  %3801 = vmatprep.subr.bf16.mxu0 0
  %3802 = vmatpush1.bf16.msra.mxu0 %v3712
  %3803 = vmatprep.subr.bf16.mxu0 0
  %3804 = vmatpush1.bf16.msra.mxu0 %v3713
  %3805 = vmatprep.subr.bf16.mxu0 0
  %3806 = vmatpush1.bf16.msra.mxu0 %v3714
  %3807 = vmatprep.subr.bf16.mxu0 0
  %3808 = vmatpush1.bf16.msra.mxu0 %v3715
  %3809 = vmatprep.subr.bf16.mxu0 0
  %3810 = vmatpush1.bf16.msra.mxu0 %v3716
  %3811 = vmatprep.subr.bf16.mxu0 0
  %3812 = vmatpush1.bf16.msra.mxu0 %v3717
  %3813 = vmatprep.subr.bf16.mxu0 0
  %3814 = vmatpush1.bf16.msra.mxu0 %v3718
  %3815 = vmatprep.subr.bf16.mxu0 0
  %3816 = vmatpush1.bf16.msra.mxu0 %v3719
  %3817 = vmatprep.subr.bf16.mxu0 0
  %3818 = vmatpush1.bf16.msra.mxu0 %v3720
  %3819 = vmatprep.subr.bf16.mxu0 0
  %3820 = vmatpush1.bf16.msra.mxu0 %v3721
  %3821 = vmatprep.subr.bf16.mxu0 0
  %3822 = vmatpush1.bf16.msra.mxu0 %v3722
  %3823 = vmatprep.subr.bf16.mxu0 0
  %3824 = vmatpush1.bf16.msra.mxu0 %v3723
  %3825 = vmatprep.subr.bf16.mxu0 0
  %3826 = vmatpush1.bf16.msra.mxu0 %v3724
  %3827 = vmatprep.mubr.bf16.mxu0 %v3433
  %3828 = vmatmul.mubr.bf16.gmra.mrb[0].mxu0 %v3413
  %v3829 = vpop.f32.mrb[0].mxu0
  %v3830 = vadd.f32 %v3563, %v3829
  %v3831 = vpop.f32.mrb[0].mxu0
  %v3832 = vpop.f32.mrb[0].mxu0
  %v3833 = vadd.f32 %v3563, %v3832
  %v3834 = vpop.f32.mrb[0].mxu0
  %3835 = vmatprep.mubr.bf16.mxu0 %v3437
  %3836 = vmatmul.mubr.bf16.gmra.mrb[0].mxu0 %v3416
  %v3837 = vpop.f32.mrb[0].mxu0
  %v3838 = vadd.f32 %v3563, %v3837
  %v3839 = vpop.f32.mrb[0].mxu0
  %v3840 = vpop.f32.mrb[0].mxu0
  %v3841 = vadd.f32 %v3563, %v3840
  %v3842 = vpop.f32.mrb[0].mxu0
  %3843 = vmatprep.mubr.bf16.mxu0 %v3441
  %3844 = vmatmul.mubr.bf16.gmra.mrb[0].mxu0 %v3419
  %v3845 = vpop.f32.mrb[0].mxu0
  %v3846 = vadd.f32 %v3563, %v3845
  %v3847 = vpop.f32.mrb[0].mxu0
  %v3848 = vpop.f32.mrb[0].mxu0
  %v3849 = vadd.f32 %v3563, %v3848
  %v3850 = vpop.f32.mrb[0].mxu0
  %3851 = vmatprep.mubr.bf16.mxu0 %v3445
  %3852 = vmatmul.mubr.bf16.gmra.mrb[0].mxu0 %v3422
  %v3853 = vpop.f32.mrb[0].mxu0
  %v3854 = vadd.f32 %v3563, %v3853
  %v3855 = vpop.f32.mrb[0].mxu0
  %v3856 = vpop.f32.mrb[0].mxu0
  %v3857 = vadd.f32 %v3563, %v3856
  %v3858 = vpop.f32.mrb[0].mxu0
  %3859 = vmatprep.mubr.bf16.mxu0 %v3449
  %3860 = vmatmul.mubr.bf16.gmra.mrb[0].mxu0 %v3425
  %v3861 = vpop.f32.mrb[0].mxu0
  %v3862 = vadd.f32 %v3563, %v3861
  %v3863 = vpop.f32.mrb[0].mxu0
  %v3864 = vpop.f32.mrb[0].mxu0
  %v3865 = vadd.f32 %v3563, %v3864
  %v3866 = vpop.f32.mrb[0].mxu0
  %3867 = vmatprep.mubr.bf16.mxu0 %v3453
  %3868 = vmatmul.mubr.bf16.gmra.mrb[0].mxu0 %v3429
  %v3869 = vpop.f32.mrb[0].mxu0
  %v3870 = vadd.f32 %v3563, %v3869
  %v3871 = vpop.f32.mrb[0].mxu0
  %v3872 = vpop.f32.mrb[0].mxu0
  %v3873 = vpop.f32.mrb[0].mxu0
  %3874 = vdwg.mxu0
  %3875 = vmatprep.subr.bf16.mxu0 0
  %3876 = vmatpush1.bf16.msra.mxu0 %v3725
  %3877 = vmatprep.subr.bf16.mxu0 0
  %3878 = vmatpush1.bf16.msra.mxu0 %v3726
  %3879 = vmatprep.subr.bf16.mxu0 0
  %3880 = vmatpush1.bf16.msra.mxu0 %v3727
  %3881 = vmatprep.subr.bf16.mxu0 0
  %3882 = vmatpush1.bf16.msra.mxu0 %v3728
  %3883 = vmatprep.subr.bf16.mxu0 0
  %3884 = vmatpush1.bf16.msra.mxu0 %v3729
  %3885 = vmatprep.subr.bf16.mxu0 0
  %3886 = vmatpush1.bf16.msra.mxu0 %v3730
  %3887 = vmatprep.subr.bf16.mxu0 0
  %3888 = vmatpush1.bf16.msra.mxu0 %v3731
  %3889 = vmatprep.subr.bf16.mxu0 0
  %3890 = vmatpush1.bf16.msra.mxu0 %v3732
  %3891 = vmatprep.subr.bf16.mxu0 0
  %3892 = vmatpush1.bf16.msra.mxu0 %v3733
  %3893 = vmatprep.subr.bf16.mxu0 0
  %3894 = vmatpush1.bf16.msra.mxu0 %v3734
  %3895 = vmatprep.subr.bf16.mxu0 0
  %3896 = vmatpush1.bf16.msra.mxu0 %v3735
  %3897 = vmatprep.subr.bf16.mxu0 0
  %3898 = vmatpush1.bf16.msra.mxu0 %v3736
  %3899 = vmatprep.subr.bf16.mxu0 0
  %3900 = vmatpush1.bf16.msra.mxu0 %v3737
  %3901 = vmatprep.subr.bf16.mxu0 0
  %3902 = vmatpush1.bf16.msra.mxu0 %v3738
  %3903 = vmatprep.subr.bf16.mxu0 0
  %3904 = vmatpush1.bf16.msra.mxu0 %v3739
  %3905 = vmatprep.subr.bf16.mxu0 0
  %3906 = vmatpush1.bf16.msra.mxu0 %v3740
  %3907 = vmatprep.mubr.bf16.mxu0 %v3416
  %3908 = vmatmul.mubr.bf16.gmra.mrb[0].mxu0 %v3457
  %v3909 = vpop.f32.mrb[0].mxu0
  %v3910 = vadd.f32 %v3830, %v3909
  %v3911 = vpop.f32.mrb[0].mxu0
  %v3912 = vpop.f32.mrb[0].mxu0
  %v3913 = vadd.f32 %v3833, %v3912
  %v3914 = vpop.f32.mrb[0].mxu0
  %3915 = vmatprep.mubr.bf16.mxu0 %v3419
  %3916 = vmatmul.mubr.bf16.gmra.mrb[0].mxu0 %v3461
  %v3917 = vpop.f32.mrb[0].mxu0
  %v3918 = vadd.f32 %v3838, %v3917
  %v3919 = vpop.f32.mrb[0].mxu0
  %v3920 = vpop.f32.mrb[0].mxu0
  %v3921 = vadd.f32 %v3841, %v3920
  %v3922 = vpop.f32.mrb[0].mxu0
  %3923 = vmatprep.mubr.bf16.mxu0 %v3422
  %3924 = vmatmul.mubr.bf16.gmra.mrb[0].mxu0 %v3465
  %v3925 = vpop.f32.mrb[0].mxu0
  %v3926 = vadd.f32 %v3846, %v3925
  %v3927 = vpop.f32.mrb[0].mxu0
  %v3928 = vpop.f32.mrb[0].mxu0
  %v3929 = vadd.f32 %v3849, %v3928
  %v3930 = vpop.f32.mrb[0].mxu0
  %3931 = vmatprep.mubr.bf16.mxu0 %v3425
  %3932 = vmatmul.mubr.bf16.gmra.mrb[0].mxu0 %v3469
  %v3933 = vpop.f32.mrb[0].mxu0
  %v3934 = vadd.f32 %v3854, %v3933
  %v3935 = vpop.f32.mrb[0].mxu0
  %v3936 = vpop.f32.mrb[0].mxu0
  %v3937 = vadd.f32 %v3857, %v3936
  %v3938 = vpop.f32.mrb[0].mxu0
  %3939 = vmatprep.mubr.bf16.mxu0 %v3480
  %3940 = vmatmul.mubr.bf16.gmra.mrb[0].mxu0 %v3473
  %v3941 = vpop.f32.mrb[0].mxu0
  %v3942 = vadd.f32 %v3862, %v3941
  %v3943 = vpop.f32.mrb[0].mxu0
  %v3944 = vpop.f32.mrb[0].mxu0
  %v3945 = vadd.f32 %v3865, %v3944
  %v3946 = vpop.f32.mrb[0].mxu0
  %3947 = vmatprep.mubr.bf16.mxu0 %v3484
  %3948 = vmatmul.mubr.bf16.gmra.mrb[0].mxu0 %v3477
  %v3949 = vpop.f32.mrb[0].mxu0
  %v3950 = vadd.f32 %v3870, %v3949
  %v3951 = vpop.f32.mrb[0].mxu0
  %v3952 = vpop.f32.mrb[0].mxu0
  %v3953 = vpop.f32.mrb[0].mxu0
  %3954 = vdwg.mxu0
  %3955 = vmatprep.subr.bf16.mxu0 0
  %3956 = vmatpush1.bf16.msra.mxu0 %v3741
  %3957 = vmatprep.subr.bf16.mxu0 0
  %3958 = vmatpush1.bf16.msra.mxu0 %v3742
  %3959 = vmatprep.subr.bf16.mxu0 0
  %3960 = vmatpush1.bf16.msra.mxu0 %v3743
  %3961 = vmatprep.subr.bf16.mxu0 0
  %3962 = vmatpush1.bf16.msra.mxu0 %v3744
  %3963 = vmatprep.subr.bf16.mxu0 0
  %3964 = vmatpush1.bf16.msra.mxu0 0
  %3965 = vmatprep.subr.bf16.mxu0 0
  %3966 = vmatpush1.bf16.msra.mxu0 0
  %3967 = vmatprep.subr.bf16.mxu0 0
  %3968 = vmatpush1.bf16.msra.mxu0 0
  %3969 = vmatprep.subr.bf16.mxu0 0
  %3970 = vmatpush1.bf16.msra.mxu0 0
  %3971 = vmatprep.subr.bf16.mxu0 0
  %3972 = vmatpush1.bf16.msra.mxu0 0
  %3973 = vmatprep.subr.bf16.mxu0 0
  %3974 = vmatpush1.bf16.msra.mxu0 0
  %3975 = vmatprep.subr.bf16.mxu0 0
  %3976 = vmatpush1.bf16.msra.mxu0 0
  %3977 = vmatprep.subr.bf16.mxu0 0
  %3978 = vmatpush1.bf16.msra.mxu0 0
  %3979 = vmatprep.subr.bf16.mxu0 0
  %3980 = vmatpush1.bf16.msra.mxu0 0
  %3981 = vmatprep.subr.bf16.mxu0 0
  %3982 = vmatpush1.bf16.msra.mxu0 0
  %3983 = vmatprep.subr.bf16.mxu0 0
  %3984 = vmatpush1.bf16.msra.mxu0 0
  %3985 = vmatprep.subr.bf16.mxu0 0
  %3986 = vmatpush1.bf16.msra.mxu0 0
  %3987 = vmatprep.mubr.bf16.mxu0 0
  %3988 = vmatmul.mubr.bf16.gmra.mrb[0].mxu0 %v3781
  %v3989 = vpop.f32.mrb[0].mxu0
  %v3990 = vadd.f32 %v3910, %v3989
  %v3991 = vpop.f32.mrb[0].mxu0
  %v3992 = vpop.f32.mrb[0].mxu0
  %v3993 = vadd.f32 %v3913, %v3992
  %v3994 = vpop.f32.mrb[0].mxu0
  %3995 = vmatprep.mubr.bf16.mxu0 0
  %3996 = vmatmul.mubr.bf16.gmra.mrb[0].mxu0 %v3783
  %v3997 = vpop.f32.mrb[0].mxu0
  %v3998 = vadd.f32 %v3918, %v3997
  %v3999 = vpop.f32.mrb[0].mxu0
  %v4000 = vpop.f32.mrb[0].mxu0
  %v4001 = vadd.f32 %v3921, %v4000
  %v4002 = vpop.f32.mrb[0].mxu0
  %4003 = vmatprep.mubr.bf16.mxu0 0
  %4004 = vmatmul.mubr.bf16.gmra.mrb[0].mxu0 %v3785
  %v4005 = vpop.f32.mrb[0].mxu0
  %v4006 = vadd.f32 %v3926, %v4005
  %v4007 = vpop.f32.mrb[0].mxu0
  %v4008 = vpop.f32.mrb[0].mxu0
  %v4009 = vadd.f32 %v3929, %v4008
  %v4010 = vpop.f32.mrb[0].mxu0
  %4011 = vmatprep.mubr.bf16.mxu0 0
  %4012 = vmatmul.mubr.bf16.gmra.mrb[0].mxu0 %v3787
  %v4013 = vpop.f32.mrb[0].mxu0
  %v4014 = vadd.f32 %v3934, %v4013
  %v4015 = vpop.f32.mrb[0].mxu0
  %v4016 = vpop.f32.mrb[0].mxu0
  %v4017 = vadd.f32 %v3937, %v4016
  %v4018 = vpop.f32.mrb[0].mxu0
  %4019 = vmatprep.mubr.bf16.mxu0 0
  %4020 = vmatmul.mubr.bf16.gmra.mrb[0].mxu0 %v3790
  %v4021 = vpop.f32.mrb[0].mxu0
  %v4022 = vadd.f32 %v3942, %v4021
  %v4023 = vpop.f32.mrb[0].mxu0
  %v4024 = vpop.f32.mrb[0].mxu0
  %v4025 = vadd.f32 %v3945, %v4024
  %v4026 = vpop.f32.mrb[0].mxu0
  %4027 = vmatprep.mubr.bf16.mxu0 0
  %4028 = vmatmul.mubr.bf16.gmra.mrb[0].mxu0 %v3793
  %v4029 = vpop.f32.mrb[0].mxu0
  %v4030 = vadd.f32 %v3950, %v4029
  %v4031 = vpop.f32.mrb[0].mxu0
  %v4032 = vpop.f32.mrb[0].mxu0
  %v4033 = vpop.f32.mrb[0].mxu0
  %4034 = vdwg.mxu0
  %v4046 = vrot.slane %v3990, 1
  %v4047 = vrot.slane %v3993, 1
  %v4048 = vsel %vm976, %v4046, %v4047
  %v4049 = vrot.slane %v3998, 1
  %v4050 = vsel %vm976, %v4047, %v4049
  %v4051 = vrot.slane %v4001, 1
  %v4052 = vsel %vm976, %v4049, %v4051
  %v4053 = vrot.slane %v4006, 1
  %v4054 = vsel %vm976, %v4051, %v4053
  %v4055 = vrot.slane %v4009, 1
  %v4056 = vsel %vm976, %v4053, %v4055
  %v4057 = vrot.slane %v4014, 1
  %v4058 = vsel %vm976, %v4055, %v4057
  %v4059 = vrot.slane %v4017, 1
  %v4060 = vsel %vm976, %v4057, %v4059
  %v4061 = vrot.slane %v4022, 1
  %v4062 = vsel %vm976, %v4059, %v4061
  %v4063 = vrot.slane %v4025, 1
  %v4064 = vsel %vm976, %v4061, %v4063
  %v4065 = vrot.slane %v4030, 1
  %v4066 = vsel %vm976, %v4063, %v4065
  %v4078 = vmax.f32 %v3990, %v4048
  %v4079 = vmax.f32 %v3993, %v4050
  %v4080 = vmax.f32 %v3998, %v4052
  %v4081 = vmax.f32 %v4001, %v4054
  %v4082 = vmax.f32 %v4006, %v4056
  %v4083 = vmax.f32 %v4009, %v4058
  %v4084 = vmax.f32 %v4014, %v4060
  %v4085 = vmax.f32 %v4017, %v4062
  %v4086 = vmax.f32 %v4022, %v4064
  %v4087 = vmax.f32 %v4025, %v4066
  %v4088 = vmax.f32 %v4030, %v4065
  %v4089 = vmax.f32 %v4078, %v4079
  %v4090 = vmax.f32 %v4079, %v4080
  %v4091 = vmax.f32 %v4080, %v4081
  %v4092 = vmax.f32 %v4081, %v4082
  %v4093 = vmax.f32 %v4082, %v4083
  %v4094 = vmax.f32 %v4083, %v4084
  %v4095 = vmax.f32 %v4084, %v4085
  %v4096 = vmax.f32 %v4085, %v4086
  %v4097 = vmax.f32 %v4086, %v4087
  %v4098 = vmax.f32 %v4087, %v4088
  %v4099 = vmax.f32 %v4089, 0.0
  %v4100 = vmax.f32 %v4090, 0.0
  %v4101 = vmax.f32 %v4091, 0.0
  %v4102 = vmax.f32 %v4092, 0.0
  %v4103 = vmax.f32 %v4093, 0.0
  %v4104 = vmax.f32 %v4094, 0.0
  %v4105 = vmax.f32 %v4095, 0.0
  %v4106 = vmax.f32 %v4096, 0.0
  %v4107 = vmax.f32 %v4097, 0.0
  %v4108 = vmax.f32 %v4098, 0.0
  %4109 = vst [vmem:[#allocation9] sm:$0xff] %v4099
  %4110 = vst [vmem:[#allocation9 + $0x8] sm:$0xff] %v4100
  %4111 = vst [vmem:[#allocation9 + $0x10] sm:$0xff] %v4101
  %4112 = vst [vmem:[#allocation9 + $0x18] sm:$0xff] %v4102
  %4113 = vst [vmem:[#allocation9 + $0x20] sm:$0xff] %v4103
  %4114 = vst [vmem:[#allocation9 + $0x28] sm:$0xff] %v4104
  %4115 = vst [vmem:[#allocation9 + $0x30] sm:$0xff] %v4105
  %4116 = vst [vmem:[#allocation9 + $0x38] sm:$0xff] %v4106
  %4117 = vst [vmem:[#allocation9 + $0x40] sm:$0xff] %v4107
  %4118 = vst [vmem:[#allocation9 + $0x48] sm:$0x7f] %v4108
  %v4119 = vld [vmem:[#allocation9] ss:$2 sm:$0x3]
  %s4120 = scalar_lea.vmem [#allocation4], 9
  %4121 = vst [vmem:[%s4120] ss:$2 sm:$0x3] %v4119
  %s4122 = scalar_lea.vmem [#allocation9], 16
  %v4123 = vld [vmem:[%s4122] ss:$2 sm:$0x3]
  %s4124 = scalar_lea.vmem [#allocation4], 25
  %4125 = vst [vmem:[%s4124] ss:$2 sm:$0x3] %v4123
  %s4126 = scalar_lea.vmem [#allocation9], 56
  %v4127 = vld [vmem:[%s4126] ss:$2 sm:$0x3]
  %s4128 = scalar_lea.vmem [#allocation4], 65
  %4129 = vst [vmem:[%s4128] ss:$2 sm:$0x3] %v4127
  %s4130 = scalar_lea.vmem [#allocation9], 72
  %v4131 = vld [vmem:[%s4130] ss:$2 sm:$0x3]
  %s4132 = scalar_lea.vmem [#allocation4], 81
  %4133 = vst [vmem:[%s4132] ss:$2 sm:$0x3] %v4131
  %v4134 = vld [vmem:[#allocation4] sm:$0xff]
  %v4135 = vld [vmem:[#allocation4 + $0x8] sm:$0xff]
  %v4136 = vld [vmem:[#allocation4 + $0x10] sm:$0xff]
  %v4137 = vld [vmem:[#allocation4 + $0x18] sm:$0xff]
  %v4138 = vld [vmem:[#allocation4 + $0x20] sm:$0xff]
  %v4139 = vld [vmem:[#allocation4 + $0x28] sm:$0xff]
  %v4140 = vld [vmem:[#allocation4 + $0x30] sm:$0xff]
  %v4141 = vld [vmem:[#allocation4 + $0x38] sm:$0xff]
  %v4142 = vld [vmem:[#allocation4 + $0x40] sm:$0xff]
  %v4143 = vld [vmem:[#allocation4 + $0x48] sm:$0xff]
  %v4144 = vld [vmem:[#allocation4 + $0x50] sm:$0xff]
  %v4145 = vld [vmem:[#allocation4 + $0x58] sm:$0xff]
  %v4146 = vld [vmem:[#allocation4 + $0x60] sm:$0xff]
  %v4147 = vld [vmem:[#allocation4 + $0x68] sm:$0xff]
  %v4148 = vpack.c.bf16 %v4135, %v4134
  %v4149 = vpack.c.bf16 %v4137, %v4136
  %v4150 = vpack.c.bf16 %v4139, %v4138
  %v4151 = vpack.c.bf16 %v4141, %v4140
  %v4152 = vpack.c.bf16 %v4143, %v4142
  %v4153 = vpack.c.bf16 %v4145, %v4144
  %v4154 = vpack.c.bf16 %v4147, %v4146
  %v4155 = vld [vmem:[%s4] sm:$0xff]
  %v4156 = vld [vmem:[%s4 + $0x8] sm:$0xff]
  %v4157 = vld [vmem:[%s4 + $0x10] sm:$0xf]
  %v4158 = vld [vmem:[%s4 + $0x14] sm:$0xff]
  %v4159 = vld [vmem:[%s4 + $0x1c] sm:$0xff]
  %v4160 = vld [vmem:[%s4 + $0x24] sm:$0xf]
  %v4161 = vld [vmem:[%s4 + $0x28] sm:$0xff]
  %v4162 = vld [vmem:[%s4 + $0x30] sm:$0xff]
  %v4163 = vld [vmem:[%s4 + $0x38] sm:$0xf]
  %v4164 = vld [vmem:[%s4 + $0x3c] sm:$0xff]
  %v4165 = vld [vmem:[%s4 + $0x44] sm:$0xff]
  %v4166 = vld [vmem:[%s4 + $0x4c] sm:$0xf]
  %v4167 = vld [vmem:[%s4 + $0x50] sm:$0xff]
  %v4168 = vld [vmem:[%s4 + $0x58] sm:$0xff]
  %v4169 = vld [vmem:[%s4 + $0x60] sm:$0xf]
  %v4170 = vld [vmem:[%s4 + $0x64] sm:$0xff]
  %v4171 = vld [vmem:[%s4 + $0x6c] sm:$0xff]
  %v4172 = vld [vmem:[%s4 + $0x74] sm:$0xf]
  %v4173 = vld [vmem:[%s4 + $0x78] sm:$0xff]
  %v4174 = vld [vmem:[%s4 + $0x80] sm:$0xff]
  %v4175 = vld [vmem:[%s4 + $0x88] sm:$0xf]
  %v4176 = vld [vmem:[%s4 + $0x8c] sm:$0xff]
  %v4177 = vld [vmem:[%s4 + $0x94] sm:$0xff]
  %v4178 = vld [vmem:[%s4 + $0x9c] sm:$0xf]
  %v4179 = vld [vmem:[%s4 + $0xa0] sm:$0xff]
  %v4180 = vld [vmem:[%s4 + $0xa8] sm:$0xff]
  %v4181 = vld [vmem:[%s4 + $0xb0] sm:$0xf]
  %v4182 = vld [vmem:[%s4 + $0xb4] sm:$0xff]
  %v4183 = vld [vmem:[%s4 + $0xbc] sm:$0xff]
  %v4184 = vld [vmem:[%s4 + $0xc4] sm:$0xf]
  %v4185 = vld [vmem:[%s4 + $0xc8] sm:$0xff]
  %v4186 = vld [vmem:[%s4 + $0xd0] sm:$0xff]
  %v4187 = vld [vmem:[%s4 + $0xd8] sm:$0xf]
  %v4188 = vld [vmem:[%s4 + $0xdc] sm:$0xff]
  %v4189 = vld [vmem:[%s4 + $0xe4] sm:$0xff]
  %v4190 = vld [vmem:[%s4 + $0xec] sm:$0xf]
  %v4191 = vld [vmem:[%s4 + $0xf0] sm:$0xff]
  %v4192 = vld [vmem:[%s4 + $0xf8] sm:$0xff]
  %v4193 = vld [vmem:[%s4 + $0x100] sm:$0xf]
  %v4194 = vld [vmem:[%s4 + $0x104] sm:$0xff]
  %v4195 = vld [vmem:[%s4 + $0x10c] sm:$0xff]
  %v4196 = vld [vmem:[%s4 + $0x114] sm:$0xf]
  %v4197 = vld [vmem:[%s4 + $0x118] sm:$0xff]
  %v4198 = vld [vmem:[%s4 + $0x120] sm:$0xff]
  %v4199 = vld [vmem:[%s4 + $0x128] sm:$0xf]
  %v4200 = vld [vmem:[%s4 + $0x12c] sm:$0xff]
  %v4201 = vld [vmem:[%s4 + $0x134] sm:$0xff]
  %v4202 = vld [vmem:[%s4 + $0x13c] sm:$0xf]
  %v4251 = vunpack.c.l.b16 %v4155
  %v4252 = vunpack.c.h.b16 %v4155
  %v4253 = vunpack.c.l.b16 %v4156
  %v4254 = vunpack.c.h.b16 %v4156
  %v4255 = vunpack.c.l.b16 %v4157
  %v4256 = vunpack.c.l.b16 %v4158
  %v4257 = vunpack.c.h.b16 %v4158
  %v4258 = vunpack.c.l.b16 %v4159
  %v4259 = vunpack.c.h.b16 %v4159
  %v4260 = vunpack.c.l.b16 %v4160
  %v4261 = vunpack.c.l.b16 %v4161
  %v4262 = vunpack.c.h.b16 %v4161
  %v4263 = vunpack.c.l.b16 %v4162
  %v4264 = vunpack.c.h.b16 %v4162
  %v4265 = vunpack.c.l.b16 %v4163
  %v4266 = vunpack.c.l.b16 %v4164
  %v4267 = vunpack.c.h.b16 %v4164
  %v4268 = vunpack.c.l.b16 %v4165
  %v4269 = vunpack.c.h.b16 %v4165
  %v4270 = vunpack.c.l.b16 %v4166
  %v4271 = vunpack.c.l.b16 %v4167
  %v4272 = vunpack.c.h.b16 %v4167
  %v4273 = vunpack.c.l.b16 %v4168
  %v4274 = vunpack.c.h.b16 %v4168
  %v4275 = vunpack.c.l.b16 %v4169
  %v4276 = vunpack.c.l.b16 %v4170
  %v4277 = vunpack.c.h.b16 %v4170
  %v4278 = vunpack.c.l.b16 %v4171
  %v4279 = vunpack.c.h.b16 %v4171
  %v4280 = vunpack.c.l.b16 %v4172
  %v4281 = vunpack.c.l.b16 %v4173
  %v4282 = vunpack.c.h.b16 %v4173
  %v4283 = vunpack.c.l.b16 %v4174
  %v4284 = vunpack.c.h.b16 %v4174
  %v4285 = vunpack.c.l.b16 %v4175
  %v4286 = vunpack.c.l.b16 %v4176
  %v4287 = vunpack.c.h.b16 %v4176
  %v4288 = vunpack.c.l.b16 %v4177
  %v4289 = vunpack.c.h.b16 %v4177
  %v4290 = vunpack.c.l.b16 %v4178
  %v4291 = vunpack.c.l.b16 %v4179
  %v4292 = vunpack.c.h.b16 %v4179
  %v4293 = vunpack.c.l.b16 %v4180
  %v4294 = vunpack.c.h.b16 %v4180
  %v4295 = vunpack.c.l.b16 %v4181
  %v4296 = vunpack.c.l.b16 %v4182
  %v4297 = vunpack.c.h.b16 %v4182
  %v4298 = vunpack.c.l.b16 %v4183
  %v4299 = vunpack.c.h.b16 %v4183
  %v4300 = vunpack.c.l.b16 %v4184
  %v4301 = vunpack.c.l.b16 %v4185
  %v4302 = vunpack.c.h.b16 %v4185
  %v4303 = vunpack.c.l.b16 %v4186
  %v4304 = vunpack.c.h.b16 %v4186
  %v4305 = vunpack.c.l.b16 %v4187
  %v4306 = vunpack.c.l.b16 %v4188
  %v4307 = vunpack.c.h.b16 %v4188
  %v4308 = vunpack.c.l.b16 %v4189
  %v4309 = vunpack.c.h.b16 %v4189
  %v4310 = vunpack.c.l.b16 %v4190
  %v4311 = vunpack.c.l.b16 %v4191
  %v4312 = vunpack.c.h.b16 %v4191
  %v4313 = vunpack.c.l.b16 %v4192
  %v4314 = vunpack.c.h.b16 %v4192
  %v4315 = vunpack.c.l.b16 %v4193
  %v4316 = vunpack.c.l.b16 %v4194
  %v4317 = vunpack.c.h.b16 %v4194
  %v4318 = vunpack.c.l.b16 %v4195
  %v4319 = vunpack.c.h.b16 %v4195
  %v4320 = vunpack.c.l.b16 %v4196
  %v4321 = vunpack.c.l.b16 %v4197
  %v4322 = vunpack.c.h.b16 %v4197
  %v4323 = vunpack.c.l.b16 %v4198
  %v4324 = vunpack.c.h.b16 %v4198
  %v4325 = vunpack.c.l.b16 %v4199
  %v4326 = vunpack.c.l.b16 %v4200
  %v4327 = vunpack.c.h.b16 %v4200
  %v4328 = vunpack.c.l.b16 %v4201
  %v4329 = vunpack.c.h.b16 %v4201
  %v4330 = vunpack.c.l.b16 %v4202
  %v4331 = vpack.c.b16 %v4256, %v4251
  %v4332 = vpack.c.b16 %v4257, %v4252
  %v4333 = vpack.c.b16 %v4258, %v4253
  %v4334 = vpack.c.b16 %v4259, %v4254
  %v4335 = vpack.c.b16 %v4260, %v4255
  %v4336 = vpack.c.b16 %v4266, %v4261
  %v4337 = vpack.c.b16 %v4267, %v4262
  %v4338 = vpack.c.b16 %v4268, %v4263
  %v4339 = vpack.c.b16 %v4269, %v4264
  %v4340 = vpack.c.b16 %v4270, %v4265
  %v4341 = vpack.c.b16 %v4276, %v4271
  %v4342 = vpack.c.b16 %v4277, %v4272
  %v4343 = vpack.c.b16 %v4278, %v4273
  %v4344 = vpack.c.b16 %v4279, %v4274
  %v4345 = vpack.c.b16 %v4280, %v4275
  %v4346 = vpack.c.b16 %v4286, %v4281
  %v4347 = vpack.c.b16 %v4287, %v4282
  %v4348 = vpack.c.b16 %v4288, %v4283
  %v4349 = vpack.c.b16 %v4289, %v4284
  %v4350 = vpack.c.b16 %v4290, %v4285
  %v4351 = vpack.c.b16 %v4296, %v4291
  %v4352 = vpack.c.b16 %v4297, %v4292
  %v4353 = vpack.c.b16 %v4298, %v4293
  %v4354 = vpack.c.b16 %v4299, %v4294
  %v4355 = vpack.c.b16 %v4300, %v4295
  %v4356 = vpack.c.b16 %v4306, %v4301
  %v4357 = vpack.c.b16 %v4307, %v4302
  %v4358 = vpack.c.b16 %v4308, %v4303
  %v4359 = vpack.c.b16 %v4309, %v4304
  %v4360 = vpack.c.b16 %v4310, %v4305
  %v4361 = vpack.c.b16 %v4316, %v4311
  %v4362 = vpack.c.b16 %v4317, %v4312
  %v4363 = vpack.c.b16 %v4318, %v4313
  %v4364 = vpack.c.b16 %v4319, %v4314
  %v4365 = vpack.c.b16 %v4320, %v4315
  %v4366 = vpack.c.b16 %v4326, %v4321
  %v4367 = vpack.c.b16 %v4327, %v4322
  %v4368 = vpack.c.b16 %v4328, %v4323
  %v4369 = vpack.c.b16 %v4329, %v4324
  %v4370 = vpack.c.b16 %v4330, %v4325
  %4411 = vmatprep.subr.bf16.mxu0 %v4332
  %4412 = vmatpush1.bf16.msra.mxu0 %v4331
  %4413 = vmatprep.subr.bf16.mxu0 %v4337
  %4414 = vmatpush1.bf16.msra.mxu0 %v4336
  %4415 = vmatprep.subr.bf16.mxu0 %v4342
  %4416 = vmatpush1.bf16.msra.mxu0 %v4341
  %4417 = vmatprep.subr.bf16.mxu0 %v4347
  %4418 = vmatpush1.bf16.msra.mxu0 %v4346
  %4419 = vmatprep.subr.bf16.mxu0 %v4352
  %4420 = vmatpush1.bf16.msra.mxu0 %v4351
  %4421 = vmatprep.subr.bf16.mxu0 %v4357
  %4422 = vmatpush1.bf16.msra.mxu0 %v4356
  %4423 = vmatprep.subr.bf16.mxu0 %v4362
  %4424 = vmatpush1.bf16.msra.mxu0 %v4361
  %4425 = vmatprep.subr.bf16.mxu0 %v4367
  %4426 = vmatpush1.bf16.msra.mxu0 %v4366
  %4427 = vmatprep.subr.bf16.mxu0 0
  %4428 = vmatpush1.bf16.msra.mxu0 0
  %4429 = vmatprep.subr.bf16.mxu0 0
  %4430 = vmatpush1.bf16.msra.mxu0 0
  %4431 = vmatprep.subr.bf16.mxu0 0
  %4432 = vmatpush1.bf16.msra.mxu0 0
  %4433 = vmatprep.subr.bf16.mxu0 0
  %4434 = vmatpush1.bf16.msra.mxu0 0
  %4435 = vmatprep.subr.bf16.mxu0 0
  %4436 = vmatpush1.bf16.msra.mxu0 0
  %4437 = vmatprep.subr.bf16.mxu0 0
  %4438 = vmatpush1.bf16.msra.mxu0 0
  %4439 = vmatprep.subr.bf16.mxu0 0
  %4440 = vmatpush1.bf16.msra.mxu0 0
  %4441 = vmatprep.subr.bf16.mxu0 0
  %4442 = vmatpush1.bf16.msra.mxu0 0
  %4443 = vmatprep.mubr.bf16.mxu0 0
  %4444 = vmatmul.mubr.bf16.gmra.mrb[0].mxu0 %v4148
  %v4445 = vpop.f32.mrb[0].mxu0
  %v4446 = vadd.f32 0.0, %v4445
  %v4447 = vpop.f32.mrb[0].mxu0
  %v4448 = vadd.f32 0.0, %v4447
  %v4449 = vpop.f32.mrb[0].mxu0
  %v4450 = vadd.f32 0.0, %v4449
  %v4451 = vpop.f32.mrb[0].mxu0
  %v4452 = vadd.f32 0.0, %v4451
  %4453 = vmatprep.mubr.bf16.mxu0 0
  %4454 = vmatmul.mubr.bf16.gmra.mrb[0].mxu0 %v4149
  %v4455 = vpop.f32.mrb[0].mxu0
  %v4456 = vadd.f32 0.0, %v4455
  %v4457 = vpop.f32.mrb[0].mxu0
  %v4458 = vadd.f32 0.0, %v4457
  %v4459 = vpop.f32.mrb[0].mxu0
  %v4460 = vadd.f32 0.0, %v4459
  %v4461 = vpop.f32.mrb[0].mxu0
  %v4462 = vadd.f32 0.0, %v4461
  %4463 = vmatprep.mubr.bf16.mxu0 0
  %4464 = vmatmul.mubr.bf16.gmra.mrb[0].mxu0 %v4150
  %v4465 = vpop.f32.mrb[0].mxu0
  %v4466 = vadd.f32 0.0, %v4465
  %v4467 = vpop.f32.mrb[0].mxu0
  %v4468 = vadd.f32 0.0, %v4467
  %v4469 = vpop.f32.mrb[0].mxu0
  %v4470 = vpop.f32.mrb[0].mxu0
  %4471 = vmatprep.mubr.bf16.mxu0 0
  %4472 = vmatmul.mubr.bf16.gmra.mrb[0].mxu0 %v4151
  %v4473 = vpop.f32.mrb[0].mxu0
  %v4474 = vpop.f32.mrb[0].mxu0
  %v4475 = vpop.f32.mrb[0].mxu0
  %v4476 = vadd.f32 0.0, %v4475
  %v4477 = vpop.f32.mrb[0].mxu0
  %v4478 = vadd.f32 0.0, %v4477
  %4479 = vmatprep.mubr.bf16.mxu0 0
  %4480 = vmatmul.mubr.bf16.gmra.mrb[0].mxu0 %v4152
  %v4481 = vpop.f32.mrb[0].mxu0
  %v4482 = vadd.f32 0.0, %v4481
  %v4483 = vpop.f32.mrb[0].mxu0
  %v4484 = vadd.f32 0.0, %v4483
  %v4485 = vpop.f32.mrb[0].mxu0
  %v4486 = vadd.f32 0.0, %v4485
  %v4487 = vpop.f32.mrb[0].mxu0
  %v4488 = vadd.f32 0.0, %v4487
  %4489 = vmatprep.mubr.bf16.mxu0 0
  %4490 = vmatmul.mubr.bf16.gmra.mrb[0].mxu0 %v4153
  %v4491 = vpop.f32.mrb[0].mxu0
  %v4492 = vadd.f32 0.0, %v4491
  %v4493 = vpop.f32.mrb[0].mxu0
  %v4494 = vadd.f32 0.0, %v4493
  %v4495 = vpop.f32.mrb[0].mxu0
  %v4496 = vadd.f32 0.0, %v4495
  %v4497 = vpop.f32.mrb[0].mxu0
  %v4498 = vadd.f32 0.0, %v4497
  %4499 = vmatprep.mubr.bf16.mxu0 0
  %4500 = vmatmul.mubr.bf16.gmra.mrb[0].mxu0 %v4154
  %v4501 = vpop.f32.mrb[0].mxu0
  %v4502 = vpop.f32.mrb[0].mxu0
  %v4503 = vpop.f32.mrb[0].mxu0
  %v4504 = vpop.f32.mrb[0].mxu0
  %4505 = vdwg.mxu0
  %4506 = vmatprep.subr.bf16.mxu0 %v4334
  %4507 = vmatpush1.bf16.msra.mxu0 %v4333
  %4508 = vmatprep.subr.bf16.mxu0 %v4339
  %4509 = vmatpush1.bf16.msra.mxu0 %v4338
  %4510 = vmatprep.subr.bf16.mxu0 %v4344
  %4511 = vmatpush1.bf16.msra.mxu0 %v4343
  %4512 = vmatprep.subr.bf16.mxu0 %v4349
  %4513 = vmatpush1.bf16.msra.mxu0 %v4348
  %4514 = vmatprep.subr.bf16.mxu0 %v4354
  %4515 = vmatpush1.bf16.msra.mxu0 %v4353
  %4516 = vmatprep.subr.bf16.mxu0 %v4359
  %4517 = vmatpush1.bf16.msra.mxu0 %v4358
  %4518 = vmatprep.subr.bf16.mxu0 %v4364
  %4519 = vmatpush1.bf16.msra.mxu0 %v4363
  %4520 = vmatprep.subr.bf16.mxu0 %v4369
  %4521 = vmatpush1.bf16.msra.mxu0 %v4368
  %4522 = vmatprep.subr.bf16.mxu0 0
  %4523 = vmatpush1.bf16.msra.mxu0 0
  %4524 = vmatprep.subr.bf16.mxu0 0
  %4525 = vmatpush1.bf16.msra.mxu0 0
  %4526 = vmatprep.subr.bf16.mxu0 0
  %4527 = vmatpush1.bf16.msra.mxu0 0
  %4528 = vmatprep.subr.bf16.mxu0 0
  %4529 = vmatpush1.bf16.msra.mxu0 0
  %4530 = vmatprep.subr.bf16.mxu0 0
  %4531 = vmatpush1.bf16.msra.mxu0 0
  %4532 = vmatprep.subr.bf16.mxu0 0
  %4533 = vmatpush1.bf16.msra.mxu0 0
  %4534 = vmatprep.subr.bf16.mxu0 0
  %4535 = vmatpush1.bf16.msra.mxu0 0
  %4536 = vmatprep.subr.bf16.mxu0 0
  %4537 = vmatpush1.bf16.msra.mxu0 0
  %4538 = vmatprep.mubr.bf16.mxu0 0
  %4539 = vmatmul.mubr.bf16.gmra.mrb[0].mxu0 %v4148
  %v4540 = vpop.f32.mrb[0].mxu0
  %v4541 = vpop.f32.mrb[0].mxu0
  %v4542 = vpop.f32.mrb[0].mxu0
  %v4543 = vadd.f32 0.0, %v4542
  %v4544 = vpop.f32.mrb[0].mxu0
  %4545 = vmatprep.mubr.bf16.mxu0 0
  %4546 = vmatmul.mubr.bf16.gmra.mrb[0].mxu0 %v4149
  %v4547 = vpop.f32.mrb[0].mxu0
  %v4548 = vadd.f32 0.0, %v4547
  %v4549 = vpop.f32.mrb[0].mxu0
  %v4550 = vadd.f32 0.0, %v4549
  %v4551 = vpop.f32.mrb[0].mxu0
  %v4552 = vadd.f32 0.0, %v4551
  %v4553 = vpop.f32.mrb[0].mxu0
  %v4554 = vadd.f32 0.0, %v4553
  %4555 = vmatprep.mubr.bf16.mxu0 0
  %4556 = vmatmul.mubr.bf16.gmra.mrb[0].mxu0 %v4150
  %v4557 = vpop.f32.mrb[0].mxu0
  %v4558 = vadd.f32 0.0, %v4557
  %v4559 = vpop.f32.mrb[0].mxu0
  %v4560 = vadd.f32 0.0, %v4559
  %v4561 = vpop.f32.mrb[0].mxu0
  %v4562 = vadd.f32 0.0, %v4561
  %v4563 = vpop.f32.mrb[0].mxu0
  %v4564 = vadd.f32 0.0, %v4563
  %4565 = vmatprep.mubr.bf16.mxu0 0
  %4566 = vmatmul.mubr.bf16.gmra.mrb[0].mxu0 %v4151
  %v4567 = vpop.f32.mrb[0].mxu0
  %v4568 = vpop.f32.mrb[0].mxu0
  %v4569 = vadd.f32 0.0, %v4568
  %v4570 = vpop.f32.mrb[0].mxu0
  %v4571 = vpop.f32.mrb[0].mxu0
  %4572 = vmatprep.mubr.bf16.mxu0 0
  %4573 = vmatmul.mubr.bf16.gmra.mrb[0].mxu0 %v4152
  %v4574 = vpop.f32.mrb[0].mxu0
  %v4575 = vadd.f32 0.0, %v4574
  %v4576 = vpop.f32.mrb[0].mxu0
  %v4577 = vpop.f32.mrb[0].mxu0
  %v4578 = vadd.f32 0.0, %v4577
  %v4579 = vpop.f32.mrb[0].mxu0
  %v4580 = vadd.f32 0.0, %v4579
  %4581 = vmatprep.mubr.bf16.mxu0 0
  %4582 = vmatmul.mubr.bf16.gmra.mrb[0].mxu0 %v4153
  %v4583 = vpop.f32.mrb[0].mxu0
  %v4584 = vadd.f32 0.0, %v4583
  %v4585 = vpop.f32.mrb[0].mxu0
  %v4586 = vadd.f32 0.0, %v4585
  %v4587 = vpop.f32.mrb[0].mxu0
  %v4588 = vadd.f32 0.0, %v4587
  %v4589 = vpop.f32.mrb[0].mxu0
  %v4590 = vadd.f32 0.0, %v4589
  %4591 = vmatprep.mubr.bf16.mxu0 0
  %4592 = vmatmul.mubr.bf16.gmra.mrb[0].mxu0 %v4154
  %v4593 = vpop.f32.mrb[0].mxu0
  %v4594 = vadd.f32 0.0, %v4593
  %v4595 = vpop.f32.mrb[0].mxu0
  %v4596 = vadd.f32 0.0, %v4595
  %v4597 = vpop.f32.mrb[0].mxu0
  %v4598 = vpop.f32.mrb[0].mxu0
  %v4599 = vadd.f32 0.0, %v4598
  %4600 = vdwg.mxu0
  %4601 = vmatprep.subr.bf16.mxu0 0
  %4602 = vmatpush1.bf16.msra.mxu0 %v4335
  %4603 = vmatprep.subr.bf16.mxu0 0
  %4604 = vmatpush1.bf16.msra.mxu0 %v4340
  %4605 = vmatprep.subr.bf16.mxu0 0
  %4606 = vmatpush1.bf16.msra.mxu0 %v4345
  %4607 = vmatprep.subr.bf16.mxu0 0
  %4608 = vmatpush1.bf16.msra.mxu0 %v4350
  %4609 = vmatprep.subr.bf16.mxu0 0
  %4610 = vmatpush1.bf16.msra.mxu0 %v4355
  %4611 = vmatprep.subr.bf16.mxu0 0
  %4612 = vmatpush1.bf16.msra.mxu0 %v4360
  %4613 = vmatprep.subr.bf16.mxu0 0
  %4614 = vmatpush1.bf16.msra.mxu0 %v4365
  %4615 = vmatprep.subr.bf16.mxu0 0
  %4616 = vmatpush1.bf16.msra.mxu0 %v4370
  %4617 = vmatprep.subr.bf16.mxu0 0
  %4618 = vmatpush1.bf16.msra.mxu0 0
  %4619 = vmatprep.subr.bf16.mxu0 0
  %4620 = vmatpush1.bf16.msra.mxu0 0
  %4621 = vmatprep.subr.bf16.mxu0 0
  %4622 = vmatpush1.bf16.msra.mxu0 0
  %4623 = vmatprep.subr.bf16.mxu0 0
  %4624 = vmatpush1.bf16.msra.mxu0 0
  %4625 = vmatprep.subr.bf16.mxu0 0
  %4626 = vmatpush1.bf16.msra.mxu0 0
  %4627 = vmatprep.subr.bf16.mxu0 0
  %4628 = vmatpush1.bf16.msra.mxu0 0
  %4629 = vmatprep.subr.bf16.mxu0 0
  %4630 = vmatpush1.bf16.msra.mxu0 0
  %4631 = vmatprep.subr.bf16.mxu0 0
  %4632 = vmatpush1.bf16.msra.mxu0 0
  %4633 = vmatprep.mubr.bf16.mxu0 0
  %4634 = vmatmul.mubr.bf16.gmra.mrb[0].mxu0 %v4148
  %v4635 = vpop.f32.mrb[0].mxu0
  %v4636 = vpop.f32.mrb[0].mxu0
  %v4637 = vpop.f32.mrb[0].mxu0
  %v4638 = vpop.f32.mrb[0].mxu0
  %4639 = vmatprep.mubr.bf16.mxu0 0
  %4640 = vmatmul.mubr.bf16.gmra.mrb[0].mxu0 %v4149
  %v4641 = vpop.f32.mrb[0].mxu0
  %v4642 = vadd.f32 0.0, %v4641
  %v4643 = vpop.f32.mrb[0].mxu0
  %v4644 = vpop.f32.mrb[0].mxu0
  %v4645 = vadd.f32 0.0, %v4644
  %v4646 = vpop.f32.mrb[0].mxu0
  %4647 = vmatprep.mubr.bf16.mxu0 0
  %4648 = vmatmul.mubr.bf16.gmra.mrb[0].mxu0 %v4150
  %v4649 = vpop.f32.mrb[0].mxu0
  %v4650 = vadd.f32 0.0, %v4649
  %v4651 = vpop.f32.mrb[0].mxu0
  %v4652 = vpop.f32.mrb[0].mxu0
  %v4653 = vadd.f32 0.0, %v4652
  %v4654 = vpop.f32.mrb[0].mxu0
  %4655 = vmatprep.mubr.bf16.mxu0 0
  %4656 = vmatmul.mubr.bf16.gmra.mrb[0].mxu0 %v4151
  %v4657 = vpop.f32.mrb[0].mxu0
  %v4658 = vadd.f32 0.0, %v4657
  %v4659 = vpop.f32.mrb[0].mxu0
  %v4660 = vpop.f32.mrb[0].mxu0
  %v4661 = vpop.f32.mrb[0].mxu0
  %4662 = vmatprep.mubr.bf16.mxu0 0
  %4663 = vmatmul.mubr.bf16.gmra.mrb[0].mxu0 %v4152
  %v4664 = vpop.f32.mrb[0].mxu0
  %v4665 = vpop.f32.mrb[0].mxu0
  %v4666 = vpop.f32.mrb[0].mxu0
  %v4667 = vadd.f32 0.0, %v4666
  %v4668 = vpop.f32.mrb[0].mxu0
  %4669 = vmatprep.mubr.bf16.mxu0 0
  %4670 = vmatmul.mubr.bf16.gmra.mrb[0].mxu0 %v4153
  %v4671 = vpop.f32.mrb[0].mxu0
  %v4672 = vadd.f32 0.0, %v4671
  %v4673 = vpop.f32.mrb[0].mxu0
  %v4674 = vpop.f32.mrb[0].mxu0
  %v4675 = vadd.f32 0.0, %v4674
  %v4676 = vpop.f32.mrb[0].mxu0
  %4677 = vmatprep.mubr.bf16.mxu0 0
  %4678 = vmatmul.mubr.bf16.gmra.mrb[0].mxu0 %v4154
  %v4679 = vpop.f32.mrb[0].mxu0
  %v4680 = vadd.f32 0.0, %v4679
  %v4681 = vpop.f32.mrb[0].mxu0
  %v4682 = vpop.f32.mrb[0].mxu0
  %v4683 = vadd.f32 0.0, %v4682
  %v4684 = vpop.f32.mrb[0].mxu0
  %4685 = vdwg.mxu0
  %v4696 = vrot.slane %v4446, 1
  %v4697 = vrot.slane %v4450, 1
  %v4698 = vsel %vm976, %v4696, %v4697
  %v4699 = vrot.slane %v4456, 1
  %v4700 = vsel %vm976, %v4697, %v4699
  %v4701 = vrot.slane %v4460, 1
  %v4702 = vsel %vm976, %v4699, %v4701
  %v4703 = vrot.slane %v4466, 1
  %v4704 = vsel %vm976, %v4701, %v4703
  %v4705 = vrot.slane %v4476, 1
  %v4706 = vrot.slane %v4482, 1
  %v4707 = vsel %vm976, %v4705, %v4706
  %v4708 = vrot.slane %v4486, 1
  %v4709 = vsel %vm976, %v4706, %v4708
  %v4710 = vrot.slane %v4492, 1
  %v4711 = vsel %vm976, %v4708, %v4710
  %v4712 = vrot.slane %v4496, 1
  %v4713 = vsel %vm976, %v4710, %v4712
  %4714 = vrot.lane.b32.xlu0 %v4698, 64
  %v4715 = vpop.permute.xlu0 %4714
  %4716 = vrot.lane.b32.xlu0 %v4700, 64
  %v4717 = vpop.permute.xlu0 %4716
  %4718 = vrot.lane.b32.xlu0 %v4702, 64
  %v4719 = vpop.permute.xlu0 %4718
  %4720 = vrot.lane.b32.xlu0 %v4704, 64
  %v4721 = vpop.permute.xlu0 %4720
  %4722 = vrot.lane.b32.xlu0 %v4707, 64
  %v4723 = vpop.permute.xlu0 %4722
  %4724 = vrot.lane.b32.xlu0 %v4709, 64
  %v4725 = vpop.permute.xlu0 %4724
  %4726 = vrot.lane.b32.xlu0 %v4711, 64
  %v4727 = vpop.permute.xlu0 %4726
  %4728 = vrot.lane.b32.xlu0 %v4713, 64
  %v4729 = vpop.permute.xlu0 %4728
  %v4738 = vadd.f32 %v4446, %v4715
  %v4739 = vadd.f32 %v4450, %v4717
  %v4740 = vadd.f32 %v4456, %v4719
  %v4741 = vadd.f32 %v4460, %v4721
  %v4742 = vadd.f32 %v4476, %v4723
  %v4743 = vadd.f32 %v4482, %v4725
  %v4744 = vadd.f32 %v4486, %v4727
  %v4745 = vadd.f32 %v4492, %v4729
  %vm4756 = vcmask 1045504
  %v4757 = vrot.slane %v4448, 2
  %v4758 = vrot.slane %v4452, 2
  %v4759 = vsel %vm4756, %v4757, %v4758
  %v4760 = vrot.slane %v4458, 2
  %v4761 = vsel %vm4756, %v4758, %v4760
  %v4762 = vrot.slane %v4462, 2
  %v4763 = vsel %vm4756, %v4760, %v4762
  %v4764 = vrot.slane %v4468, 2
  %v4765 = vsel %vm4756, %v4762, %v4764
  %v4766 = vrot.slane %v4478, 2
  %v4767 = vrot.slane %v4484, 2
  %v4768 = vsel %vm4756, %v4766, %v4767
  %v4769 = vrot.slane %v4488, 2
  %v4770 = vsel %vm4756, %v4767, %v4769
  %v4771 = vrot.slane %v4494, 2
  %v4772 = vsel %vm4756, %v4769, %v4771
  %v4773 = vrot.slane %v4498, 2
  %v4774 = vsel %vm4756, %v4771, %v4773
  %v4783 = vadd.f32 %v4738, %v4759
  %v4784 = vadd.f32 %v4739, %v4761
  %v4785 = vadd.f32 %v4740, %v4763
  %v4786 = vadd.f32 %v4741, %v4765
  %v4787 = vadd.f32 %v4742, %v4768
  %v4788 = vadd.f32 %v4743, %v4770
  %v4789 = vadd.f32 %v4744, %v4772
  %v4790 = vadd.f32 %v4745, %v4774
  %4791 = vrot.lane.b32.xlu0 %v4452, 64
  %v4792 = vpop.permute.xlu0 %4791
  %4793 = vrot.lane.b32.xlu0 %v4458, 64
  %v4794 = vpop.permute.xlu0 %4793
  %4795 = vrot.lane.b32.xlu0 %v4462, 64
  %v4796 = vpop.permute.xlu0 %4795
  %4797 = vrot.lane.b32.xlu0 %v4468, 64
  %v4798 = vpop.permute.xlu0 %4797
  %4799 = vrot.lane.b32.xlu0 %v4484, 64
  %v4800 = vpop.permute.xlu0 %4799
  %4801 = vrot.lane.b32.xlu0 %v4488, 64
  %v4802 = vpop.permute.xlu0 %4801
  %4803 = vrot.lane.b32.xlu0 %v4494, 64
  %v4804 = vpop.permute.xlu0 %4803
  %4805 = vrot.lane.b32.xlu0 %v4498, 64
  %v4806 = vpop.permute.xlu0 %4805
  %v4815 = vadd.f32 %v4783, %v4792
  %v4816 = vadd.f32 %v4784, %v4794
  %v4817 = vadd.f32 %v4785, %v4796
  %v4818 = vadd.f32 %v4786, %v4798
  %v4819 = vadd.f32 %v4787, %v4800
  %v4820 = vadd.f32 %v4788, %v4802
  %v4821 = vadd.f32 %v4789, %v4804
  %v4822 = vadd.f32 %v4790, %v4806
  %v4833 = vrot.slane %v4543, 1
  %v4834 = vrot.slane %v4548, 1
  %v4835 = vsel %vm976, %v4833, %v4834
  %v4836 = vrot.slane %v4552, 1
  %v4837 = vsel %vm976, %v4834, %v4836
  %v4838 = vrot.slane %v4558, 1
  %v4839 = vsel %vm976, %v4836, %v4838
  %v4840 = vrot.slane %v4562, 1
  %v4841 = vsel %vm976, %v4838, %v4840
  %v4842 = vrot.slane %v4575, 1
  %v4843 = vrot.slane %v4578, 1
  %v4844 = vsel %vm976, %v4842, %v4843
  %v4845 = vrot.slane %v4584, 1
  %v4846 = vsel %vm976, %v4843, %v4845
  %v4847 = vrot.slane %v4588, 1
  %v4848 = vsel %vm976, %v4845, %v4847
  %v4849 = vrot.slane %v4594, 1
  %v4850 = vsel %vm976, %v4847, %v4849
  %v4859 = vadd.f32 %v4815, %v4835
  %v4860 = vadd.f32 %v4816, %v4837
  %v4861 = vadd.f32 %v4817, %v4839
  %v4862 = vadd.f32 %v4818, %v4841
  %v4863 = vadd.f32 %v4819, %v4844
  %v4864 = vadd.f32 %v4820, %v4846
  %v4865 = vadd.f32 %v4821, %v4848
  %v4866 = vadd.f32 %v4822, %v4850
  %v4867 = vrot.slane %v4543, 2
  %v4868 = vrot.slane %v4548, 2
  %v4869 = vsel %vm4756, %v4867, %v4868
  %v4870 = vrot.slane %v4552, 2
  %v4871 = vsel %vm4756, %v4868, %v4870
  %v4872 = vrot.slane %v4558, 2
  %v4873 = vsel %vm4756, %v4870, %v4872
  %v4874 = vrot.slane %v4562, 2
  %v4875 = vsel %vm4756, %v4872, %v4874
  %v4876 = vrot.slane %v4575, 2
  %v4877 = vrot.slane %v4578, 2
  %v4878 = vsel %vm4756, %v4876, %v4877
  %v4879 = vrot.slane %v4584, 2
  %v4880 = vsel %vm4756, %v4877, %v4879
  %v4881 = vrot.slane %v4588, 2
  %v4882 = vsel %vm4756, %v4879, %v4881
  %v4883 = vrot.slane %v4594, 2
  %v4884 = vsel %vm4756, %v4881, %v4883
  %4885 = vrot.lane.b32.xlu0 %v4869, 64
  %v4886 = vpop.permute.xlu0 %4885
  %4887 = vrot.lane.b32.xlu0 %v4871, 64
  %v4888 = vpop.permute.xlu0 %4887
  %4889 = vrot.lane.b32.xlu0 %v4873, 64
  %v4890 = vpop.permute.xlu0 %4889
  %4891 = vrot.lane.b32.xlu0 %v4875, 64
  %v4892 = vpop.permute.xlu0 %4891
  %4893 = vrot.lane.b32.xlu0 %v4878, 64
  %v4894 = vpop.permute.xlu0 %4893
  %4895 = vrot.lane.b32.xlu0 %v4880, 64
  %v4896 = vpop.permute.xlu0 %4895
  %4897 = vrot.lane.b32.xlu0 %v4882, 64
  %v4898 = vpop.permute.xlu0 %4897
  %4899 = vrot.lane.b32.xlu0 %v4884, 64
  %v4900 = vpop.permute.xlu0 %4899
  %v4909 = vadd.f32 %v4859, %v4886
  %v4910 = vadd.f32 %v4860, %v4888
  %v4911 = vadd.f32 %v4861, %v4890
  %v4912 = vadd.f32 %v4862, %v4892
  %v4913 = vadd.f32 %v4863, %v4894
  %v4914 = vadd.f32 %v4864, %v4896
  %v4915 = vadd.f32 %v4865, %v4898
  %v4916 = vadd.f32 %v4866, %v4900
  %v4917 = vadd.f32 %v4909, %v4550
  %v4918 = vadd.f32 %v4910, %v4554
  %v4919 = vadd.f32 %v4911, %v4560
  %v4920 = vadd.f32 %v4912, %v4564
  %v4921 = vadd.f32 %v4913, %v4580
  %v4922 = vadd.f32 %v4914, %v4586
  %v4923 = vadd.f32 %v4915, %v4590
  %v4924 = vadd.f32 %v4916, %v4596
  %v4935 = vrot.slane %v4550, 1
  %v4936 = vrot.slane %v4554, 1
  %v4937 = vsel %vm976, %v4935, %v4936
  %v4938 = vrot.slane %v4560, 1
  %v4939 = vsel %vm976, %v4936, %v4938
  %v4940 = vrot.slane %v4564, 1
  %v4941 = vsel %vm976, %v4938, %v4940
  %v4942 = vrot.slane %v4569, 1
  %v4943 = vsel %vm976, %v4940, %v4942
  %v4944 = vrot.slane %v4580, 1
  %v4945 = vrot.slane %v4586, 1
  %v4946 = vsel %vm976, %v4944, %v4945
  %v4947 = vrot.slane %v4590, 1
  %v4948 = vsel %vm976, %v4945, %v4947
  %v4949 = vrot.slane %v4596, 1
  %v4950 = vsel %vm976, %v4947, %v4949
  %v4951 = vrot.slane %v4599, 1
  %v4952 = vsel %vm976, %v4949, %v4951
  %4953 = vrot.lane.b32.xlu0 %v4937, 64
  %v4954 = vpop.permute.xlu0 %4953
  %4955 = vrot.lane.b32.xlu0 %v4939, 64
  %v4956 = vpop.permute.xlu0 %4955
  %4957 = vrot.lane.b32.xlu0 %v4941, 64
  %v4958 = vpop.permute.xlu0 %4957
  %4959 = vrot.lane.b32.xlu0 %v4943, 64
  %v4960 = vpop.permute.xlu0 %4959
  %4961 = vrot.lane.b32.xlu0 %v4946, 64
  %v4962 = vpop.permute.xlu0 %4961
  %4963 = vrot.lane.b32.xlu0 %v4948, 64
  %v4964 = vpop.permute.xlu0 %4963
  %4965 = vrot.lane.b32.xlu0 %v4950, 64
  %v4966 = vpop.permute.xlu0 %4965
  %4967 = vrot.lane.b32.xlu0 %v4952, 64
  %v4968 = vpop.permute.xlu0 %4967
  %v4977 = vadd.f32 %v4917, %v4954
  %v4978 = vadd.f32 %v4918, %v4956
  %v4979 = vadd.f32 %v4919, %v4958
  %v4980 = vadd.f32 %v4920, %v4960
  %v4981 = vadd.f32 %v4921, %v4962
  %v4982 = vadd.f32 %v4922, %v4964
  %v4983 = vadd.f32 %v4923, %v4966
  %v4984 = vadd.f32 %v4924, %v4968
  %v4995 = vrot.slane %v4642, 2
  %v4996 = vrot.slane %v4645, 2
  %v4997 = vsel %vm4756, %v4995, %v4996
  %v4998 = vrot.slane %v4650, 2
  %v4999 = vsel %vm4756, %v4996, %v4998
  %v5000 = vrot.slane %v4653, 2
  %v5001 = vsel %vm4756, %v4998, %v5000
  %v5002 = vrot.slane %v4658, 2
  %v5003 = vsel %vm4756, %v5000, %v5002
  %v5004 = vrot.slane %v4667, 2
  %v5005 = vrot.slane %v4672, 2
  %v5006 = vsel %vm4756, %v5004, %v5005
  %v5007 = vrot.slane %v4675, 2
  %v5008 = vsel %vm4756, %v5005, %v5007
  %v5009 = vrot.slane %v4680, 2
  %v5010 = vsel %vm4756, %v5007, %v5009
  %v5011 = vrot.slane %v4683, 2
  %v5012 = vsel %vm4756, %v5009, %v5011
  %v5021 = vadd.f32 %v4977, %v4997
  %v5022 = vadd.f32 %v4978, %v4999
  %v5023 = vadd.f32 %v4979, %v5001
  %v5024 = vadd.f32 %v4980, %v5003
  %v5025 = vadd.f32 %v4981, %v5006
  %v5026 = vadd.f32 %v4982, %v5008
  %v5027 = vadd.f32 %v4983, %v5010
  %v5028 = vadd.f32 %v4984, %v5012
  %v5029 = vld [vmem:[%s10] sm:$0x1]
  %v5031 = vlaneseq
  %v5032 = vshrl.u32 %v5031, 7
  %v5033 = vsub.s32 0, %v5032
  %v5034 = vrot.slane %v5029, %v5033
  %v5036 = vadd.f32 %v5021, %v5034
  %v5037 = vadd.f32 %v5022, %v5034
  %v5038 = vadd.f32 %v5023, %v5034
  %v5039 = vadd.f32 %v5024, %v5034
  %v5040 = vadd.f32 %v5025, %v5034
  %v5041 = vadd.f32 %v5026, %v5034
  %v5042 = vadd.f32 %v5027, %v5034
  %v5043 = vadd.f32 %v5028, %v5034
  %v5044 = vmax.f32 %v5036, 0.0
  %v5045 = vmax.f32 %v5037, 0.0
  %v5046 = vmax.f32 %v5038, 0.0
  %v5047 = vmax.f32 %v5039, 0.0
  %v5048 = vmax.f32 %v5040, 0.0
  %v5049 = vmax.f32 %v5041, 0.0
  %v5050 = vmax.f32 %v5042, 0.0
  %v5051 = vmax.f32 %v5043, 0.0
  %s5052 = scalar_lea.vmem [#allocation5], 17
  %5053 = vst [vmem:[%s5052] ss:$2 sm:$0xf] %v5044
  %s5054 = scalar_lea.vmem [#allocation5], 49
  %5055 = vst [vmem:[%s5054] ss:$2 sm:$0xf] %v5045
  %s5056 = scalar_lea.vmem [#allocation5], 81
  %5057 = vst [vmem:[%s5056] ss:$2 sm:$0xf] %v5046
  %s5058 = scalar_lea.vmem [#allocation5], 113
  %5059 = vst [vmem:[%s5058] ss:$2 sm:$0xf] %v5047
  %s5060 = scalar_lea.vmem [#allocation5], 193
  %5061 = vst [vmem:[%s5060] ss:$2 sm:$0xf] %v5048
  %s5062 = scalar_lea.vmem [#allocation5], 225
  %5063 = vst [vmem:[%s5062] ss:$2 sm:$0xf] %v5049
  %s5064 = scalar_lea.vmem [#allocation5], 257
  %5065 = vst [vmem:[%s5064] ss:$2 sm:$0xf] %v5050
  %s5066 = scalar_lea.vmem [#allocation5], 289
  %5067 = vst [vmem:[%s5066] ss:$2 sm:$0xf] %v5051
  %v5068 = vld [vmem:[#allocation5] sm:$0xff]
  %v5069 = vld [vmem:[#allocation5 + $0x8] sm:$0xff]
  %v5070 = vld [vmem:[#allocation5 + $0x10] sm:$0xff]
  %v5071 = vld [vmem:[#allocation5 + $0x18] sm:$0xff]
  %v5072 = vld [vmem:[#allocation5 + $0x20] sm:$0xff]
  %v5073 = vld [vmem:[#allocation5 + $0x28] sm:$0xff]
  %v5074 = vld [vmem:[#allocation5 + $0x30] sm:$0xff]
  %v5075 = vld [vmem:[#allocation5 + $0x38] sm:$0xff]
  %v5076 = vld [vmem:[#allocation5 + $0x40] sm:$0xff]
  %v5077 = vld [vmem:[#allocation5 + $0x48] sm:$0xff]
  %v5078 = vld [vmem:[#allocation5 + $0x50] sm:$0xff]
  %v5079 = vld [vmem:[#allocation5 + $0x58] sm:$0xff]
  %v5080 = vld [vmem:[#allocation5 + $0x60] sm:$0xff]
  %v5081 = vld [vmem:[#allocation5 + $0x68] sm:$0xff]
  %v5082 = vld [vmem:[#allocation5 + $0x70] sm:$0xff]
  %v5083 = vld [vmem:[#allocation5 + $0x78] sm:$0xff]
  %v5084 = vld [vmem:[#allocation5 + $0x80] sm:$0xff]
  %v5085 = vld [vmem:[#allocation5 + $0x88] sm:$0xff]
  %v5086 = vld [vmem:[#allocation5 + $0x90] sm:$0xff]
  %v5087 = vld [vmem:[#allocation5 + $0x98] sm:$0xff]
  %v5088 = vld [vmem:[#allocation5 + $0xa0] sm:$0xff]
  %v5089 = vld [vmem:[#allocation5 + $0xa8] sm:$0xff]
  %v5090 = vld [vmem:[#allocation5 + $0xb0] sm:$0xff]
  %v5091 = vld [vmem:[#allocation5 + $0xb8] sm:$0xff]
  %v5092 = vld [vmem:[#allocation5 + $0xc0] sm:$0xff]
  %v5093 = vld [vmem:[#allocation5 + $0xc8] sm:$0xff]
  %v5094 = vld [vmem:[#allocation5 + $0xd0] sm:$0xff]
  %v5095 = vld [vmem:[#allocation5 + $0xd8] sm:$0xff]
  %v5096 = vld [vmem:[#allocation5 + $0xe0] sm:$0xff]
  %v5097 = vld [vmem:[#allocation5 + $0xe8] sm:$0xff]
  %v5098 = vld [vmem:[#allocation5 + $0xf0] sm:$0xff]
  %v5099 = vld [vmem:[#allocation5 + $0xf8] sm:$0xff]
  %v5100 = vld [vmem:[#allocation5 + $0x100] sm:$0xff]
  %v5101 = vld [vmem:[#allocation5 + $0x108] sm:$0xff]
  %v5102 = vld [vmem:[#allocation5 + $0x110] sm:$0xff]
  %v5103 = vld [vmem:[#allocation5 + $0x118] sm:$0xff]
  %v5104 = vld [vmem:[#allocation5 + $0x120] sm:$0xff]
  %v5105 = vld [vmem:[#allocation5 + $0x128] sm:$0xff]
  %v5106 = vld [vmem:[#allocation5 + $0x130] sm:$0xff]
  %v5107 = vld [vmem:[#allocation5 + $0x138] sm:$0xff]
  %v5108 = vld [vmem:[#allocation5 + $0x140] sm:$0xff]
  %v5109 = vld [vmem:[#allocation5 + $0x148] sm:$0xff]
  %v5110 = vld [vmem:[#allocation5 + $0x150] sm:$0xff]
  %v5111 = vld [vmem:[#allocation5 + $0x158] sm:$0xff]
  %v5112 = vpack.c.bf16 %v5069, %v5068
  %v5113 = vpack.c.bf16 %v5071, %v5070
  %v5114 = vpack.c.bf16 %v5073, %v5072
  %v5115 = vpack.c.bf16 %v5075, %v5074
  %v5116 = vpack.c.bf16 %v5077, %v5076
  %v5117 = vpack.c.bf16 %v5079, %v5078
  %v5118 = vpack.c.bf16 %v5081, %v5080
  %v5119 = vpack.c.bf16 %v5083, %v5082
  %v5120 = vpack.c.bf16 %v5085, %v5084
  %v5121 = vpack.c.bf16 %v5087, %v5086
  %v5122 = vpack.c.bf16 %v5089, %v5088
  %v5123 = vpack.c.bf16 %v5091, %v5090
  %v5124 = vpack.c.bf16 %v5093, %v5092
  %v5125 = vpack.c.bf16 %v5095, %v5094
  %v5126 = vpack.c.bf16 %v5097, %v5096
  %v5127 = vpack.c.bf16 %v5099, %v5098
  %v5128 = vpack.c.bf16 %v5101, %v5100
  %v5129 = vpack.c.bf16 %v5103, %v5102
  %v5130 = vpack.c.bf16 %v5105, %v5104
  %v5131 = vpack.c.bf16 %v5107, %v5106
  %v5132 = vpack.c.bf16 %v5109, %v5108
  %v5133 = vpack.c.bf16 %v5111, %v5110
  %v5134 = vld [vmem:[%s5] sm:$0xff]
  %v5135 = vld [vmem:[%s5 + $0x8] sm:$0xf]
  %v5136 = vld [vmem:[%s5 + $0xc] sm:$0xff]
  %v5137 = vld [vmem:[%s5 + $0x14] sm:$0xf]
  %v5138 = vld [vmem:[%s5 + $0x18] sm:$0xff]
  %v5139 = vld [vmem:[%s5 + $0x20] sm:$0xf]
  %v5140 = vld [vmem:[%s5 + $0x24] sm:$0xff]
  %v5141 = vld [vmem:[%s5 + $0x2c] sm:$0xf]
  %v5142 = vld [vmem:[%s5 + $0x30] sm:$0xff]
  %v5143 = vld [vmem:[%s5 + $0x38] sm:$0xf]
  %v5144 = vld [vmem:[%s5 + $0x3c] sm:$0xff]
  %v5145 = vld [vmem:[%s5 + $0x44] sm:$0xf]
  %v5146 = vld [vmem:[%s5 + $0x48] sm:$0xff]
  %v5147 = vld [vmem:[%s5 + $0x50] sm:$0xf]
  %v5148 = vld [vmem:[%s5 + $0x54] sm:$0xff]
  %v5149 = vld [vmem:[%s5 + $0x5c] sm:$0xf]
  %v5166 = vunpack.c.l.b16 %v5134
  %v5167 = vunpack.c.h.b16 %v5134
  %v5168 = vunpack.c.l.b16 %v5135
  %v5169 = vunpack.c.l.b16 %v5136
  %v5170 = vunpack.c.h.b16 %v5136
  %v5171 = vunpack.c.l.b16 %v5137
  %v5172 = vunpack.c.l.b16 %v5138
  %v5173 = vunpack.c.h.b16 %v5138
  %v5174 = vunpack.c.l.b16 %v5139
  %v5175 = vunpack.c.l.b16 %v5140
  %v5176 = vunpack.c.h.b16 %v5140
  %v5177 = vunpack.c.l.b16 %v5141
  %v5178 = vunpack.c.l.b16 %v5142
  %v5179 = vunpack.c.h.b16 %v5142
  %v5180 = vunpack.c.l.b16 %v5143
  %v5181 = vunpack.c.l.b16 %v5144
  %v5182 = vunpack.c.h.b16 %v5144
  %v5183 = vunpack.c.l.b16 %v5145
  %v5184 = vunpack.c.l.b16 %v5146
  %v5185 = vunpack.c.h.b16 %v5146
  %v5186 = vunpack.c.l.b16 %v5147
  %v5187 = vunpack.c.l.b16 %v5148
  %v5188 = vunpack.c.h.b16 %v5148
  %v5189 = vunpack.c.l.b16 %v5149
  %v5190 = vpack.c.b16 %v5169, %v5166
  %v5191 = vpack.c.b16 %v5170, %v5167
  %v5192 = vpack.c.b16 %v5171, %v5168
  %v5193 = vpack.c.b16 %v5175, %v5172
  %v5194 = vpack.c.b16 %v5176, %v5173
  %v5195 = vpack.c.b16 %v5177, %v5174
  %v5196 = vpack.c.b16 %v5181, %v5178
  %v5197 = vpack.c.b16 %v5182, %v5179
  %v5198 = vpack.c.b16 %v5183, %v5180
  %v5199 = vpack.c.b16 %v5187, %v5184
  %v5200 = vpack.c.b16 %v5188, %v5185
  %v5201 = vpack.c.b16 %v5189, %v5186
  %v5215 = vsel %vm92, %v5112, 0
  %v5218 = vsel %vm92, %v5113, 0
  %v5221 = vsel %vm92, %v5114, 0
  %v5224 = vsel %vm92, %v5115, 0
  %v5227 = vsel %vm92, %v5116, 0
  %v5230 = vsel %vm92, %v5117, 0
  %v5233 = vsel %vm92, %v5118, 0
  %v5236 = vsel %vm92, %v5119, 0
  %v5239 = vsel %vm92, %v5120, 0
  %v5242 = vsel %vm92, %v5121, 0
  %v5245 = vsel %vm92, %v5122, 0
  %v5248 = vsel %vm92, %v5123, 0
  %v5251 = vsel %vm92, %v5124, 0
  %v5254 = vsel %vm92, %v5125, 0
  %v5257 = vsel %vm92, %v5126, 0
  %v5260 = vsel %vm92, %v5127, 0
  %v5263 = vsel %vm92, %v5128, 0
  %v5266 = vsel %vm92, %v5129, 0
  %v5269 = vsel %vm92, %v5130, 0
  %v5272 = vsel %vm92, %v5131, 0
  %v5275 = vsel %vm92, %v5132, 0
  %v5278 = vsel %vm92, %v5133, 0
  %5280 = vmatprep.subr.bf16.mxu0 %v5191
  %5281 = vmatpush1.bf16.msra.mxu0 %v5190
  %5282 = vmatprep.subr.bf16.mxu0 %v5194
  %5283 = vmatpush1.bf16.msra.mxu0 %v5193
  %5284 = vmatprep.subr.bf16.mxu0 %v5197
  %5285 = vmatpush1.bf16.msra.mxu0 %v5196
  %5286 = vmatprep.subr.bf16.mxu0 %v5200
  %5287 = vmatpush1.bf16.msra.mxu0 %v5199
  %5288 = vmatprep.subr.bf16.mxu0 0
  %5289 = vmatpush1.bf16.msra.mxu0 0
  %5290 = vmatprep.subr.bf16.mxu0 0
  %5291 = vmatpush1.bf16.msra.mxu0 0
  %5292 = vmatprep.subr.bf16.mxu0 0
  %5293 = vmatpush1.bf16.msra.mxu0 0
  %5294 = vmatprep.subr.bf16.mxu0 0
  %5295 = vmatpush1.bf16.msra.mxu0 0
  %5296 = vmatprep.subr.bf16.mxu0 0
  %5297 = vmatpush1.bf16.msra.mxu0 0
  %5298 = vmatprep.subr.bf16.mxu0 0
  %5299 = vmatpush1.bf16.msra.mxu0 0
  %5300 = vmatprep.subr.bf16.mxu0 0
  %5301 = vmatpush1.bf16.msra.mxu0 0
  %5302 = vmatprep.subr.bf16.mxu0 0
  %5303 = vmatpush1.bf16.msra.mxu0 0
  %5304 = vmatprep.subr.bf16.mxu0 0
  %5305 = vmatpush1.bf16.msra.mxu0 0
  %5306 = vmatprep.subr.bf16.mxu0 0
  %5307 = vmatpush1.bf16.msra.mxu0 0
  %5308 = vmatprep.subr.bf16.mxu0 0
  %5309 = vmatpush1.bf16.msra.mxu0 0
  %5310 = vmatprep.subr.bf16.mxu0 0
  %5311 = vmatpush1.bf16.msra.mxu0 0
  %5312 = vmatprep.mubr.bf16.mxu0 0
  %5313 = vmatmul.mubr.bf16.gmra.mrb[0].mxu0 %v5215
  %v5314 = vpop.f32.mrb[0].mxu0
  %v5315 = vadd.f32 0.0, %v5314
  %v5316 = vpop.f32.mrb[0].mxu0
  %v5317 = vpop.f32.mrb[0].mxu0
  %v5318 = vadd.f32 0.0, %v5317
  %v5319 = vpop.f32.mrb[0].mxu0
  %5320 = vmatprep.mubr.bf16.mxu0 0
  %5321 = vmatmul.mubr.bf16.gmra.mrb[0].mxu0 %v5218
  %v5322 = vpop.f32.mrb[0].mxu0
  %v5323 = vadd.f32 0.0, %v5322
  %v5324 = vpop.f32.mrb[0].mxu0
  %v5325 = vadd.f32 0.0, %v5324
  %v5326 = vpop.f32.mrb[0].mxu0
  %v5327 = vadd.f32 0.0, %v5326
  %v5328 = vpop.f32.mrb[0].mxu0
  %v5329 = vadd.f32 0.0, %v5328
  %5330 = vmatprep.mubr.bf16.mxu0 0
  %5331 = vmatmul.mubr.bf16.gmra.mrb[0].mxu0 %v5221
  %v5332 = vpop.f32.mrb[0].mxu0
  %v5333 = vadd.f32 0.0, %v5332
  %v5334 = vpop.f32.mrb[0].mxu0
  %v5335 = vadd.f32 0.0, %v5334
  %v5336 = vpop.f32.mrb[0].mxu0
  %v5337 = vadd.f32 0.0, %v5336
  %v5338 = vpop.f32.mrb[0].mxu0
  %v5339 = vadd.f32 0.0, %v5338
  %5340 = vmatprep.mubr.bf16.mxu0 0
  %5341 = vmatmul.mubr.bf16.gmra.mrb[0].mxu0 %v5224
  %v5342 = vpop.f32.mrb[0].mxu0
  %v5343 = vadd.f32 0.0, %v5342
  %v5344 = vpop.f32.mrb[0].mxu0
  %v5345 = vadd.f32 0.0, %v5344
  %v5346 = vpop.f32.mrb[0].mxu0
  %v5347 = vadd.f32 0.0, %v5346
  %v5348 = vpop.f32.mrb[0].mxu0
  %v5349 = vadd.f32 0.0, %v5348
  %5350 = vmatprep.mubr.bf16.mxu0 0
  %5351 = vmatmul.mubr.bf16.gmra.mrb[0].mxu0 %v5227
  %v5352 = vpop.f32.mrb[0].mxu0
  %v5353 = vadd.f32 0.0, %v5352
  %v5354 = vpop.f32.mrb[0].mxu0
  %v5355 = vadd.f32 0.0, %v5354
  %v5356 = vpop.f32.mrb[0].mxu0
  %v5357 = vadd.f32 0.0, %v5356
  %v5358 = vpop.f32.mrb[0].mxu0
  %v5359 = vadd.f32 0.0, %v5358
  %5360 = vmatprep.mubr.bf16.mxu0 0
  %5361 = vmatmul.mubr.bf16.gmra.mrb[0].mxu0 %v5230
  %v5362 = vpop.f32.mrb[0].mxu0
  %v5363 = vadd.f32 0.0, %v5362
  %v5364 = vpop.f32.mrb[0].mxu0
  %v5365 = vadd.f32 0.0, %v5364
  %v5366 = vpop.f32.mrb[0].mxu0
  %v5367 = vadd.f32 0.0, %v5366
  %v5368 = vpop.f32.mrb[0].mxu0
  %v5369 = vadd.f32 0.0, %v5368
  %5370 = vmatprep.mubr.bf16.mxu0 0
  %5371 = vmatmul.mubr.bf16.gmra.mrb[0].mxu0 %v5233
  %v5372 = vpop.f32.mrb[0].mxu0
  %v5373 = vadd.f32 0.0, %v5372
  %v5374 = vpop.f32.mrb[0].mxu0
  %v5375 = vadd.f32 0.0, %v5374
  %v5376 = vpop.f32.mrb[0].mxu0
  %v5377 = vadd.f32 0.0, %v5376
  %v5378 = vpop.f32.mrb[0].mxu0
  %v5379 = vadd.f32 0.0, %v5378
  %5380 = vmatprep.mubr.bf16.mxu0 0
  %5381 = vmatmul.mubr.bf16.gmra.mrb[0].mxu0 %v5236
  %v5382 = vpop.f32.mrb[0].mxu0
  %v5383 = vadd.f32 0.0, %v5382
  %v5384 = vpop.f32.mrb[0].mxu0
  %v5385 = vadd.f32 0.0, %v5384
  %v5386 = vpop.f32.mrb[0].mxu0
  %v5387 = vadd.f32 0.0, %v5386
  %v5388 = vpop.f32.mrb[0].mxu0
  %v5389 = vadd.f32 0.0, %v5388
  %5390 = vmatprep.mubr.bf16.mxu0 0
  %5391 = vmatmul.mubr.bf16.gmra.mrb[0].mxu0 %v5239
  %v5392 = vpop.f32.mrb[0].mxu0
  %v5393 = vadd.f32 0.0, %v5392
  %v5394 = vpop.f32.mrb[0].mxu0
  %v5395 = vadd.f32 0.0, %v5394
  %v5396 = vpop.f32.mrb[0].mxu0
  %v5397 = vpop.f32.mrb[0].mxu0
  %v5398 = vadd.f32 0.0, %v5397
  %5399 = vmatprep.mubr.bf16.mxu0 0
  %5400 = vmatmul.mubr.bf16.gmra.mrb[0].mxu0 %v5242
  %v5401 = vpop.f32.mrb[0].mxu0
  %v5402 = vpop.f32.mrb[0].mxu0
  %v5403 = vadd.f32 0.0, %v5402
  %v5404 = vpop.f32.mrb[0].mxu0
  %v5405 = vpop.f32.mrb[0].mxu0
  %v5406 = vadd.f32 0.0, %v5405
  %5407 = vmatprep.mubr.bf16.mxu0 0
  %5408 = vmatmul.mubr.bf16.gmra.mrb[0].mxu0 %v5245
  %v5409 = vpop.f32.mrb[0].mxu0
  %v5410 = vpop.f32.mrb[0].mxu0
  %v5411 = vpop.f32.mrb[0].mxu0
  %v5412 = vpop.f32.mrb[0].mxu0
  %5413 = vmatprep.mubr.bf16.mxu0 0
  %5414 = vmatmul.mubr.bf16.gmra.mrb[0].mxu0 %v5248
  %v5415 = vpop.f32.mrb[0].mxu0
  %v5416 = vadd.f32 0.0, %v5415
  %v5417 = vpop.f32.mrb[0].mxu0
  %v5418 = vpop.f32.mrb[0].mxu0
  %v5419 = vadd.f32 0.0, %v5418
  %v5420 = vpop.f32.mrb[0].mxu0
  %5421 = vmatprep.mubr.bf16.mxu0 0
  %5422 = vmatmul.mubr.bf16.gmra.mrb[0].mxu0 %v5251
  %v5423 = vpop.f32.mrb[0].mxu0
  %v5424 = vadd.f32 0.0, %v5423
  %v5425 = vpop.f32.mrb[0].mxu0
  %v5426 = vadd.f32 0.0, %v5425
  %v5427 = vpop.f32.mrb[0].mxu0
  %v5428 = vadd.f32 0.0, %v5427
  %v5429 = vpop.f32.mrb[0].mxu0
  %v5430 = vadd.f32 0.0, %v5429
  %5431 = vmatprep.mubr.bf16.mxu0 0
  %5432 = vmatmul.mubr.bf16.gmra.mrb[0].mxu0 %v5254
  %v5433 = vpop.f32.mrb[0].mxu0
  %v5434 = vadd.f32 0.0, %v5433
  %v5435 = vpop.f32.mrb[0].mxu0
  %v5436 = vadd.f32 0.0, %v5435
  %v5437 = vpop.f32.mrb[0].mxu0
  %v5438 = vadd.f32 0.0, %v5437
  %v5439 = vpop.f32.mrb[0].mxu0
  %v5440 = vadd.f32 0.0, %v5439
  %5441 = vmatprep.mubr.bf16.mxu0 0
  %5442 = vmatmul.mubr.bf16.gmra.mrb[0].mxu0 %v5257
  %v5443 = vpop.f32.mrb[0].mxu0
  %v5444 = vadd.f32 0.0, %v5443
  %v5445 = vpop.f32.mrb[0].mxu0
  %v5446 = vadd.f32 0.0, %v5445
  %v5447 = vpop.f32.mrb[0].mxu0
  %v5448 = vadd.f32 0.0, %v5447
  %v5449 = vpop.f32.mrb[0].mxu0
  %v5450 = vadd.f32 0.0, %v5449
  %5451 = vmatprep.mubr.bf16.mxu0 0
  %5452 = vmatmul.mubr.bf16.gmra.mrb[0].mxu0 %v5260
  %v5453 = vpop.f32.mrb[0].mxu0
  %v5454 = vadd.f32 0.0, %v5453
  %v5455 = vpop.f32.mrb[0].mxu0
  %v5456 = vadd.f32 0.0, %v5455
  %v5457 = vpop.f32.mrb[0].mxu0
  %v5458 = vadd.f32 0.0, %v5457
  %v5459 = vpop.f32.mrb[0].mxu0
  %v5460 = vadd.f32 0.0, %v5459
  %5461 = vmatprep.mubr.bf16.mxu0 0
  %5462 = vmatmul.mubr.bf16.gmra.mrb[0].mxu0 %v5263
  %v5463 = vpop.f32.mrb[0].mxu0
  %v5464 = vadd.f32 0.0, %v5463
  %v5465 = vpop.f32.mrb[0].mxu0
  %v5466 = vadd.f32 0.0, %v5465
  %v5467 = vpop.f32.mrb[0].mxu0
  %v5468 = vadd.f32 0.0, %v5467
  %v5469 = vpop.f32.mrb[0].mxu0
  %v5470 = vadd.f32 0.0, %v5469
  %5471 = vmatprep.mubr.bf16.mxu0 0
  %5472 = vmatmul.mubr.bf16.gmra.mrb[0].mxu0 %v5266
  %v5473 = vpop.f32.mrb[0].mxu0
  %v5474 = vadd.f32 0.0, %v5473
  %v5475 = vpop.f32.mrb[0].mxu0
  %v5476 = vadd.f32 0.0, %v5475
  %v5477 = vpop.f32.mrb[0].mxu0
  %v5478 = vadd.f32 0.0, %v5477
  %v5479 = vpop.f32.mrb[0].mxu0
  %v5480 = vadd.f32 0.0, %v5479
  %5481 = vmatprep.mubr.bf16.mxu0 0
  %5482 = vmatmul.mubr.bf16.gmra.mrb[0].mxu0 %v5269
  %v5483 = vpop.f32.mrb[0].mxu0
  %v5484 = vadd.f32 0.0, %v5483
  %v5485 = vpop.f32.mrb[0].mxu0
  %v5486 = vadd.f32 0.0, %v5485
  %v5487 = vpop.f32.mrb[0].mxu0
  %v5488 = vadd.f32 0.0, %v5487
  %v5489 = vpop.f32.mrb[0].mxu0
  %v5490 = vadd.f32 0.0, %v5489
  %5491 = vmatprep.mubr.bf16.mxu0 0
  %5492 = vmatmul.mubr.bf16.gmra.mrb[0].mxu0 %v5272
  %v5493 = vpop.f32.mrb[0].mxu0
  %v5494 = vadd.f32 0.0, %v5493
  %v5495 = vpop.f32.mrb[0].mxu0
  %v5496 = vadd.f32 0.0, %v5495
  %v5497 = vpop.f32.mrb[0].mxu0
  %v5498 = vpop.f32.mrb[0].mxu0
  %v5499 = vadd.f32 0.0, %v5498
  %5500 = vmatprep.mubr.bf16.mxu0 0
  %5501 = vmatmul.mubr.bf16.gmra.mrb[0].mxu0 %v5275
  %v5502 = vpop.f32.mrb[0].mxu0
  %v5503 = vpop.f32.mrb[0].mxu0
  %v5504 = vadd.f32 0.0, %v5503
  %v5505 = vpop.f32.mrb[0].mxu0
  %v5506 = vpop.f32.mrb[0].mxu0
  %v5507 = vadd.f32 0.0, %v5506
  %5508 = vmatprep.mubr.bf16.mxu0 0
  %5509 = vmatmul.mubr.bf16.gmra.mrb[0].mxu0 %v5278
  %v5510 = vpop.f32.mrb[0].mxu0
  %v5511 = vpop.f32.mrb[0].mxu0
  %v5512 = vpop.f32.mrb[0].mxu0
  %v5513 = vpop.f32.mrb[0].mxu0
  %5514 = vdwg.mxu0
  %5515 = vmatprep.subr.bf16.mxu0 0
  %5516 = vmatpush1.bf16.msra.mxu0 %v5192
  %5517 = vmatprep.subr.bf16.mxu0 0
  %5518 = vmatpush1.bf16.msra.mxu0 %v5195
  %5519 = vmatprep.subr.bf16.mxu0 0
  %5520 = vmatpush1.bf16.msra.mxu0 %v5198
  %5521 = vmatprep.subr.bf16.mxu0 0
  %5522 = vmatpush1.bf16.msra.mxu0 %v5201
  %5523 = vmatprep.subr.bf16.mxu0 0
  %5524 = vmatpush1.bf16.msra.mxu0 0
  %5525 = vmatprep.subr.bf16.mxu0 0
  %5526 = vmatpush1.bf16.msra.mxu0 0
  %5527 = vmatprep.subr.bf16.mxu0 0
  %5528 = vmatpush1.bf16.msra.mxu0 0
  %5529 = vmatprep.subr.bf16.mxu0 0
  %5530 = vmatpush1.bf16.msra.mxu0 0
  %5531 = vmatprep.subr.bf16.mxu0 0
  %5532 = vmatpush1.bf16.msra.mxu0 0
  %5533 = vmatprep.subr.bf16.mxu0 0
  %5534 = vmatpush1.bf16.msra.mxu0 0
  %5535 = vmatprep.subr.bf16.mxu0 0
  %5536 = vmatpush1.bf16.msra.mxu0 0
  %5537 = vmatprep.subr.bf16.mxu0 0
  %5538 = vmatpush1.bf16.msra.mxu0 0
  %5539 = vmatprep.subr.bf16.mxu0 0
  %5540 = vmatpush1.bf16.msra.mxu0 0
  %5541 = vmatprep.subr.bf16.mxu0 0
  %5542 = vmatpush1.bf16.msra.mxu0 0
  %5543 = vmatprep.subr.bf16.mxu0 0
  %5544 = vmatpush1.bf16.msra.mxu0 0
  %5545 = vmatprep.subr.bf16.mxu0 0
  %5546 = vmatpush1.bf16.msra.mxu0 0
  %5547 = vmatprep.mubr.bf16.mxu0 0
  %5548 = vmatmul.mubr.bf16.gmra.mrb[0].mxu0 %v5215
  %v5549 = vpop.f32.mrb[0].mxu0
  %v5550 = vpop.f32.mrb[0].mxu0
  %v5551 = vpop.f32.mrb[0].mxu0
  %v5552 = vpop.f32.mrb[0].mxu0
  %5553 = vmatprep.mubr.bf16.mxu0 0
  %5554 = vmatmul.mubr.bf16.gmra.mrb[0].mxu0 %v5218
  %v5555 = vpop.f32.mrb[0].mxu0
  %v5556 = vpop.f32.mrb[0].mxu0
  %v5557 = vpop.f32.mrb[0].mxu0
  %v5558 = vpop.f32.mrb[0].mxu0
  %5559 = vmatprep.mubr.bf16.mxu0 0
  %5560 = vmatmul.mubr.bf16.gmra.mrb[0].mxu0 %v5221
  %v5561 = vpop.f32.mrb[0].mxu0
  %v5562 = vadd.f32 0.0, %v5561
  %v5563 = vpop.f32.mrb[0].mxu0
  %v5564 = vpop.f32.mrb[0].mxu0
  %v5565 = vadd.f32 0.0, %v5564
  %v5566 = vpop.f32.mrb[0].mxu0
  %5567 = vmatprep.mubr.bf16.mxu0 0
  %5568 = vmatmul.mubr.bf16.gmra.mrb[0].mxu0 %v5224
  %v5569 = vpop.f32.mrb[0].mxu0
  %v5570 = vadd.f32 0.0, %v5569
  %v5571 = vpop.f32.mrb[0].mxu0
  %v5572 = vpop.f32.mrb[0].mxu0
  %v5573 = vadd.f32 0.0, %v5572
  %v5574 = vpop.f32.mrb[0].mxu0
  %5575 = vmatprep.mubr.bf16.mxu0 0
  %5576 = vmatmul.mubr.bf16.gmra.mrb[0].mxu0 %v5227
  %v5577 = vpop.f32.mrb[0].mxu0
  %v5578 = vadd.f32 0.0, %v5577
  %v5579 = vpop.f32.mrb[0].mxu0
  %v5580 = vpop.f32.mrb[0].mxu0
  %v5581 = vadd.f32 0.0, %v5580
  %v5582 = vpop.f32.mrb[0].mxu0
  %5583 = vmatprep.mubr.bf16.mxu0 0
  %5584 = vmatmul.mubr.bf16.gmra.mrb[0].mxu0 %v5230
  %v5585 = vpop.f32.mrb[0].mxu0
  %v5586 = vadd.f32 0.0, %v5585
  %v5587 = vpop.f32.mrb[0].mxu0
  %v5588 = vpop.f32.mrb[0].mxu0
  %v5589 = vadd.f32 0.0, %v5588
  %v5590 = vpop.f32.mrb[0].mxu0
  %5591 = vmatprep.mubr.bf16.mxu0 0
  %5592 = vmatmul.mubr.bf16.gmra.mrb[0].mxu0 %v5233
  %v5593 = vpop.f32.mrb[0].mxu0
  %v5594 = vadd.f32 0.0, %v5593
  %v5595 = vpop.f32.mrb[0].mxu0
  %v5596 = vpop.f32.mrb[0].mxu0
  %v5597 = vadd.f32 0.0, %v5596
  %v5598 = vpop.f32.mrb[0].mxu0
  %5599 = vmatprep.mubr.bf16.mxu0 0
  %5600 = vmatmul.mubr.bf16.gmra.mrb[0].mxu0 %v5236
  %v5601 = vpop.f32.mrb[0].mxu0
  %v5602 = vadd.f32 0.0, %v5601
  %v5603 = vpop.f32.mrb[0].mxu0
  %v5604 = vpop.f32.mrb[0].mxu0
  %v5605 = vadd.f32 0.0, %v5604
  %v5606 = vpop.f32.mrb[0].mxu0
  %5607 = vmatprep.mubr.bf16.mxu0 0
  %5608 = vmatmul.mubr.bf16.gmra.mrb[0].mxu0 %v5239
  %v5609 = vpop.f32.mrb[0].mxu0
  %v5610 = vadd.f32 0.0, %v5609
  %v5611 = vpop.f32.mrb[0].mxu0
  %v5612 = vpop.f32.mrb[0].mxu0
  %v5613 = vadd.f32 0.0, %v5612
  %v5614 = vpop.f32.mrb[0].mxu0
  %5615 = vmatprep.mubr.bf16.mxu0 0
  %5616 = vmatmul.mubr.bf16.gmra.mrb[0].mxu0 %v5242
  %v5617 = vpop.f32.mrb[0].mxu0
  %v5618 = vadd.f32 0.0, %v5617
  %v5619 = vpop.f32.mrb[0].mxu0
  %v5620 = vpop.f32.mrb[0].mxu0
  %v5621 = vadd.f32 0.0, %v5620
  %v5622 = vpop.f32.mrb[0].mxu0
  %5623 = vmatprep.mubr.bf16.mxu0 0
  %5624 = vmatmul.mubr.bf16.gmra.mrb[0].mxu0 %v5245
  %v5625 = vpop.f32.mrb[0].mxu0
  %v5626 = vpop.f32.mrb[0].mxu0
  %v5627 = vpop.f32.mrb[0].mxu0
  %v5628 = vpop.f32.mrb[0].mxu0
  %5629 = vmatprep.mubr.bf16.mxu0 0
  %5630 = vmatmul.mubr.bf16.gmra.mrb[0].mxu0 %v5248
  %v5631 = vpop.f32.mrb[0].mxu0
  %v5632 = vpop.f32.mrb[0].mxu0
  %v5633 = vpop.f32.mrb[0].mxu0
  %v5634 = vpop.f32.mrb[0].mxu0
  %5635 = vmatprep.mubr.bf16.mxu0 0
  %5636 = vmatmul.mubr.bf16.gmra.mrb[0].mxu0 %v5251
  %v5637 = vpop.f32.mrb[0].mxu0
  %v5638 = vpop.f32.mrb[0].mxu0
  %v5639 = vpop.f32.mrb[0].mxu0
  %v5640 = vpop.f32.mrb[0].mxu0
  %5641 = vmatprep.mubr.bf16.mxu0 0
  %5642 = vmatmul.mubr.bf16.gmra.mrb[0].mxu0 %v5254
  %v5643 = vpop.f32.mrb[0].mxu0
  %v5644 = vadd.f32 0.0, %v5643
  %v5645 = vpop.f32.mrb[0].mxu0
  %v5646 = vpop.f32.mrb[0].mxu0
  %v5647 = vadd.f32 0.0, %v5646
  %v5648 = vpop.f32.mrb[0].mxu0
  %5649 = vmatprep.mubr.bf16.mxu0 0
  %5650 = vmatmul.mubr.bf16.gmra.mrb[0].mxu0 %v5257
  %v5651 = vpop.f32.mrb[0].mxu0
  %v5652 = vadd.f32 0.0, %v5651
  %v5653 = vpop.f32.mrb[0].mxu0
  %v5654 = vpop.f32.mrb[0].mxu0
  %v5655 = vadd.f32 0.0, %v5654
  %v5656 = vpop.f32.mrb[0].mxu0
  %5657 = vmatprep.mubr.bf16.mxu0 0
  %5658 = vmatmul.mubr.bf16.gmra.mrb[0].mxu0 %v5260
  %v5659 = vpop.f32.mrb[0].mxu0
  %v5660 = vadd.f32 0.0, %v5659
  %v5661 = vpop.f32.mrb[0].mxu0
  %v5662 = vpop.f32.mrb[0].mxu0
  %v5663 = vadd.f32 0.0, %v5662
  %v5664 = vpop.f32.mrb[0].mxu0
  %5665 = vmatprep.mubr.bf16.mxu0 0
  %5666 = vmatmul.mubr.bf16.gmra.mrb[0].mxu0 %v5263
  %v5667 = vpop.f32.mrb[0].mxu0
  %v5668 = vadd.f32 0.0, %v5667
  %v5669 = vpop.f32.mrb[0].mxu0
  %v5670 = vpop.f32.mrb[0].mxu0
  %v5671 = vadd.f32 0.0, %v5670
  %v5672 = vpop.f32.mrb[0].mxu0
  %5673 = vmatprep.mubr.bf16.mxu0 0
  %5674 = vmatmul.mubr.bf16.gmra.mrb[0].mxu0 %v5266
  %v5675 = vpop.f32.mrb[0].mxu0
  %v5676 = vadd.f32 0.0, %v5675
  %v5677 = vpop.f32.mrb[0].mxu0
  %v5678 = vpop.f32.mrb[0].mxu0
  %v5679 = vadd.f32 0.0, %v5678
  %v5680 = vpop.f32.mrb[0].mxu0
  %5681 = vmatprep.mubr.bf16.mxu0 0
  %5682 = vmatmul.mubr.bf16.gmra.mrb[0].mxu0 %v5269
  %v5683 = vpop.f32.mrb[0].mxu0
  %v5684 = vadd.f32 0.0, %v5683
  %v5685 = vpop.f32.mrb[0].mxu0
  %v5686 = vpop.f32.mrb[0].mxu0
  %v5687 = vadd.f32 0.0, %v5686
  %v5688 = vpop.f32.mrb[0].mxu0
  %5689 = vmatprep.mubr.bf16.mxu0 0
  %5690 = vmatmul.mubr.bf16.gmra.mrb[0].mxu0 %v5272
  %v5691 = vpop.f32.mrb[0].mxu0
  %v5692 = vadd.f32 0.0, %v5691
  %v5693 = vpop.f32.mrb[0].mxu0
  %v5694 = vpop.f32.mrb[0].mxu0
  %v5695 = vadd.f32 0.0, %v5694
  %v5696 = vpop.f32.mrb[0].mxu0
  %5697 = vmatprep.mubr.bf16.mxu0 0
  %5698 = vmatmul.mubr.bf16.gmra.mrb[0].mxu0 %v5275
  %v5699 = vpop.f32.mrb[0].mxu0
  %v5700 = vadd.f32 0.0, %v5699
  %v5701 = vpop.f32.mrb[0].mxu0
  %v5702 = vpop.f32.mrb[0].mxu0
  %v5703 = vadd.f32 0.0, %v5702
  %v5704 = vpop.f32.mrb[0].mxu0
  %5705 = vmatprep.mubr.bf16.mxu0 0
  %5706 = vmatmul.mubr.bf16.gmra.mrb[0].mxu0 %v5278
  %v5707 = vpop.f32.mrb[0].mxu0
  %v5708 = vpop.f32.mrb[0].mxu0
  %v5709 = vpop.f32.mrb[0].mxu0
  %v5710 = vpop.f32.mrb[0].mxu0
  %5711 = vdwg.mxu0
  %v5744 = vrot.slane %v5315, 1
  %v5745 = vrot.slane %v5318, 1
  %v5746 = vsel %vm976, %v5744, %v5745
  %v5747 = vrot.slane %v5323, 1
  %v5748 = vrot.slane %v5327, 1
  %v5749 = vsel %vm976, %v5747, %v5748
  %v5750 = vrot.slane %v5333, 1
  %v5751 = vrot.slane %v5337, 1
  %v5752 = vsel %vm976, %v5750, %v5751
  %v5753 = vrot.slane %v5343, 1
  %v5754 = vrot.slane %v5347, 1
  %v5755 = vsel %vm976, %v5753, %v5754
  %v5756 = vrot.slane %v5353, 1
  %v5757 = vrot.slane %v5357, 1
  %v5758 = vsel %vm976, %v5756, %v5757
  %v5759 = vrot.slane %v5363, 1
  %v5760 = vrot.slane %v5367, 1
  %v5761 = vsel %vm976, %v5759, %v5760
  %v5762 = vrot.slane %v5373, 1
  %v5763 = vrot.slane %v5377, 1
  %v5764 = vsel %vm976, %v5762, %v5763
  %v5765 = vrot.slane %v5383, 1
  %v5766 = vrot.slane %v5387, 1
  %v5767 = vsel %vm976, %v5765, %v5766
  %v5768 = vrot.slane %v5416, 1
  %v5769 = vrot.slane %v5419, 1
  %v5770 = vsel %vm976, %v5768, %v5769
  %v5771 = vrot.slane %v5424, 1
  %v5772 = vrot.slane %v5428, 1
  %v5773 = vsel %vm976, %v5771, %v5772
  %v5774 = vrot.slane %v5434, 1
  %v5775 = vrot.slane %v5438, 1
  %v5776 = vsel %vm976, %v5774, %v5775
  %v5777 = vrot.slane %v5444, 1
  %v5778 = vrot.slane %v5448, 1
  %v5779 = vsel %vm976, %v5777, %v5778
  %v5780 = vrot.slane %v5454, 1
  %v5781 = vrot.slane %v5458, 1
  %v5782 = vsel %vm976, %v5780, %v5781
  %v5783 = vrot.slane %v5464, 1
  %v5784 = vrot.slane %v5468, 1
  %v5785 = vsel %vm976, %v5783, %v5784
  %v5786 = vrot.slane %v5474, 1
  %v5787 = vrot.slane %v5478, 1
  %v5788 = vsel %vm976, %v5786, %v5787
  %v5789 = vrot.slane %v5484, 1
  %v5790 = vrot.slane %v5488, 1
  %v5791 = vsel %vm976, %v5789, %v5790
  %5792 = vrot.lane.b32.xlu0 %v5746, 96
  %v5793 = vpop.permute.xlu0 %5792
  %5794 = vrot.lane.b32.xlu0 %v5749, 96
  %v5795 = vpop.permute.xlu0 %5794
  %5796 = vrot.lane.b32.xlu0 %v5752, 96
  %v5797 = vpop.permute.xlu0 %5796
  %5798 = vrot.lane.b32.xlu0 %v5755, 96
  %v5799 = vpop.permute.xlu0 %5798
  %5800 = vrot.lane.b32.xlu0 %v5758, 96
  %v5801 = vpop.permute.xlu0 %5800
  %5802 = vrot.lane.b32.xlu0 %v5761, 96
  %v5803 = vpop.permute.xlu0 %5802
  %5804 = vrot.lane.b32.xlu0 %v5764, 96
  %v5805 = vpop.permute.xlu0 %5804
  %5806 = vrot.lane.b32.xlu0 %v5767, 96
  %v5807 = vpop.permute.xlu0 %5806
  %5808 = vrot.lane.b32.xlu0 %v5770, 96
  %v5809 = vpop.permute.xlu0 %5808
  %5810 = vrot.lane.b32.xlu0 %v5773, 96
  %v5811 = vpop.permute.xlu0 %5810
  %5812 = vrot.lane.b32.xlu0 %v5776, 96
  %v5813 = vpop.permute.xlu0 %5812
  %5814 = vrot.lane.b32.xlu0 %v5779, 96
  %v5815 = vpop.permute.xlu0 %5814
  %5816 = vrot.lane.b32.xlu0 %v5782, 96
  %v5817 = vpop.permute.xlu0 %5816
  %5818 = vrot.lane.b32.xlu0 %v5785, 96
  %v5819 = vpop.permute.xlu0 %5818
  %5820 = vrot.lane.b32.xlu0 %v5788, 96
  %v5821 = vpop.permute.xlu0 %5820
  %5822 = vrot.lane.b32.xlu0 %v5791, 96
  %v5823 = vpop.permute.xlu0 %5822
  %v5840 = vadd.f32 %v5315, %v5793
  %v5841 = vadd.f32 %v5323, %v5795
  %v5842 = vadd.f32 %v5333, %v5797
  %v5843 = vadd.f32 %v5343, %v5799
  %v5844 = vadd.f32 %v5353, %v5801
  %v5845 = vadd.f32 %v5363, %v5803
  %v5846 = vadd.f32 %v5373, %v5805
  %v5847 = vadd.f32 %v5383, %v5807
  %v5848 = vadd.f32 %v5416, %v5809
  %v5849 = vadd.f32 %v5424, %v5811
  %v5850 = vadd.f32 %v5434, %v5813
  %v5851 = vadd.f32 %v5444, %v5815
  %v5852 = vadd.f32 %v5454, %v5817
  %v5853 = vadd.f32 %v5464, %v5819
  %v5854 = vadd.f32 %v5474, %v5821
  %v5855 = vadd.f32 %v5484, %v5823
  %v5856 = vrot.slane %v5315, 2
  %v5857 = vrot.slane %v5318, 2
  %v5858 = vsel %vm4756, %v5856, %v5857
  %v5859 = vrot.slane %v5323, 2
  %v5860 = vrot.slane %v5327, 2
  %v5861 = vsel %vm4756, %v5859, %v5860
  %v5862 = vrot.slane %v5333, 2
  %v5863 = vrot.slane %v5337, 2
  %v5864 = vsel %vm4756, %v5862, %v5863
  %v5865 = vrot.slane %v5343, 2
  %v5866 = vrot.slane %v5347, 2
  %v5867 = vsel %vm4756, %v5865, %v5866
  %v5868 = vrot.slane %v5353, 2
  %v5869 = vrot.slane %v5357, 2
  %v5870 = vsel %vm4756, %v5868, %v5869
  %v5871 = vrot.slane %v5363, 2
  %v5872 = vrot.slane %v5367, 2
  %v5873 = vsel %vm4756, %v5871, %v5872
  %v5874 = vrot.slane %v5373, 2
  %v5875 = vrot.slane %v5377, 2
  %v5876 = vsel %vm4756, %v5874, %v5875
  %v5877 = vrot.slane %v5383, 2
  %v5878 = vrot.slane %v5387, 2
  %v5879 = vsel %vm4756, %v5877, %v5878
  %v5880 = vrot.slane %v5416, 2
  %v5881 = vrot.slane %v5419, 2
  %v5882 = vsel %vm4756, %v5880, %v5881
  %v5883 = vrot.slane %v5424, 2
  %v5884 = vrot.slane %v5428, 2
  %v5885 = vsel %vm4756, %v5883, %v5884
  %v5886 = vrot.slane %v5434, 2
  %v5887 = vrot.slane %v5438, 2
  %v5888 = vsel %vm4756, %v5886, %v5887
  %v5889 = vrot.slane %v5444, 2
  %v5890 = vrot.slane %v5448, 2
  %v5891 = vsel %vm4756, %v5889, %v5890
  %v5892 = vrot.slane %v5454, 2
  %v5893 = vrot.slane %v5458, 2
  %v5894 = vsel %vm4756, %v5892, %v5893
  %v5895 = vrot.slane %v5464, 2
  %v5896 = vrot.slane %v5468, 2
  %v5897 = vsel %vm4756, %v5895, %v5896
  %v5898 = vrot.slane %v5474, 2
  %v5899 = vrot.slane %v5478, 2
  %v5900 = vsel %vm4756, %v5898, %v5899
  %v5901 = vrot.slane %v5484, 2
  %v5902 = vrot.slane %v5488, 2
  %v5903 = vsel %vm4756, %v5901, %v5902
  %5904 = vrot.lane.b32.xlu0 %v5858, 64
  %v5905 = vpop.permute.xlu0 %5904
  %5906 = vrot.lane.b32.xlu0 %v5861, 64
  %v5907 = vpop.permute.xlu0 %5906
  %5908 = vrot.lane.b32.xlu0 %v5864, 64
  %v5909 = vpop.permute.xlu0 %5908
  %5910 = vrot.lane.b32.xlu0 %v5867, 64
  %v5911 = vpop.permute.xlu0 %5910
  %5912 = vrot.lane.b32.xlu0 %v5870, 64
  %v5913 = vpop.permute.xlu0 %5912
  %5914 = vrot.lane.b32.xlu0 %v5873, 64
  %v5915 = vpop.permute.xlu0 %5914
  %5916 = vrot.lane.b32.xlu0 %v5876, 64
  %v5917 = vpop.permute.xlu0 %5916
  %5918 = vrot.lane.b32.xlu0 %v5879, 64
  %v5919 = vpop.permute.xlu0 %5918
  %5920 = vrot.lane.b32.xlu0 %v5882, 64
  %v5921 = vpop.permute.xlu0 %5920
  %5922 = vrot.lane.b32.xlu0 %v5885, 64
  %v5923 = vpop.permute.xlu0 %5922
  %5924 = vrot.lane.b32.xlu0 %v5888, 64
  %v5925 = vpop.permute.xlu0 %5924
  %5926 = vrot.lane.b32.xlu0 %v5891, 64
  %v5927 = vpop.permute.xlu0 %5926
  %5928 = vrot.lane.b32.xlu0 %v5894, 64
  %v5929 = vpop.permute.xlu0 %5928
  %5930 = vrot.lane.b32.xlu0 %v5897, 64
  %v5931 = vpop.permute.xlu0 %5930
  %5932 = vrot.lane.b32.xlu0 %v5900, 64
  %v5933 = vpop.permute.xlu0 %5932
  %5934 = vrot.lane.b32.xlu0 %v5903, 64
  %v5935 = vpop.permute.xlu0 %5934
  %v5952 = vadd.f32 %v5840, %v5905
  %v5953 = vadd.f32 %v5841, %v5907
  %v5954 = vadd.f32 %v5842, %v5909
  %v5955 = vadd.f32 %v5843, %v5911
  %v5956 = vadd.f32 %v5844, %v5913
  %v5957 = vadd.f32 %v5845, %v5915
  %v5958 = vadd.f32 %v5846, %v5917
  %v5959 = vadd.f32 %v5847, %v5919
  %v5960 = vadd.f32 %v5848, %v5921
  %v5961 = vadd.f32 %v5849, %v5923
  %v5962 = vadd.f32 %v5850, %v5925
  %v5963 = vadd.f32 %v5851, %v5927
  %v5964 = vadd.f32 %v5852, %v5929
  %v5965 = vadd.f32 %v5853, %v5931
  %v5966 = vadd.f32 %v5854, %v5933
  %v5967 = vadd.f32 %v5855, %v5935
  %5970 = vrot.lane.b32.xlu0 %v5323, 32
  %v5971 = vpop.permute.xlu0 %5970
  %5972 = vrot.lane.b32.xlu0 %v5333, 32
  %v5973 = vpop.permute.xlu0 %5972
  %5974 = vrot.lane.b32.xlu0 %v5343, 32
  %v5975 = vpop.permute.xlu0 %5974
  %5976 = vrot.lane.b32.xlu0 %v5353, 32
  %v5977 = vpop.permute.xlu0 %5976
  %5978 = vrot.lane.b32.xlu0 %v5363, 32
  %v5979 = vpop.permute.xlu0 %5978
  %5980 = vrot.lane.b32.xlu0 %v5373, 32
  %v5981 = vpop.permute.xlu0 %5980
  %5982 = vrot.lane.b32.xlu0 %v5383, 32
  %v5983 = vpop.permute.xlu0 %5982
  %5984 = vrot.lane.b32.xlu0 %v5393, 32
  %v5985 = vpop.permute.xlu0 %5984
  %5986 = vrot.lane.b32.xlu0 %v5424, 32
  %v5987 = vpop.permute.xlu0 %5986
  %5988 = vrot.lane.b32.xlu0 %v5434, 32
  %v5989 = vpop.permute.xlu0 %5988
  %5990 = vrot.lane.b32.xlu0 %v5444, 32
  %v5991 = vpop.permute.xlu0 %5990
  %5992 = vrot.lane.b32.xlu0 %v5454, 32
  %v5993 = vpop.permute.xlu0 %5992
  %5994 = vrot.lane.b32.xlu0 %v5464, 32
  %v5995 = vpop.permute.xlu0 %5994
  %5996 = vrot.lane.b32.xlu0 %v5474, 32
  %v5997 = vpop.permute.xlu0 %5996
  %5998 = vrot.lane.b32.xlu0 %v5484, 32
  %v5999 = vpop.permute.xlu0 %5998
  %6000 = vrot.lane.b32.xlu0 %v5494, 32
  %v6001 = vpop.permute.xlu0 %6000
  %v6018 = vadd.f32 %v5952, %v5971
  %v6019 = vadd.f32 %v5953, %v5973
  %v6020 = vadd.f32 %v5954, %v5975
  %v6021 = vadd.f32 %v5955, %v5977
  %v6022 = vadd.f32 %v5956, %v5979
  %v6023 = vadd.f32 %v5957, %v5981
  %v6024 = vadd.f32 %v5958, %v5983
  %v6025 = vadd.f32 %v5959, %v5985
  %v6026 = vadd.f32 %v5960, %v5987
  %v6027 = vadd.f32 %v5961, %v5989
  %v6028 = vadd.f32 %v5962, %v5991
  %v6029 = vadd.f32 %v5963, %v5993
  %v6030 = vadd.f32 %v5964, %v5995
  %v6031 = vadd.f32 %v5965, %v5997
  %v6032 = vadd.f32 %v5966, %v5999
  %v6033 = vadd.f32 %v5967, %v6001
  %v6066 = vrot.slane %v5325, 1
  %v6067 = vrot.slane %v5329, 1
  %v6068 = vsel %vm976, %v6066, %v6067
  %v6069 = vrot.slane %v5335, 1
  %v6070 = vrot.slane %v5339, 1
  %v6071 = vsel %vm976, %v6069, %v6070
  %v6072 = vrot.slane %v5345, 1
  %v6073 = vrot.slane %v5349, 1
  %v6074 = vsel %vm976, %v6072, %v6073
  %v6075 = vrot.slane %v5355, 1
  %v6076 = vrot.slane %v5359, 1
  %v6077 = vsel %vm976, %v6075, %v6076
  %v6078 = vrot.slane %v5365, 1
  %v6079 = vrot.slane %v5369, 1
  %v6080 = vsel %vm976, %v6078, %v6079
  %v6081 = vrot.slane %v5375, 1
  %v6082 = vrot.slane %v5379, 1
  %v6083 = vsel %vm976, %v6081, %v6082
  %v6084 = vrot.slane %v5385, 1
  %v6085 = vrot.slane %v5389, 1
  %v6086 = vsel %vm976, %v6084, %v6085
  %v6087 = vrot.slane %v5395, 1
  %v6088 = vrot.slane %v5398, 1
  %v6089 = vsel %vm976, %v6087, %v6088
  %v6090 = vrot.slane %v5426, 1
  %v6091 = vrot.slane %v5430, 1
  %v6092 = vsel %vm976, %v6090, %v6091
  %v6093 = vrot.slane %v5436, 1
  %v6094 = vrot.slane %v5440, 1
  %v6095 = vsel %vm976, %v6093, %v6094
  %v6096 = vrot.slane %v5446, 1
  %v6097 = vrot.slane %v5450, 1
  %v6098 = vsel %vm976, %v6096, %v6097
  %v6099 = vrot.slane %v5456, 1
  %v6100 = vrot.slane %v5460, 1
  %v6101 = vsel %vm976, %v6099, %v6100
  %v6102 = vrot.slane %v5466, 1
  %v6103 = vrot.slane %v5470, 1
  %v6104 = vsel %vm976, %v6102, %v6103
  %v6105 = vrot.slane %v5476, 1
  %v6106 = vrot.slane %v5480, 1
  %v6107 = vsel %vm976, %v6105, %v6106
  %v6108 = vrot.slane %v5486, 1
  %v6109 = vrot.slane %v5490, 1
  %v6110 = vsel %vm976, %v6108, %v6109
  %v6111 = vrot.slane %v5496, 1
  %v6112 = vrot.slane %v5499, 1
  %v6113 = vsel %vm976, %v6111, %v6112
  %v6130 = vadd.f32 %v6018, %v6068
  %v6131 = vadd.f32 %v6019, %v6071
  %v6132 = vadd.f32 %v6020, %v6074
  %v6133 = vadd.f32 %v6021, %v6077
  %v6134 = vadd.f32 %v6022, %v6080
  %v6135 = vadd.f32 %v6023, %v6083
  %v6136 = vadd.f32 %v6024, %v6086
  %v6137 = vadd.f32 %v6025, %v6089
  %v6138 = vadd.f32 %v6026, %v6092
  %v6139 = vadd.f32 %v6027, %v6095
  %v6140 = vadd.f32 %v6028, %v6098
  %v6141 = vadd.f32 %v6029, %v6101
  %v6142 = vadd.f32 %v6030, %v6104
  %v6143 = vadd.f32 %v6031, %v6107
  %v6144 = vadd.f32 %v6032, %v6110
  %v6145 = vadd.f32 %v6033, %v6113
  %v6146 = vrot.slane %v5325, 2
  %v6147 = vrot.slane %v5329, 2
  %v6148 = vsel %vm4756, %v6146, %v6147
  %v6149 = vrot.slane %v5335, 2
  %v6150 = vrot.slane %v5339, 2
  %v6151 = vsel %vm4756, %v6149, %v6150
  %v6152 = vrot.slane %v5345, 2
  %v6153 = vrot.slane %v5349, 2
  %v6154 = vsel %vm4756, %v6152, %v6153
  %v6155 = vrot.slane %v5355, 2
  %v6156 = vrot.slane %v5359, 2
  %v6157 = vsel %vm4756, %v6155, %v6156
  %v6158 = vrot.slane %v5365, 2
  %v6159 = vrot.slane %v5369, 2
  %v6160 = vsel %vm4756, %v6158, %v6159
  %v6161 = vrot.slane %v5375, 2
  %v6162 = vrot.slane %v5379, 2
  %v6163 = vsel %vm4756, %v6161, %v6162
  %v6164 = vrot.slane %v5385, 2
  %v6165 = vrot.slane %v5389, 2
  %v6166 = vsel %vm4756, %v6164, %v6165
  %v6167 = vrot.slane %v5395, 2
  %v6168 = vrot.slane %v5398, 2
  %v6169 = vsel %vm4756, %v6167, %v6168
  %v6170 = vrot.slane %v5426, 2
  %v6171 = vrot.slane %v5430, 2
  %v6172 = vsel %vm4756, %v6170, %v6171
  %v6173 = vrot.slane %v5436, 2
  %v6174 = vrot.slane %v5440, 2
  %v6175 = vsel %vm4756, %v6173, %v6174
  %v6176 = vrot.slane %v5446, 2
  %v6177 = vrot.slane %v5450, 2
  %v6178 = vsel %vm4756, %v6176, %v6177
  %v6179 = vrot.slane %v5456, 2
  %v6180 = vrot.slane %v5460, 2
  %v6181 = vsel %vm4756, %v6179, %v6180
  %v6182 = vrot.slane %v5466, 2
  %v6183 = vrot.slane %v5470, 2
  %v6184 = vsel %vm4756, %v6182, %v6183
  %v6185 = vrot.slane %v5476, 2
  %v6186 = vrot.slane %v5480, 2
  %v6187 = vsel %vm4756, %v6185, %v6186
  %v6188 = vrot.slane %v5486, 2
  %v6189 = vrot.slane %v5490, 2
  %v6190 = vsel %vm4756, %v6188, %v6189
  %v6191 = vrot.slane %v5496, 2
  %v6192 = vrot.slane %v5499, 2
  %v6193 = vsel %vm4756, %v6191, %v6192
  %6194 = vrot.lane.b32.xlu0 %v6148, 96
  %v6195 = vpop.permute.xlu0 %6194
  %6196 = vrot.lane.b32.xlu0 %v6151, 96
  %v6197 = vpop.permute.xlu0 %6196
  %6198 = vrot.lane.b32.xlu0 %v6154, 96
  %v6199 = vpop.permute.xlu0 %6198
  %6200 = vrot.lane.b32.xlu0 %v6157, 96
  %v6201 = vpop.permute.xlu0 %6200
  %6202 = vrot.lane.b32.xlu0 %v6160, 96
  %v6203 = vpop.permute.xlu0 %6202
  %6204 = vrot.lane.b32.xlu0 %v6163, 96
  %v6205 = vpop.permute.xlu0 %6204
  %6206 = vrot.lane.b32.xlu0 %v6166, 96
  %v6207 = vpop.permute.xlu0 %6206
  %6208 = vrot.lane.b32.xlu0 %v6169, 96
  %v6209 = vpop.permute.xlu0 %6208
  %6210 = vrot.lane.b32.xlu0 %v6172, 96
  %v6211 = vpop.permute.xlu0 %6210
  %6212 = vrot.lane.b32.xlu0 %v6175, 96
  %v6213 = vpop.permute.xlu0 %6212
  %6214 = vrot.lane.b32.xlu0 %v6178, 96
  %v6215 = vpop.permute.xlu0 %6214
  %6216 = vrot.lane.b32.xlu0 %v6181, 96
  %v6217 = vpop.permute.xlu0 %6216
  %6218 = vrot.lane.b32.xlu0 %v6184, 96
  %v6219 = vpop.permute.xlu0 %6218
  %6220 = vrot.lane.b32.xlu0 %v6187, 96
  %v6221 = vpop.permute.xlu0 %6220
  %6222 = vrot.lane.b32.xlu0 %v6190, 96
  %v6223 = vpop.permute.xlu0 %6222
  %6224 = vrot.lane.b32.xlu0 %v6193, 96
  %v6225 = vpop.permute.xlu0 %6224
  %v6242 = vadd.f32 %v6130, %v6195
  %v6243 = vadd.f32 %v6131, %v6197
  %v6244 = vadd.f32 %v6132, %v6199
  %v6245 = vadd.f32 %v6133, %v6201
  %v6246 = vadd.f32 %v6134, %v6203
  %v6247 = vadd.f32 %v6135, %v6205
  %v6248 = vadd.f32 %v6136, %v6207
  %v6249 = vadd.f32 %v6137, %v6209
  %v6250 = vadd.f32 %v6138, %v6211
  %v6251 = vadd.f32 %v6139, %v6213
  %v6252 = vadd.f32 %v6140, %v6215
  %v6253 = vadd.f32 %v6141, %v6217
  %v6254 = vadd.f32 %v6142, %v6219
  %v6255 = vadd.f32 %v6143, %v6221
  %v6256 = vadd.f32 %v6144, %v6223
  %v6257 = vadd.f32 %v6145, %v6225
  %6260 = vrot.lane.b32.xlu0 %v5335, 64
  %v6261 = vpop.permute.xlu0 %6260
  %6262 = vrot.lane.b32.xlu0 %v5345, 64
  %v6263 = vpop.permute.xlu0 %6262
  %6264 = vrot.lane.b32.xlu0 %v5355, 64
  %v6265 = vpop.permute.xlu0 %6264
  %6266 = vrot.lane.b32.xlu0 %v5365, 64
  %v6267 = vpop.permute.xlu0 %6266
  %6268 = vrot.lane.b32.xlu0 %v5375, 64
  %v6269 = vpop.permute.xlu0 %6268
  %6270 = vrot.lane.b32.xlu0 %v5385, 64
  %v6271 = vpop.permute.xlu0 %6270
  %6272 = vrot.lane.b32.xlu0 %v5395, 64
  %v6273 = vpop.permute.xlu0 %6272
  %6274 = vrot.lane.b32.xlu0 %v5403, 64
  %v6275 = vpop.permute.xlu0 %6274
  %6276 = vrot.lane.b32.xlu0 %v5436, 64
  %v6277 = vpop.permute.xlu0 %6276
  %6278 = vrot.lane.b32.xlu0 %v5446, 64
  %v6279 = vpop.permute.xlu0 %6278
  %6280 = vrot.lane.b32.xlu0 %v5456, 64
  %v6281 = vpop.permute.xlu0 %6280
  %6282 = vrot.lane.b32.xlu0 %v5466, 64
  %v6283 = vpop.permute.xlu0 %6282
  %6284 = vrot.lane.b32.xlu0 %v5476, 64
  %v6285 = vpop.permute.xlu0 %6284
  %6286 = vrot.lane.b32.xlu0 %v5486, 64
  %v6287 = vpop.permute.xlu0 %6286
  %6288 = vrot.lane.b32.xlu0 %v5496, 64
  %v6289 = vpop.permute.xlu0 %6288
  %6290 = vrot.lane.b32.xlu0 %v5504, 64
  %v6291 = vpop.permute.xlu0 %6290
  %v6308 = vadd.f32 %v6242, %v6261
  %v6309 = vadd.f32 %v6243, %v6263
  %v6310 = vadd.f32 %v6244, %v6265
  %v6311 = vadd.f32 %v6245, %v6267
  %v6312 = vadd.f32 %v6246, %v6269
  %v6313 = vadd.f32 %v6247, %v6271
  %v6314 = vadd.f32 %v6248, %v6273
  %v6315 = vadd.f32 %v6249, %v6275
  %v6316 = vadd.f32 %v6250, %v6277
  %v6317 = vadd.f32 %v6251, %v6279
  %v6318 = vadd.f32 %v6252, %v6281
  %v6319 = vadd.f32 %v6253, %v6283
  %v6320 = vadd.f32 %v6254, %v6285
  %v6321 = vadd.f32 %v6255, %v6287
  %v6322 = vadd.f32 %v6256, %v6289
  %v6323 = vadd.f32 %v6257, %v6291
  %v6326 = vrot.slane %v5403, 1
  %v6327 = vrot.slane %v5406, 1
  %v6328 = vsel %vm976, %v6326, %v6327
  %v6329 = vrot.slane %v5504, 1
  %v6330 = vrot.slane %v5507, 1
  %v6331 = vsel %vm976, %v6329, %v6330
  %6332 = vrot.lane.b32.xlu0 %v6071, 32
  %v6333 = vpop.permute.xlu0 %6332
  %6334 = vrot.lane.b32.xlu0 %v6074, 32
  %v6335 = vpop.permute.xlu0 %6334
  %6336 = vrot.lane.b32.xlu0 %v6077, 32
  %v6337 = vpop.permute.xlu0 %6336
  %6338 = vrot.lane.b32.xlu0 %v6080, 32
  %v6339 = vpop.permute.xlu0 %6338
  %6340 = vrot.lane.b32.xlu0 %v6083, 32
  %v6341 = vpop.permute.xlu0 %6340
  %6342 = vrot.lane.b32.xlu0 %v6086, 32
  %v6343 = vpop.permute.xlu0 %6342
  %6344 = vrot.lane.b32.xlu0 %v6089, 32
  %v6345 = vpop.permute.xlu0 %6344
  %6346 = vrot.lane.b32.xlu0 %v6328, 32
  %v6347 = vpop.permute.xlu0 %6346
  %6348 = vrot.lane.b32.xlu0 %v6095, 32
  %v6349 = vpop.permute.xlu0 %6348
  %6350 = vrot.lane.b32.xlu0 %v6098, 32
  %v6351 = vpop.permute.xlu0 %6350
  %6352 = vrot.lane.b32.xlu0 %v6101, 32
  %v6353 = vpop.permute.xlu0 %6352
  %6354 = vrot.lane.b32.xlu0 %v6104, 32
  %v6355 = vpop.permute.xlu0 %6354
  %6356 = vrot.lane.b32.xlu0 %v6107, 32
  %v6357 = vpop.permute.xlu0 %6356
  %6358 = vrot.lane.b32.xlu0 %v6110, 32
  %v6359 = vpop.permute.xlu0 %6358
  %6360 = vrot.lane.b32.xlu0 %v6113, 32
  %v6361 = vpop.permute.xlu0 %6360
  %6362 = vrot.lane.b32.xlu0 %v6331, 32
  %v6363 = vpop.permute.xlu0 %6362
  %v6380 = vadd.f32 %v6308, %v6333
  %v6381 = vadd.f32 %v6309, %v6335
  %v6382 = vadd.f32 %v6310, %v6337
  %v6383 = vadd.f32 %v6311, %v6339
  %v6384 = vadd.f32 %v6312, %v6341
  %v6385 = vadd.f32 %v6313, %v6343
  %v6386 = vadd.f32 %v6314, %v6345
  %v6387 = vadd.f32 %v6315, %v6347
  %v6388 = vadd.f32 %v6316, %v6349
  %v6389 = vadd.f32 %v6317, %v6351
  %v6390 = vadd.f32 %v6318, %v6353
  %v6391 = vadd.f32 %v6319, %v6355
  %v6392 = vadd.f32 %v6320, %v6357
  %v6393 = vadd.f32 %v6321, %v6359
  %v6394 = vadd.f32 %v6322, %v6361
  %v6395 = vadd.f32 %v6323, %v6363
  %v6428 = vrot.slane %v5562, 2
  %v6429 = vrot.slane %v5565, 2
  %v6430 = vsel %vm4756, %v6428, %v6429
  %v6431 = vrot.slane %v5570, 2
  %v6432 = vrot.slane %v5573, 2
  %v6433 = vsel %vm4756, %v6431, %v6432
  %v6434 = vrot.slane %v5578, 2
  %v6435 = vrot.slane %v5581, 2
  %v6436 = vsel %vm4756, %v6434, %v6435
  %v6437 = vrot.slane %v5586, 2
  %v6438 = vrot.slane %v5589, 2
  %v6439 = vsel %vm4756, %v6437, %v6438
  %v6440 = vrot.slane %v5594, 2
  %v6441 = vrot.slane %v5597, 2
  %v6442 = vsel %vm4756, %v6440, %v6441
  %v6443 = vrot.slane %v5602, 2
  %v6444 = vrot.slane %v5605, 2
  %v6445 = vsel %vm4756, %v6443, %v6444
  %v6446 = vrot.slane %v5610, 2
  %v6447 = vrot.slane %v5613, 2
  %v6448 = vsel %vm4756, %v6446, %v6447
  %v6449 = vrot.slane %v5618, 2
  %v6450 = vrot.slane %v5621, 2
  %v6451 = vsel %vm4756, %v6449, %v6450
  %v6452 = vrot.slane %v5644, 2
  %v6453 = vrot.slane %v5647, 2
  %v6454 = vsel %vm4756, %v6452, %v6453
  %v6455 = vrot.slane %v5652, 2
  %v6456 = vrot.slane %v5655, 2
  %v6457 = vsel %vm4756, %v6455, %v6456
  %v6458 = vrot.slane %v5660, 2
  %v6459 = vrot.slane %v5663, 2
  %v6460 = vsel %vm4756, %v6458, %v6459
  %v6461 = vrot.slane %v5668, 2
  %v6462 = vrot.slane %v5671, 2
  %v6463 = vsel %vm4756, %v6461, %v6462
  %v6464 = vrot.slane %v5676, 2
  %v6465 = vrot.slane %v5679, 2
  %v6466 = vsel %vm4756, %v6464, %v6465
  %v6467 = vrot.slane %v5684, 2
  %v6468 = vrot.slane %v5687, 2
  %v6469 = vsel %vm4756, %v6467, %v6468
  %v6470 = vrot.slane %v5692, 2
  %v6471 = vrot.slane %v5695, 2
  %v6472 = vsel %vm4756, %v6470, %v6471
  %v6473 = vrot.slane %v5700, 2
  %v6474 = vrot.slane %v5703, 2
  %v6475 = vsel %vm4756, %v6473, %v6474
  %v6492 = vadd.f32 %v6380, %v6430
  %v6493 = vadd.f32 %v6381, %v6433
  %v6494 = vadd.f32 %v6382, %v6436
  %v6495 = vadd.f32 %v6383, %v6439
  %v6496 = vadd.f32 %v6384, %v6442
  %v6497 = vadd.f32 %v6385, %v6445
  %v6498 = vadd.f32 %v6386, %v6448
  %v6499 = vadd.f32 %v6387, %v6451
  %v6500 = vadd.f32 %v6388, %v6454
  %v6501 = vadd.f32 %v6389, %v6457
  %v6502 = vadd.f32 %v6390, %v6460
  %v6503 = vadd.f32 %v6391, %v6463
  %v6504 = vadd.f32 %v6392, %v6466
  %v6505 = vadd.f32 %v6393, %v6469
  %v6506 = vadd.f32 %v6394, %v6472
  %v6507 = vadd.f32 %v6395, %v6475
  %v6508 = vld [vmem:[%s11] sm:$0x1]
  %v6510 = vlaneseq
  %v6511 = vshrl.u32 %v6510, 7
  %v6512 = vsub.s32 0, %v6511
  %v6513 = vrot.slane %v6508, %v6512
  %v6515 = vadd.f32 %v6492, %v6513
  %v6516 = vadd.f32 %v6493, %v6513
  %v6517 = vadd.f32 %v6494, %v6513
  %v6518 = vadd.f32 %v6495, %v6513
  %v6519 = vadd.f32 %v6496, %v6513
  %v6520 = vadd.f32 %v6497, %v6513
  %v6521 = vadd.f32 %v6498, %v6513
  %v6522 = vadd.f32 %v6499, %v6513
  %v6523 = vadd.f32 %v6500, %v6513
  %v6524 = vadd.f32 %v6501, %v6513
  %v6525 = vadd.f32 %v6502, %v6513
  %v6526 = vadd.f32 %v6503, %v6513
  %v6527 = vadd.f32 %v6504, %v6513
  %v6528 = vadd.f32 %v6505, %v6513
  %v6529 = vadd.f32 %v6506, %v6513
  %v6530 = vadd.f32 %v6507, %v6513
  %v6531 = vmax.f32 %v6515, 0.0
  %v6532 = vmax.f32 %v6516, 0.0
  %v6533 = vmax.f32 %v6517, 0.0
  %v6534 = vmax.f32 %v6518, 0.0
  %v6535 = vmax.f32 %v6519, 0.0
  %v6536 = vmax.f32 %v6520, 0.0
  %v6537 = vmax.f32 %v6521, 0.0
  %v6538 = vmax.f32 %v6522, 0.0
  %v6539 = vmax.f32 %v6523, 0.0
  %v6540 = vmax.f32 %v6524, 0.0
  %v6541 = vmax.f32 %v6525, 0.0
  %v6542 = vmax.f32 %v6526, 0.0
  %v6543 = vmax.f32 %v6527, 0.0
  %v6544 = vmax.f32 %v6528, 0.0
  %v6545 = vmax.f32 %v6529, 0.0
  %v6546 = vmax.f32 %v6530, 0.0
  %s6547 = scalar_lea.vmem [#allocation6], 25
  %6548 = vst [vmem:[%s6547] ss:$2 sm:$0xff] %v6531
  %s6549 = scalar_lea.vmem [#allocation6], 73
  %6550 = vst [vmem:[%s6549] ss:$2 sm:$0xff] %v6532
  %s6551 = scalar_lea.vmem [#allocation6], 121
  %6552 = vst [vmem:[%s6551] ss:$2 sm:$0xff] %v6533
  %s6553 = scalar_lea.vmem [#allocation6], 169
  %6554 = vst [vmem:[%s6553] ss:$2 sm:$0xff] %v6534
  %s6555 = scalar_lea.vmem [#allocation6], 217
  %6556 = vst [vmem:[%s6555] ss:$2 sm:$0xff] %v6535
  %s6557 = scalar_lea.vmem [#allocation6], 265
  %6558 = vst [vmem:[%s6557] ss:$2 sm:$0xff] %v6536
  %s6559 = scalar_lea.vmem [#allocation6], 313
  %6560 = vst [vmem:[%s6559] ss:$2 sm:$0xff] %v6537
  %s6561 = scalar_lea.vmem [#allocation6], 361
  %6562 = vst [vmem:[%s6561] ss:$2 sm:$0xff] %v6538
  %s6563 = scalar_lea.vmem [#allocation6], 481
  %6564 = vst [vmem:[%s6563] ss:$2 sm:$0xff] %v6539
  %s6565 = scalar_lea.vmem [#allocation6], 529
  %6566 = vst [vmem:[%s6565] ss:$2 sm:$0xff] %v6540
  %s6567 = scalar_lea.vmem [#allocation6], 577
  %6568 = vst [vmem:[%s6567] ss:$2 sm:$0xff] %v6541
  %s6569 = scalar_lea.vmem [#allocation6], 625
  %6570 = vst [vmem:[%s6569] ss:$2 sm:$0xff] %v6542
  %s6571 = scalar_lea.vmem [#allocation6], 673
  %6572 = vst [vmem:[%s6571] ss:$2 sm:$0xff] %v6543
  %s6573 = scalar_lea.vmem [#allocation6], 721
  %6574 = vst [vmem:[%s6573] ss:$2 sm:$0xff] %v6544
  %s6575 = scalar_lea.vmem [#allocation6], 769
  %6576 = vst [vmem:[%s6575] ss:$2 sm:$0xff] %v6545
  %s6577 = scalar_lea.vmem [#allocation6], 817
  %6578 = vst [vmem:[%s6577] ss:$2 sm:$0xff] %v6546
  %v6579 = vld [vmem:[#allocation6] sm:$0xff]
  %v6580 = vld [vmem:[#allocation6 + $0x8] sm:$0xff]
  %v6581 = vld [vmem:[#allocation6 + $0x10] sm:$0xff]
  %v6582 = vld [vmem:[#allocation6 + $0x18] sm:$0xff]
  %v6583 = vld [vmem:[#allocation6 + $0x20] sm:$0xff]
  %v6584 = vld [vmem:[#allocation6 + $0x28] sm:$0xff]
  %v6585 = vld [vmem:[#allocation6 + $0x30] sm:$0xff]
  %v6586 = vld [vmem:[#allocation6 + $0x38] sm:$0xff]
  %v6587 = vld [vmem:[#allocation6 + $0x40] sm:$0xff]
  %v6588 = vld [vmem:[#allocation6 + $0x48] sm:$0xff]
  %v6589 = vld [vmem:[#allocation6 + $0x50] sm:$0xff]
  %v6590 = vld [vmem:[#allocation6 + $0x58] sm:$0xff]
  %v6591 = vld [vmem:[#allocation6 + $0x60] sm:$0xff]
  %v6592 = vld [vmem:[#allocation6 + $0x68] sm:$0xff]
  %v6593 = vld [vmem:[#allocation6 + $0x70] sm:$0xff]
  %v6594 = vld [vmem:[#allocation6 + $0x78] sm:$0xff]
  %v6595 = vld [vmem:[#allocation6 + $0x80] sm:$0xff]
  %v6596 = vld [vmem:[#allocation6 + $0x88] sm:$0xff]
  %v6597 = vld [vmem:[#allocation6 + $0x90] sm:$0xff]
  %v6598 = vld [vmem:[#allocation6 + $0x98] sm:$0xff]
  %v6599 = vld [vmem:[#allocation6 + $0xa0] sm:$0xff]
  %v6600 = vld [vmem:[#allocation6 + $0xa8] sm:$0xff]
  %v6601 = vld [vmem:[#allocation6 + $0xb0] sm:$0xff]
  %v6602 = vld [vmem:[#allocation6 + $0xb8] sm:$0xff]
  %v6603 = vld [vmem:[#allocation6 + $0xc0] sm:$0xff]
  %v6604 = vld [vmem:[#allocation6 + $0xc8] sm:$0xff]
  %v6605 = vld [vmem:[#allocation6 + $0xd0] sm:$0xff]
  %v6606 = vld [vmem:[#allocation6 + $0xd8] sm:$0xff]
  %v6607 = vld [vmem:[#allocation6 + $0xe0] sm:$0xff]
  %v6608 = vld [vmem:[#allocation6 + $0xe8] sm:$0xff]
  %v6609 = vld [vmem:[#allocation6 + $0xf0] sm:$0xff]
  %v6610 = vld [vmem:[#allocation6 + $0xf8] sm:$0xff]
  %v6611 = vld [vmem:[#allocation6 + $0x100] sm:$0xff]
  %v6612 = vld [vmem:[#allocation6 + $0x108] sm:$0xff]
  %v6613 = vld [vmem:[#allocation6 + $0x110] sm:$0xff]
  %v6614 = vld [vmem:[#allocation6 + $0x118] sm:$0xff]
  %v6615 = vld [vmem:[#allocation6 + $0x120] sm:$0xff]
  %v6616 = vld [vmem:[#allocation6 + $0x128] sm:$0xff]
  %v6617 = vld [vmem:[#allocation6 + $0x130] sm:$0xff]
  %v6618 = vld [vmem:[#allocation6 + $0x138] sm:$0xff]
  %v6619 = vld [vmem:[#allocation6 + $0x140] sm:$0xff]
  %v6620 = vld [vmem:[#allocation6 + $0x148] sm:$0xff]
  %v6621 = vld [vmem:[#allocation6 + $0x150] sm:$0xff]
  %v6622 = vld [vmem:[#allocation6 + $0x158] sm:$0xff]
  %v6623 = vld [vmem:[#allocation6 + $0x160] sm:$0xff]
  %v6624 = vld [vmem:[#allocation6 + $0x168] sm:$0xff]
  %v6625 = vld [vmem:[#allocation6 + $0x170] sm:$0xff]
  %v6626 = vld [vmem:[#allocation6 + $0x178] sm:$0xff]
  %v6627 = vld [vmem:[#allocation6 + $0x180] sm:$0xff]
  %v6628 = vld [vmem:[#allocation6 + $0x188] sm:$0xff]
  %v6629 = vld [vmem:[#allocation6 + $0x190] sm:$0xff]
  %v6630 = vld [vmem:[#allocation6 + $0x198] sm:$0xff]
  %v6631 = vld [vmem:[#allocation6 + $0x1a0] sm:$0xff]
  %v6632 = vld [vmem:[#allocation6 + $0x1a8] sm:$0xff]
  %v6633 = vld [vmem:[#allocation6 + $0x1b0] sm:$0xff]
  %v6634 = vld [vmem:[#allocation6 + $0x1b8] sm:$0xff]
  %v6635 = vld [vmem:[#allocation6 + $0x1c0] sm:$0xff]
  %v6636 = vld [vmem:[#allocation6 + $0x1c8] sm:$0xff]
  %v6637 = vld [vmem:[#allocation6 + $0x1d0] sm:$0xff]
  %v6638 = vld [vmem:[#allocation6 + $0x1d8] sm:$0xff]
  %v6639 = vld [vmem:[#allocation6 + $0x1e0] sm:$0xff]
  %v6640 = vld [vmem:[#allocation6 + $0x1e8] sm:$0xff]
  %v6641 = vld [vmem:[#allocation6 + $0x1f0] sm:$0xff]
  %v6642 = vld [vmem:[#allocation6 + $0x1f8] sm:$0xff]
  %v6643 = vld [vmem:[#allocation6 + $0x200] sm:$0xff]
  %v6644 = vld [vmem:[#allocation6 + $0x208] sm:$0xff]
  %v6645 = vld [vmem:[#allocation6 + $0x210] sm:$0xff]
  %v6646 = vld [vmem:[#allocation6 + $0x218] sm:$0xff]
  %v6647 = vld [vmem:[#allocation6 + $0x220] sm:$0xff]
  %v6648 = vld [vmem:[#allocation6 + $0x228] sm:$0xff]
  %v6649 = vld [vmem:[#allocation6 + $0x230] sm:$0xff]
  %v6650 = vld [vmem:[#allocation6 + $0x238] sm:$0xff]
  %v6651 = vld [vmem:[#allocation6 + $0x240] sm:$0xff]
  %v6652 = vld [vmem:[#allocation6 + $0x248] sm:$0xff]
  %v6653 = vld [vmem:[#allocation6 + $0x250] sm:$0xff]
  %v6654 = vld [vmem:[#allocation6 + $0x258] sm:$0xff]
  %v6655 = vld [vmem:[#allocation6 + $0x260] sm:$0xff]
  %v6656 = vld [vmem:[#allocation6 + $0x268] sm:$0xff]
  %v6657 = vld [vmem:[#allocation6 + $0x270] sm:$0xff]
  %v6658 = vld [vmem:[#allocation6 + $0x278] sm:$0xff]
  %v6659 = vld [vmem:[#allocation6 + $0x280] sm:$0xff]
  %v6660 = vld [vmem:[#allocation6 + $0x288] sm:$0xff]
  %v6661 = vld [vmem:[#allocation6 + $0x290] sm:$0xff]
  %v6662 = vld [vmem:[#allocation6 + $0x298] sm:$0xff]
  %v6663 = vld [vmem:[#allocation6 + $0x2a0] sm:$0xff]
  %v6664 = vld [vmem:[#allocation6 + $0x2a8] sm:$0xff]
  %v6665 = vld [vmem:[#allocation6 + $0x2b0] sm:$0xff]
  %v6666 = vld [vmem:[#allocation6 + $0x2b8] sm:$0xff]
  %v6667 = vld [vmem:[#allocation6 + $0x2c0] sm:$0xff]
  %v6668 = vld [vmem:[#allocation6 + $0x2c8] sm:$0xff]
  %v6669 = vld [vmem:[#allocation6 + $0x2d0] sm:$0xff]
  %v6670 = vld [vmem:[#allocation6 + $0x2d8] sm:$0xff]
  %v6671 = vld [vmem:[#allocation6 + $0x2e0] sm:$0xff]
  %v6672 = vld [vmem:[#allocation6 + $0x2e8] sm:$0xff]
  %v6673 = vld [vmem:[#allocation6 + $0x2f0] sm:$0xff]
  %v6674 = vld [vmem:[#allocation6 + $0x2f8] sm:$0xff]
  %v6675 = vld [vmem:[#allocation6 + $0x300] sm:$0xff]
  %v6676 = vld [vmem:[#allocation6 + $0x308] sm:$0xff]
  %v6677 = vld [vmem:[#allocation6 + $0x310] sm:$0xff]
  %v6678 = vld [vmem:[#allocation6 + $0x318] sm:$0xff]
  %v6679 = vld [vmem:[#allocation6 + $0x320] sm:$0xff]
  %v6680 = vld [vmem:[#allocation6 + $0x328] sm:$0xff]
  %v6681 = vld [vmem:[#allocation6 + $0x330] sm:$0xff]
  %v6682 = vld [vmem:[#allocation6 + $0x338] sm:$0xff]
  %v6683 = vld [vmem:[#allocation6 + $0x340] sm:$0xff]
  %v6684 = vld [vmem:[#allocation6 + $0x348] sm:$0xff]
  %v6685 = vld [vmem:[#allocation6 + $0x350] sm:$0xff]
  %v6686 = vld [vmem:[#allocation6 + $0x358] sm:$0xff]
  %v6687 = vld [vmem:[#allocation6 + $0x360] sm:$0xff]
  %v6688 = vld [vmem:[#allocation6 + $0x368] sm:$0xff]
  %v6689 = vld [vmem:[#allocation6 + $0x370] sm:$0xff]
  %v6690 = vld [vmem:[#allocation6 + $0x378] sm:$0xff]
  %v6691 = vld [vmem:[#allocation6 + $0x380] sm:$0xff]
  %v6692 = vld [vmem:[#allocation6 + $0x388] sm:$0xff]
  %v6693 = vpack.c.bf16 %v6580, %v6579
  %v6694 = vpack.c.bf16 %v6582, %v6581
  %v6695 = vpack.c.bf16 %v6584, %v6583
  %v6696 = vpack.c.bf16 %v6586, %v6585
  %v6697 = vpack.c.bf16 %v6588, %v6587
  %v6698 = vpack.c.bf16 %v6590, %v6589
  %v6699 = vpack.c.bf16 %v6592, %v6591
  %v6700 = vpack.c.bf16 %v6594, %v6593
  %v6701 = vpack.c.bf16 %v6596, %v6595
  %v6702 = vpack.c.bf16 %v6598, %v6597
  %v6703 = vpack.c.bf16 %v6600, %v6599
  %v6704 = vpack.c.bf16 %v6602, %v6601
  %v6705 = vpack.c.bf16 %v6604, %v6603
  %v6706 = vpack.c.bf16 %v6606, %v6605
  %v6707 = vpack.c.bf16 %v6608, %v6607
  %v6708 = vpack.c.bf16 %v6610, %v6609
  %v6709 = vpack.c.bf16 %v6612, %v6611
  %v6710 = vpack.c.bf16 %v6614, %v6613
  %v6711 = vpack.c.bf16 %v6616, %v6615
  %v6712 = vpack.c.bf16 %v6618, %v6617
  %v6713 = vpack.c.bf16 %v6620, %v6619
  %v6714 = vpack.c.bf16 %v6622, %v6621
  %v6715 = vpack.c.bf16 %v6624, %v6623
  %v6716 = vpack.c.bf16 %v6626, %v6625
  %v6717 = vpack.c.bf16 %v6628, %v6627
  %v6718 = vpack.c.bf16 %v6630, %v6629
  %v6719 = vpack.c.bf16 %v6632, %v6631
  %v6720 = vpack.c.bf16 %v6634, %v6633
  %v6721 = vpack.c.bf16 %v6636, %v6635
  %v6722 = vpack.c.bf16 %v6638, %v6637
  %v6723 = vpack.c.bf16 %v6640, %v6639
  %v6724 = vpack.c.bf16 %v6642, %v6641
  %v6725 = vpack.c.bf16 %v6644, %v6643
  %v6726 = vpack.c.bf16 %v6646, %v6645
  %v6727 = vpack.c.bf16 %v6648, %v6647
  %v6728 = vpack.c.bf16 %v6650, %v6649
  %v6729 = vpack.c.bf16 %v6652, %v6651
  %v6730 = vpack.c.bf16 %v6654, %v6653
  %v6731 = vpack.c.bf16 %v6656, %v6655
  %v6732 = vpack.c.bf16 %v6658, %v6657
  %v6733 = vpack.c.bf16 %v6660, %v6659
  %v6734 = vpack.c.bf16 %v6662, %v6661
  %v6735 = vpack.c.bf16 %v6664, %v6663
  %v6736 = vpack.c.bf16 %v6666, %v6665
  %v6737 = vpack.c.bf16 %v6668, %v6667
  %v6738 = vpack.c.bf16 %v6670, %v6669
  %v6739 = vpack.c.bf16 %v6672, %v6671
  %v6740 = vpack.c.bf16 %v6674, %v6673
  %v6741 = vpack.c.bf16 %v6676, %v6675
  %v6742 = vpack.c.bf16 %v6678, %v6677
  %v6743 = vpack.c.bf16 %v6680, %v6679
  %v6744 = vpack.c.bf16 %v6682, %v6681
  %v6745 = vpack.c.bf16 %v6684, %v6683
  %v6746 = vpack.c.bf16 %v6686, %v6685
  %v6747 = vpack.c.bf16 %v6688, %v6687
  %v6748 = vpack.c.bf16 %v6690, %v6689
  %v6749 = vpack.c.bf16 %v6692, %v6691
  %v6750 = vld [vmem:[%s6] sm:$0xf]
  %v6751 = vld [vmem:[%s6 + $0x4] sm:$0xf]
  %v6752 = vld [vmem:[%s6 + $0x8] sm:$0xf]
  %v6753 = vld [vmem:[%s6 + $0xc] sm:$0xf]
  %v6758 = vunpack.c.l.b16 %v6750
  %v6759 = vunpack.c.l.b16 %v6751
  %v6760 = vunpack.c.l.b16 %v6752
  %v6761 = vunpack.c.l.b16 %v6753
  %v6762 = vpack.c.b16 %v6759, %v6758
  %v6763 = vpack.c.b16 %v6761, %v6760
  %v6767 = vsel %vm47, %v6693, 0
  %v6770 = vsel %vm47, %v6694, 0
  %v6773 = vsel %vm47, %v6695, 0
  %v6776 = vsel %vm47, %v6696, 0
  %v6779 = vsel %vm47, %v6697, 0
  %v6782 = vsel %vm47, %v6698, 0
  %v6785 = vsel %vm47, %v6699, 0
  %v6788 = vsel %vm47, %v6700, 0
  %v6791 = vsel %vm47, %v6701, 0
  %v6794 = vsel %vm47, %v6702, 0
  %v6797 = vsel %vm47, %v6703, 0
  %v6800 = vsel %vm47, %v6704, 0
  %v6803 = vsel %vm47, %v6705, 0
  %v6806 = vsel %vm47, %v6706, 0
  %v6809 = vsel %vm47, %v6707, 0
  %v6812 = vsel %vm47, %v6708, 0
  %v6815 = vsel %vm47, %v6709, 0
  %v6818 = vsel %vm47, %v6710, 0
  %v6821 = vsel %vm47, %v6711, 0
  %v6824 = vsel %vm47, %v6712, 0
  %v6827 = vsel %vm47, %v6713, 0
  %v6830 = vsel %vm47, %v6714, 0
  %v6833 = vsel %vm47, %v6715, 0
  %v6836 = vsel %vm47, %v6716, 0
  %v6839 = vsel %vm47, %v6717, 0
  %v6842 = vsel %vm47, %v6718, 0
  %v6845 = vsel %vm47, %v6719, 0
  %v6848 = vsel %vm47, %v6720, 0
  %v6851 = vsel %vm47, %v6721, 0
  %v6854 = vsel %vm47, %v6722, 0
  %v6857 = vsel %vm47, %v6723, 0
  %v6860 = vsel %vm47, %v6724, 0
  %v6863 = vsel %vm47, %v6725, 0
  %v6866 = vsel %vm47, %v6726, 0
  %v6869 = vsel %vm47, %v6727, 0
  %v6872 = vsel %vm47, %v6728, 0
  %v6875 = vsel %vm47, %v6729, 0
  %v6878 = vsel %vm47, %v6730, 0
  %v6881 = vsel %vm47, %v6731, 0
  %v6884 = vsel %vm47, %v6732, 0
  %v6887 = vsel %vm47, %v6733, 0
  %v6890 = vsel %vm47, %v6734, 0
  %v6893 = vsel %vm47, %v6735, 0
  %v6896 = vsel %vm47, %v6736, 0
  %v6899 = vsel %vm47, %v6737, 0
  %v6902 = vsel %vm47, %v6738, 0
  %v6905 = vsel %vm47, %v6739, 0
  %v6908 = vsel %vm47, %v6740, 0
  %v6911 = vsel %vm47, %v6741, 0
  %v6914 = vsel %vm47, %v6742, 0
  %v6917 = vsel %vm47, %v6743, 0
  %v6920 = vsel %vm47, %v6744, 0
  %v6923 = vsel %vm47, %v6745, 0
  %v6926 = vsel %vm47, %v6746, 0
  %v6929 = vsel %vm47, %v6747, 0
  %v6932 = vsel %vm47, %v6748, 0
  %v6935 = vsel %vm47, %v6749, 0
  %6937 = vmatprep.subr.bf16.mxu0 0
  %6938 = vmatpush1.bf16.msra.mxu0 %v6762
  %6939 = vmatprep.subr.bf16.mxu0 0
  %6940 = vmatpush1.bf16.msra.mxu0 %v6763
  %6941 = vmatprep.subr.bf16.mxu0 0
  %6942 = vmatpush1.bf16.msra.mxu0 0
  %6943 = vmatprep.subr.bf16.mxu0 0
  %6944 = vmatpush1.bf16.msra.mxu0 0
  %6945 = vmatprep.subr.bf16.mxu0 0
  %6946 = vmatpush1.bf16.msra.mxu0 0
  %6947 = vmatprep.subr.bf16.mxu0 0
  %6948 = vmatpush1.bf16.msra.mxu0 0
  %6949 = vmatprep.subr.bf16.mxu0 0
  %6950 = vmatpush1.bf16.msra.mxu0 0
  %6951 = vmatprep.subr.bf16.mxu0 0
  %6952 = vmatpush1.bf16.msra.mxu0 0
  %6953 = vmatprep.subr.bf16.mxu0 0
  %6954 = vmatpush1.bf16.msra.mxu0 0
  %6955 = vmatprep.subr.bf16.mxu0 0
  %6956 = vmatpush1.bf16.msra.mxu0 0
  %6957 = vmatprep.subr.bf16.mxu0 0
  %6958 = vmatpush1.bf16.msra.mxu0 0
  %6959 = vmatprep.subr.bf16.mxu0 0
  %6960 = vmatpush1.bf16.msra.mxu0 0
  %6961 = vmatprep.subr.bf16.mxu0 0
  %6962 = vmatpush1.bf16.msra.mxu0 0
  %6963 = vmatprep.subr.bf16.mxu0 0
  %6964 = vmatpush1.bf16.msra.mxu0 0
  %6965 = vmatprep.subr.bf16.mxu0 0
  %6966 = vmatpush1.bf16.msra.mxu0 0
  %6967 = vmatprep.subr.bf16.mxu0 0
  %6968 = vmatpush1.bf16.msra.mxu0 0
  %6969 = vmatprep.mubr.bf16.mxu0 0
  %6970 = vmatmul.mubr.bf16.gmra.mrb[0].mxu0 %v6767
  %v6971 = vpop.f32.mrb[0].mxu0
  %v6972 = vadd.f32 0.0, %v6971
  %v6973 = vpop.f32.mrb[0].mxu0
  %v6974 = vpop.f32.mrb[0].mxu0
  %v6975 = vadd.f32 0.0, %v6974
  %v6976 = vpop.f32.mrb[0].mxu0
  %6977 = vmatprep.mubr.bf16.mxu0 0
  %6978 = vmatmul.mubr.bf16.gmra.mrb[0].mxu0 %v6770
  %v6979 = vpop.f32.mrb[0].mxu0
  %v6980 = vadd.f32 0.0, %v6979
  %v6981 = vpop.f32.mrb[0].mxu0
  %v6982 = vpop.f32.mrb[0].mxu0
  %v6983 = vadd.f32 0.0, %v6982
  %v6984 = vpop.f32.mrb[0].mxu0
  %6985 = vmatprep.mubr.bf16.mxu0 0
  %6986 = vmatmul.mubr.bf16.gmra.mrb[0].mxu0 %v6773
  %v6987 = vpop.f32.mrb[0].mxu0
  %v6988 = vadd.f32 0.0, %v6987
  %v6989 = vpop.f32.mrb[0].mxu0
  %v6990 = vpop.f32.mrb[0].mxu0
  %v6991 = vadd.f32 0.0, %v6990
  %v6992 = vpop.f32.mrb[0].mxu0
  %6993 = vmatprep.mubr.bf16.mxu0 0
  %6994 = vmatmul.mubr.bf16.gmra.mrb[0].mxu0 %v6776
  %v6995 = vpop.f32.mrb[0].mxu0
  %v6996 = vadd.f32 0.0, %v6995
  %v6997 = vpop.f32.mrb[0].mxu0
  %v6998 = vpop.f32.mrb[0].mxu0
  %v6999 = vadd.f32 0.0, %v6998
  %v7000 = vpop.f32.mrb[0].mxu0
  %7001 = vmatprep.mubr.bf16.mxu0 0
  %7002 = vmatmul.mubr.bf16.gmra.mrb[0].mxu0 %v6779
  %v7003 = vpop.f32.mrb[0].mxu0
  %v7004 = vadd.f32 0.0, %v7003
  %v7005 = vpop.f32.mrb[0].mxu0
  %v7006 = vpop.f32.mrb[0].mxu0
  %v7007 = vadd.f32 0.0, %v7006
  %v7008 = vpop.f32.mrb[0].mxu0
  %7009 = vmatprep.mubr.bf16.mxu0 0
  %7010 = vmatmul.mubr.bf16.gmra.mrb[0].mxu0 %v6782
  %v7011 = vpop.f32.mrb[0].mxu0
  %v7012 = vadd.f32 0.0, %v7011
  %v7013 = vpop.f32.mrb[0].mxu0
  %v7014 = vpop.f32.mrb[0].mxu0
  %v7015 = vadd.f32 0.0, %v7014
  %v7016 = vpop.f32.mrb[0].mxu0
  %7017 = vmatprep.mubr.bf16.mxu0 0
  %7018 = vmatmul.mubr.bf16.gmra.mrb[0].mxu0 %v6785
  %v7019 = vpop.f32.mrb[0].mxu0
  %v7020 = vadd.f32 0.0, %v7019
  %v7021 = vpop.f32.mrb[0].mxu0
  %v7022 = vpop.f32.mrb[0].mxu0
  %v7023 = vadd.f32 0.0, %v7022
  %v7024 = vpop.f32.mrb[0].mxu0
  %7025 = vmatprep.mubr.bf16.mxu0 0
  %7026 = vmatmul.mubr.bf16.gmra.mrb[0].mxu0 %v6788
  %v7027 = vpop.f32.mrb[0].mxu0
  %v7028 = vadd.f32 0.0, %v7027
  %v7029 = vpop.f32.mrb[0].mxu0
  %v7030 = vpop.f32.mrb[0].mxu0
  %v7031 = vadd.f32 0.0, %v7030
  %v7032 = vpop.f32.mrb[0].mxu0
  %7033 = vmatprep.mubr.bf16.mxu0 0
  %7034 = vmatmul.mubr.bf16.gmra.mrb[0].mxu0 %v6791
  %v7035 = vpop.f32.mrb[0].mxu0
  %v7036 = vadd.f32 0.0, %v7035
  %v7037 = vpop.f32.mrb[0].mxu0
  %v7038 = vpop.f32.mrb[0].mxu0
  %v7039 = vadd.f32 0.0, %v7038
  %v7040 = vpop.f32.mrb[0].mxu0
  %7041 = vmatprep.mubr.bf16.mxu0 0
  %7042 = vmatmul.mubr.bf16.gmra.mrb[0].mxu0 %v6794
  %v7043 = vpop.f32.mrb[0].mxu0
  %v7044 = vadd.f32 0.0, %v7043
  %v7045 = vpop.f32.mrb[0].mxu0
  %v7046 = vpop.f32.mrb[0].mxu0
  %v7047 = vadd.f32 0.0, %v7046
  %v7048 = vpop.f32.mrb[0].mxu0
  %7049 = vmatprep.mubr.bf16.mxu0 0
  %7050 = vmatmul.mubr.bf16.gmra.mrb[0].mxu0 %v6797
  %v7051 = vpop.f32.mrb[0].mxu0
  %v7052 = vadd.f32 0.0, %v7051
  %v7053 = vpop.f32.mrb[0].mxu0
  %v7054 = vpop.f32.mrb[0].mxu0
  %v7055 = vadd.f32 0.0, %v7054
  %v7056 = vpop.f32.mrb[0].mxu0
  %7057 = vmatprep.mubr.bf16.mxu0 0
  %7058 = vmatmul.mubr.bf16.gmra.mrb[0].mxu0 %v6800
  %v7059 = vpop.f32.mrb[0].mxu0
  %v7060 = vadd.f32 0.0, %v7059
  %v7061 = vpop.f32.mrb[0].mxu0
  %v7062 = vpop.f32.mrb[0].mxu0
  %v7063 = vadd.f32 0.0, %v7062
  %v7064 = vpop.f32.mrb[0].mxu0
  %7065 = vmatprep.mubr.bf16.mxu0 0
  %7066 = vmatmul.mubr.bf16.gmra.mrb[0].mxu0 %v6803
  %v7067 = vpop.f32.mrb[0].mxu0
  %v7068 = vadd.f32 0.0, %v7067
  %v7069 = vpop.f32.mrb[0].mxu0
  %v7070 = vpop.f32.mrb[0].mxu0
  %v7071 = vadd.f32 0.0, %v7070
  %v7072 = vpop.f32.mrb[0].mxu0
  %7073 = vmatprep.mubr.bf16.mxu0 0
  %7074 = vmatmul.mubr.bf16.gmra.mrb[0].mxu0 %v6806
  %v7075 = vpop.f32.mrb[0].mxu0
  %v7076 = vadd.f32 0.0, %v7075
  %v7077 = vpop.f32.mrb[0].mxu0
  %v7078 = vpop.f32.mrb[0].mxu0
  %v7079 = vadd.f32 0.0, %v7078
  %v7080 = vpop.f32.mrb[0].mxu0
  %7081 = vmatprep.mubr.bf16.mxu0 0
  %7082 = vmatmul.mubr.bf16.gmra.mrb[0].mxu0 %v6809
  %v7083 = vpop.f32.mrb[0].mxu0
  %v7084 = vadd.f32 0.0, %v7083
  %v7085 = vpop.f32.mrb[0].mxu0
  %v7086 = vpop.f32.mrb[0].mxu0
  %v7087 = vadd.f32 0.0, %v7086
  %v7088 = vpop.f32.mrb[0].mxu0
  %7089 = vmatprep.mubr.bf16.mxu0 0
  %7090 = vmatmul.mubr.bf16.gmra.mrb[0].mxu0 %v6812
  %v7091 = vpop.f32.mrb[0].mxu0
  %v7092 = vadd.f32 0.0, %v7091
  %v7093 = vpop.f32.mrb[0].mxu0
  %v7094 = vpop.f32.mrb[0].mxu0
  %v7095 = vadd.f32 0.0, %v7094
  %v7096 = vpop.f32.mrb[0].mxu0
  %7097 = vmatprep.mubr.bf16.mxu0 0
  %7098 = vmatmul.mubr.bf16.gmra.mrb[0].mxu0 %v6815
  %v7099 = vpop.f32.mrb[0].mxu0
  %v7100 = vadd.f32 0.0, %v7099
  %v7101 = vpop.f32.mrb[0].mxu0
  %v7102 = vpop.f32.mrb[0].mxu0
  %v7103 = vadd.f32 0.0, %v7102
  %v7104 = vpop.f32.mrb[0].mxu0
  %7105 = vmatprep.mubr.bf16.mxu0 0
  %7106 = vmatmul.mubr.bf16.gmra.mrb[0].mxu0 %v6818
  %v7107 = vpop.f32.mrb[0].mxu0
  %v7108 = vadd.f32 0.0, %v7107
  %v7109 = vpop.f32.mrb[0].mxu0
  %v7110 = vpop.f32.mrb[0].mxu0
  %v7111 = vadd.f32 0.0, %v7110
  %v7112 = vpop.f32.mrb[0].mxu0
  %7113 = vmatprep.mubr.bf16.mxu0 0
  %7114 = vmatmul.mubr.bf16.gmra.mrb[0].mxu0 %v6821
  %v7115 = vpop.f32.mrb[0].mxu0
  %v7116 = vadd.f32 0.0, %v7115
  %v7117 = vpop.f32.mrb[0].mxu0
  %v7118 = vpop.f32.mrb[0].mxu0
  %v7119 = vadd.f32 0.0, %v7118
  %v7120 = vpop.f32.mrb[0].mxu0
  %7121 = vmatprep.mubr.bf16.mxu0 0
  %7122 = vmatmul.mubr.bf16.gmra.mrb[0].mxu0 %v6824
  %v7123 = vpop.f32.mrb[0].mxu0
  %v7124 = vadd.f32 0.0, %v7123
  %v7125 = vpop.f32.mrb[0].mxu0
  %v7126 = vpop.f32.mrb[0].mxu0
  %v7127 = vadd.f32 0.0, %v7126
  %v7128 = vpop.f32.mrb[0].mxu0
  %7129 = vmatprep.mubr.bf16.mxu0 0
  %7130 = vmatmul.mubr.bf16.gmra.mrb[0].mxu0 %v6827
  %v7131 = vpop.f32.mrb[0].mxu0
  %v7132 = vadd.f32 0.0, %v7131
  %v7133 = vpop.f32.mrb[0].mxu0
  %v7134 = vpop.f32.mrb[0].mxu0
  %v7135 = vadd.f32 0.0, %v7134
  %v7136 = vpop.f32.mrb[0].mxu0
  %7137 = vmatprep.mubr.bf16.mxu0 0
  %7138 = vmatmul.mubr.bf16.gmra.mrb[0].mxu0 %v6830
  %v7139 = vpop.f32.mrb[0].mxu0
  %v7140 = vadd.f32 0.0, %v7139
  %v7141 = vpop.f32.mrb[0].mxu0
  %v7142 = vpop.f32.mrb[0].mxu0
  %v7143 = vadd.f32 0.0, %v7142
  %v7144 = vpop.f32.mrb[0].mxu0
  %7145 = vmatprep.mubr.bf16.mxu0 0
  %7146 = vmatmul.mubr.bf16.gmra.mrb[0].mxu0 %v6833
  %v7147 = vpop.f32.mrb[0].mxu0
  %v7148 = vadd.f32 0.0, %v7147
  %v7149 = vpop.f32.mrb[0].mxu0
  %v7150 = vpop.f32.mrb[0].mxu0
  %v7151 = vadd.f32 0.0, %v7150
  %v7152 = vpop.f32.mrb[0].mxu0
  %7153 = vmatprep.mubr.bf16.mxu0 0
  %7154 = vmatmul.mubr.bf16.gmra.mrb[0].mxu0 %v6836
  %v7155 = vpop.f32.mrb[0].mxu0
  %v7156 = vadd.f32 0.0, %v7155
  %v7157 = vpop.f32.mrb[0].mxu0
  %v7158 = vpop.f32.mrb[0].mxu0
  %v7159 = vadd.f32 0.0, %v7158
  %v7160 = vpop.f32.mrb[0].mxu0
  %7161 = vmatprep.mubr.bf16.mxu0 0
  %7162 = vmatmul.mubr.bf16.gmra.mrb[0].mxu0 %v6839
  %v7163 = vpop.f32.mrb[0].mxu0
  %v7164 = vadd.f32 0.0, %v7163
  %v7165 = vpop.f32.mrb[0].mxu0
  %v7166 = vpop.f32.mrb[0].mxu0
  %v7167 = vadd.f32 0.0, %v7166
  %v7168 = vpop.f32.mrb[0].mxu0
  %7169 = vmatprep.mubr.bf16.mxu0 0
  %7170 = vmatmul.mubr.bf16.gmra.mrb[0].mxu0 %v6842
  %v7171 = vpop.f32.mrb[0].mxu0
  %v7172 = vadd.f32 0.0, %v7171
  %v7173 = vpop.f32.mrb[0].mxu0
  %v7174 = vpop.f32.mrb[0].mxu0
  %v7175 = vadd.f32 0.0, %v7174
  %v7176 = vpop.f32.mrb[0].mxu0
  %7177 = vmatprep.mubr.bf16.mxu0 0
  %7178 = vmatmul.mubr.bf16.gmra.mrb[0].mxu0 %v6845
  %v7179 = vpop.f32.mrb[0].mxu0
  %v7180 = vadd.f32 0.0, %v7179
  %v7181 = vpop.f32.mrb[0].mxu0
  %v7182 = vpop.f32.mrb[0].mxu0
  %v7183 = vadd.f32 0.0, %v7182
  %v7184 = vpop.f32.mrb[0].mxu0
  %7185 = vmatprep.mubr.bf16.mxu0 0
  %7186 = vmatmul.mubr.bf16.gmra.mrb[0].mxu0 %v6848
  %v7187 = vpop.f32.mrb[0].mxu0
  %v7188 = vpop.f32.mrb[0].mxu0
  %v7189 = vpop.f32.mrb[0].mxu0
  %v7190 = vpop.f32.mrb[0].mxu0
  %7191 = vmatprep.mubr.bf16.mxu0 0
  %7192 = vmatmul.mubr.bf16.gmra.mrb[0].mxu0 %v6851
  %v7193 = vpop.f32.mrb[0].mxu0
  %v7194 = vpop.f32.mrb[0].mxu0
  %v7195 = vpop.f32.mrb[0].mxu0
  %v7196 = vadd.f32 0.0, %v7195
  %v7197 = vpop.f32.mrb[0].mxu0
  %7198 = vmatprep.mubr.bf16.mxu0 0
  %7199 = vmatmul.mubr.bf16.gmra.mrb[0].mxu0 %v6854
  %v7200 = vpop.f32.mrb[0].mxu0
  %v7201 = vadd.f32 0.0, %v7200
  %v7202 = vpop.f32.mrb[0].mxu0
  %v7203 = vpop.f32.mrb[0].mxu0
  %v7204 = vadd.f32 0.0, %v7203
  %v7205 = vpop.f32.mrb[0].mxu0
  %7206 = vmatprep.mubr.bf16.mxu0 0
  %7207 = vmatmul.mubr.bf16.gmra.mrb[0].mxu0 %v6857
  %v7208 = vpop.f32.mrb[0].mxu0
  %v7209 = vadd.f32 0.0, %v7208
  %v7210 = vpop.f32.mrb[0].mxu0
  %v7211 = vpop.f32.mrb[0].mxu0
  %v7212 = vadd.f32 0.0, %v7211
  %v7213 = vpop.f32.mrb[0].mxu0
  %7214 = vmatprep.mubr.bf16.mxu0 0
  %7215 = vmatmul.mubr.bf16.gmra.mrb[0].mxu0 %v6860
  %v7216 = vpop.f32.mrb[0].mxu0
  %v7217 = vadd.f32 0.0, %v7216
  %v7218 = vpop.f32.mrb[0].mxu0
  %v7219 = vpop.f32.mrb[0].mxu0
  %v7220 = vadd.f32 0.0, %v7219
  %v7221 = vpop.f32.mrb[0].mxu0
  %7222 = vmatprep.mubr.bf16.mxu0 0
  %7223 = vmatmul.mubr.bf16.gmra.mrb[0].mxu0 %v6863
  %v7224 = vpop.f32.mrb[0].mxu0
  %v7225 = vadd.f32 0.0, %v7224
  %v7226 = vpop.f32.mrb[0].mxu0
  %v7227 = vpop.f32.mrb[0].mxu0
  %v7228 = vadd.f32 0.0, %v7227
  %v7229 = vpop.f32.mrb[0].mxu0
  %7230 = vmatprep.mubr.bf16.mxu0 0
  %7231 = vmatmul.mubr.bf16.gmra.mrb[0].mxu0 %v6866
  %v7232 = vpop.f32.mrb[0].mxu0
  %v7233 = vadd.f32 0.0, %v7232
  %v7234 = vpop.f32.mrb[0].mxu0
  %v7235 = vpop.f32.mrb[0].mxu0
  %v7236 = vadd.f32 0.0, %v7235
  %v7237 = vpop.f32.mrb[0].mxu0
  %7238 = vmatprep.mubr.bf16.mxu0 0
  %7239 = vmatmul.mubr.bf16.gmra.mrb[0].mxu0 %v6869
  %v7240 = vpop.f32.mrb[0].mxu0
  %v7241 = vadd.f32 0.0, %v7240
  %v7242 = vpop.f32.mrb[0].mxu0
  %v7243 = vpop.f32.mrb[0].mxu0
  %v7244 = vadd.f32 0.0, %v7243
  %v7245 = vpop.f32.mrb[0].mxu0
  %7246 = vmatprep.mubr.bf16.mxu0 0
  %7247 = vmatmul.mubr.bf16.gmra.mrb[0].mxu0 %v6872
  %v7248 = vpop.f32.mrb[0].mxu0
  %v7249 = vadd.f32 0.0, %v7248
  %v7250 = vpop.f32.mrb[0].mxu0
  %v7251 = vpop.f32.mrb[0].mxu0
  %v7252 = vadd.f32 0.0, %v7251
  %v7253 = vpop.f32.mrb[0].mxu0
  %7254 = vmatprep.mubr.bf16.mxu0 0
  %7255 = vmatmul.mubr.bf16.gmra.mrb[0].mxu0 %v6875
  %v7256 = vpop.f32.mrb[0].mxu0
  %v7257 = vadd.f32 0.0, %v7256
  %v7258 = vpop.f32.mrb[0].mxu0
  %v7259 = vpop.f32.mrb[0].mxu0
  %v7260 = vadd.f32 0.0, %v7259
  %v7261 = vpop.f32.mrb[0].mxu0
  %7262 = vmatprep.mubr.bf16.mxu0 0
  %7263 = vmatmul.mubr.bf16.gmra.mrb[0].mxu0 %v6878
  %v7264 = vpop.f32.mrb[0].mxu0
  %v7265 = vadd.f32 0.0, %v7264
  %v7266 = vpop.f32.mrb[0].mxu0
  %v7267 = vpop.f32.mrb[0].mxu0
  %v7268 = vadd.f32 0.0, %v7267
  %v7269 = vpop.f32.mrb[0].mxu0
  %7270 = vmatprep.mubr.bf16.mxu0 0
  %7271 = vmatmul.mubr.bf16.gmra.mrb[0].mxu0 %v6881
  %v7272 = vpop.f32.mrb[0].mxu0
  %v7273 = vadd.f32 0.0, %v7272
  %v7274 = vpop.f32.mrb[0].mxu0
  %v7275 = vpop.f32.mrb[0].mxu0
  %v7276 = vadd.f32 0.0, %v7275
  %v7277 = vpop.f32.mrb[0].mxu0
  %7278 = vmatprep.mubr.bf16.mxu0 0
  %7279 = vmatmul.mubr.bf16.gmra.mrb[0].mxu0 %v6884
  %v7280 = vpop.f32.mrb[0].mxu0
  %v7281 = vadd.f32 0.0, %v7280
  %v7282 = vpop.f32.mrb[0].mxu0
  %v7283 = vpop.f32.mrb[0].mxu0
  %v7284 = vadd.f32 0.0, %v7283
  %v7285 = vpop.f32.mrb[0].mxu0
  %7286 = vmatprep.mubr.bf16.mxu0 0
  %7287 = vmatmul.mubr.bf16.gmra.mrb[0].mxu0 %v6887
  %v7288 = vpop.f32.mrb[0].mxu0
  %v7289 = vadd.f32 0.0, %v7288
  %v7290 = vpop.f32.mrb[0].mxu0
  %v7291 = vpop.f32.mrb[0].mxu0
  %v7292 = vadd.f32 0.0, %v7291
  %v7293 = vpop.f32.mrb[0].mxu0
  %7294 = vmatprep.mubr.bf16.mxu0 0
  %7295 = vmatmul.mubr.bf16.gmra.mrb[0].mxu0 %v6890
  %v7296 = vpop.f32.mrb[0].mxu0
  %v7297 = vadd.f32 0.0, %v7296
  %v7298 = vpop.f32.mrb[0].mxu0
  %v7299 = vpop.f32.mrb[0].mxu0
  %v7300 = vadd.f32 0.0, %v7299
  %v7301 = vpop.f32.mrb[0].mxu0
  %7302 = vmatprep.mubr.bf16.mxu0 0
  %7303 = vmatmul.mubr.bf16.gmra.mrb[0].mxu0 %v6893
  %v7304 = vpop.f32.mrb[0].mxu0
  %v7305 = vadd.f32 0.0, %v7304
  %v7306 = vpop.f32.mrb[0].mxu0
  %v7307 = vpop.f32.mrb[0].mxu0
  %v7308 = vadd.f32 0.0, %v7307
  %v7309 = vpop.f32.mrb[0].mxu0
  %7310 = vmatprep.mubr.bf16.mxu0 0
  %7311 = vmatmul.mubr.bf16.gmra.mrb[0].mxu0 %v6896
  %v7312 = vpop.f32.mrb[0].mxu0
  %v7313 = vadd.f32 0.0, %v7312
  %v7314 = vpop.f32.mrb[0].mxu0
  %v7315 = vpop.f32.mrb[0].mxu0
  %v7316 = vadd.f32 0.0, %v7315
  %v7317 = vpop.f32.mrb[0].mxu0
  %7318 = vmatprep.mubr.bf16.mxu0 0
  %7319 = vmatmul.mubr.bf16.gmra.mrb[0].mxu0 %v6899
  %v7320 = vpop.f32.mrb[0].mxu0
  %v7321 = vadd.f32 0.0, %v7320
  %v7322 = vpop.f32.mrb[0].mxu0
  %v7323 = vpop.f32.mrb[0].mxu0
  %v7324 = vadd.f32 0.0, %v7323
  %v7325 = vpop.f32.mrb[0].mxu0
  %7326 = vmatprep.mubr.bf16.mxu0 0
  %7327 = vmatmul.mubr.bf16.gmra.mrb[0].mxu0 %v6902
  %v7328 = vpop.f32.mrb[0].mxu0
  %v7329 = vadd.f32 0.0, %v7328
  %v7330 = vpop.f32.mrb[0].mxu0
  %v7331 = vpop.f32.mrb[0].mxu0
  %v7332 = vadd.f32 0.0, %v7331
  %v7333 = vpop.f32.mrb[0].mxu0
  %7334 = vmatprep.mubr.bf16.mxu0 0
  %7335 = vmatmul.mubr.bf16.gmra.mrb[0].mxu0 %v6905
  %v7336 = vpop.f32.mrb[0].mxu0
  %v7337 = vadd.f32 0.0, %v7336
  %v7338 = vpop.f32.mrb[0].mxu0
  %v7339 = vpop.f32.mrb[0].mxu0
  %v7340 = vadd.f32 0.0, %v7339
  %v7341 = vpop.f32.mrb[0].mxu0
  %7342 = vmatprep.mubr.bf16.mxu0 0
  %7343 = vmatmul.mubr.bf16.gmra.mrb[0].mxu0 %v6908
  %v7344 = vpop.f32.mrb[0].mxu0
  %v7345 = vadd.f32 0.0, %v7344
  %v7346 = vpop.f32.mrb[0].mxu0
  %v7347 = vpop.f32.mrb[0].mxu0
  %v7348 = vadd.f32 0.0, %v7347
  %v7349 = vpop.f32.mrb[0].mxu0
  %7350 = vmatprep.mubr.bf16.mxu0 0
  %7351 = vmatmul.mubr.bf16.gmra.mrb[0].mxu0 %v6911
  %v7352 = vpop.f32.mrb[0].mxu0
  %v7353 = vadd.f32 0.0, %v7352
  %v7354 = vpop.f32.mrb[0].mxu0
  %v7355 = vpop.f32.mrb[0].mxu0
  %v7356 = vadd.f32 0.0, %v7355
  %v7357 = vpop.f32.mrb[0].mxu0
  %7358 = vmatprep.mubr.bf16.mxu0 0
  %7359 = vmatmul.mubr.bf16.gmra.mrb[0].mxu0 %v6914
  %v7360 = vpop.f32.mrb[0].mxu0
  %v7361 = vadd.f32 0.0, %v7360
  %v7362 = vpop.f32.mrb[0].mxu0
  %v7363 = vpop.f32.mrb[0].mxu0
  %v7364 = vadd.f32 0.0, %v7363
  %v7365 = vpop.f32.mrb[0].mxu0
  %7366 = vmatprep.mubr.bf16.mxu0 0
  %7367 = vmatmul.mubr.bf16.gmra.mrb[0].mxu0 %v6917
  %v7368 = vpop.f32.mrb[0].mxu0
  %v7369 = vadd.f32 0.0, %v7368
  %v7370 = vpop.f32.mrb[0].mxu0
  %v7371 = vpop.f32.mrb[0].mxu0
  %v7372 = vadd.f32 0.0, %v7371
  %v7373 = vpop.f32.mrb[0].mxu0
  %7374 = vmatprep.mubr.bf16.mxu0 0
  %7375 = vmatmul.mubr.bf16.gmra.mrb[0].mxu0 %v6920
  %v7376 = vpop.f32.mrb[0].mxu0
  %v7377 = vadd.f32 0.0, %v7376
  %v7378 = vpop.f32.mrb[0].mxu0
  %v7379 = vpop.f32.mrb[0].mxu0
  %v7380 = vadd.f32 0.0, %v7379
  %v7381 = vpop.f32.mrb[0].mxu0
  %7382 = vmatprep.mubr.bf16.mxu0 0
  %7383 = vmatmul.mubr.bf16.gmra.mrb[0].mxu0 %v6923
  %v7384 = vpop.f32.mrb[0].mxu0
  %v7385 = vadd.f32 0.0, %v7384
  %v7386 = vpop.f32.mrb[0].mxu0
  %v7387 = vpop.f32.mrb[0].mxu0
  %v7388 = vadd.f32 0.0, %v7387
  %v7389 = vpop.f32.mrb[0].mxu0
  %7390 = vmatprep.mubr.bf16.mxu0 0
  %7391 = vmatmul.mubr.bf16.gmra.mrb[0].mxu0 %v6926
  %v7392 = vpop.f32.mrb[0].mxu0
  %v7393 = vadd.f32 0.0, %v7392
  %v7394 = vpop.f32.mrb[0].mxu0
  %v7395 = vpop.f32.mrb[0].mxu0
  %v7396 = vadd.f32 0.0, %v7395
  %v7397 = vpop.f32.mrb[0].mxu0
  %7398 = vmatprep.mubr.bf16.mxu0 0
  %7399 = vmatmul.mubr.bf16.gmra.mrb[0].mxu0 %v6929
  %v7400 = vpop.f32.mrb[0].mxu0
  %v7401 = vadd.f32 0.0, %v7400
  %v7402 = vpop.f32.mrb[0].mxu0
  %v7403 = vpop.f32.mrb[0].mxu0
  %v7404 = vadd.f32 0.0, %v7403
  %v7405 = vpop.f32.mrb[0].mxu0
  %7406 = vmatprep.mubr.bf16.mxu0 0
  %7407 = vmatmul.mubr.bf16.gmra.mrb[0].mxu0 %v6932
  %v7408 = vpop.f32.mrb[0].mxu0
  %v7409 = vadd.f32 0.0, %v7408
  %v7410 = vpop.f32.mrb[0].mxu0
  %v7411 = vpop.f32.mrb[0].mxu0
  %v7412 = vpop.f32.mrb[0].mxu0
  %7413 = vmatprep.mubr.bf16.mxu0 0
  %7414 = vmatmul.mubr.bf16.gmra.mrb[0].mxu0 %v6935
  %v7415 = vpop.f32.mrb[0].mxu0
  %v7416 = vpop.f32.mrb[0].mxu0
  %v7417 = vpop.f32.mrb[0].mxu0
  %v7418 = vpop.f32.mrb[0].mxu0
  %7419 = vdwg.mxu0
  %v7516 = vrot.slane %v6972, 1
  %v7517 = vrot.slane %v6975, 1
  %v7518 = vsel %vm976, %v7516, %v7517
  %v7519 = vrot.slane %v6980, 1
  %v7520 = vsel %vm976, %v7517, %v7519
  %v7521 = vrot.slane %v6983, 1
  %v7522 = vrot.slane %v6988, 1
  %v7523 = vsel %vm976, %v7521, %v7522
  %v7524 = vrot.slane %v6991, 1
  %v7525 = vsel %vm976, %v7522, %v7524
  %v7526 = vrot.slane %v6996, 1
  %v7527 = vrot.slane %v6999, 1
  %v7528 = vsel %vm976, %v7526, %v7527
  %v7529 = vrot.slane %v7004, 1
  %v7530 = vsel %vm976, %v7527, %v7529
  %v7531 = vrot.slane %v7007, 1
  %v7532 = vrot.slane %v7012, 1
  %v7533 = vsel %vm976, %v7531, %v7532
  %v7534 = vrot.slane %v7015, 1
  %v7535 = vsel %vm976, %v7532, %v7534
  %v7536 = vrot.slane %v7020, 1
  %v7537 = vrot.slane %v7023, 1
  %v7538 = vsel %vm976, %v7536, %v7537
  %v7539 = vrot.slane %v7028, 1
  %v7540 = vsel %vm976, %v7537, %v7539
  %v7541 = vrot.slane %v7031, 1
  %v7542 = vrot.slane %v7036, 1
  %v7543 = vsel %vm976, %v7541, %v7542
  %v7544 = vrot.slane %v7039, 1
  %v7545 = vsel %vm976, %v7542, %v7544
  %v7546 = vrot.slane %v7044, 1
  %v7547 = vrot.slane %v7047, 1
  %v7548 = vsel %vm976, %v7546, %v7547
  %v7549 = vrot.slane %v7052, 1
  %v7550 = vsel %vm976, %v7547, %v7549
  %v7551 = vrot.slane %v7055, 1
  %v7552 = vrot.slane %v7060, 1
  %v7553 = vsel %vm976, %v7551, %v7552
  %v7554 = vrot.slane %v7063, 1
  %v7555 = vsel %vm976, %v7552, %v7554
  %v7556 = vrot.slane %v7068, 1
  %v7557 = vrot.slane %v7071, 1
  %v7558 = vsel %vm976, %v7556, %v7557
  %v7559 = vrot.slane %v7076, 1
  %v7560 = vsel %vm976, %v7557, %v7559
  %v7561 = vrot.slane %v7079, 1
  %v7562 = vrot.slane %v7084, 1
  %v7563 = vsel %vm976, %v7561, %v7562
  %v7564 = vrot.slane %v7087, 1
  %v7565 = vsel %vm976, %v7562, %v7564
  %v7566 = vrot.slane %v7092, 1
  %v7567 = vrot.slane %v7095, 1
  %v7568 = vsel %vm976, %v7566, %v7567
  %v7569 = vrot.slane %v7100, 1
  %v7570 = vsel %vm976, %v7567, %v7569
  %v7571 = vrot.slane %v7103, 1
  %v7572 = vrot.slane %v7108, 1
  %v7573 = vsel %vm976, %v7571, %v7572
  %v7574 = vrot.slane %v7111, 1
  %v7575 = vsel %vm976, %v7572, %v7574
  %v7576 = vrot.slane %v7116, 1
  %v7577 = vrot.slane %v7119, 1
  %v7578 = vsel %vm976, %v7576, %v7577
  %v7579 = vrot.slane %v7124, 1
  %v7580 = vsel %vm976, %v7577, %v7579
  %v7581 = vrot.slane %v7127, 1
  %v7582 = vrot.slane %v7132, 1
  %v7583 = vsel %vm976, %v7581, %v7582
  %v7584 = vrot.slane %v7135, 1
  %v7585 = vsel %vm976, %v7582, %v7584
  %v7586 = vrot.slane %v7140, 1
  %v7587 = vrot.slane %v7143, 1
  %v7588 = vsel %vm976, %v7586, %v7587
  %v7589 = vrot.slane %v7148, 1
  %v7590 = vsel %vm976, %v7587, %v7589
  %v7591 = vrot.slane %v7151, 1
  %v7592 = vrot.slane %v7156, 1
  %v7593 = vsel %vm976, %v7591, %v7592
  %v7594 = vrot.slane %v7159, 1
  %v7595 = vsel %vm976, %v7592, %v7594
  %v7596 = vrot.slane %v7196, 1
  %v7597 = vrot.slane %v7201, 1
  %v7598 = vsel %vm976, %v7596, %v7597
  %v7599 = vrot.slane %v7204, 1
  %v7600 = vsel %vm976, %v7597, %v7599
  %v7601 = vrot.slane %v7209, 1
  %v7602 = vrot.slane %v7212, 1
  %v7603 = vsel %vm976, %v7601, %v7602
  %v7604 = vrot.slane %v7217, 1
  %v7605 = vsel %vm976, %v7602, %v7604
  %v7606 = vrot.slane %v7220, 1
  %v7607 = vrot.slane %v7225, 1
  %v7608 = vsel %vm976, %v7606, %v7607
  %v7609 = vrot.slane %v7228, 1
  %v7610 = vsel %vm976, %v7607, %v7609
  %v7611 = vrot.slane %v7233, 1
  %v7612 = vrot.slane %v7236, 1
  %v7613 = vsel %vm976, %v7611, %v7612
  %v7614 = vrot.slane %v7241, 1
  %v7615 = vsel %vm976, %v7612, %v7614
  %v7616 = vrot.slane %v7244, 1
  %v7617 = vrot.slane %v7249, 1
  %v7618 = vsel %vm976, %v7616, %v7617
  %v7619 = vrot.slane %v7252, 1
  %v7620 = vsel %vm976, %v7617, %v7619
  %v7621 = vrot.slane %v7257, 1
  %v7622 = vrot.slane %v7260, 1
  %v7623 = vsel %vm976, %v7621, %v7622
  %v7624 = vrot.slane %v7265, 1
  %v7625 = vsel %vm976, %v7622, %v7624
  %v7626 = vrot.slane %v7268, 1
  %v7627 = vrot.slane %v7273, 1
  %v7628 = vsel %vm976, %v7626, %v7627
  %v7629 = vrot.slane %v7276, 1
  %v7630 = vsel %vm976, %v7627, %v7629
  %v7631 = vrot.slane %v7281, 1
  %v7632 = vrot.slane %v7284, 1
  %v7633 = vsel %vm976, %v7631, %v7632
  %v7634 = vrot.slane %v7289, 1
  %v7635 = vsel %vm976, %v7632, %v7634
  %v7636 = vrot.slane %v7292, 1
  %v7637 = vrot.slane %v7297, 1
  %v7638 = vsel %vm976, %v7636, %v7637
  %v7639 = vrot.slane %v7300, 1
  %v7640 = vsel %vm976, %v7637, %v7639
  %v7641 = vrot.slane %v7305, 1
  %v7642 = vrot.slane %v7308, 1
  %v7643 = vsel %vm976, %v7641, %v7642
  %v7644 = vrot.slane %v7313, 1
  %v7645 = vsel %vm976, %v7642, %v7644
  %v7646 = vrot.slane %v7316, 1
  %v7647 = vrot.slane %v7321, 1
  %v7648 = vsel %vm976, %v7646, %v7647
  %v7649 = vrot.slane %v7324, 1
  %v7650 = vsel %vm976, %v7647, %v7649
  %v7651 = vrot.slane %v7329, 1
  %v7652 = vrot.slane %v7332, 1
  %v7653 = vsel %vm976, %v7651, %v7652
  %v7654 = vrot.slane %v7337, 1
  %v7655 = vsel %vm976, %v7652, %v7654
  %v7656 = vrot.slane %v7340, 1
  %v7657 = vrot.slane %v7345, 1
  %v7658 = vsel %vm976, %v7656, %v7657
  %v7659 = vrot.slane %v7348, 1
  %v7660 = vsel %vm976, %v7657, %v7659
  %v7661 = vrot.slane %v7353, 1
  %v7662 = vrot.slane %v7356, 1
  %v7663 = vsel %vm976, %v7661, %v7662
  %v7664 = vrot.slane %v7361, 1
  %v7665 = vsel %vm976, %v7662, %v7664
  %v7666 = vrot.slane %v7364, 1
  %v7667 = vrot.slane %v7369, 1
  %v7668 = vsel %vm976, %v7666, %v7667
  %v7669 = vrot.slane %v7372, 1
  %v7670 = vsel %vm976, %v7667, %v7669
  %v7671 = vrot.slane %v7377, 1
  %v7672 = vrot.slane %v7380, 1
  %v7673 = vsel %vm976, %v7671, %v7672
  %v7674 = vrot.slane %v7385, 1
  %v7675 = vsel %vm976, %v7672, %v7674
  %7676 = vrot.lane.b32.xlu0 %v7518, 127
  %v7677 = vpop.permute.xlu0 %7676
  %7678 = vrot.lane.b32.xlu0 %v7520, 127
  %v7679 = vpop.permute.xlu0 %7678
  %7680 = vrot.lane.b32.xlu0 %v7523, 127
  %v7681 = vpop.permute.xlu0 %7680
  %7682 = vrot.lane.b32.xlu0 %v7525, 127
  %v7683 = vpop.permute.xlu0 %7682
  %7684 = vrot.lane.b32.xlu0 %v7528, 127
  %v7685 = vpop.permute.xlu0 %7684
  %7686 = vrot.lane.b32.xlu0 %v7530, 127
  %v7687 = vpop.permute.xlu0 %7686
  %7688 = vrot.lane.b32.xlu0 %v7533, 127
  %v7689 = vpop.permute.xlu0 %7688
  %7690 = vrot.lane.b32.xlu0 %v7535, 127
  %v7691 = vpop.permute.xlu0 %7690
  %7692 = vrot.lane.b32.xlu0 %v7538, 127
  %v7693 = vpop.permute.xlu0 %7692
  %7694 = vrot.lane.b32.xlu0 %v7540, 127
  %v7695 = vpop.permute.xlu0 %7694
  %7696 = vrot.lane.b32.xlu0 %v7543, 127
  %v7697 = vpop.permute.xlu0 %7696
  %7698 = vrot.lane.b32.xlu0 %v7545, 127
  %v7699 = vpop.permute.xlu0 %7698
  %7700 = vrot.lane.b32.xlu0 %v7548, 127
  %v7701 = vpop.permute.xlu0 %7700
  %7702 = vrot.lane.b32.xlu0 %v7550, 127
  %v7703 = vpop.permute.xlu0 %7702
  %7704 = vrot.lane.b32.xlu0 %v7553, 127
  %v7705 = vpop.permute.xlu0 %7704
  %7706 = vrot.lane.b32.xlu0 %v7555, 127
  %v7707 = vpop.permute.xlu0 %7706
  %7708 = vrot.lane.b32.xlu0 %v7558, 127
  %v7709 = vpop.permute.xlu0 %7708
  %7710 = vrot.lane.b32.xlu0 %v7560, 127
  %v7711 = vpop.permute.xlu0 %7710
  %7712 = vrot.lane.b32.xlu0 %v7563, 127
  %v7713 = vpop.permute.xlu0 %7712
  %7714 = vrot.lane.b32.xlu0 %v7565, 127
  %v7715 = vpop.permute.xlu0 %7714
  %7716 = vrot.lane.b32.xlu0 %v7568, 127
  %v7717 = vpop.permute.xlu0 %7716
  %7718 = vrot.lane.b32.xlu0 %v7570, 127
  %v7719 = vpop.permute.xlu0 %7718
  %7720 = vrot.lane.b32.xlu0 %v7573, 127
  %v7721 = vpop.permute.xlu0 %7720
  %7722 = vrot.lane.b32.xlu0 %v7575, 127
  %v7723 = vpop.permute.xlu0 %7722
  %7724 = vrot.lane.b32.xlu0 %v7578, 127
  %v7725 = vpop.permute.xlu0 %7724
  %7726 = vrot.lane.b32.xlu0 %v7580, 127
  %v7727 = vpop.permute.xlu0 %7726
  %7728 = vrot.lane.b32.xlu0 %v7583, 127
  %v7729 = vpop.permute.xlu0 %7728
  %7730 = vrot.lane.b32.xlu0 %v7585, 127
  %v7731 = vpop.permute.xlu0 %7730
  %7732 = vrot.lane.b32.xlu0 %v7588, 127
  %v7733 = vpop.permute.xlu0 %7732
  %7734 = vrot.lane.b32.xlu0 %v7590, 127
  %v7735 = vpop.permute.xlu0 %7734
  %7736 = vrot.lane.b32.xlu0 %v7593, 127
  %v7737 = vpop.permute.xlu0 %7736
  %7738 = vrot.lane.b32.xlu0 %v7595, 127
  %v7739 = vpop.permute.xlu0 %7738
  %7740 = vrot.lane.b32.xlu0 %v7598, 127
  %v7741 = vpop.permute.xlu0 %7740
  %7742 = vrot.lane.b32.xlu0 %v7600, 127
  %v7743 = vpop.permute.xlu0 %7742
  %7744 = vrot.lane.b32.xlu0 %v7603, 127
  %v7745 = vpop.permute.xlu0 %7744
  %7746 = vrot.lane.b32.xlu0 %v7605, 127
  %v7747 = vpop.permute.xlu0 %7746
  %7748 = vrot.lane.b32.xlu0 %v7608, 127
  %v7749 = vpop.permute.xlu0 %7748
  %7750 = vrot.lane.b32.xlu0 %v7610, 127
  %v7751 = vpop.permute.xlu0 %7750
  %7752 = vrot.lane.b32.xlu0 %v7613, 127
  %v7753 = vpop.permute.xlu0 %7752
  %7754 = vrot.lane.b32.xlu0 %v7615, 127
  %v7755 = vpop.permute.xlu0 %7754
  %7756 = vrot.lane.b32.xlu0 %v7618, 127
  %v7757 = vpop.permute.xlu0 %7756
  %7758 = vrot.lane.b32.xlu0 %v7620, 127
  %v7759 = vpop.permute.xlu0 %7758
  %7760 = vrot.lane.b32.xlu0 %v7623, 127
  %v7761 = vpop.permute.xlu0 %7760
  %7762 = vrot.lane.b32.xlu0 %v7625, 127
  %v7763 = vpop.permute.xlu0 %7762
  %7764 = vrot.lane.b32.xlu0 %v7628, 127
  %v7765 = vpop.permute.xlu0 %7764
  %7766 = vrot.lane.b32.xlu0 %v7630, 127
  %v7767 = vpop.permute.xlu0 %7766
  %7768 = vrot.lane.b32.xlu0 %v7633, 127
  %v7769 = vpop.permute.xlu0 %7768
  %7770 = vrot.lane.b32.xlu0 %v7635, 127
  %v7771 = vpop.permute.xlu0 %7770
  %7772 = vrot.lane.b32.xlu0 %v7638, 127
  %v7773 = vpop.permute.xlu0 %7772
  %7774 = vrot.lane.b32.xlu0 %v7640, 127
  %v7775 = vpop.permute.xlu0 %7774
  %7776 = vrot.lane.b32.xlu0 %v7643, 127
  %v7777 = vpop.permute.xlu0 %7776
  %7778 = vrot.lane.b32.xlu0 %v7645, 127
  %v7779 = vpop.permute.xlu0 %7778
  %7780 = vrot.lane.b32.xlu0 %v7648, 127
  %v7781 = vpop.permute.xlu0 %7780
  %7782 = vrot.lane.b32.xlu0 %v7650, 127
  %v7783 = vpop.permute.xlu0 %7782
  %7784 = vrot.lane.b32.xlu0 %v7653, 127
  %v7785 = vpop.permute.xlu0 %7784
  %7786 = vrot.lane.b32.xlu0 %v7655, 127
  %v7787 = vpop.permute.xlu0 %7786
  %7788 = vrot.lane.b32.xlu0 %v7658, 127
  %v7789 = vpop.permute.xlu0 %7788
  %7790 = vrot.lane.b32.xlu0 %v7660, 127
  %v7791 = vpop.permute.xlu0 %7790
  %7792 = vrot.lane.b32.xlu0 %v7663, 127
  %v7793 = vpop.permute.xlu0 %7792
  %7794 = vrot.lane.b32.xlu0 %v7665, 127
  %v7795 = vpop.permute.xlu0 %7794
  %7796 = vrot.lane.b32.xlu0 %v7668, 127
  %v7797 = vpop.permute.xlu0 %7796
  %7798 = vrot.lane.b32.xlu0 %v7670, 127
  %v7799 = vpop.permute.xlu0 %7798
  %7800 = vrot.lane.b32.xlu0 %v7673, 127
  %v7801 = vpop.permute.xlu0 %7800
  %7802 = vrot.lane.b32.xlu0 %v7675, 127
  %v7803 = vpop.permute.xlu0 %7802
  %v7868 = vadd.f32 %v6972, %v7677
  %v7869 = vadd.f32 %v6975, %v7679
  %v7870 = vadd.f32 %v6983, %v7681
  %v7871 = vadd.f32 %v6988, %v7683
  %v7872 = vadd.f32 %v6996, %v7685
  %v7873 = vadd.f32 %v6999, %v7687
  %v7874 = vadd.f32 %v7007, %v7689
  %v7875 = vadd.f32 %v7012, %v7691
  %v7876 = vadd.f32 %v7020, %v7693
  %v7877 = vadd.f32 %v7023, %v7695
  %v7878 = vadd.f32 %v7031, %v7697
  %v7879 = vadd.f32 %v7036, %v7699
  %v7880 = vadd.f32 %v7044, %v7701
  %v7881 = vadd.f32 %v7047, %v7703
  %v7882 = vadd.f32 %v7055, %v7705
  %v7883 = vadd.f32 %v7060, %v7707
  %v7884 = vadd.f32 %v7068, %v7709
  %v7885 = vadd.f32 %v7071, %v7711
  %v7886 = vadd.f32 %v7079, %v7713
  %v7887 = vadd.f32 %v7084, %v7715
  %v7888 = vadd.f32 %v7092, %v7717
  %v7889 = vadd.f32 %v7095, %v7719
  %v7890 = vadd.f32 %v7103, %v7721
  %v7891 = vadd.f32 %v7108, %v7723
  %v7892 = vadd.f32 %v7116, %v7725
  %v7893 = vadd.f32 %v7119, %v7727
  %v7894 = vadd.f32 %v7127, %v7729
  %v7895 = vadd.f32 %v7132, %v7731
  %v7896 = vadd.f32 %v7140, %v7733
  %v7897 = vadd.f32 %v7143, %v7735
  %v7898 = vadd.f32 %v7151, %v7737
  %v7899 = vadd.f32 %v7156, %v7739
  %v7900 = vadd.f32 %v7196, %v7741
  %v7901 = vadd.f32 %v7201, %v7743
  %v7902 = vadd.f32 %v7209, %v7745
  %v7903 = vadd.f32 %v7212, %v7747
  %v7904 = vadd.f32 %v7220, %v7749
  %v7905 = vadd.f32 %v7225, %v7751
  %v7906 = vadd.f32 %v7233, %v7753
  %v7907 = vadd.f32 %v7236, %v7755
  %v7908 = vadd.f32 %v7244, %v7757
  %v7909 = vadd.f32 %v7249, %v7759
  %v7910 = vadd.f32 %v7257, %v7761
  %v7911 = vadd.f32 %v7260, %v7763
  %v7912 = vadd.f32 %v7268, %v7765
  %v7913 = vadd.f32 %v7273, %v7767
  %v7914 = vadd.f32 %v7281, %v7769
  %v7915 = vadd.f32 %v7284, %v7771
  %v7916 = vadd.f32 %v7292, %v7773
  %v7917 = vadd.f32 %v7297, %v7775
  %v7918 = vadd.f32 %v7305, %v7777
  %v7919 = vadd.f32 %v7308, %v7779
  %v7920 = vadd.f32 %v7316, %v7781
  %v7921 = vadd.f32 %v7321, %v7783
  %v7922 = vadd.f32 %v7329, %v7785
  %v7923 = vadd.f32 %v7332, %v7787
  %v7924 = vadd.f32 %v7340, %v7789
  %v7925 = vadd.f32 %v7345, %v7791
  %v7926 = vadd.f32 %v7353, %v7793
  %v7927 = vadd.f32 %v7356, %v7795
  %v7928 = vadd.f32 %v7364, %v7797
  %v7929 = vadd.f32 %v7369, %v7799
  %v7930 = vadd.f32 %v7377, %v7801
  %v7931 = vadd.f32 %v7380, %v7803
  %v7932 = vrot.slane %v6972, 2
  %v7933 = vrot.slane %v6975, 2
  %v7934 = vsel %vm4756, %v7932, %v7933
  %v7935 = vrot.slane %v6980, 2
  %v7936 = vsel %vm4756, %v7933, %v7935
  %v7937 = vrot.slane %v6983, 2
  %v7938 = vrot.slane %v6988, 2
  %v7939 = vsel %vm4756, %v7937, %v7938
  %v7940 = vrot.slane %v6991, 2
  %v7941 = vsel %vm4756, %v7938, %v7940
  %v7942 = vrot.slane %v6996, 2
  %v7943 = vrot.slane %v6999, 2
  %v7944 = vsel %vm4756, %v7942, %v7943
  %v7945 = vrot.slane %v7004, 2
  %v7946 = vsel %vm4756, %v7943, %v7945
  %v7947 = vrot.slane %v7007, 2
  %v7948 = vrot.slane %v7012, 2
  %v7949 = vsel %vm4756, %v7947, %v7948
  %v7950 = vrot.slane %v7015, 2
  %v7951 = vsel %vm4756, %v7948, %v7950
  %v7952 = vrot.slane %v7020, 2
  %v7953 = vrot.slane %v7023, 2
  %v7954 = vsel %vm4756, %v7952, %v7953
  %v7955 = vrot.slane %v7028, 2
  %v7956 = vsel %vm4756, %v7953, %v7955
  %v7957 = vrot.slane %v7031, 2
  %v7958 = vrot.slane %v7036, 2
  %v7959 = vsel %vm4756, %v7957, %v7958
  %v7960 = vrot.slane %v7039, 2
  %v7961 = vsel %vm4756, %v7958, %v7960
  %v7962 = vrot.slane %v7044, 2
  %v7963 = vrot.slane %v7047, 2
  %v7964 = vsel %vm4756, %v7962, %v7963
  %v7965 = vrot.slane %v7052, 2
  %v7966 = vsel %vm4756, %v7963, %v7965
  %v7967 = vrot.slane %v7055, 2
  %v7968 = vrot.slane %v7060, 2
  %v7969 = vsel %vm4756, %v7967, %v7968
  %v7970 = vrot.slane %v7063, 2
  %v7971 = vsel %vm4756, %v7968, %v7970
  %v7972 = vrot.slane %v7068, 2
  %v7973 = vrot.slane %v7071, 2
  %v7974 = vsel %vm4756, %v7972, %v7973
  %v7975 = vrot.slane %v7076, 2
  %v7976 = vsel %vm4756, %v7973, %v7975
  %v7977 = vrot.slane %v7079, 2
  %v7978 = vrot.slane %v7084, 2
  %v7979 = vsel %vm4756, %v7977, %v7978
  %v7980 = vrot.slane %v7087, 2
  %v7981 = vsel %vm4756, %v7978, %v7980
  %v7982 = vrot.slane %v7092, 2
  %v7983 = vrot.slane %v7095, 2
  %v7984 = vsel %vm4756, %v7982, %v7983
  %v7985 = vrot.slane %v7100, 2
  %v7986 = vsel %vm4756, %v7983, %v7985
  %v7987 = vrot.slane %v7103, 2
  %v7988 = vrot.slane %v7108, 2
  %v7989 = vsel %vm4756, %v7987, %v7988
  %v7990 = vrot.slane %v7111, 2
  %v7991 = vsel %vm4756, %v7988, %v7990
  %v7992 = vrot.slane %v7116, 2
  %v7993 = vrot.slane %v7119, 2
  %v7994 = vsel %vm4756, %v7992, %v7993
  %v7995 = vrot.slane %v7124, 2
  %v7996 = vsel %vm4756, %v7993, %v7995
  %v7997 = vrot.slane %v7127, 2
  %v7998 = vrot.slane %v7132, 2
  %v7999 = vsel %vm4756, %v7997, %v7998
  %v8000 = vrot.slane %v7135, 2
  %v8001 = vsel %vm4756, %v7998, %v8000
  %v8002 = vrot.slane %v7140, 2
  %v8003 = vrot.slane %v7143, 2
  %v8004 = vsel %vm4756, %v8002, %v8003
  %v8005 = vrot.slane %v7148, 2
  %v8006 = vsel %vm4756, %v8003, %v8005
  %v8007 = vrot.slane %v7151, 2
  %v8008 = vrot.slane %v7156, 2
  %v8009 = vsel %vm4756, %v8007, %v8008
  %v8010 = vrot.slane %v7159, 2
  %v8011 = vsel %vm4756, %v8008, %v8010
  %v8012 = vrot.slane %v7196, 2
  %v8013 = vrot.slane %v7201, 2
  %v8014 = vsel %vm4756, %v8012, %v8013
  %v8015 = vrot.slane %v7204, 2
  %v8016 = vsel %vm4756, %v8013, %v8015
  %v8017 = vrot.slane %v7209, 2
  %v8018 = vrot.slane %v7212, 2
  %v8019 = vsel %vm4756, %v8017, %v8018
  %v8020 = vrot.slane %v7217, 2
  %v8021 = vsel %vm4756, %v8018, %v8020
  %v8022 = vrot.slane %v7220, 2
  %v8023 = vrot.slane %v7225, 2
  %v8024 = vsel %vm4756, %v8022, %v8023
  %v8025 = vrot.slane %v7228, 2
  %v8026 = vsel %vm4756, %v8023, %v8025
  %v8027 = vrot.slane %v7233, 2
  %v8028 = vrot.slane %v7236, 2
  %v8029 = vsel %vm4756, %v8027, %v8028
  %v8030 = vrot.slane %v7241, 2
  %v8031 = vsel %vm4756, %v8028, %v8030
  %v8032 = vrot.slane %v7244, 2
  %v8033 = vrot.slane %v7249, 2
  %v8034 = vsel %vm4756, %v8032, %v8033
  %v8035 = vrot.slane %v7252, 2
  %v8036 = vsel %vm4756, %v8033, %v8035
  %v8037 = vrot.slane %v7257, 2
  %v8038 = vrot.slane %v7260, 2
  %v8039 = vsel %vm4756, %v8037, %v8038
  %v8040 = vrot.slane %v7265, 2
  %v8041 = vsel %vm4756, %v8038, %v8040
  %v8042 = vrot.slane %v7268, 2
  %v8043 = vrot.slane %v7273, 2
  %v8044 = vsel %vm4756, %v8042, %v8043
  %v8045 = vrot.slane %v7276, 2
  %v8046 = vsel %vm4756, %v8043, %v8045
  %v8047 = vrot.slane %v7281, 2
  %v8048 = vrot.slane %v7284, 2
  %v8049 = vsel %vm4756, %v8047, %v8048
  %v8050 = vrot.slane %v7289, 2
  %v8051 = vsel %vm4756, %v8048, %v8050
  %v8052 = vrot.slane %v7292, 2
  %v8053 = vrot.slane %v7297, 2
  %v8054 = vsel %vm4756, %v8052, %v8053
  %v8055 = vrot.slane %v7300, 2
  %v8056 = vsel %vm4756, %v8053, %v8055
  %v8057 = vrot.slane %v7305, 2
  %v8058 = vrot.slane %v7308, 2
  %v8059 = vsel %vm4756, %v8057, %v8058
  %v8060 = vrot.slane %v7313, 2
  %v8061 = vsel %vm4756, %v8058, %v8060
  %v8062 = vrot.slane %v7316, 2
  %v8063 = vrot.slane %v7321, 2
  %v8064 = vsel %vm4756, %v8062, %v8063
  %v8065 = vrot.slane %v7324, 2
  %v8066 = vsel %vm4756, %v8063, %v8065
  %v8067 = vrot.slane %v7329, 2
  %v8068 = vrot.slane %v7332, 2
  %v8069 = vsel %vm4756, %v8067, %v8068
  %v8070 = vrot.slane %v7337, 2
  %v8071 = vsel %vm4756, %v8068, %v8070
  %v8072 = vrot.slane %v7340, 2
  %v8073 = vrot.slane %v7345, 2
  %v8074 = vsel %vm4756, %v8072, %v8073
  %v8075 = vrot.slane %v7348, 2
  %v8076 = vsel %vm4756, %v8073, %v8075
  %v8077 = vrot.slane %v7353, 2
  %v8078 = vrot.slane %v7356, 2
  %v8079 = vsel %vm4756, %v8077, %v8078
  %v8080 = vrot.slane %v7361, 2
  %v8081 = vsel %vm4756, %v8078, %v8080
  %v8082 = vrot.slane %v7364, 2
  %v8083 = vrot.slane %v7369, 2
  %v8084 = vsel %vm4756, %v8082, %v8083
  %v8085 = vrot.slane %v7372, 2
  %v8086 = vsel %vm4756, %v8083, %v8085
  %v8087 = vrot.slane %v7377, 2
  %v8088 = vrot.slane %v7380, 2
  %v8089 = vsel %vm4756, %v8087, %v8088
  %v8090 = vrot.slane %v7385, 2
  %v8091 = vsel %vm4756, %v8088, %v8090
  %8092 = vrot.lane.b32.xlu0 %v7934, 126
  %v8093 = vpop.permute.xlu0 %8092
  %8094 = vrot.lane.b32.xlu0 %v7936, 126
  %v8095 = vpop.permute.xlu0 %8094
  %8096 = vrot.lane.b32.xlu0 %v7939, 126
  %v8097 = vpop.permute.xlu0 %8096
  %8098 = vrot.lane.b32.xlu0 %v7941, 126
  %v8099 = vpop.permute.xlu0 %8098
  %8100 = vrot.lane.b32.xlu0 %v7944, 126
  %v8101 = vpop.permute.xlu0 %8100
  %8102 = vrot.lane.b32.xlu0 %v7946, 126
  %v8103 = vpop.permute.xlu0 %8102
  %8104 = vrot.lane.b32.xlu0 %v7949, 126
  %v8105 = vpop.permute.xlu0 %8104
  %8106 = vrot.lane.b32.xlu0 %v7951, 126
  %v8107 = vpop.permute.xlu0 %8106
  %8108 = vrot.lane.b32.xlu0 %v7954, 126
  %v8109 = vpop.permute.xlu0 %8108
  %8110 = vrot.lane.b32.xlu0 %v7956, 126
  %v8111 = vpop.permute.xlu0 %8110
  %8112 = vrot.lane.b32.xlu0 %v7959, 126
  %v8113 = vpop.permute.xlu0 %8112
  %8114 = vrot.lane.b32.xlu0 %v7961, 126
  %v8115 = vpop.permute.xlu0 %8114
  %8116 = vrot.lane.b32.xlu0 %v7964, 126
  %v8117 = vpop.permute.xlu0 %8116
  %8118 = vrot.lane.b32.xlu0 %v7966, 126
  %v8119 = vpop.permute.xlu0 %8118
  %8120 = vrot.lane.b32.xlu0 %v7969, 126
  %v8121 = vpop.permute.xlu0 %8120
  %8122 = vrot.lane.b32.xlu0 %v7971, 126
  %v8123 = vpop.permute.xlu0 %8122
  %8124 = vrot.lane.b32.xlu0 %v7974, 126
  %v8125 = vpop.permute.xlu0 %8124
  %8126 = vrot.lane.b32.xlu0 %v7976, 126
  %v8127 = vpop.permute.xlu0 %8126
  %8128 = vrot.lane.b32.xlu0 %v7979, 126
  %v8129 = vpop.permute.xlu0 %8128
  %8130 = vrot.lane.b32.xlu0 %v7981, 126
  %v8131 = vpop.permute.xlu0 %8130
  %8132 = vrot.lane.b32.xlu0 %v7984, 126
  %v8133 = vpop.permute.xlu0 %8132
  %8134 = vrot.lane.b32.xlu0 %v7986, 126
  %v8135 = vpop.permute.xlu0 %8134
  %8136 = vrot.lane.b32.xlu0 %v7989, 126
  %v8137 = vpop.permute.xlu0 %8136
  %8138 = vrot.lane.b32.xlu0 %v7991, 126
  %v8139 = vpop.permute.xlu0 %8138
  %8140 = vrot.lane.b32.xlu0 %v7994, 126
  %v8141 = vpop.permute.xlu0 %8140
  %8142 = vrot.lane.b32.xlu0 %v7996, 126
  %v8143 = vpop.permute.xlu0 %8142
  %8144 = vrot.lane.b32.xlu0 %v7999, 126
  %v8145 = vpop.permute.xlu0 %8144
  %8146 = vrot.lane.b32.xlu0 %v8001, 126
  %v8147 = vpop.permute.xlu0 %8146
  %8148 = vrot.lane.b32.xlu0 %v8004, 126
  %v8149 = vpop.permute.xlu0 %8148
  %8150 = vrot.lane.b32.xlu0 %v8006, 126
  %v8151 = vpop.permute.xlu0 %8150
  %8152 = vrot.lane.b32.xlu0 %v8009, 126
  %v8153 = vpop.permute.xlu0 %8152
  %8154 = vrot.lane.b32.xlu0 %v8011, 126
  %v8155 = vpop.permute.xlu0 %8154
  %8156 = vrot.lane.b32.xlu0 %v8014, 126
  %v8157 = vpop.permute.xlu0 %8156
  %8158 = vrot.lane.b32.xlu0 %v8016, 126
  %v8159 = vpop.permute.xlu0 %8158
  %8160 = vrot.lane.b32.xlu0 %v8019, 126
  %v8161 = vpop.permute.xlu0 %8160
  %8162 = vrot.lane.b32.xlu0 %v8021, 126
  %v8163 = vpop.permute.xlu0 %8162
  %8164 = vrot.lane.b32.xlu0 %v8024, 126
  %v8165 = vpop.permute.xlu0 %8164
  %8166 = vrot.lane.b32.xlu0 %v8026, 126
  %v8167 = vpop.permute.xlu0 %8166
  %8168 = vrot.lane.b32.xlu0 %v8029, 126
  %v8169 = vpop.permute.xlu0 %8168
  %8170 = vrot.lane.b32.xlu0 %v8031, 126
  %v8171 = vpop.permute.xlu0 %8170
  %8172 = vrot.lane.b32.xlu0 %v8034, 126
  %v8173 = vpop.permute.xlu0 %8172
  %8174 = vrot.lane.b32.xlu0 %v8036, 126
  %v8175 = vpop.permute.xlu0 %8174
  %8176 = vrot.lane.b32.xlu0 %v8039, 126
  %v8177 = vpop.permute.xlu0 %8176
  %8178 = vrot.lane.b32.xlu0 %v8041, 126
  %v8179 = vpop.permute.xlu0 %8178
  %8180 = vrot.lane.b32.xlu0 %v8044, 126
  %v8181 = vpop.permute.xlu0 %8180
  %8182 = vrot.lane.b32.xlu0 %v8046, 126
  %v8183 = vpop.permute.xlu0 %8182
  %8184 = vrot.lane.b32.xlu0 %v8049, 126
  %v8185 = vpop.permute.xlu0 %8184
  %8186 = vrot.lane.b32.xlu0 %v8051, 126
  %v8187 = vpop.permute.xlu0 %8186
  %8188 = vrot.lane.b32.xlu0 %v8054, 126
  %v8189 = vpop.permute.xlu0 %8188
  %8190 = vrot.lane.b32.xlu0 %v8056, 126
  %v8191 = vpop.permute.xlu0 %8190
  %8192 = vrot.lane.b32.xlu0 %v8059, 126
  %v8193 = vpop.permute.xlu0 %8192
  %8194 = vrot.lane.b32.xlu0 %v8061, 126
  %v8195 = vpop.permute.xlu0 %8194
  %8196 = vrot.lane.b32.xlu0 %v8064, 126
  %v8197 = vpop.permute.xlu0 %8196
  %8198 = vrot.lane.b32.xlu0 %v8066, 126
  %v8199 = vpop.permute.xlu0 %8198
  %8200 = vrot.lane.b32.xlu0 %v8069, 126
  %v8201 = vpop.permute.xlu0 %8200
  %8202 = vrot.lane.b32.xlu0 %v8071, 126
  %v8203 = vpop.permute.xlu0 %8202
  %8204 = vrot.lane.b32.xlu0 %v8074, 126
  %v8205 = vpop.permute.xlu0 %8204
  %8206 = vrot.lane.b32.xlu0 %v8076, 126
  %v8207 = vpop.permute.xlu0 %8206
  %8208 = vrot.lane.b32.xlu0 %v8079, 126
  %v8209 = vpop.permute.xlu0 %8208
  %8210 = vrot.lane.b32.xlu0 %v8081, 126
  %v8211 = vpop.permute.xlu0 %8210
  %8212 = vrot.lane.b32.xlu0 %v8084, 126
  %v8213 = vpop.permute.xlu0 %8212
  %8214 = vrot.lane.b32.xlu0 %v8086, 126
  %v8215 = vpop.permute.xlu0 %8214
  %8216 = vrot.lane.b32.xlu0 %v8089, 126
  %v8217 = vpop.permute.xlu0 %8216
  %8218 = vrot.lane.b32.xlu0 %v8091, 126
  %v8219 = vpop.permute.xlu0 %8218
  %v8284 = vadd.f32 %v7868, %v8093
  %v8285 = vadd.f32 %v7869, %v8095
  %v8286 = vadd.f32 %v7870, %v8097
  %v8287 = vadd.f32 %v7871, %v8099
  %v8288 = vadd.f32 %v7872, %v8101
  %v8289 = vadd.f32 %v7873, %v8103
  %v8290 = vadd.f32 %v7874, %v8105
  %v8291 = vadd.f32 %v7875, %v8107
  %v8292 = vadd.f32 %v7876, %v8109
  %v8293 = vadd.f32 %v7877, %v8111
  %v8294 = vadd.f32 %v7878, %v8113
  %v8295 = vadd.f32 %v7879, %v8115
  %v8296 = vadd.f32 %v7880, %v8117
  %v8297 = vadd.f32 %v7881, %v8119
  %v8298 = vadd.f32 %v7882, %v8121
  %v8299 = vadd.f32 %v7883, %v8123
  %v8300 = vadd.f32 %v7884, %v8125
  %v8301 = vadd.f32 %v7885, %v8127
  %v8302 = vadd.f32 %v7886, %v8129
  %v8303 = vadd.f32 %v7887, %v8131
  %v8304 = vadd.f32 %v7888, %v8133
  %v8305 = vadd.f32 %v7889, %v8135
  %v8306 = vadd.f32 %v7890, %v8137
  %v8307 = vadd.f32 %v7891, %v8139
  %v8308 = vadd.f32 %v7892, %v8141
  %v8309 = vadd.f32 %v7893, %v8143
  %v8310 = vadd.f32 %v7894, %v8145
  %v8311 = vadd.f32 %v7895, %v8147
  %v8312 = vadd.f32 %v7896, %v8149
  %v8313 = vadd.f32 %v7897, %v8151
  %v8314 = vadd.f32 %v7898, %v8153
  %v8315 = vadd.f32 %v7899, %v8155
  %v8316 = vadd.f32 %v7900, %v8157
  %v8317 = vadd.f32 %v7901, %v8159
  %v8318 = vadd.f32 %v7902, %v8161
  %v8319 = vadd.f32 %v7903, %v8163
  %v8320 = vadd.f32 %v7904, %v8165
  %v8321 = vadd.f32 %v7905, %v8167
  %v8322 = vadd.f32 %v7906, %v8169
  %v8323 = vadd.f32 %v7907, %v8171
  %v8324 = vadd.f32 %v7908, %v8173
  %v8325 = vadd.f32 %v7909, %v8175
  %v8326 = vadd.f32 %v7910, %v8177
  %v8327 = vadd.f32 %v7911, %v8179
  %v8328 = vadd.f32 %v7912, %v8181
  %v8329 = vadd.f32 %v7913, %v8183
  %v8330 = vadd.f32 %v7914, %v8185
  %v8331 = vadd.f32 %v7915, %v8187
  %v8332 = vadd.f32 %v7916, %v8189
  %v8333 = vadd.f32 %v7917, %v8191
  %v8334 = vadd.f32 %v7918, %v8193
  %v8335 = vadd.f32 %v7919, %v8195
  %v8336 = vadd.f32 %v7920, %v8197
  %v8337 = vadd.f32 %v7921, %v8199
  %v8338 = vadd.f32 %v7922, %v8201
  %v8339 = vadd.f32 %v7923, %v8203
  %v8340 = vadd.f32 %v7924, %v8205
  %v8341 = vadd.f32 %v7925, %v8207
  %v8342 = vadd.f32 %v7926, %v8209
  %v8343 = vadd.f32 %v7927, %v8211
  %v8344 = vadd.f32 %v7928, %v8213
  %v8345 = vadd.f32 %v7929, %v8215
  %v8346 = vadd.f32 %v7930, %v8217
  %v8347 = vadd.f32 %v7931, %v8219
  %8352 = vrot.lane.b32.xlu0 %v6983, 125
  %v8353 = vpop.permute.xlu0 %8352
  %8354 = vrot.lane.b32.xlu0 %v6988, 125
  %v8355 = vpop.permute.xlu0 %8354
  %8356 = vrot.lane.b32.xlu0 %v6996, 125
  %v8357 = vpop.permute.xlu0 %8356
  %8358 = vrot.lane.b32.xlu0 %v6999, 125
  %v8359 = vpop.permute.xlu0 %8358
  %8360 = vrot.lane.b32.xlu0 %v7007, 125
  %v8361 = vpop.permute.xlu0 %8360
  %8362 = vrot.lane.b32.xlu0 %v7012, 125
  %v8363 = vpop.permute.xlu0 %8362
  %8364 = vrot.lane.b32.xlu0 %v7020, 125
  %v8365 = vpop.permute.xlu0 %8364
  %8366 = vrot.lane.b32.xlu0 %v7023, 125
  %v8367 = vpop.permute.xlu0 %8366
  %8368 = vrot.lane.b32.xlu0 %v7031, 125
  %v8369 = vpop.permute.xlu0 %8368
  %8370 = vrot.lane.b32.xlu0 %v7036, 125
  %v8371 = vpop.permute.xlu0 %8370
  %8372 = vrot.lane.b32.xlu0 %v7044, 125
  %v8373 = vpop.permute.xlu0 %8372
  %8374 = vrot.lane.b32.xlu0 %v7047, 125
  %v8375 = vpop.permute.xlu0 %8374
  %8376 = vrot.lane.b32.xlu0 %v7055, 125
  %v8377 = vpop.permute.xlu0 %8376
  %8378 = vrot.lane.b32.xlu0 %v7060, 125
  %v8379 = vpop.permute.xlu0 %8378
  %8380 = vrot.lane.b32.xlu0 %v7068, 125
  %v8381 = vpop.permute.xlu0 %8380
  %8382 = vrot.lane.b32.xlu0 %v7071, 125
  %v8383 = vpop.permute.xlu0 %8382
  %8384 = vrot.lane.b32.xlu0 %v7079, 125
  %v8385 = vpop.permute.xlu0 %8384
  %8386 = vrot.lane.b32.xlu0 %v7084, 125
  %v8387 = vpop.permute.xlu0 %8386
  %8388 = vrot.lane.b32.xlu0 %v7092, 125
  %v8389 = vpop.permute.xlu0 %8388
  %8390 = vrot.lane.b32.xlu0 %v7095, 125
  %v8391 = vpop.permute.xlu0 %8390
  %8392 = vrot.lane.b32.xlu0 %v7103, 125
  %v8393 = vpop.permute.xlu0 %8392
  %8394 = vrot.lane.b32.xlu0 %v7108, 125
  %v8395 = vpop.permute.xlu0 %8394
  %8396 = vrot.lane.b32.xlu0 %v7116, 125
  %v8397 = vpop.permute.xlu0 %8396
  %8398 = vrot.lane.b32.xlu0 %v7119, 125
  %v8399 = vpop.permute.xlu0 %8398
  %8400 = vrot.lane.b32.xlu0 %v7127, 125
  %v8401 = vpop.permute.xlu0 %8400
  %8402 = vrot.lane.b32.xlu0 %v7132, 125
  %v8403 = vpop.permute.xlu0 %8402
  %8404 = vrot.lane.b32.xlu0 %v7140, 125
  %v8405 = vpop.permute.xlu0 %8404
  %8406 = vrot.lane.b32.xlu0 %v7143, 125
  %v8407 = vpop.permute.xlu0 %8406
  %8408 = vrot.lane.b32.xlu0 %v7151, 125
  %v8409 = vpop.permute.xlu0 %8408
  %8410 = vrot.lane.b32.xlu0 %v7156, 125
  %v8411 = vpop.permute.xlu0 %8410
  %8412 = vrot.lane.b32.xlu0 %v7164, 125
  %v8413 = vpop.permute.xlu0 %8412
  %8414 = vrot.lane.b32.xlu0 %v7167, 125
  %v8415 = vpop.permute.xlu0 %8414
  %8416 = vrot.lane.b32.xlu0 %v7209, 125
  %v8417 = vpop.permute.xlu0 %8416
  %8418 = vrot.lane.b32.xlu0 %v7212, 125
  %v8419 = vpop.permute.xlu0 %8418
  %8420 = vrot.lane.b32.xlu0 %v7220, 125
  %v8421 = vpop.permute.xlu0 %8420
  %8422 = vrot.lane.b32.xlu0 %v7225, 125
  %v8423 = vpop.permute.xlu0 %8422
  %8424 = vrot.lane.b32.xlu0 %v7233, 125
  %v8425 = vpop.permute.xlu0 %8424
  %8426 = vrot.lane.b32.xlu0 %v7236, 125
  %v8427 = vpop.permute.xlu0 %8426
  %8428 = vrot.lane.b32.xlu0 %v7244, 125
  %v8429 = vpop.permute.xlu0 %8428
  %8430 = vrot.lane.b32.xlu0 %v7249, 125
  %v8431 = vpop.permute.xlu0 %8430
  %8432 = vrot.lane.b32.xlu0 %v7257, 125
  %v8433 = vpop.permute.xlu0 %8432
  %8434 = vrot.lane.b32.xlu0 %v7260, 125
  %v8435 = vpop.permute.xlu0 %8434
  %8436 = vrot.lane.b32.xlu0 %v7268, 125
  %v8437 = vpop.permute.xlu0 %8436
  %8438 = vrot.lane.b32.xlu0 %v7273, 125
  %v8439 = vpop.permute.xlu0 %8438
  %8440 = vrot.lane.b32.xlu0 %v7281, 125
  %v8441 = vpop.permute.xlu0 %8440
  %8442 = vrot.lane.b32.xlu0 %v7284, 125
  %v8443 = vpop.permute.xlu0 %8442
  %8444 = vrot.lane.b32.xlu0 %v7292, 125
  %v8445 = vpop.permute.xlu0 %8444
  %8446 = vrot.lane.b32.xlu0 %v7297, 125
  %v8447 = vpop.permute.xlu0 %8446
  %8448 = vrot.lane.b32.xlu0 %v7305, 125
  %v8449 = vpop.permute.xlu0 %8448
  %8450 = vrot.lane.b32.xlu0 %v7308, 125
  %v8451 = vpop.permute.xlu0 %8450
  %8452 = vrot.lane.b32.xlu0 %v7316, 125
  %v8453 = vpop.permute.xlu0 %8452
  %8454 = vrot.lane.b32.xlu0 %v7321, 125
  %v8455 = vpop.permute.xlu0 %8454
  %8456 = vrot.lane.b32.xlu0 %v7329, 125
  %v8457 = vpop.permute.xlu0 %8456
  %8458 = vrot.lane.b32.xlu0 %v7332, 125
  %v8459 = vpop.permute.xlu0 %8458
  %8460 = vrot.lane.b32.xlu0 %v7340, 125
  %v8461 = vpop.permute.xlu0 %8460
  %8462 = vrot.lane.b32.xlu0 %v7345, 125
  %v8463 = vpop.permute.xlu0 %8462
  %8464 = vrot.lane.b32.xlu0 %v7353, 125
  %v8465 = vpop.permute.xlu0 %8464
  %8466 = vrot.lane.b32.xlu0 %v7356, 125
  %v8467 = vpop.permute.xlu0 %8466
  %8468 = vrot.lane.b32.xlu0 %v7364, 125
  %v8469 = vpop.permute.xlu0 %8468
  %8470 = vrot.lane.b32.xlu0 %v7369, 125
  %v8471 = vpop.permute.xlu0 %8470
  %8472 = vrot.lane.b32.xlu0 %v7377, 125
  %v8473 = vpop.permute.xlu0 %8472
  %8474 = vrot.lane.b32.xlu0 %v7380, 125
  %v8475 = vpop.permute.xlu0 %8474
  %8476 = vrot.lane.b32.xlu0 %v7388, 125
  %v8477 = vpop.permute.xlu0 %8476
  %8478 = vrot.lane.b32.xlu0 %v7393, 125
  %v8479 = vpop.permute.xlu0 %8478
  %v8544 = vadd.f32 %v8284, %v8353
  %v8545 = vadd.f32 %v8285, %v8355
  %v8546 = vadd.f32 %v8286, %v8357
  %v8547 = vadd.f32 %v8287, %v8359
  %v8548 = vadd.f32 %v8288, %v8361
  %v8549 = vadd.f32 %v8289, %v8363
  %v8550 = vadd.f32 %v8290, %v8365
  %v8551 = vadd.f32 %v8291, %v8367
  %v8552 = vadd.f32 %v8292, %v8369
  %v8553 = vadd.f32 %v8293, %v8371
  %v8554 = vadd.f32 %v8294, %v8373
  %v8555 = vadd.f32 %v8295, %v8375
  %v8556 = vadd.f32 %v8296, %v8377
  %v8557 = vadd.f32 %v8297, %v8379
  %v8558 = vadd.f32 %v8298, %v8381
  %v8559 = vadd.f32 %v8299, %v8383
  %v8560 = vadd.f32 %v8300, %v8385
  %v8561 = vadd.f32 %v8301, %v8387
  %v8562 = vadd.f32 %v8302, %v8389
  %v8563 = vadd.f32 %v8303, %v8391
  %v8564 = vadd.f32 %v8304, %v8393
  %v8565 = vadd.f32 %v8305, %v8395
  %v8566 = vadd.f32 %v8306, %v8397
  %v8567 = vadd.f32 %v8307, %v8399
  %v8568 = vadd.f32 %v8308, %v8401
  %v8569 = vadd.f32 %v8309, %v8403
  %v8570 = vadd.f32 %v8310, %v8405
  %v8571 = vadd.f32 %v8311, %v8407
  %v8572 = vadd.f32 %v8312, %v8409
  %v8573 = vadd.f32 %v8313, %v8411
  %v8574 = vadd.f32 %v8314, %v8413
  %v8575 = vadd.f32 %v8315, %v8415
  %v8576 = vadd.f32 %v8316, %v8417
  %v8577 = vadd.f32 %v8317, %v8419
  %v8578 = vadd.f32 %v8318, %v8421
  %v8579 = vadd.f32 %v8319, %v8423
  %v8580 = vadd.f32 %v8320, %v8425
  %v8581 = vadd.f32 %v8321, %v8427
  %v8582 = vadd.f32 %v8322, %v8429
  %v8583 = vadd.f32 %v8323, %v8431
  %v8584 = vadd.f32 %v8324, %v8433
  %v8585 = vadd.f32 %v8325, %v8435
  %v8586 = vadd.f32 %v8326, %v8437
  %v8587 = vadd.f32 %v8327, %v8439
  %v8588 = vadd.f32 %v8328, %v8441
  %v8589 = vadd.f32 %v8329, %v8443
  %v8590 = vadd.f32 %v8330, %v8445
  %v8591 = vadd.f32 %v8331, %v8447
  %v8592 = vadd.f32 %v8332, %v8449
  %v8593 = vadd.f32 %v8333, %v8451
  %v8594 = vadd.f32 %v8334, %v8453
  %v8595 = vadd.f32 %v8335, %v8455
  %v8596 = vadd.f32 %v8336, %v8457
  %v8597 = vadd.f32 %v8337, %v8459
  %v8598 = vadd.f32 %v8338, %v8461
  %v8599 = vadd.f32 %v8339, %v8463
  %v8600 = vadd.f32 %v8340, %v8465
  %v8601 = vadd.f32 %v8341, %v8467
  %v8602 = vadd.f32 %v8342, %v8469
  %v8603 = vadd.f32 %v8343, %v8471
  %v8604 = vadd.f32 %v8344, %v8473
  %v8605 = vadd.f32 %v8345, %v8475
  %v8606 = vadd.f32 %v8346, %v8477
  %v8607 = vadd.f32 %v8347, %v8479
  %v8610 = vrot.slane %v7164, 1
  %v8611 = vrot.slane %v7167, 1
  %v8612 = vsel %vm976, %v8610, %v8611
  %v8613 = vrot.slane %v7172, 1
  %v8614 = vsel %vm976, %v8611, %v8613
  %v8615 = vrot.slane %v7388, 1
  %v8616 = vrot.slane %v7393, 1
  %v8617 = vsel %vm976, %v8615, %v8616
  %v8618 = vrot.slane %v7396, 1
  %v8619 = vsel %vm976, %v8616, %v8618
  %8620 = vrot.lane.b32.xlu0 %v7523, 124
  %v8621 = vpop.permute.xlu0 %8620
  %8622 = vrot.lane.b32.xlu0 %v7525, 124
  %v8623 = vpop.permute.xlu0 %8622
  %8624 = vrot.lane.b32.xlu0 %v7528, 124
  %v8625 = vpop.permute.xlu0 %8624
  %8626 = vrot.lane.b32.xlu0 %v7530, 124
  %v8627 = vpop.permute.xlu0 %8626
  %8628 = vrot.lane.b32.xlu0 %v7533, 124
  %v8629 = vpop.permute.xlu0 %8628
  %8630 = vrot.lane.b32.xlu0 %v7535, 124
  %v8631 = vpop.permute.xlu0 %8630
  %8632 = vrot.lane.b32.xlu0 %v7538, 124
  %v8633 = vpop.permute.xlu0 %8632
  %8634 = vrot.lane.b32.xlu0 %v7540, 124
  %v8635 = vpop.permute.xlu0 %8634
  %8636 = vrot.lane.b32.xlu0 %v7543, 124
  %v8637 = vpop.permute.xlu0 %8636
  %8638 = vrot.lane.b32.xlu0 %v7545, 124
  %v8639 = vpop.permute.xlu0 %8638
  %8640 = vrot.lane.b32.xlu0 %v7548, 124
  %v8641 = vpop.permute.xlu0 %8640
  %8642 = vrot.lane.b32.xlu0 %v7550, 124
  %v8643 = vpop.permute.xlu0 %8642
  %8644 = vrot.lane.b32.xlu0 %v7553, 124
  %v8645 = vpop.permute.xlu0 %8644
  %8646 = vrot.lane.b32.xlu0 %v7555, 124
  %v8647 = vpop.permute.xlu0 %8646
  %8648 = vrot.lane.b32.xlu0 %v7558, 124
  %v8649 = vpop.permute.xlu0 %8648
  %8650 = vrot.lane.b32.xlu0 %v7560, 124
  %v8651 = vpop.permute.xlu0 %8650
  %8652 = vrot.lane.b32.xlu0 %v7563, 124
  %v8653 = vpop.permute.xlu0 %8652
  %8654 = vrot.lane.b32.xlu0 %v7565, 124
  %v8655 = vpop.permute.xlu0 %8654
  %8656 = vrot.lane.b32.xlu0 %v7568, 124
  %v8657 = vpop.permute.xlu0 %8656
  %8658 = vrot.lane.b32.xlu0 %v7570, 124
  %v8659 = vpop.permute.xlu0 %8658
  %8660 = vrot.lane.b32.xlu0 %v7573, 124
  %v8661 = vpop.permute.xlu0 %8660
  %8662 = vrot.lane.b32.xlu0 %v7575, 124
  %v8663 = vpop.permute.xlu0 %8662
  %8664 = vrot.lane.b32.xlu0 %v7578, 124
  %v8665 = vpop.permute.xlu0 %8664
  %8666 = vrot.lane.b32.xlu0 %v7580, 124
  %v8667 = vpop.permute.xlu0 %8666
  %8668 = vrot.lane.b32.xlu0 %v7583, 124
  %v8669 = vpop.permute.xlu0 %8668
  %8670 = vrot.lane.b32.xlu0 %v7585, 124
  %v8671 = vpop.permute.xlu0 %8670
  %8672 = vrot.lane.b32.xlu0 %v7588, 124
  %v8673 = vpop.permute.xlu0 %8672
  %8674 = vrot.lane.b32.xlu0 %v7590, 124
  %v8675 = vpop.permute.xlu0 %8674
  %8676 = vrot.lane.b32.xlu0 %v7593, 124
  %v8677 = vpop.permute.xlu0 %8676
  %8678 = vrot.lane.b32.xlu0 %v7595, 124
  %v8679 = vpop.permute.xlu0 %8678
  %8680 = vrot.lane.b32.xlu0 %v8612, 124
  %v8681 = vpop.permute.xlu0 %8680
  %8682 = vrot.lane.b32.xlu0 %v8614, 124
  %v8683 = vpop.permute.xlu0 %8682
  %8684 = vrot.lane.b32.xlu0 %v7603, 124
  %v8685 = vpop.permute.xlu0 %8684
  %8686 = vrot.lane.b32.xlu0 %v7605, 124
  %v8687 = vpop.permute.xlu0 %8686
  %8688 = vrot.lane.b32.xlu0 %v7608, 124
  %v8689 = vpop.permute.xlu0 %8688
  %8690 = vrot.lane.b32.xlu0 %v7610, 124
  %v8691 = vpop.permute.xlu0 %8690
  %8692 = vrot.lane.b32.xlu0 %v7613, 124
  %v8693 = vpop.permute.xlu0 %8692
  %8694 = vrot.lane.b32.xlu0 %v7615, 124
  %v8695 = vpop.permute.xlu0 %8694
  %8696 = vrot.lane.b32.xlu0 %v7618, 124
  %v8697 = vpop.permute.xlu0 %8696
  %8698 = vrot.lane.b32.xlu0 %v7620, 124
  %v8699 = vpop.permute.xlu0 %8698
  %8700 = vrot.lane.b32.xlu0 %v7623, 124
  %v8701 = vpop.permute.xlu0 %8700
  %8702 = vrot.lane.b32.xlu0 %v7625, 124
  %v8703 = vpop.permute.xlu0 %8702
  %8704 = vrot.lane.b32.xlu0 %v7628, 124
  %v8705 = vpop.permute.xlu0 %8704
  %8706 = vrot.lane.b32.xlu0 %v7630, 124
  %v8707 = vpop.permute.xlu0 %8706
  %8708 = vrot.lane.b32.xlu0 %v7633, 124
  %v8709 = vpop.permute.xlu0 %8708
  %8710 = vrot.lane.b32.xlu0 %v7635, 124
  %v8711 = vpop.permute.xlu0 %8710
  %8712 = vrot.lane.b32.xlu0 %v7638, 124
  %v8713 = vpop.permute.xlu0 %8712
  %8714 = vrot.lane.b32.xlu0 %v7640, 124
  %v8715 = vpop.permute.xlu0 %8714
  %8716 = vrot.lane.b32.xlu0 %v7643, 124
  %v8717 = vpop.permute.xlu0 %8716
  %8718 = vrot.lane.b32.xlu0 %v7645, 124
  %v8719 = vpop.permute.xlu0 %8718
  %8720 = vrot.lane.b32.xlu0 %v7648, 124
  %v8721 = vpop.permute.xlu0 %8720
  %8722 = vrot.lane.b32.xlu0 %v7650, 124
  %v8723 = vpop.permute.xlu0 %8722
  %8724 = vrot.lane.b32.xlu0 %v7653, 124
  %v8725 = vpop.permute.xlu0 %8724
  %8726 = vrot.lane.b32.xlu0 %v7655, 124
  %v8727 = vpop.permute.xlu0 %8726
  %8728 = vrot.lane.b32.xlu0 %v7658, 124
  %v8729 = vpop.permute.xlu0 %8728
  %8730 = vrot.lane.b32.xlu0 %v7660, 124
  %v8731 = vpop.permute.xlu0 %8730
  %8732 = vrot.lane.b32.xlu0 %v7663, 124
  %v8733 = vpop.permute.xlu0 %8732
  %8734 = vrot.lane.b32.xlu0 %v7665, 124
  %v8735 = vpop.permute.xlu0 %8734
  %8736 = vrot.lane.b32.xlu0 %v7668, 124
  %v8737 = vpop.permute.xlu0 %8736
  %8738 = vrot.lane.b32.xlu0 %v7670, 124
  %v8739 = vpop.permute.xlu0 %8738
  %8740 = vrot.lane.b32.xlu0 %v7673, 124
  %v8741 = vpop.permute.xlu0 %8740
  %8742 = vrot.lane.b32.xlu0 %v7675, 124
  %v8743 = vpop.permute.xlu0 %8742
  %8744 = vrot.lane.b32.xlu0 %v8617, 124
  %v8745 = vpop.permute.xlu0 %8744
  %8746 = vrot.lane.b32.xlu0 %v8619, 124
  %v8747 = vpop.permute.xlu0 %8746
  %v8812 = vadd.f32 %v8544, %v8621
  %v8813 = vadd.f32 %v8545, %v8623
  %v8814 = vadd.f32 %v8546, %v8625
  %v8815 = vadd.f32 %v8547, %v8627
  %v8816 = vadd.f32 %v8548, %v8629
  %v8817 = vadd.f32 %v8549, %v8631
  %v8818 = vadd.f32 %v8550, %v8633
  %v8819 = vadd.f32 %v8551, %v8635
  %v8820 = vadd.f32 %v8552, %v8637
  %v8821 = vadd.f32 %v8553, %v8639
  %v8822 = vadd.f32 %v8554, %v8641
  %v8823 = vadd.f32 %v8555, %v8643
  %v8824 = vadd.f32 %v8556, %v8645
  %v8825 = vadd.f32 %v8557, %v8647
  %v8826 = vadd.f32 %v8558, %v8649
  %v8827 = vadd.f32 %v8559, %v8651
  %v8828 = vadd.f32 %v8560, %v8653
  %v8829 = vadd.f32 %v8561, %v8655
  %v8830 = vadd.f32 %v8562, %v8657
  %v8831 = vadd.f32 %v8563, %v8659
  %v8832 = vadd.f32 %v8564, %v8661
  %v8833 = vadd.f32 %v8565, %v8663
  %v8834 = vadd.f32 %v8566, %v8665
  %v8835 = vadd.f32 %v8567, %v8667
  %v8836 = vadd.f32 %v8568, %v8669
  %v8837 = vadd.f32 %v8569, %v8671
  %v8838 = vadd.f32 %v8570, %v8673
  %v8839 = vadd.f32 %v8571, %v8675
  %v8840 = vadd.f32 %v8572, %v8677
  %v8841 = vadd.f32 %v8573, %v8679
  %v8842 = vadd.f32 %v8574, %v8681
  %v8843 = vadd.f32 %v8575, %v8683
  %v8844 = vadd.f32 %v8576, %v8685
  %v8845 = vadd.f32 %v8577, %v8687
  %v8846 = vadd.f32 %v8578, %v8689
  %v8847 = vadd.f32 %v8579, %v8691
  %v8848 = vadd.f32 %v8580, %v8693
  %v8849 = vadd.f32 %v8581, %v8695
  %v8850 = vadd.f32 %v8582, %v8697
  %v8851 = vadd.f32 %v8583, %v8699
  %v8852 = vadd.f32 %v8584, %v8701
  %v8853 = vadd.f32 %v8585, %v8703
  %v8854 = vadd.f32 %v8586, %v8705
  %v8855 = vadd.f32 %v8587, %v8707
  %v8856 = vadd.f32 %v8588, %v8709
  %v8857 = vadd.f32 %v8589, %v8711
  %v8858 = vadd.f32 %v8590, %v8713
  %v8859 = vadd.f32 %v8591, %v8715
  %v8860 = vadd.f32 %v8592, %v8717
  %v8861 = vadd.f32 %v8593, %v8719
  %v8862 = vadd.f32 %v8594, %v8721
  %v8863 = vadd.f32 %v8595, %v8723
  %v8864 = vadd.f32 %v8596, %v8725
  %v8865 = vadd.f32 %v8597, %v8727
  %v8866 = vadd.f32 %v8598, %v8729
  %v8867 = vadd.f32 %v8599, %v8731
  %v8868 = vadd.f32 %v8600, %v8733
  %v8869 = vadd.f32 %v8601, %v8735
  %v8870 = vadd.f32 %v8602, %v8737
  %v8871 = vadd.f32 %v8603, %v8739
  %v8872 = vadd.f32 %v8604, %v8741
  %v8873 = vadd.f32 %v8605, %v8743
  %v8874 = vadd.f32 %v8606, %v8745
  %v8875 = vadd.f32 %v8607, %v8747
  %v8876 = vrot.slane %v7164, 2
  %v8877 = vrot.slane %v7167, 2
  %v8878 = vsel %vm4756, %v8876, %v8877
  %v8879 = vrot.slane %v7172, 2
  %v8880 = vsel %vm4756, %v8877, %v8879
  %v8881 = vrot.slane %v7388, 2
  %v8882 = vrot.slane %v7393, 2
  %v8883 = vsel %vm4756, %v8881, %v8882
  %v8884 = vrot.slane %v7396, 2
  %v8885 = vsel %vm4756, %v8882, %v8884
  %8886 = vrot.lane.b32.xlu0 %v7939, 123
  %v8887 = vpop.permute.xlu0 %8886
  %8888 = vrot.lane.b32.xlu0 %v7941, 123
  %v8889 = vpop.permute.xlu0 %8888
  %8890 = vrot.lane.b32.xlu0 %v7944, 123
  %v8891 = vpop.permute.xlu0 %8890
  %8892 = vrot.lane.b32.xlu0 %v7946, 123
  %v8893 = vpop.permute.xlu0 %8892
  %8894 = vrot.lane.b32.xlu0 %v7949, 123
  %v8895 = vpop.permute.xlu0 %8894
  %8896 = vrot.lane.b32.xlu0 %v7951, 123
  %v8897 = vpop.permute.xlu0 %8896
  %8898 = vrot.lane.b32.xlu0 %v7954, 123
  %v8899 = vpop.permute.xlu0 %8898
  %8900 = vrot.lane.b32.xlu0 %v7956, 123
  %v8901 = vpop.permute.xlu0 %8900
  %8902 = vrot.lane.b32.xlu0 %v7959, 123
  %v8903 = vpop.permute.xlu0 %8902
  %8904 = vrot.lane.b32.xlu0 %v7961, 123
  %v8905 = vpop.permute.xlu0 %8904
  %8906 = vrot.lane.b32.xlu0 %v7964, 123
  %v8907 = vpop.permute.xlu0 %8906
  %8908 = vrot.lane.b32.xlu0 %v7966, 123
  %v8909 = vpop.permute.xlu0 %8908
  %8910 = vrot.lane.b32.xlu0 %v7969, 123
  %v8911 = vpop.permute.xlu0 %8910
  %8912 = vrot.lane.b32.xlu0 %v7971, 123
  %v8913 = vpop.permute.xlu0 %8912
  %8914 = vrot.lane.b32.xlu0 %v7974, 123
  %v8915 = vpop.permute.xlu0 %8914
  %8916 = vrot.lane.b32.xlu0 %v7976, 123
  %v8917 = vpop.permute.xlu0 %8916
  %8918 = vrot.lane.b32.xlu0 %v7979, 123
  %v8919 = vpop.permute.xlu0 %8918
  %8920 = vrot.lane.b32.xlu0 %v7981, 123
  %v8921 = vpop.permute.xlu0 %8920
  %8922 = vrot.lane.b32.xlu0 %v7984, 123
  %v8923 = vpop.permute.xlu0 %8922
  %8924 = vrot.lane.b32.xlu0 %v7986, 123
  %v8925 = vpop.permute.xlu0 %8924
  %8926 = vrot.lane.b32.xlu0 %v7989, 123
  %v8927 = vpop.permute.xlu0 %8926
  %8928 = vrot.lane.b32.xlu0 %v7991, 123
  %v8929 = vpop.permute.xlu0 %8928
  %8930 = vrot.lane.b32.xlu0 %v7994, 123
  %v8931 = vpop.permute.xlu0 %8930
  %8932 = vrot.lane.b32.xlu0 %v7996, 123
  %v8933 = vpop.permute.xlu0 %8932
  %8934 = vrot.lane.b32.xlu0 %v7999, 123
  %v8935 = vpop.permute.xlu0 %8934
  %8936 = vrot.lane.b32.xlu0 %v8001, 123
  %v8937 = vpop.permute.xlu0 %8936
  %8938 = vrot.lane.b32.xlu0 %v8004, 123
  %v8939 = vpop.permute.xlu0 %8938
  %8940 = vrot.lane.b32.xlu0 %v8006, 123
  %v8941 = vpop.permute.xlu0 %8940
  %8942 = vrot.lane.b32.xlu0 %v8009, 123
  %v8943 = vpop.permute.xlu0 %8942
  %8944 = vrot.lane.b32.xlu0 %v8011, 123
  %v8945 = vpop.permute.xlu0 %8944
  %8946 = vrot.lane.b32.xlu0 %v8878, 123
  %v8947 = vpop.permute.xlu0 %8946
  %8948 = vrot.lane.b32.xlu0 %v8880, 123
  %v8949 = vpop.permute.xlu0 %8948
  %8950 = vrot.lane.b32.xlu0 %v8019, 123
  %v8951 = vpop.permute.xlu0 %8950
  %8952 = vrot.lane.b32.xlu0 %v8021, 123
  %v8953 = vpop.permute.xlu0 %8952
  %8954 = vrot.lane.b32.xlu0 %v8024, 123
  %v8955 = vpop.permute.xlu0 %8954
  %8956 = vrot.lane.b32.xlu0 %v8026, 123
  %v8957 = vpop.permute.xlu0 %8956
  %8958 = vrot.lane.b32.xlu0 %v8029, 123
  %v8959 = vpop.permute.xlu0 %8958
  %8960 = vrot.lane.b32.xlu0 %v8031, 123
  %v8961 = vpop.permute.xlu0 %8960
  %8962 = vrot.lane.b32.xlu0 %v8034, 123
  %v8963 = vpop.permute.xlu0 %8962
  %8964 = vrot.lane.b32.xlu0 %v8036, 123
  %v8965 = vpop.permute.xlu0 %8964
  %8966 = vrot.lane.b32.xlu0 %v8039, 123
  %v8967 = vpop.permute.xlu0 %8966
  %8968 = vrot.lane.b32.xlu0 %v8041, 123
  %v8969 = vpop.permute.xlu0 %8968
  %8970 = vrot.lane.b32.xlu0 %v8044, 123
  %v8971 = vpop.permute.xlu0 %8970
  %8972 = vrot.lane.b32.xlu0 %v8046, 123
  %v8973 = vpop.permute.xlu0 %8972
  %8974 = vrot.lane.b32.xlu0 %v8049, 123
  %v8975 = vpop.permute.xlu0 %8974
  %8976 = vrot.lane.b32.xlu0 %v8051, 123
  %v8977 = vpop.permute.xlu0 %8976
  %8978 = vrot.lane.b32.xlu0 %v8054, 123
  %v8979 = vpop.permute.xlu0 %8978
  %8980 = vrot.lane.b32.xlu0 %v8056, 123
  %v8981 = vpop.permute.xlu0 %8980
  %8982 = vrot.lane.b32.xlu0 %v8059, 123
  %v8983 = vpop.permute.xlu0 %8982
  %8984 = vrot.lane.b32.xlu0 %v8061, 123
  %v8985 = vpop.permute.xlu0 %8984
  %8986 = vrot.lane.b32.xlu0 %v8064, 123
  %v8987 = vpop.permute.xlu0 %8986
  %8988 = vrot.lane.b32.xlu0 %v8066, 123
  %v8989 = vpop.permute.xlu0 %8988
  %8990 = vrot.lane.b32.xlu0 %v8069, 123
  %v8991 = vpop.permute.xlu0 %8990
  %8992 = vrot.lane.b32.xlu0 %v8071, 123
  %v8993 = vpop.permute.xlu0 %8992
  %8994 = vrot.lane.b32.xlu0 %v8074, 123
  %v8995 = vpop.permute.xlu0 %8994
  %8996 = vrot.lane.b32.xlu0 %v8076, 123
  %v8997 = vpop.permute.xlu0 %8996
  %8998 = vrot.lane.b32.xlu0 %v8079, 123
  %v8999 = vpop.permute.xlu0 %8998
  %9000 = vrot.lane.b32.xlu0 %v8081, 123
  %v9001 = vpop.permute.xlu0 %9000
  %9002 = vrot.lane.b32.xlu0 %v8084, 123
  %v9003 = vpop.permute.xlu0 %9002
  %9004 = vrot.lane.b32.xlu0 %v8086, 123
  %v9005 = vpop.permute.xlu0 %9004
  %9006 = vrot.lane.b32.xlu0 %v8089, 123
  %v9007 = vpop.permute.xlu0 %9006
  %9008 = vrot.lane.b32.xlu0 %v8091, 123
  %v9009 = vpop.permute.xlu0 %9008
  %9010 = vrot.lane.b32.xlu0 %v8883, 123
  %v9011 = vpop.permute.xlu0 %9010
  %9012 = vrot.lane.b32.xlu0 %v8885, 123
  %v9013 = vpop.permute.xlu0 %9012
  %v9078 = vadd.f32 %v8812, %v8887
  %v9079 = vadd.f32 %v8813, %v8889
  %v9080 = vadd.f32 %v8814, %v8891
  %v9081 = vadd.f32 %v8815, %v8893
  %v9082 = vadd.f32 %v8816, %v8895
  %v9083 = vadd.f32 %v8817, %v8897
  %v9084 = vadd.f32 %v8818, %v8899
  %v9085 = vadd.f32 %v8819, %v8901
  %v9086 = vadd.f32 %v8820, %v8903
  %v9087 = vadd.f32 %v8821, %v8905
  %v9088 = vadd.f32 %v8822, %v8907
  %v9089 = vadd.f32 %v8823, %v8909
  %v9090 = vadd.f32 %v8824, %v8911
  %v9091 = vadd.f32 %v8825, %v8913
  %v9092 = vadd.f32 %v8826, %v8915
  %v9093 = vadd.f32 %v8827, %v8917
  %v9094 = vadd.f32 %v8828, %v8919
  %v9095 = vadd.f32 %v8829, %v8921
  %v9096 = vadd.f32 %v8830, %v8923
  %v9097 = vadd.f32 %v8831, %v8925
  %v9098 = vadd.f32 %v8832, %v8927
  %v9099 = vadd.f32 %v8833, %v8929
  %v9100 = vadd.f32 %v8834, %v8931
  %v9101 = vadd.f32 %v8835, %v8933
  %v9102 = vadd.f32 %v8836, %v8935
  %v9103 = vadd.f32 %v8837, %v8937
  %v9104 = vadd.f32 %v8838, %v8939
  %v9105 = vadd.f32 %v8839, %v8941
  %v9106 = vadd.f32 %v8840, %v8943
  %v9107 = vadd.f32 %v8841, %v8945
  %v9108 = vadd.f32 %v8842, %v8947
  %v9109 = vadd.f32 %v8843, %v8949
  %v9110 = vadd.f32 %v8844, %v8951
  %v9111 = vadd.f32 %v8845, %v8953
  %v9112 = vadd.f32 %v8846, %v8955
  %v9113 = vadd.f32 %v8847, %v8957
  %v9114 = vadd.f32 %v8848, %v8959
  %v9115 = vadd.f32 %v8849, %v8961
  %v9116 = vadd.f32 %v8850, %v8963
  %v9117 = vadd.f32 %v8851, %v8965
  %v9118 = vadd.f32 %v8852, %v8967
  %v9119 = vadd.f32 %v8853, %v8969
  %v9120 = vadd.f32 %v8854, %v8971
  %v9121 = vadd.f32 %v8855, %v8973
  %v9122 = vadd.f32 %v8856, %v8975
  %v9123 = vadd.f32 %v8857, %v8977
  %v9124 = vadd.f32 %v8858, %v8979
  %v9125 = vadd.f32 %v8859, %v8981
  %v9126 = vadd.f32 %v8860, %v8983
  %v9127 = vadd.f32 %v8861, %v8985
  %v9128 = vadd.f32 %v8862, %v8987
  %v9129 = vadd.f32 %v8863, %v8989
  %v9130 = vadd.f32 %v8864, %v8991
  %v9131 = vadd.f32 %v8865, %v8993
  %v9132 = vadd.f32 %v8866, %v8995
  %v9133 = vadd.f32 %v8867, %v8997
  %v9134 = vadd.f32 %v8868, %v8999
  %v9135 = vadd.f32 %v8869, %v9001
  %v9136 = vadd.f32 %v8870, %v9003
  %v9137 = vadd.f32 %v8871, %v9005
  %v9138 = vadd.f32 %v8872, %v9007
  %v9139 = vadd.f32 %v8873, %v9009
  %v9140 = vadd.f32 %v8874, %v9011
  %v9141 = vadd.f32 %v8875, %v9013
  %9146 = vrot.lane.b32.xlu0 %v6996, 122
  %v9147 = vpop.permute.xlu0 %9146
  %9148 = vrot.lane.b32.xlu0 %v6999, 122
  %v9149 = vpop.permute.xlu0 %9148
  %9150 = vrot.lane.b32.xlu0 %v7007, 122
  %v9151 = vpop.permute.xlu0 %9150
  %9152 = vrot.lane.b32.xlu0 %v7012, 122
  %v9153 = vpop.permute.xlu0 %9152
  %9154 = vrot.lane.b32.xlu0 %v7020, 122
  %v9155 = vpop.permute.xlu0 %9154
  %9156 = vrot.lane.b32.xlu0 %v7023, 122
  %v9157 = vpop.permute.xlu0 %9156
  %9158 = vrot.lane.b32.xlu0 %v7031, 122
  %v9159 = vpop.permute.xlu0 %9158
  %9160 = vrot.lane.b32.xlu0 %v7036, 122
  %v9161 = vpop.permute.xlu0 %9160
  %9162 = vrot.lane.b32.xlu0 %v7044, 122
  %v9163 = vpop.permute.xlu0 %9162
  %9164 = vrot.lane.b32.xlu0 %v7047, 122
  %v9165 = vpop.permute.xlu0 %9164
  %9166 = vrot.lane.b32.xlu0 %v7055, 122
  %v9167 = vpop.permute.xlu0 %9166
  %9168 = vrot.lane.b32.xlu0 %v7060, 122
  %v9169 = vpop.permute.xlu0 %9168
  %9170 = vrot.lane.b32.xlu0 %v7068, 122
  %v9171 = vpop.permute.xlu0 %9170
  %9172 = vrot.lane.b32.xlu0 %v7071, 122
  %v9173 = vpop.permute.xlu0 %9172
  %9174 = vrot.lane.b32.xlu0 %v7079, 122
  %v9175 = vpop.permute.xlu0 %9174
  %9176 = vrot.lane.b32.xlu0 %v7084, 122
  %v9177 = vpop.permute.xlu0 %9176
  %9178 = vrot.lane.b32.xlu0 %v7092, 122
  %v9179 = vpop.permute.xlu0 %9178
  %9180 = vrot.lane.b32.xlu0 %v7095, 122
  %v9181 = vpop.permute.xlu0 %9180
  %9182 = vrot.lane.b32.xlu0 %v7103, 122
  %v9183 = vpop.permute.xlu0 %9182
  %9184 = vrot.lane.b32.xlu0 %v7108, 122
  %v9185 = vpop.permute.xlu0 %9184
  %9186 = vrot.lane.b32.xlu0 %v7116, 122
  %v9187 = vpop.permute.xlu0 %9186
  %9188 = vrot.lane.b32.xlu0 %v7119, 122
  %v9189 = vpop.permute.xlu0 %9188
  %9190 = vrot.lane.b32.xlu0 %v7127, 122
  %v9191 = vpop.permute.xlu0 %9190
  %9192 = vrot.lane.b32.xlu0 %v7132, 122
  %v9193 = vpop.permute.xlu0 %9192
  %9194 = vrot.lane.b32.xlu0 %v7140, 122
  %v9195 = vpop.permute.xlu0 %9194
  %9196 = vrot.lane.b32.xlu0 %v7143, 122
  %v9197 = vpop.permute.xlu0 %9196
  %9198 = vrot.lane.b32.xlu0 %v7151, 122
  %v9199 = vpop.permute.xlu0 %9198
  %9200 = vrot.lane.b32.xlu0 %v7156, 122
  %v9201 = vpop.permute.xlu0 %9200
  %9202 = vrot.lane.b32.xlu0 %v7164, 122
  %v9203 = vpop.permute.xlu0 %9202
  %9204 = vrot.lane.b32.xlu0 %v7167, 122
  %v9205 = vpop.permute.xlu0 %9204
  %9206 = vrot.lane.b32.xlu0 %v7175, 122
  %v9207 = vpop.permute.xlu0 %9206
  %9208 = vrot.lane.b32.xlu0 %v7180, 122
  %v9209 = vpop.permute.xlu0 %9208
  %9210 = vrot.lane.b32.xlu0 %v7220, 122
  %v9211 = vpop.permute.xlu0 %9210
  %9212 = vrot.lane.b32.xlu0 %v7225, 122
  %v9213 = vpop.permute.xlu0 %9212
  %9214 = vrot.lane.b32.xlu0 %v7233, 122
  %v9215 = vpop.permute.xlu0 %9214
  %9216 = vrot.lane.b32.xlu0 %v7236, 122
  %v9217 = vpop.permute.xlu0 %9216
  %9218 = vrot.lane.b32.xlu0 %v7244, 122
  %v9219 = vpop.permute.xlu0 %9218
  %9220 = vrot.lane.b32.xlu0 %v7249, 122
  %v9221 = vpop.permute.xlu0 %9220
  %9222 = vrot.lane.b32.xlu0 %v7257, 122
  %v9223 = vpop.permute.xlu0 %9222
  %9224 = vrot.lane.b32.xlu0 %v7260, 122
  %v9225 = vpop.permute.xlu0 %9224
  %9226 = vrot.lane.b32.xlu0 %v7268, 122
  %v9227 = vpop.permute.xlu0 %9226
  %9228 = vrot.lane.b32.xlu0 %v7273, 122
  %v9229 = vpop.permute.xlu0 %9228
  %9230 = vrot.lane.b32.xlu0 %v7281, 122
  %v9231 = vpop.permute.xlu0 %9230
  %9232 = vrot.lane.b32.xlu0 %v7284, 122
  %v9233 = vpop.permute.xlu0 %9232
  %9234 = vrot.lane.b32.xlu0 %v7292, 122
  %v9235 = vpop.permute.xlu0 %9234
  %9236 = vrot.lane.b32.xlu0 %v7297, 122
  %v9237 = vpop.permute.xlu0 %9236
  %9238 = vrot.lane.b32.xlu0 %v7305, 122
  %v9239 = vpop.permute.xlu0 %9238
  %9240 = vrot.lane.b32.xlu0 %v7308, 122
  %v9241 = vpop.permute.xlu0 %9240
  %9242 = vrot.lane.b32.xlu0 %v7316, 122
  %v9243 = vpop.permute.xlu0 %9242
  %9244 = vrot.lane.b32.xlu0 %v7321, 122
  %v9245 = vpop.permute.xlu0 %9244
  %9246 = vrot.lane.b32.xlu0 %v7329, 122
  %v9247 = vpop.permute.xlu0 %9246
  %9248 = vrot.lane.b32.xlu0 %v7332, 122
  %v9249 = vpop.permute.xlu0 %9248
  %9250 = vrot.lane.b32.xlu0 %v7340, 122
  %v9251 = vpop.permute.xlu0 %9250
  %9252 = vrot.lane.b32.xlu0 %v7345, 122
  %v9253 = vpop.permute.xlu0 %9252
  %9254 = vrot.lane.b32.xlu0 %v7353, 122
  %v9255 = vpop.permute.xlu0 %9254
  %9256 = vrot.lane.b32.xlu0 %v7356, 122
  %v9257 = vpop.permute.xlu0 %9256
  %9258 = vrot.lane.b32.xlu0 %v7364, 122
  %v9259 = vpop.permute.xlu0 %9258
  %9260 = vrot.lane.b32.xlu0 %v7369, 122
  %v9261 = vpop.permute.xlu0 %9260
  %9262 = vrot.lane.b32.xlu0 %v7377, 122
  %v9263 = vpop.permute.xlu0 %9262
  %9264 = vrot.lane.b32.xlu0 %v7380, 122
  %v9265 = vpop.permute.xlu0 %9264
  %9266 = vrot.lane.b32.xlu0 %v7388, 122
  %v9267 = vpop.permute.xlu0 %9266
  %9268 = vrot.lane.b32.xlu0 %v7393, 122
  %v9269 = vpop.permute.xlu0 %9268
  %9270 = vrot.lane.b32.xlu0 %v7401, 122
  %v9271 = vpop.permute.xlu0 %9270
  %9272 = vrot.lane.b32.xlu0 %v7404, 122
  %v9273 = vpop.permute.xlu0 %9272
  %v9338 = vadd.f32 %v9078, %v9147
  %v9339 = vadd.f32 %v9079, %v9149
  %v9340 = vadd.f32 %v9080, %v9151
  %v9341 = vadd.f32 %v9081, %v9153
  %v9342 = vadd.f32 %v9082, %v9155
  %v9343 = vadd.f32 %v9083, %v9157
  %v9344 = vadd.f32 %v9084, %v9159
  %v9345 = vadd.f32 %v9085, %v9161
  %v9346 = vadd.f32 %v9086, %v9163
  %v9347 = vadd.f32 %v9087, %v9165
  %v9348 = vadd.f32 %v9088, %v9167
  %v9349 = vadd.f32 %v9089, %v9169
  %v9350 = vadd.f32 %v9090, %v9171
  %v9351 = vadd.f32 %v9091, %v9173
  %v9352 = vadd.f32 %v9092, %v9175
  %v9353 = vadd.f32 %v9093, %v9177
  %v9354 = vadd.f32 %v9094, %v9179
  %v9355 = vadd.f32 %v9095, %v9181
  %v9356 = vadd.f32 %v9096, %v9183
  %v9357 = vadd.f32 %v9097, %v9185
  %v9358 = vadd.f32 %v9098, %v9187
  %v9359 = vadd.f32 %v9099, %v9189
  %v9360 = vadd.f32 %v9100, %v9191
  %v9361 = vadd.f32 %v9101, %v9193
  %v9362 = vadd.f32 %v9102, %v9195
  %v9363 = vadd.f32 %v9103, %v9197
  %v9364 = vadd.f32 %v9104, %v9199
  %v9365 = vadd.f32 %v9105, %v9201
  %v9366 = vadd.f32 %v9106, %v9203
  %v9367 = vadd.f32 %v9107, %v9205
  %v9368 = vadd.f32 %v9108, %v9207
  %v9369 = vadd.f32 %v9109, %v9209
  %v9370 = vadd.f32 %v9110, %v9211
  %v9371 = vadd.f32 %v9111, %v9213
  %v9372 = vadd.f32 %v9112, %v9215
  %v9373 = vadd.f32 %v9113, %v9217
  %v9374 = vadd.f32 %v9114, %v9219
  %v9375 = vadd.f32 %v9115, %v9221
  %v9376 = vadd.f32 %v9116, %v9223
  %v9377 = vadd.f32 %v9117, %v9225
  %v9378 = vadd.f32 %v9118, %v9227
  %v9379 = vadd.f32 %v9119, %v9229
  %v9380 = vadd.f32 %v9120, %v9231
  %v9381 = vadd.f32 %v9121, %v9233
  %v9382 = vadd.f32 %v9122, %v9235
  %v9383 = vadd.f32 %v9123, %v9237
  %v9384 = vadd.f32 %v9124, %v9239
  %v9385 = vadd.f32 %v9125, %v9241
  %v9386 = vadd.f32 %v9126, %v9243
  %v9387 = vadd.f32 %v9127, %v9245
  %v9388 = vadd.f32 %v9128, %v9247
  %v9389 = vadd.f32 %v9129, %v9249
  %v9390 = vadd.f32 %v9130, %v9251
  %v9391 = vadd.f32 %v9131, %v9253
  %v9392 = vadd.f32 %v9132, %v9255
  %v9393 = vadd.f32 %v9133, %v9257
  %v9394 = vadd.f32 %v9134, %v9259
  %v9395 = vadd.f32 %v9135, %v9261
  %v9396 = vadd.f32 %v9136, %v9263
  %v9397 = vadd.f32 %v9137, %v9265
  %v9398 = vadd.f32 %v9138, %v9267
  %v9399 = vadd.f32 %v9139, %v9269
  %v9400 = vadd.f32 %v9140, %v9271
  %v9401 = vadd.f32 %v9141, %v9273
  %v9404 = vrot.slane %v7175, 1
  %v9405 = vrot.slane %v7180, 1
  %v9406 = vsel %vm976, %v9404, %v9405
  %v9407 = vrot.slane %v7183, 1
  %v9408 = vsel %vm976, %v9405, %v9407
  %v9409 = vrot.slane %v7401, 1
  %v9410 = vrot.slane %v7404, 1
  %v9411 = vsel %vm976, %v9409, %v9410
  %v9412 = vrot.slane %v7409, 1
  %v9413 = vsel %vm976, %v9410, %v9412
  %9414 = vrot.lane.b32.xlu0 %v7528, 121
  %v9415 = vpop.permute.xlu0 %9414
  %9416 = vrot.lane.b32.xlu0 %v7530, 121
  %v9417 = vpop.permute.xlu0 %9416
  %9418 = vrot.lane.b32.xlu0 %v7533, 121
  %v9419 = vpop.permute.xlu0 %9418
  %9420 = vrot.lane.b32.xlu0 %v7535, 121
  %v9421 = vpop.permute.xlu0 %9420
  %9422 = vrot.lane.b32.xlu0 %v7538, 121
  %v9423 = vpop.permute.xlu0 %9422
  %9424 = vrot.lane.b32.xlu0 %v7540, 121
  %v9425 = vpop.permute.xlu0 %9424
  %9426 = vrot.lane.b32.xlu0 %v7543, 121
  %v9427 = vpop.permute.xlu0 %9426
  %9428 = vrot.lane.b32.xlu0 %v7545, 121
  %v9429 = vpop.permute.xlu0 %9428
  %9430 = vrot.lane.b32.xlu0 %v7548, 121
  %v9431 = vpop.permute.xlu0 %9430
  %9432 = vrot.lane.b32.xlu0 %v7550, 121
  %v9433 = vpop.permute.xlu0 %9432
  %9434 = vrot.lane.b32.xlu0 %v7553, 121
  %v9435 = vpop.permute.xlu0 %9434
  %9436 = vrot.lane.b32.xlu0 %v7555, 121
  %v9437 = vpop.permute.xlu0 %9436
  %9438 = vrot.lane.b32.xlu0 %v7558, 121
  %v9439 = vpop.permute.xlu0 %9438
  %9440 = vrot.lane.b32.xlu0 %v7560, 121
  %v9441 = vpop.permute.xlu0 %9440
  %9442 = vrot.lane.b32.xlu0 %v7563, 121
  %v9443 = vpop.permute.xlu0 %9442
  %9444 = vrot.lane.b32.xlu0 %v7565, 121
  %v9445 = vpop.permute.xlu0 %9444
  %9446 = vrot.lane.b32.xlu0 %v7568, 121
  %v9447 = vpop.permute.xlu0 %9446
  %9448 = vrot.lane.b32.xlu0 %v7570, 121
  %v9449 = vpop.permute.xlu0 %9448
  %9450 = vrot.lane.b32.xlu0 %v7573, 121
  %v9451 = vpop.permute.xlu0 %9450
  %9452 = vrot.lane.b32.xlu0 %v7575, 121
  %v9453 = vpop.permute.xlu0 %9452
  %9454 = vrot.lane.b32.xlu0 %v7578, 121
  %v9455 = vpop.permute.xlu0 %9454
  %9456 = vrot.lane.b32.xlu0 %v7580, 121
  %v9457 = vpop.permute.xlu0 %9456
  %9458 = vrot.lane.b32.xlu0 %v7583, 121
  %v9459 = vpop.permute.xlu0 %9458
  %9460 = vrot.lane.b32.xlu0 %v7585, 121
  %v9461 = vpop.permute.xlu0 %9460
  %9462 = vrot.lane.b32.xlu0 %v7588, 121
  %v9463 = vpop.permute.xlu0 %9462
  %9464 = vrot.lane.b32.xlu0 %v7590, 121
  %v9465 = vpop.permute.xlu0 %9464
  %9466 = vrot.lane.b32.xlu0 %v7593, 121
  %v9467 = vpop.permute.xlu0 %9466
  %9468 = vrot.lane.b32.xlu0 %v7595, 121
  %v9469 = vpop.permute.xlu0 %9468
  %9470 = vrot.lane.b32.xlu0 %v8612, 121
  %v9471 = vpop.permute.xlu0 %9470
  %9472 = vrot.lane.b32.xlu0 %v8614, 121
  %v9473 = vpop.permute.xlu0 %9472
  %9474 = vrot.lane.b32.xlu0 %v9406, 121
  %v9475 = vpop.permute.xlu0 %9474
  %9476 = vrot.lane.b32.xlu0 %v9408, 121
  %v9477 = vpop.permute.xlu0 %9476
  %9478 = vrot.lane.b32.xlu0 %v7608, 121
  %v9479 = vpop.permute.xlu0 %9478
  %9480 = vrot.lane.b32.xlu0 %v7610, 121
  %v9481 = vpop.permute.xlu0 %9480
  %9482 = vrot.lane.b32.xlu0 %v7613, 121
  %v9483 = vpop.permute.xlu0 %9482
  %9484 = vrot.lane.b32.xlu0 %v7615, 121
  %v9485 = vpop.permute.xlu0 %9484
  %9486 = vrot.lane.b32.xlu0 %v7618, 121
  %v9487 = vpop.permute.xlu0 %9486
  %9488 = vrot.lane.b32.xlu0 %v7620, 121
  %v9489 = vpop.permute.xlu0 %9488
  %9490 = vrot.lane.b32.xlu0 %v7623, 121
  %v9491 = vpop.permute.xlu0 %9490
  %9492 = vrot.lane.b32.xlu0 %v7625, 121
  %v9493 = vpop.permute.xlu0 %9492
  %9494 = vrot.lane.b32.xlu0 %v7628, 121
  %v9495 = vpop.permute.xlu0 %9494
  %9496 = vrot.lane.b32.xlu0 %v7630, 121
  %v9497 = vpop.permute.xlu0 %9496
  %9498 = vrot.lane.b32.xlu0 %v7633, 121
  %v9499 = vpop.permute.xlu0 %9498
  %9500 = vrot.lane.b32.xlu0 %v7635, 121
  %v9501 = vpop.permute.xlu0 %9500
  %9502 = vrot.lane.b32.xlu0 %v7638, 121
  %v9503 = vpop.permute.xlu0 %9502
  %9504 = vrot.lane.b32.xlu0 %v7640, 121
  %v9505 = vpop.permute.xlu0 %9504
  %9506 = vrot.lane.b32.xlu0 %v7643, 121
  %v9507 = vpop.permute.xlu0 %9506
  %9508 = vrot.lane.b32.xlu0 %v7645, 121
  %v9509 = vpop.permute.xlu0 %9508
  %9510 = vrot.lane.b32.xlu0 %v7648, 121
  %v9511 = vpop.permute.xlu0 %9510
  %9512 = vrot.lane.b32.xlu0 %v7650, 121
  %v9513 = vpop.permute.xlu0 %9512
  %9514 = vrot.lane.b32.xlu0 %v7653, 121
  %v9515 = vpop.permute.xlu0 %9514
  %9516 = vrot.lane.b32.xlu0 %v7655, 121
  %v9517 = vpop.permute.xlu0 %9516
  %9518 = vrot.lane.b32.xlu0 %v7658, 121
  %v9519 = vpop.permute.xlu0 %9518
  %9520 = vrot.lane.b32.xlu0 %v7660, 121
  %v9521 = vpop.permute.xlu0 %9520
  %9522 = vrot.lane.b32.xlu0 %v7663, 121
  %v9523 = vpop.permute.xlu0 %9522
  %9524 = vrot.lane.b32.xlu0 %v7665, 121
  %v9525 = vpop.permute.xlu0 %9524
  %9526 = vrot.lane.b32.xlu0 %v7668, 121
  %v9527 = vpop.permute.xlu0 %9526
  %9528 = vrot.lane.b32.xlu0 %v7670, 121
  %v9529 = vpop.permute.xlu0 %9528
  %9530 = vrot.lane.b32.xlu0 %v7673, 121
  %v9531 = vpop.permute.xlu0 %9530
  %9532 = vrot.lane.b32.xlu0 %v7675, 121
  %v9533 = vpop.permute.xlu0 %9532
  %9534 = vrot.lane.b32.xlu0 %v8617, 121
  %v9535 = vpop.permute.xlu0 %9534
  %9536 = vrot.lane.b32.xlu0 %v8619, 121
  %v9537 = vpop.permute.xlu0 %9536
  %9538 = vrot.lane.b32.xlu0 %v9411, 121
  %v9539 = vpop.permute.xlu0 %9538
  %9540 = vrot.lane.b32.xlu0 %v9413, 121
  %v9541 = vpop.permute.xlu0 %9540
  %v9606 = vadd.f32 %v9338, %v9415
  %v9607 = vadd.f32 %v9339, %v9417
  %v9608 = vadd.f32 %v9340, %v9419
  %v9609 = vadd.f32 %v9341, %v9421
  %v9610 = vadd.f32 %v9342, %v9423
  %v9611 = vadd.f32 %v9343, %v9425
  %v9612 = vadd.f32 %v9344, %v9427
  %v9613 = vadd.f32 %v9345, %v9429
  %v9614 = vadd.f32 %v9346, %v9431
  %v9615 = vadd.f32 %v9347, %v9433
  %v9616 = vadd.f32 %v9348, %v9435
  %v9617 = vadd.f32 %v9349, %v9437
  %v9618 = vadd.f32 %v9350, %v9439
  %v9619 = vadd.f32 %v9351, %v9441
  %v9620 = vadd.f32 %v9352, %v9443
  %v9621 = vadd.f32 %v9353, %v9445
  %v9622 = vadd.f32 %v9354, %v9447
  %v9623 = vadd.f32 %v9355, %v9449
  %v9624 = vadd.f32 %v9356, %v9451
  %v9625 = vadd.f32 %v9357, %v9453
  %v9626 = vadd.f32 %v9358, %v9455
  %v9627 = vadd.f32 %v9359, %v9457
  %v9628 = vadd.f32 %v9360, %v9459
  %v9629 = vadd.f32 %v9361, %v9461
  %v9630 = vadd.f32 %v9362, %v9463
  %v9631 = vadd.f32 %v9363, %v9465
  %v9632 = vadd.f32 %v9364, %v9467
  %v9633 = vadd.f32 %v9365, %v9469
  %v9634 = vadd.f32 %v9366, %v9471
  %v9635 = vadd.f32 %v9367, %v9473
  %v9636 = vadd.f32 %v9368, %v9475
  %v9637 = vadd.f32 %v9369, %v9477
  %v9638 = vadd.f32 %v9370, %v9479
  %v9639 = vadd.f32 %v9371, %v9481
  %v9640 = vadd.f32 %v9372, %v9483
  %v9641 = vadd.f32 %v9373, %v9485
  %v9642 = vadd.f32 %v9374, %v9487
  %v9643 = vadd.f32 %v9375, %v9489
  %v9644 = vadd.f32 %v9376, %v9491
  %v9645 = vadd.f32 %v9377, %v9493
  %v9646 = vadd.f32 %v9378, %v9495
  %v9647 = vadd.f32 %v9379, %v9497
  %v9648 = vadd.f32 %v9380, %v9499
  %v9649 = vadd.f32 %v9381, %v9501
  %v9650 = vadd.f32 %v9382, %v9503
  %v9651 = vadd.f32 %v9383, %v9505
  %v9652 = vadd.f32 %v9384, %v9507
  %v9653 = vadd.f32 %v9385, %v9509
  %v9654 = vadd.f32 %v9386, %v9511
  %v9655 = vadd.f32 %v9387, %v9513
  %v9656 = vadd.f32 %v9388, %v9515
  %v9657 = vadd.f32 %v9389, %v9517
  %v9658 = vadd.f32 %v9390, %v9519
  %v9659 = vadd.f32 %v9391, %v9521
  %v9660 = vadd.f32 %v9392, %v9523
  %v9661 = vadd.f32 %v9393, %v9525
  %v9662 = vadd.f32 %v9394, %v9527
  %v9663 = vadd.f32 %v9395, %v9529
  %v9664 = vadd.f32 %v9396, %v9531
  %v9665 = vadd.f32 %v9397, %v9533
  %v9666 = vadd.f32 %v9398, %v9535
  %v9667 = vadd.f32 %v9399, %v9537
  %v9668 = vadd.f32 %v9400, %v9539
  %v9669 = vadd.f32 %v9401, %v9541
  %v9670 = vrot.slane %v7175, 2
  %v9671 = vrot.slane %v7180, 2
  %v9672 = vsel %vm4756, %v9670, %v9671
  %v9673 = vrot.slane %v7183, 2
  %v9674 = vsel %vm4756, %v9671, %v9673
  %v9675 = vrot.slane %v7401, 2
  %v9676 = vrot.slane %v7404, 2
  %v9677 = vsel %vm4756, %v9675, %v9676
  %v9678 = vrot.slane %v7409, 2
  %v9679 = vsel %vm4756, %v9676, %v9678
  %9680 = vrot.lane.b32.xlu0 %v7944, 120
  %v9681 = vpop.permute.xlu0 %9680
  %9682 = vrot.lane.b32.xlu0 %v7946, 120
  %v9683 = vpop.permute.xlu0 %9682
  %9684 = vrot.lane.b32.xlu0 %v7949, 120
  %v9685 = vpop.permute.xlu0 %9684
  %9686 = vrot.lane.b32.xlu0 %v7951, 120
  %v9687 = vpop.permute.xlu0 %9686
  %9688 = vrot.lane.b32.xlu0 %v7954, 120
  %v9689 = vpop.permute.xlu0 %9688
  %9690 = vrot.lane.b32.xlu0 %v7956, 120
  %v9691 = vpop.permute.xlu0 %9690
  %9692 = vrot.lane.b32.xlu0 %v7959, 120
  %v9693 = vpop.permute.xlu0 %9692
  %9694 = vrot.lane.b32.xlu0 %v7961, 120
  %v9695 = vpop.permute.xlu0 %9694
  %9696 = vrot.lane.b32.xlu0 %v7964, 120
  %v9697 = vpop.permute.xlu0 %9696
  %9698 = vrot.lane.b32.xlu0 %v7966, 120
  %v9699 = vpop.permute.xlu0 %9698
  %9700 = vrot.lane.b32.xlu0 %v7969, 120
  %v9701 = vpop.permute.xlu0 %9700
  %9702 = vrot.lane.b32.xlu0 %v7971, 120
  %v9703 = vpop.permute.xlu0 %9702
  %9704 = vrot.lane.b32.xlu0 %v7974, 120
  %v9705 = vpop.permute.xlu0 %9704
  %9706 = vrot.lane.b32.xlu0 %v7976, 120
  %v9707 = vpop.permute.xlu0 %9706
  %9708 = vrot.lane.b32.xlu0 %v7979, 120
  %v9709 = vpop.permute.xlu0 %9708
  %9710 = vrot.lane.b32.xlu0 %v7981, 120
  %v9711 = vpop.permute.xlu0 %9710
  %9712 = vrot.lane.b32.xlu0 %v7984, 120
  %v9713 = vpop.permute.xlu0 %9712
  %9714 = vrot.lane.b32.xlu0 %v7986, 120
  %v9715 = vpop.permute.xlu0 %9714
  %9716 = vrot.lane.b32.xlu0 %v7989, 120
  %v9717 = vpop.permute.xlu0 %9716
  %9718 = vrot.lane.b32.xlu0 %v7991, 120
  %v9719 = vpop.permute.xlu0 %9718
  %9720 = vrot.lane.b32.xlu0 %v7994, 120
  %v9721 = vpop.permute.xlu0 %9720
  %9722 = vrot.lane.b32.xlu0 %v7996, 120
  %v9723 = vpop.permute.xlu0 %9722
  %9724 = vrot.lane.b32.xlu0 %v7999, 120
  %v9725 = vpop.permute.xlu0 %9724
  %9726 = vrot.lane.b32.xlu0 %v8001, 120
  %v9727 = vpop.permute.xlu0 %9726
  %9728 = vrot.lane.b32.xlu0 %v8004, 120
  %v9729 = vpop.permute.xlu0 %9728
  %9730 = vrot.lane.b32.xlu0 %v8006, 120
  %v9731 = vpop.permute.xlu0 %9730
  %9732 = vrot.lane.b32.xlu0 %v8009, 120
  %v9733 = vpop.permute.xlu0 %9732
  %9734 = vrot.lane.b32.xlu0 %v8011, 120
  %v9735 = vpop.permute.xlu0 %9734
  %9736 = vrot.lane.b32.xlu0 %v8878, 120
  %v9737 = vpop.permute.xlu0 %9736
  %9738 = vrot.lane.b32.xlu0 %v8880, 120
  %v9739 = vpop.permute.xlu0 %9738
  %9740 = vrot.lane.b32.xlu0 %v9672, 120
  %v9741 = vpop.permute.xlu0 %9740
  %9742 = vrot.lane.b32.xlu0 %v9674, 120
  %v9743 = vpop.permute.xlu0 %9742
  %9744 = vrot.lane.b32.xlu0 %v8024, 120
  %v9745 = vpop.permute.xlu0 %9744
  %9746 = vrot.lane.b32.xlu0 %v8026, 120
  %v9747 = vpop.permute.xlu0 %9746
  %9748 = vrot.lane.b32.xlu0 %v8029, 120
  %v9749 = vpop.permute.xlu0 %9748
  %9750 = vrot.lane.b32.xlu0 %v8031, 120
  %v9751 = vpop.permute.xlu0 %9750
  %9752 = vrot.lane.b32.xlu0 %v8034, 120
  %v9753 = vpop.permute.xlu0 %9752
  %9754 = vrot.lane.b32.xlu0 %v8036, 120
  %v9755 = vpop.permute.xlu0 %9754
  %9756 = vrot.lane.b32.xlu0 %v8039, 120
  %v9757 = vpop.permute.xlu0 %9756
  %9758 = vrot.lane.b32.xlu0 %v8041, 120
  %v9759 = vpop.permute.xlu0 %9758
  %9760 = vrot.lane.b32.xlu0 %v8044, 120
  %v9761 = vpop.permute.xlu0 %9760
  %9762 = vrot.lane.b32.xlu0 %v8046, 120
  %v9763 = vpop.permute.xlu0 %9762
  %9764 = vrot.lane.b32.xlu0 %v8049, 120
  %v9765 = vpop.permute.xlu0 %9764
  %9766 = vrot.lane.b32.xlu0 %v8051, 120
  %v9767 = vpop.permute.xlu0 %9766
  %9768 = vrot.lane.b32.xlu0 %v8054, 120
  %v9769 = vpop.permute.xlu0 %9768
  %9770 = vrot.lane.b32.xlu0 %v8056, 120
  %v9771 = vpop.permute.xlu0 %9770
  %9772 = vrot.lane.b32.xlu0 %v8059, 120
  %v9773 = vpop.permute.xlu0 %9772
  %9774 = vrot.lane.b32.xlu0 %v8061, 120
  %v9775 = vpop.permute.xlu0 %9774
  %9776 = vrot.lane.b32.xlu0 %v8064, 120
  %v9777 = vpop.permute.xlu0 %9776
  %9778 = vrot.lane.b32.xlu0 %v8066, 120
  %v9779 = vpop.permute.xlu0 %9778
  %9780 = vrot.lane.b32.xlu0 %v8069, 120
  %v9781 = vpop.permute.xlu0 %9780
  %9782 = vrot.lane.b32.xlu0 %v8071, 120
  %v9783 = vpop.permute.xlu0 %9782
  %9784 = vrot.lane.b32.xlu0 %v8074, 120
  %v9785 = vpop.permute.xlu0 %9784
  %9786 = vrot.lane.b32.xlu0 %v8076, 120
  %v9787 = vpop.permute.xlu0 %9786
  %9788 = vrot.lane.b32.xlu0 %v8079, 120
  %v9789 = vpop.permute.xlu0 %9788
  %9790 = vrot.lane.b32.xlu0 %v8081, 120
  %v9791 = vpop.permute.xlu0 %9790
  %9792 = vrot.lane.b32.xlu0 %v8084, 120
  %v9793 = vpop.permute.xlu0 %9792
  %9794 = vrot.lane.b32.xlu0 %v8086, 120
  %v9795 = vpop.permute.xlu0 %9794
  %9796 = vrot.lane.b32.xlu0 %v8089, 120
  %v9797 = vpop.permute.xlu0 %9796
  %9798 = vrot.lane.b32.xlu0 %v8091, 120
  %v9799 = vpop.permute.xlu0 %9798
  %9800 = vrot.lane.b32.xlu0 %v8883, 120
  %v9801 = vpop.permute.xlu0 %9800
  %9802 = vrot.lane.b32.xlu0 %v8885, 120
  %v9803 = vpop.permute.xlu0 %9802
  %9804 = vrot.lane.b32.xlu0 %v9677, 120
  %v9805 = vpop.permute.xlu0 %9804
  %9806 = vrot.lane.b32.xlu0 %v9679, 120
  %v9807 = vpop.permute.xlu0 %9806
  %v9872 = vadd.f32 %v9606, %v9681
  %v9873 = vadd.f32 %v9607, %v9683
  %v9874 = vadd.f32 %v9608, %v9685
  %v9875 = vadd.f32 %v9609, %v9687
  %v9876 = vadd.f32 %v9610, %v9689
  %v9877 = vadd.f32 %v9611, %v9691
  %v9878 = vadd.f32 %v9612, %v9693
  %v9879 = vadd.f32 %v9613, %v9695
  %v9880 = vadd.f32 %v9614, %v9697
  %v9881 = vadd.f32 %v9615, %v9699
  %v9882 = vadd.f32 %v9616, %v9701
  %v9883 = vadd.f32 %v9617, %v9703
  %v9884 = vadd.f32 %v9618, %v9705
  %v9885 = vadd.f32 %v9619, %v9707
  %v9886 = vadd.f32 %v9620, %v9709
  %v9887 = vadd.f32 %v9621, %v9711
  %v9888 = vadd.f32 %v9622, %v9713
  %v9889 = vadd.f32 %v9623, %v9715
  %v9890 = vadd.f32 %v9624, %v9717
  %v9891 = vadd.f32 %v9625, %v9719
  %v9892 = vadd.f32 %v9626, %v9721
  %v9893 = vadd.f32 %v9627, %v9723
  %v9894 = vadd.f32 %v9628, %v9725
  %v9895 = vadd.f32 %v9629, %v9727
  %v9896 = vadd.f32 %v9630, %v9729
  %v9897 = vadd.f32 %v9631, %v9731
  %v9898 = vadd.f32 %v9632, %v9733
  %v9899 = vadd.f32 %v9633, %v9735
  %v9900 = vadd.f32 %v9634, %v9737
  %v9901 = vadd.f32 %v9635, %v9739
  %v9902 = vadd.f32 %v9636, %v9741
  %v9903 = vadd.f32 %v9637, %v9743
  %v9904 = vadd.f32 %v9638, %v9745
  %v9905 = vadd.f32 %v9639, %v9747
  %v9906 = vadd.f32 %v9640, %v9749
  %v9907 = vadd.f32 %v9641, %v9751
  %v9908 = vadd.f32 %v9642, %v9753
  %v9909 = vadd.f32 %v9643, %v9755
  %v9910 = vadd.f32 %v9644, %v9757
  %v9911 = vadd.f32 %v9645, %v9759
  %v9912 = vadd.f32 %v9646, %v9761
  %v9913 = vadd.f32 %v9647, %v9763
  %v9914 = vadd.f32 %v9648, %v9765
  %v9915 = vadd.f32 %v9649, %v9767
  %v9916 = vadd.f32 %v9650, %v9769
  %v9917 = vadd.f32 %v9651, %v9771
  %v9918 = vadd.f32 %v9652, %v9773
  %v9919 = vadd.f32 %v9653, %v9775
  %v9920 = vadd.f32 %v9654, %v9777
  %v9921 = vadd.f32 %v9655, %v9779
  %v9922 = vadd.f32 %v9656, %v9781
  %v9923 = vadd.f32 %v9657, %v9783
  %v9924 = vadd.f32 %v9658, %v9785
  %v9925 = vadd.f32 %v9659, %v9787
  %v9926 = vadd.f32 %v9660, %v9789
  %v9927 = vadd.f32 %v9661, %v9791
  %v9928 = vadd.f32 %v9662, %v9793
  %v9929 = vadd.f32 %v9663, %v9795
  %v9930 = vadd.f32 %v9664, %v9797
  %v9931 = vadd.f32 %v9665, %v9799
  %v9932 = vadd.f32 %v9666, %v9801
  %v9933 = vadd.f32 %v9667, %v9803
  %v9934 = vadd.f32 %v9668, %v9805
  %v9935 = vadd.f32 %v9669, %v9807
  %v9936 = vld [vmem:[#allocation10] sm:$0x1]
  %v9938 = vlaneseq
  %v9939 = vshrl.u32 %v9938, 7
  %v9940 = vsub.s32 0, %v9939
  %v9941 = vrot.slane %v9936, %v9940
  %v9943 = vadd.f32 %v9872, %v9941
  %v9944 = vadd.f32 %v9873, %v9941
  %v9945 = vadd.f32 %v9874, %v9941
  %v9946 = vadd.f32 %v9875, %v9941
  %v9947 = vadd.f32 %v9876, %v9941
  %v9948 = vadd.f32 %v9877, %v9941
  %v9949 = vadd.f32 %v9878, %v9941
  %v9950 = vadd.f32 %v9879, %v9941
  %v9951 = vadd.f32 %v9880, %v9941
  %v9952 = vadd.f32 %v9881, %v9941
  %v9953 = vadd.f32 %v9882, %v9941
  %v9954 = vadd.f32 %v9883, %v9941
  %v9955 = vadd.f32 %v9884, %v9941
  %v9956 = vadd.f32 %v9885, %v9941
  %v9957 = vadd.f32 %v9886, %v9941
  %v9958 = vadd.f32 %v9887, %v9941
  %v9959 = vadd.f32 %v9888, %v9941
  %v9960 = vadd.f32 %v9889, %v9941
  %v9961 = vadd.f32 %v9890, %v9941
  %v9962 = vadd.f32 %v9891, %v9941
  %v9963 = vadd.f32 %v9892, %v9941
  %v9964 = vadd.f32 %v9893, %v9941
  %v9965 = vadd.f32 %v9894, %v9941
  %v9966 = vadd.f32 %v9895, %v9941
  %v9967 = vadd.f32 %v9896, %v9941
  %v9968 = vadd.f32 %v9897, %v9941
  %v9969 = vadd.f32 %v9898, %v9941
  %v9970 = vadd.f32 %v9899, %v9941
  %v9971 = vadd.f32 %v9900, %v9941
  %v9972 = vadd.f32 %v9901, %v9941
  %v9973 = vadd.f32 %v9902, %v9941
  %v9974 = vadd.f32 %v9903, %v9941
  %v9975 = vadd.f32 %v9904, %v9941
  %v9976 = vadd.f32 %v9905, %v9941
  %v9977 = vadd.f32 %v9906, %v9941
  %v9978 = vadd.f32 %v9907, %v9941
  %v9979 = vadd.f32 %v9908, %v9941
  %v9980 = vadd.f32 %v9909, %v9941
  %v9981 = vadd.f32 %v9910, %v9941
  %v9982 = vadd.f32 %v9911, %v9941
  %v9983 = vadd.f32 %v9912, %v9941
  %v9984 = vadd.f32 %v9913, %v9941
  %v9985 = vadd.f32 %v9914, %v9941
  %v9986 = vadd.f32 %v9915, %v9941
  %v9987 = vadd.f32 %v9916, %v9941
  %v9988 = vadd.f32 %v9917, %v9941
  %v9989 = vadd.f32 %v9918, %v9941
  %v9990 = vadd.f32 %v9919, %v9941
  %v9991 = vadd.f32 %v9920, %v9941
  %v9992 = vadd.f32 %v9921, %v9941
  %v9993 = vadd.f32 %v9922, %v9941
  %v9994 = vadd.f32 %v9923, %v9941
  %v9995 = vadd.f32 %v9924, %v9941
  %v9996 = vadd.f32 %v9925, %v9941
  %v9997 = vadd.f32 %v9926, %v9941
  %v9998 = vadd.f32 %v9927, %v9941
  %v9999 = vadd.f32 %v9928, %v9941
  %v10000 = vadd.f32 %v9929, %v9941
  %v10001 = vadd.f32 %v9930, %v9941
  %v10002 = vadd.f32 %v9931, %v9941
  %v10003 = vadd.f32 %v9932, %v9941
  %v10004 = vadd.f32 %v9933, %v9941
  %v10005 = vadd.f32 %v9934, %v9941
  %v10006 = vadd.f32 %v9935, %v9941
  %v10007 = vand.u32 2147483647, %v9943
  %v10008 = vand.u32 2147483647, %v9944
  %v10009 = vand.u32 2147483647, %v9945
  %v10010 = vand.u32 2147483647, %v9946
  %v10011 = vand.u32 2147483647, %v9947
  %v10012 = vand.u32 2147483647, %v9948
  %v10013 = vand.u32 2147483647, %v9949
  %v10014 = vand.u32 2147483647, %v9950
  %v10015 = vand.u32 2147483647, %v9951
  %v10016 = vand.u32 2147483647, %v9952
  %v10017 = vand.u32 2147483647, %v9953
  %v10018 = vand.u32 2147483647, %v9954
  %v10019 = vand.u32 2147483647, %v9955
  %v10020 = vand.u32 2147483647, %v9956
  %v10021 = vand.u32 2147483647, %v9957
  %v10022 = vand.u32 2147483647, %v9958
  %v10023 = vand.u32 2147483647, %v9959
  %v10024 = vand.u32 2147483647, %v9960
  %v10025 = vand.u32 2147483647, %v9961
  %v10026 = vand.u32 2147483647, %v9962
  %v10027 = vand.u32 2147483647, %v9963
  %v10028 = vand.u32 2147483647, %v9964
  %v10029 = vand.u32 2147483647, %v9965
  %v10030 = vand.u32 2147483647, %v9966
  %v10031 = vand.u32 2147483647, %v9967
  %v10032 = vand.u32 2147483647, %v9968
  %v10033 = vand.u32 2147483647, %v9969
  %v10034 = vand.u32 2147483647, %v9970
  %v10035 = vand.u32 2147483647, %v9971
  %v10036 = vand.u32 2147483647, %v9972
  %v10037 = vand.u32 2147483647, %v9973
  %v10038 = vand.u32 2147483647, %v9974
  %v10039 = vand.u32 2147483647, %v9975
  %v10040 = vand.u32 2147483647, %v9976
  %v10041 = vand.u32 2147483647, %v9977
  %v10042 = vand.u32 2147483647, %v9978
  %v10043 = vand.u32 2147483647, %v9979
  %v10044 = vand.u32 2147483647, %v9980
  %v10045 = vand.u32 2147483647, %v9981
  %v10046 = vand.u32 2147483647, %v9982
  %v10047 = vand.u32 2147483647, %v9983
  %v10048 = vand.u32 2147483647, %v9984
  %v10049 = vand.u32 2147483647, %v9985
  %v10050 = vand.u32 2147483647, %v9986
  %v10051 = vand.u32 2147483647, %v9987
  %v10052 = vand.u32 2147483647, %v9988
  %v10053 = vand.u32 2147483647, %v9989
  %v10054 = vand.u32 2147483647, %v9990
  %v10055 = vand.u32 2147483647, %v9991
  %v10056 = vand.u32 2147483647, %v9992
  %v10057 = vand.u32 2147483647, %v9993
  %v10058 = vand.u32 2147483647, %v9994
  %v10059 = vand.u32 2147483647, %v9995
  %v10060 = vand.u32 2147483647, %v9996
  %v10061 = vand.u32 2147483647, %v9997
  %v10062 = vand.u32 2147483647, %v9998
  %v10063 = vand.u32 2147483647, %v9999
  %v10064 = vand.u32 2147483647, %v10000
  %v10065 = vand.u32 2147483647, %v10001
  %v10066 = vand.u32 2147483647, %v10002
  %v10067 = vand.u32 2147483647, %v10003
  %v10068 = vand.u32 2147483647, %v10004
  %v10069 = vand.u32 2147483647, %v10005
  %v10070 = vand.u32 2147483647, %v10006
  %v10071 = vsub.f32 0.0, %v10007
  %v10072 = vsub.f32 0.0, %v10008
  %v10073 = vsub.f32 0.0, %v10009
  %v10074 = vsub.f32 0.0, %v10010
  %v10075 = vsub.f32 0.0, %v10011
  %v10076 = vsub.f32 0.0, %v10012
  %v10077 = vsub.f32 0.0, %v10013
  %v10078 = vsub.f32 0.0, %v10014
  %v10079 = vsub.f32 0.0, %v10015
  %v10080 = vsub.f32 0.0, %v10016
  %v10081 = vsub.f32 0.0, %v10017
  %v10082 = vsub.f32 0.0, %v10018
  %v10083 = vsub.f32 0.0, %v10019
  %v10084 = vsub.f32 0.0, %v10020
  %v10085 = vsub.f32 0.0, %v10021
  %v10086 = vsub.f32 0.0, %v10022
  %v10087 = vsub.f32 0.0, %v10023
  %v10088 = vsub.f32 0.0, %v10024
  %v10089 = vsub.f32 0.0, %v10025
  %v10090 = vsub.f32 0.0, %v10026
  %v10091 = vsub.f32 0.0, %v10027
  %v10092 = vsub.f32 0.0, %v10028
  %v10093 = vsub.f32 0.0, %v10029
  %v10094 = vsub.f32 0.0, %v10030
  %v10095 = vsub.f32 0.0, %v10031
  %v10096 = vsub.f32 0.0, %v10032
  %v10097 = vsub.f32 0.0, %v10033
  %v10098 = vsub.f32 0.0, %v10034
  %v10099 = vsub.f32 0.0, %v10035
  %v10100 = vsub.f32 0.0, %v10036
  %v10101 = vsub.f32 0.0, %v10037
  %v10102 = vsub.f32 0.0, %v10038
  %v10103 = vsub.f32 0.0, %v10039
  %v10104 = vsub.f32 0.0, %v10040
  %v10105 = vsub.f32 0.0, %v10041
  %v10106 = vsub.f32 0.0, %v10042
  %v10107 = vsub.f32 0.0, %v10043
  %v10108 = vsub.f32 0.0, %v10044
  %v10109 = vsub.f32 0.0, %v10045
  %v10110 = vsub.f32 0.0, %v10046
  %v10111 = vsub.f32 0.0, %v10047
  %v10112 = vsub.f32 0.0, %v10048
  %v10113 = vsub.f32 0.0, %v10049
  %v10114 = vsub.f32 0.0, %v10050
  %v10115 = vsub.f32 0.0, %v10051
  %v10116 = vsub.f32 0.0, %v10052
  %v10117 = vsub.f32 0.0, %v10053
  %v10118 = vsub.f32 0.0, %v10054
  %v10119 = vsub.f32 0.0, %v10055
  %v10120 = vsub.f32 0.0, %v10056
  %v10121 = vsub.f32 0.0, %v10057
  %v10122 = vsub.f32 0.0, %v10058
  %v10123 = vsub.f32 0.0, %v10059
  %v10124 = vsub.f32 0.0, %v10060
  %v10125 = vsub.f32 0.0, %v10061
  %v10126 = vsub.f32 0.0, %v10062
  %v10127 = vsub.f32 0.0, %v10063
  %v10128 = vsub.f32 0.0, %v10064
  %v10129 = vsub.f32 0.0, %v10065
  %v10130 = vsub.f32 0.0, %v10066
  %v10131 = vsub.f32 0.0, %v10067
  %v10132 = vsub.f32 0.0, %v10068
  %v10133 = vsub.f32 0.0, %v10069
  %v10134 = vsub.f32 0.0, %v10070
  %v10135 = vmul.f32 %v10071, 1.442695
  %v10136 = vpow.pop %v10135
  %v10137 = vmul.f32 %v10072, 1.442695
  %v10138 = vpow.pop %v10137
  %v10139 = vmul.f32 %v10073, 1.442695
  %v10140 = vpow.pop %v10139
  %v10141 = vmul.f32 %v10074, 1.442695
  %v10142 = vpow.pop %v10141
  %v10143 = vmul.f32 %v10075, 1.442695
  %v10144 = vpow.pop %v10143
  %v10145 = vmul.f32 %v10076, 1.442695
  %v10146 = vpow.pop %v10145
  %v10147 = vmul.f32 %v10077, 1.442695
  %v10148 = vpow.pop %v10147
  %v10149 = vmul.f32 %v10078, 1.442695
  %v10150 = vpow.pop %v10149
  %v10151 = vmul.f32 %v10079, 1.442695
  %v10152 = vpow.pop %v10151
  %v10153 = vmul.f32 %v10080, 1.442695
  %v10154 = vpow.pop %v10153
  %v10155 = vmul.f32 %v10081, 1.442695
  %v10156 = vpow.pop %v10155
  %v10157 = vmul.f32 %v10082, 1.442695
  %v10158 = vpow.pop %v10157
  %v10159 = vmul.f32 %v10083, 1.442695
  %v10160 = vpow.pop %v10159
  %v10161 = vmul.f32 %v10084, 1.442695
  %v10162 = vpow.pop %v10161
  %v10163 = vmul.f32 %v10085, 1.442695
  %v10164 = vpow.pop %v10163
  %v10165 = vmul.f32 %v10086, 1.442695
  %v10166 = vpow.pop %v10165
  %v10167 = vmul.f32 %v10087, 1.442695
  %v10168 = vpow.pop %v10167
  %v10169 = vmul.f32 %v10088, 1.442695
  %v10170 = vpow.pop %v10169
  %v10171 = vmul.f32 %v10089, 1.442695
  %v10172 = vpow.pop %v10171
  %v10173 = vmul.f32 %v10090, 1.442695
  %v10174 = vpow.pop %v10173
  %v10175 = vmul.f32 %v10091, 1.442695
  %v10176 = vpow.pop %v10175
  %v10177 = vmul.f32 %v10092, 1.442695
  %v10178 = vpow.pop %v10177
  %v10179 = vmul.f32 %v10093, 1.442695
  %v10180 = vpow.pop %v10179
  %v10181 = vmul.f32 %v10094, 1.442695
  %v10182 = vpow.pop %v10181
  %v10183 = vmul.f32 %v10095, 1.442695
  %v10184 = vpow.pop %v10183
  %v10185 = vmul.f32 %v10096, 1.442695
  %v10186 = vpow.pop %v10185
  %v10187 = vmul.f32 %v10097, 1.442695
  %v10188 = vpow.pop %v10187
  %v10189 = vmul.f32 %v10098, 1.442695
  %v10190 = vpow.pop %v10189
  %v10191 = vmul.f32 %v10099, 1.442695
  %v10192 = vpow.pop %v10191
  %v10193 = vmul.f32 %v10100, 1.442695
  %v10194 = vpow.pop %v10193
  %v10195 = vmul.f32 %v10101, 1.442695
  %v10196 = vpow.pop %v10195
  %v10197 = vmul.f32 %v10102, 1.442695
  %v10198 = vpow.pop %v10197
  %v10199 = vmul.f32 %v10103, 1.442695
  %v10200 = vpow.pop %v10199
  %v10201 = vmul.f32 %v10104, 1.442695
  %v10202 = vpow.pop %v10201
  %v10203 = vmul.f32 %v10105, 1.442695
  %v10204 = vpow.pop %v10203
  %v10205 = vmul.f32 %v10106, 1.442695
  %v10206 = vpow.pop %v10205
  %v10207 = vmul.f32 %v10107, 1.442695
  %v10208 = vpow.pop %v10207
  %v10209 = vmul.f32 %v10108, 1.442695
  %v10210 = vpow.pop %v10209
  %v10211 = vmul.f32 %v10109, 1.442695
  %v10212 = vpow.pop %v10211
  %v10213 = vmul.f32 %v10110, 1.442695
  %v10214 = vpow.pop %v10213
  %v10215 = vmul.f32 %v10111, 1.442695
  %v10216 = vpow.pop %v10215
  %v10217 = vmul.f32 %v10112, 1.442695
  %v10218 = vpow.pop %v10217
  %v10219 = vmul.f32 %v10113, 1.442695
  %v10220 = vpow.pop %v10219
  %v10221 = vmul.f32 %v10114, 1.442695
  %v10222 = vpow.pop %v10221
  %v10223 = vmul.f32 %v10115, 1.442695
  %v10224 = vpow.pop %v10223
  %v10225 = vmul.f32 %v10116, 1.442695
  %v10226 = vpow.pop %v10225
  %v10227 = vmul.f32 %v10117, 1.442695
  %v10228 = vpow.pop %v10227
  %v10229 = vmul.f32 %v10118, 1.442695
  %v10230 = vpow.pop %v10229
  %v10231 = vmul.f32 %v10119, 1.442695
  %v10232 = vpow.pop %v10231
  %v10233 = vmul.f32 %v10120, 1.442695
  %v10234 = vpow.pop %v10233
  %v10235 = vmul.f32 %v10121, 1.442695
  %v10236 = vpow.pop %v10235
  %v10237 = vmul.f32 %v10122, 1.442695
  %v10238 = vpow.pop %v10237
  %v10239 = vmul.f32 %v10123, 1.442695
  %v10240 = vpow.pop %v10239
  %v10241 = vmul.f32 %v10124, 1.442695
  %v10242 = vpow.pop %v10241
  %v10243 = vmul.f32 %v10125, 1.442695
  %v10244 = vpow.pop %v10243
  %v10245 = vmul.f32 %v10126, 1.442695
  %v10246 = vpow.pop %v10245
  %v10247 = vmul.f32 %v10127, 1.442695
  %v10248 = vpow.pop %v10247
  %v10249 = vmul.f32 %v10128, 1.442695
  %v10250 = vpow.pop %v10249
  %v10251 = vmul.f32 %v10129, 1.442695
  %v10252 = vpow.pop %v10251
  %v10253 = vmul.f32 %v10130, 1.442695
  %v10254 = vpow.pop %v10253
  %v10255 = vmul.f32 %v10131, 1.442695
  %v10256 = vpow.pop %v10255
  %v10257 = vmul.f32 %v10132, 1.442695
  %v10258 = vpow.pop %v10257
  %v10259 = vmul.f32 %v10133, 1.442695
  %v10260 = vpow.pop %v10259
  %v10261 = vmul.f32 %v10134, 1.442695
  %v10262 = vpow.pop %v10261
  %v10263 = vadd.f32 %v10136, 1.0
  %v10264 = vadd.f32 %v10138, 1.0
  %v10265 = vadd.f32 %v10140, 1.0
  %v10266 = vadd.f32 %v10142, 1.0
  %v10267 = vadd.f32 %v10144, 1.0
  %v10268 = vadd.f32 %v10146, 1.0
  %v10269 = vadd.f32 %v10148, 1.0
  %v10270 = vadd.f32 %v10150, 1.0
  %v10271 = vadd.f32 %v10152, 1.0
  %v10272 = vadd.f32 %v10154, 1.0
  %v10273 = vadd.f32 %v10156, 1.0
  %v10274 = vadd.f32 %v10158, 1.0
  %v10275 = vadd.f32 %v10160, 1.0
  %v10276 = vadd.f32 %v10162, 1.0
  %v10277 = vadd.f32 %v10164, 1.0
  %v10278 = vadd.f32 %v10166, 1.0
  %v10279 = vadd.f32 %v10168, 1.0
  %v10280 = vadd.f32 %v10170, 1.0
  %v10281 = vadd.f32 %v10172, 1.0
  %v10282 = vadd.f32 %v10174, 1.0
  %v10283 = vadd.f32 %v10176, 1.0
  %v10284 = vadd.f32 %v10178, 1.0
  %v10285 = vadd.f32 %v10180, 1.0
  %v10286 = vadd.f32 %v10182, 1.0
  %v10287 = vadd.f32 %v10184, 1.0
  %v10288 = vadd.f32 %v10186, 1.0
  %v10289 = vadd.f32 %v10188, 1.0
  %v10290 = vadd.f32 %v10190, 1.0
  %v10291 = vadd.f32 %v10192, 1.0
  %v10292 = vadd.f32 %v10194, 1.0
  %v10293 = vadd.f32 %v10196, 1.0
  %v10294 = vadd.f32 %v10198, 1.0
  %v10295 = vadd.f32 %v10200, 1.0
  %v10296 = vadd.f32 %v10202, 1.0
  %v10297 = vadd.f32 %v10204, 1.0
  %v10298 = vadd.f32 %v10206, 1.0
  %v10299 = vadd.f32 %v10208, 1.0
  %v10300 = vadd.f32 %v10210, 1.0
  %v10301 = vadd.f32 %v10212, 1.0
  %v10302 = vadd.f32 %v10214, 1.0
  %v10303 = vadd.f32 %v10216, 1.0
  %v10304 = vadd.f32 %v10218, 1.0
  %v10305 = vadd.f32 %v10220, 1.0
  %v10306 = vadd.f32 %v10222, 1.0
  %v10307 = vadd.f32 %v10224, 1.0
  %v10308 = vadd.f32 %v10226, 1.0
  %v10309 = vadd.f32 %v10228, 1.0
  %v10310 = vadd.f32 %v10230, 1.0
  %v10311 = vadd.f32 %v10232, 1.0
  %v10312 = vadd.f32 %v10234, 1.0
  %v10313 = vadd.f32 %v10236, 1.0
  %v10314 = vadd.f32 %v10238, 1.0
  %v10315 = vadd.f32 %v10240, 1.0
  %v10316 = vadd.f32 %v10242, 1.0
  %v10317 = vadd.f32 %v10244, 1.0
  %v10318 = vadd.f32 %v10246, 1.0
  %v10319 = vadd.f32 %v10248, 1.0
  %v10320 = vadd.f32 %v10250, 1.0
  %v10321 = vadd.f32 %v10252, 1.0
  %v10322 = vadd.f32 %v10254, 1.0
  %v10323 = vadd.f32 %v10256, 1.0
  %v10324 = vadd.f32 %v10258, 1.0
  %v10325 = vadd.f32 %v10260, 1.0
  %v10326 = vadd.f32 %v10262, 1.0
  %v10327 = vrcp.pop %v10263
  %v10328 = vmul.f32 1.0, %v10327
  %v10329 = vrcp.pop %v10264
  %v10330 = vmul.f32 1.0, %v10329
  %v10331 = vrcp.pop %v10265
  %v10332 = vmul.f32 1.0, %v10331
  %v10333 = vrcp.pop %v10266
  %v10334 = vmul.f32 1.0, %v10333
  %v10335 = vrcp.pop %v10267
  %v10336 = vmul.f32 1.0, %v10335
  %v10337 = vrcp.pop %v10268
  %v10338 = vmul.f32 1.0, %v10337
  %v10339 = vrcp.pop %v10269
  %v10340 = vmul.f32 1.0, %v10339
  %v10341 = vrcp.pop %v10270
  %v10342 = vmul.f32 1.0, %v10341
  %v10343 = vrcp.pop %v10271
  %v10344 = vmul.f32 1.0, %v10343
  %v10345 = vrcp.pop %v10272
  %v10346 = vmul.f32 1.0, %v10345
  %v10347 = vrcp.pop %v10273
  %v10348 = vmul.f32 1.0, %v10347
  %v10349 = vrcp.pop %v10274
  %v10350 = vmul.f32 1.0, %v10349
  %v10351 = vrcp.pop %v10275
  %v10352 = vmul.f32 1.0, %v10351
  %v10353 = vrcp.pop %v10276
  %v10354 = vmul.f32 1.0, %v10353
  %v10355 = vrcp.pop %v10277
  %v10356 = vmul.f32 1.0, %v10355
  %v10357 = vrcp.pop %v10278
  %v10358 = vmul.f32 1.0, %v10357
  %v10359 = vrcp.pop %v10279
  %v10360 = vmul.f32 1.0, %v10359
  %v10361 = vrcp.pop %v10280
  %v10362 = vmul.f32 1.0, %v10361
  %v10363 = vrcp.pop %v10281
  %v10364 = vmul.f32 1.0, %v10363
  %v10365 = vrcp.pop %v10282
  %v10366 = vmul.f32 1.0, %v10365
  %v10367 = vrcp.pop %v10283
  %v10368 = vmul.f32 1.0, %v10367
  %v10369 = vrcp.pop %v10284
  %v10370 = vmul.f32 1.0, %v10369
  %v10371 = vrcp.pop %v10285
  %v10372 = vmul.f32 1.0, %v10371
  %v10373 = vrcp.pop %v10286
  %v10374 = vmul.f32 1.0, %v10373
  %v10375 = vrcp.pop %v10287
  %v10376 = vmul.f32 1.0, %v10375
  %v10377 = vrcp.pop %v10288
  %v10378 = vmul.f32 1.0, %v10377
  %v10379 = vrcp.pop %v10289
  %v10380 = vmul.f32 1.0, %v10379
  %v10381 = vrcp.pop %v10290
  %v10382 = vmul.f32 1.0, %v10381
  %v10383 = vrcp.pop %v10291
  %v10384 = vmul.f32 1.0, %v10383
  %v10385 = vrcp.pop %v10292
  %v10386 = vmul.f32 1.0, %v10385
  %v10387 = vrcp.pop %v10293
  %v10388 = vmul.f32 1.0, %v10387
  %v10389 = vrcp.pop %v10294
  %v10390 = vmul.f32 1.0, %v10389
  %v10391 = vrcp.pop %v10295
  %v10392 = vmul.f32 1.0, %v10391
  %v10393 = vrcp.pop %v10296
  %v10394 = vmul.f32 1.0, %v10393
  %v10395 = vrcp.pop %v10297
  %v10396 = vmul.f32 1.0, %v10395
  %v10397 = vrcp.pop %v10298
  %v10398 = vmul.f32 1.0, %v10397
  %v10399 = vrcp.pop %v10299
  %v10400 = vmul.f32 1.0, %v10399
  %v10401 = vrcp.pop %v10300
  %v10402 = vmul.f32 1.0, %v10401
  %v10403 = vrcp.pop %v10301
  %v10404 = vmul.f32 1.0, %v10403
  %v10405 = vrcp.pop %v10302
  %v10406 = vmul.f32 1.0, %v10405
  %v10407 = vrcp.pop %v10303
  %v10408 = vmul.f32 1.0, %v10407
  %v10409 = vrcp.pop %v10304
  %v10410 = vmul.f32 1.0, %v10409
  %v10411 = vrcp.pop %v10305
  %v10412 = vmul.f32 1.0, %v10411
  %v10413 = vrcp.pop %v10306
  %v10414 = vmul.f32 1.0, %v10413
  %v10415 = vrcp.pop %v10307
  %v10416 = vmul.f32 1.0, %v10415
  %v10417 = vrcp.pop %v10308
  %v10418 = vmul.f32 1.0, %v10417
  %v10419 = vrcp.pop %v10309
  %v10420 = vmul.f32 1.0, %v10419
  %v10421 = vrcp.pop %v10310
  %v10422 = vmul.f32 1.0, %v10421
  %v10423 = vrcp.pop %v10311
  %v10424 = vmul.f32 1.0, %v10423
  %v10425 = vrcp.pop %v10312
  %v10426 = vmul.f32 1.0, %v10425
  %v10427 = vrcp.pop %v10313
  %v10428 = vmul.f32 1.0, %v10427
  %v10429 = vrcp.pop %v10314
  %v10430 = vmul.f32 1.0, %v10429
  %v10431 = vrcp.pop %v10315
  %v10432 = vmul.f32 1.0, %v10431
  %v10433 = vrcp.pop %v10316
  %v10434 = vmul.f32 1.0, %v10433
  %v10435 = vrcp.pop %v10317
  %v10436 = vmul.f32 1.0, %v10435
  %v10437 = vrcp.pop %v10318
  %v10438 = vmul.f32 1.0, %v10437
  %v10439 = vrcp.pop %v10319
  %v10440 = vmul.f32 1.0, %v10439
  %v10441 = vrcp.pop %v10320
  %v10442 = vmul.f32 1.0, %v10441
  %v10443 = vrcp.pop %v10321
  %v10444 = vmul.f32 1.0, %v10443
  %v10445 = vrcp.pop %v10322
  %v10446 = vmul.f32 1.0, %v10445
  %v10447 = vrcp.pop %v10323
  %v10448 = vmul.f32 1.0, %v10447
  %v10449 = vrcp.pop %v10324
  %v10450 = vmul.f32 1.0, %v10449
  %v10451 = vrcp.pop %v10325
  %v10452 = vmul.f32 1.0, %v10451
  %v10453 = vrcp.pop %v10326
  %v10454 = vmul.f32 1.0, %v10453
  %vm10455 = vcmp.ge.f32.partialorder %v9943, 0.0
  %vm10456 = vcmp.ge.f32.partialorder %v9944, 0.0
  %vm10457 = vcmp.ge.f32.partialorder %v9945, 0.0
  %vm10458 = vcmp.ge.f32.partialorder %v9946, 0.0
  %vm10459 = vcmp.ge.f32.partialorder %v9947, 0.0
  %vm10460 = vcmp.ge.f32.partialorder %v9948, 0.0
  %vm10461 = vcmp.ge.f32.partialorder %v9949, 0.0
  %vm10462 = vcmp.ge.f32.partialorder %v9950, 0.0
  %vm10463 = vcmp.ge.f32.partialorder %v9951, 0.0
  %vm10464 = vcmp.ge.f32.partialorder %v9952, 0.0
  %vm10465 = vcmp.ge.f32.partialorder %v9953, 0.0
  %vm10466 = vcmp.ge.f32.partialorder %v9954, 0.0
  %vm10467 = vcmp.ge.f32.partialorder %v9955, 0.0
  %vm10468 = vcmp.ge.f32.partialorder %v9956, 0.0
  %vm10469 = vcmp.ge.f32.partialorder %v9957, 0.0
  %vm10470 = vcmp.ge.f32.partialorder %v9958, 0.0
  %vm10471 = vcmp.ge.f32.partialorder %v9959, 0.0
  %vm10472 = vcmp.ge.f32.partialorder %v9960, 0.0
  %vm10473 = vcmp.ge.f32.partialorder %v9961, 0.0
  %vm10474 = vcmp.ge.f32.partialorder %v9962, 0.0
  %vm10475 = vcmp.ge.f32.partialorder %v9963, 0.0
  %vm10476 = vcmp.ge.f32.partialorder %v9964, 0.0
  %vm10477 = vcmp.ge.f32.partialorder %v9965, 0.0
  %vm10478 = vcmp.ge.f32.partialorder %v9966, 0.0
  %vm10479 = vcmp.ge.f32.partialorder %v9967, 0.0
  %vm10480 = vcmp.ge.f32.partialorder %v9968, 0.0
  %vm10481 = vcmp.ge.f32.partialorder %v9969, 0.0
  %vm10482 = vcmp.ge.f32.partialorder %v9970, 0.0
  %vm10483 = vcmp.ge.f32.partialorder %v9971, 0.0
  %vm10484 = vcmp.ge.f32.partialorder %v9972, 0.0
  %vm10485 = vcmp.ge.f32.partialorder %v9973, 0.0
  %vm10486 = vcmp.ge.f32.partialorder %v9974, 0.0
  %vm10487 = vcmp.ge.f32.partialorder %v9975, 0.0
  %vm10488 = vcmp.ge.f32.partialorder %v9976, 0.0
  %vm10489 = vcmp.ge.f32.partialorder %v9977, 0.0
  %vm10490 = vcmp.ge.f32.partialorder %v9978, 0.0
  %vm10491 = vcmp.ge.f32.partialorder %v9979, 0.0
  %vm10492 = vcmp.ge.f32.partialorder %v9980, 0.0
  %vm10493 = vcmp.ge.f32.partialorder %v9981, 0.0
  %vm10494 = vcmp.ge.f32.partialorder %v9982, 0.0
  %vm10495 = vcmp.ge.f32.partialorder %v9983, 0.0
  %vm10496 = vcmp.ge.f32.partialorder %v9984, 0.0
  %vm10497 = vcmp.ge.f32.partialorder %v9985, 0.0
  %vm10498 = vcmp.ge.f32.partialorder %v9986, 0.0
  %vm10499 = vcmp.ge.f32.partialorder %v9987, 0.0
  %vm10500 = vcmp.ge.f32.partialorder %v9988, 0.0
  %vm10501 = vcmp.ge.f32.partialorder %v9989, 0.0
  %vm10502 = vcmp.ge.f32.partialorder %v9990, 0.0
  %vm10503 = vcmp.ge.f32.partialorder %v9991, 0.0
  %vm10504 = vcmp.ge.f32.partialorder %v9992, 0.0
  %vm10505 = vcmp.ge.f32.partialorder %v9993, 0.0
  %vm10506 = vcmp.ge.f32.partialorder %v9994, 0.0
  %vm10507 = vcmp.ge.f32.partialorder %v9995, 0.0
  %vm10508 = vcmp.ge.f32.partialorder %v9996, 0.0
  %vm10509 = vcmp.ge.f32.partialorder %v9997, 0.0
  %vm10510 = vcmp.ge.f32.partialorder %v9998, 0.0
  %vm10511 = vcmp.ge.f32.partialorder %v9999, 0.0
  %vm10512 = vcmp.ge.f32.partialorder %v10000, 0.0
  %vm10513 = vcmp.ge.f32.partialorder %v10001, 0.0
  %vm10514 = vcmp.ge.f32.partialorder %v10002, 0.0
  %vm10515 = vcmp.ge.f32.partialorder %v10003, 0.0
  %vm10516 = vcmp.ge.f32.partialorder %v10004, 0.0
  %vm10517 = vcmp.ge.f32.partialorder %v10005, 0.0
  %vm10518 = vcmp.ge.f32.partialorder %v10006, 0.0
  %v10519 = vmul.f32 %v10136, %v10328
  %v10520 = vmul.f32 %v10138, %v10330
  %v10521 = vmul.f32 %v10140, %v10332
  %v10522 = vmul.f32 %v10142, %v10334
  %v10523 = vmul.f32 %v10144, %v10336
  %v10524 = vmul.f32 %v10146, %v10338
  %v10525 = vmul.f32 %v10148, %v10340
  %v10526 = vmul.f32 %v10150, %v10342
  %v10527 = vmul.f32 %v10152, %v10344
  %v10528 = vmul.f32 %v10154, %v10346
  %v10529 = vmul.f32 %v10156, %v10348
  %v10530 = vmul.f32 %v10158, %v10350
  %v10531 = vmul.f32 %v10160, %v10352
  %v10532 = vmul.f32 %v10162, %v10354
  %v10533 = vmul.f32 %v10164, %v10356
  %v10534 = vmul.f32 %v10166, %v10358
  %v10535 = vmul.f32 %v10168, %v10360
  %v10536 = vmul.f32 %v10170, %v10362
  %v10537 = vmul.f32 %v10172, %v10364
  %v10538 = vmul.f32 %v10174, %v10366
  %v10539 = vmul.f32 %v10176, %v10368
  %v10540 = vmul.f32 %v10178, %v10370
  %v10541 = vmul.f32 %v10180, %v10372
  %v10542 = vmul.f32 %v10182, %v10374
  %v10543 = vmul.f32 %v10184, %v10376
  %v10544 = vmul.f32 %v10186, %v10378
  %v10545 = vmul.f32 %v10188, %v10380
  %v10546 = vmul.f32 %v10190, %v10382
  %v10547 = vmul.f32 %v10192, %v10384
  %v10548 = vmul.f32 %v10194, %v10386
  %v10549 = vmul.f32 %v10196, %v10388
  %v10550 = vmul.f32 %v10198, %v10390
  %v10551 = vmul.f32 %v10200, %v10392
  %v10552 = vmul.f32 %v10202, %v10394
  %v10553 = vmul.f32 %v10204, %v10396
  %v10554 = vmul.f32 %v10206, %v10398
  %v10555 = vmul.f32 %v10208, %v10400
  %v10556 = vmul.f32 %v10210, %v10402
  %v10557 = vmul.f32 %v10212, %v10404
  %v10558 = vmul.f32 %v10214, %v10406
  %v10559 = vmul.f32 %v10216, %v10408
  %v10560 = vmul.f32 %v10218, %v10410
  %v10561 = vmul.f32 %v10220, %v10412
  %v10562 = vmul.f32 %v10222, %v10414
  %v10563 = vmul.f32 %v10224, %v10416
  %v10564 = vmul.f32 %v10226, %v10418
  %v10565 = vmul.f32 %v10228, %v10420
  %v10566 = vmul.f32 %v10230, %v10422
  %v10567 = vmul.f32 %v10232, %v10424
  %v10568 = vmul.f32 %v10234, %v10426
  %v10569 = vmul.f32 %v10236, %v10428
  %v10570 = vmul.f32 %v10238, %v10430
  %v10571 = vmul.f32 %v10240, %v10432
  %v10572 = vmul.f32 %v10242, %v10434
  %v10573 = vmul.f32 %v10244, %v10436
  %v10574 = vmul.f32 %v10246, %v10438
  %v10575 = vmul.f32 %v10248, %v10440
  %v10576 = vmul.f32 %v10250, %v10442
  %v10577 = vmul.f32 %v10252, %v10444
  %v10578 = vmul.f32 %v10254, %v10446
  %v10579 = vmul.f32 %v10256, %v10448
  %v10580 = vmul.f32 %v10258, %v10450
  %v10581 = vmul.f32 %v10260, %v10452
  %v10582 = vmul.f32 %v10262, %v10454
  %v10583 = vsel %vm10455, %v10328, %v10519
  %v10584 = vsel %vm10456, %v10330, %v10520
  %v10585 = vsel %vm10457, %v10332, %v10521
  %v10586 = vsel %vm10458, %v10334, %v10522
  %v10587 = vsel %vm10459, %v10336, %v10523
  %v10588 = vsel %vm10460, %v10338, %v10524
  %v10589 = vsel %vm10461, %v10340, %v10525
  %v10590 = vsel %vm10462, %v10342, %v10526
  %v10591 = vsel %vm10463, %v10344, %v10527
  %v10592 = vsel %vm10464, %v10346, %v10528
  %v10593 = vsel %vm10465, %v10348, %v10529
  %v10594 = vsel %vm10466, %v10350, %v10530
  %v10595 = vsel %vm10467, %v10352, %v10531
  %v10596 = vsel %vm10468, %v10354, %v10532
  %v10597 = vsel %vm10469, %v10356, %v10533
  %v10598 = vsel %vm10470, %v10358, %v10534
  %v10599 = vsel %vm10471, %v10360, %v10535
  %v10600 = vsel %vm10472, %v10362, %v10536
  %v10601 = vsel %vm10473, %v10364, %v10537
  %v10602 = vsel %vm10474, %v10366, %v10538
  %v10603 = vsel %vm10475, %v10368, %v10539
  %v10604 = vsel %vm10476, %v10370, %v10540
  %v10605 = vsel %vm10477, %v10372, %v10541
  %v10606 = vsel %vm10478, %v10374, %v10542
  %v10607 = vsel %vm10479, %v10376, %v10543
  %v10608 = vsel %vm10480, %v10378, %v10544
  %v10609 = vsel %vm10481, %v10380, %v10545
  %v10610 = vsel %vm10482, %v10382, %v10546
  %v10611 = vsel %vm10483, %v10384, %v10547
  %v10612 = vsel %vm10484, %v10386, %v10548
  %v10613 = vsel %vm10485, %v10388, %v10549
  %v10614 = vsel %vm10486, %v10390, %v10550
  %v10615 = vsel %vm10487, %v10392, %v10551
  %v10616 = vsel %vm10488, %v10394, %v10552
  %v10617 = vsel %vm10489, %v10396, %v10553
  %v10618 = vsel %vm10490, %v10398, %v10554
  %v10619 = vsel %vm10491, %v10400, %v10555
  %v10620 = vsel %vm10492, %v10402, %v10556
  %v10621 = vsel %vm10493, %v10404, %v10557
  %v10622 = vsel %vm10494, %v10406, %v10558
  %v10623 = vsel %vm10495, %v10408, %v10559
  %v10624 = vsel %vm10496, %v10410, %v10560
  %v10625 = vsel %vm10497, %v10412, %v10561
  %v10626 = vsel %vm10498, %v10414, %v10562
  %v10627 = vsel %vm10499, %v10416, %v10563
  %v10628 = vsel %vm10500, %v10418, %v10564
  %v10629 = vsel %vm10501, %v10420, %v10565
  %v10630 = vsel %vm10502, %v10422, %v10566
  %v10631 = vsel %vm10503, %v10424, %v10567
  %v10632 = vsel %vm10504, %v10426, %v10568
  %v10633 = vsel %vm10505, %v10428, %v10569
  %v10634 = vsel %vm10506, %v10430, %v10570
  %v10635 = vsel %vm10507, %v10432, %v10571
  %v10636 = vsel %vm10508, %v10434, %v10572
  %v10637 = vsel %vm10509, %v10436, %v10573
  %v10638 = vsel %vm10510, %v10438, %v10574
  %v10639 = vsel %vm10511, %v10440, %v10575
  %v10640 = vsel %vm10512, %v10442, %v10576
  %v10641 = vsel %vm10513, %v10444, %v10577
  %v10642 = vsel %vm10514, %v10446, %v10578
  %v10643 = vsel %vm10515, %v10448, %v10579
  %v10644 = vsel %vm10516, %v10450, %v10580
  %v10645 = vsel %vm10517, %v10452, %v10581
  %v10646 = vsel %vm10518, %v10454, %v10582
  %vm10647 = vcmask 7168
  %10648 = vst.msk [vmem:[%s13] sm:$0xff] %vm10647, %v10583
  %10649 = vst.msk [vmem:[%s13 + $0x8] sm:$0xff] %vm10647, %v10584
  %s10650 = scalar_lea.vmem %s13, 16
  %10651 = vst.msk [vmem:[%s10650] sm:$0xff] %vm10647, %v10585
  %10652 = vst.msk [vmem:[%s10650 + $0x8] sm:$0xff] %vm10647, %v10586
  %s10653 = scalar_lea.vmem %s13, 32
  %10654 = vst.msk [vmem:[%s10653] sm:$0xff] %vm10647, %v10587
  %10655 = vst.msk [vmem:[%s10653 + $0x8] sm:$0xff] %vm10647, %v10588
  %s10656 = scalar_lea.vmem %s13, 48
  %10657 = vst.msk [vmem:[%s10656] sm:$0xff] %vm10647, %v10589
  %10658 = vst.msk [vmem:[%s10656 + $0x8] sm:$0xff] %vm10647, %v10590
  %s10659 = scalar_lea.vmem %s13, 64
  %10660 = vst.msk [vmem:[%s10659] sm:$0xff] %vm10647, %v10591
  %10661 = vst.msk [vmem:[%s10659 + $0x8] sm:$0xff] %vm10647, %v10592
  %s10662 = scalar_lea.vmem %s13, 80
  %10663 = vst.msk [vmem:[%s10662] sm:$0xff] %vm10647, %v10593
  %10664 = vst.msk [vmem:[%s10662 + $0x8] sm:$0xff] %vm10647, %v10594
  %s10665 = scalar_lea.vmem %s13, 96
  %10666 = vst.msk [vmem:[%s10665] sm:$0xff] %vm10647, %v10595
  %10667 = vst.msk [vmem:[%s10665 + $0x8] sm:$0xff] %vm10647, %v10596
  %s10668 = scalar_lea.vmem %s13, 112
  %10669 = vst.msk [vmem:[%s10668] sm:$0xff] %vm10647, %v10597
  %10670 = vst.msk [vmem:[%s10668 + $0x8] sm:$0xff] %vm10647, %v10598
  %s10671 = scalar_lea.vmem %s13, 128
  %10672 = vst.msk [vmem:[%s10671] sm:$0xff] %vm10647, %v10599
  %10673 = vst.msk [vmem:[%s10671 + $0x8] sm:$0xff] %vm10647, %v10600
  %s10674 = scalar_lea.vmem %s13, 144
  %10675 = vst.msk [vmem:[%s10674] sm:$0xff] %vm10647, %v10601
  %10676 = vst.msk [vmem:[%s10674 + $0x8] sm:$0xff] %vm10647, %v10602
  %s10677 = scalar_lea.vmem %s13, 160
  %10678 = vst.msk [vmem:[%s10677] sm:$0xff] %vm10647, %v10603
  %10679 = vst.msk [vmem:[%s10677 + $0x8] sm:$0xff] %vm10647, %v10604
  %s10680 = scalar_lea.vmem %s13, 176
  %10681 = vst.msk [vmem:[%s10680] sm:$0xff] %vm10647, %v10605
  %10682 = vst.msk [vmem:[%s10680 + $0x8] sm:$0xff] %vm10647, %v10606
  %s10683 = scalar_lea.vmem %s13, 192
  %10684 = vst.msk [vmem:[%s10683] sm:$0xff] %vm10647, %v10607
  %10685 = vst.msk [vmem:[%s10683 + $0x8] sm:$0xff] %vm10647, %v10608
  %s10686 = scalar_lea.vmem %s13, 208
  %10687 = vst.msk [vmem:[%s10686] sm:$0xff] %vm10647, %v10609
  %10688 = vst.msk [vmem:[%s10686 + $0x8] sm:$0xff] %vm10647, %v10610
  %s10689 = scalar_lea.vmem %s13, 224
  %10690 = vst.msk [vmem:[%s10689] sm:$0xff] %vm10647, %v10611
  %10691 = vst.msk [vmem:[%s10689 + $0x8] sm:$0xff] %vm10647, %v10612
  %s10692 = scalar_lea.vmem %s13, 240
  %10693 = vst.msk [vmem:[%s10692] sm:$0xff] %vm10647, %v10613
  %10694 = vst.msk [vmem:[%s10692 + $0x8] sm:$0xff] %vm10647, %v10614
  %s10695 = scalar_lea.vmem %s13, 256
  %10696 = vst.msk [vmem:[%s10695] sm:$0xff] %vm10647, %v10615
  %10697 = vst.msk [vmem:[%s10695 + $0x8] sm:$0xff] %vm10647, %v10616
  %s10698 = scalar_lea.vmem %s13, 272
  %10699 = vst.msk [vmem:[%s10698] sm:$0xff] %vm10647, %v10617
  %10700 = vst.msk [vmem:[%s10698 + $0x8] sm:$0xff] %vm10647, %v10618
  %s10701 = scalar_lea.vmem %s13, 288
  %10702 = vst.msk [vmem:[%s10701] sm:$0xff] %vm10647, %v10619
  %10703 = vst.msk [vmem:[%s10701 + $0x8] sm:$0xff] %vm10647, %v10620
  %s10704 = scalar_lea.vmem %s13, 304
  %10705 = vst.msk [vmem:[%s10704] sm:$0xff] %vm10647, %v10621
  %10706 = vst.msk [vmem:[%s10704 + $0x8] sm:$0xff] %vm10647, %v10622
  %s10707 = scalar_lea.vmem %s13, 320
  %10708 = vst.msk [vmem:[%s10707] sm:$0xff] %vm10647, %v10623
  %10709 = vst.msk [vmem:[%s10707 + $0x8] sm:$0xff] %vm10647, %v10624
  %s10710 = scalar_lea.vmem %s13, 336
  %10711 = vst.msk [vmem:[%s10710] sm:$0xff] %vm10647, %v10625
  %10712 = vst.msk [vmem:[%s10710 + $0x8] sm:$0xff] %vm10647, %v10626
  %s10713 = scalar_lea.vmem %s13, 352
  %10714 = vst.msk [vmem:[%s10713] sm:$0xff] %vm10647, %v10627
  %10715 = vst.msk [vmem:[%s10713 + $0x8] sm:$0xff] %vm10647, %v10628
  %s10716 = scalar_lea.vmem %s13, 368
  %10717 = vst.msk [vmem:[%s10716] sm:$0xff] %vm10647, %v10629
  %10718 = vst.msk [vmem:[%s10716 + $0x8] sm:$0xff] %vm10647, %v10630
  %s10719 = scalar_lea.vmem %s13, 384
  %10720 = vst.msk [vmem:[%s10719] sm:$0xff] %vm10647, %v10631
  %10721 = vst.msk [vmem:[%s10719 + $0x8] sm:$0xff] %vm10647, %v10632
  %s10722 = scalar_lea.vmem %s13, 400
  %10723 = vst.msk [vmem:[%s10722] sm:$0xff] %vm10647, %v10633
  %10724 = vst.msk [vmem:[%s10722 + $0x8] sm:$0xff] %vm10647, %v10634
  %s10725 = scalar_lea.vmem %s13, 416
  %10726 = vst.msk [vmem:[%s10725] sm:$0xff] %vm10647, %v10635
  %10727 = vst.msk [vmem:[%s10725 + $0x8] sm:$0xff] %vm10647, %v10636
  %s10728 = scalar_lea.vmem %s13, 432
  %10729 = vst.msk [vmem:[%s10728] sm:$0xff] %vm10647, %v10637
  %10730 = vst.msk [vmem:[%s10728 + $0x8] sm:$0xff] %vm10647, %v10638
  %s10731 = scalar_lea.vmem %s13, 448
  %10732 = vst.msk [vmem:[%s10731] sm:$0xff] %vm10647, %v10639
  %10733 = vst.msk [vmem:[%s10731 + $0x8] sm:$0xff] %vm10647, %v10640
  %s10734 = scalar_lea.vmem %s13, 464
  %10735 = vst.msk [vmem:[%s10734] sm:$0xff] %vm10647, %v10641
  %10736 = vst.msk [vmem:[%s10734 + $0x8] sm:$0xff] %vm10647, %v10642
  %s10737 = scalar_lea.vmem %s13, 480
  %10738 = vst.msk [vmem:[%s10737] sm:$0xff] %vm10647, %v10643
  %10739 = vst.msk [vmem:[%s10737 + $0x8] sm:$0xff] %vm10647, %v10644
  %s10740 = scalar_lea.vmem %s13, 496
  %10741 = vst.msk [vmem:[%s10740] sm:$0xff] %vm10647, %v10645
  %10742 = vst.msk [vmem:[%s10740 + $0x8] sm:$0xff] %vm10647, %v10646
  // Predicated region
  $region54: #{autoencoder_forward.1} parent=0 // pred_check
    _
  $region55: #{autoencoder_forward.1} parent=0 // pred_check_branch
    %10744 = sbr.rel (0) target = $region57
  $region56: #{autoencoder_forward.1} parent=0 // pred_region
    _
  $region57: #{autoencoder_forward.1} parent=0 // pred_fallthru
    _
  // Predicated region
  $region58: #{autoencoder_forward.1} parent=0 // pred_check
    _
  $region59: #{autoencoder_forward.1} parent=0 // pred_check_branch
    %10746 = sbr.rel (0) target = $region61
  $region60: #{autoencoder_forward.1} parent=0 // pred_region
    _
  $region61: #{autoencoder_forward.1} parent=0 // pred_fallthru
    _

</llo_original>
